<compile_context>
chip_gen: v7x
topology: tpu7x:2x2x1
jax: 0.10.0
libtpu: 0.0.40
codegen_flags: <defaults>
</compile_context>

<pallas_src>
import functools

import jax
import jax.numpy as jnp
from jax.experimental import pallas as pl
from jax.experimental.pallas import tpu as pltpu


# ----------------------------------------------------------------------------
# In-kernel activation helpers (f32)
# ----------------------------------------------------------------------------
def _apply_act(x, act):
    if act == "relu":
        return jnp.maximum(x, 0.0)
    if act == "sigmoid":
        # Stable sigmoid via tanh (EUP): avoids exp overflow for large |x|.
        return 0.5 * (jnp.tanh(0.5 * x) + 1.0)
    return x


# ----------------------------------------------------------------------------
# Pallas kernels
# ----------------------------------------------------------------------------
def _mm_bias_act_kernel(x_ref, w_ref, b_ref, o_ref, *, act):
    """out = act(x @ w + b); bf16 MXU inputs, f32 accumulate."""
    acc = jnp.dot(x_ref[...], w_ref[...], preferred_element_type=jnp.float32)
    acc = acc + b_ref[...]
    o_ref[...] = _apply_act(acc, act).astype(o_ref.dtype)


def _enc4_dec1_kernel(p_ref, w4_ref, b4_ref, wd_ref, bd_ref, o_ref):
    """Fused enc4 (conv-as-matmul) + relu + dec1 (matmul) + relu."""
    h = jnp.dot(p_ref[...], w4_ref[...], preferred_element_type=jnp.float32)
    h = jnp.maximum(h + b4_ref[...], 0.0).astype(jnp.bfloat16)
    z = jnp.dot(h, wd_ref[...], preferred_element_type=jnp.float32)
    z = jnp.maximum(z + bd_ref[...], 0.0)
    o_ref[...] = z.astype(o_ref.dtype)


# ----------------------------------------------------------------------------
# pallas_call wrappers
# ----------------------------------------------------------------------------
def _mm_bias_act(x, w, bias, act, out_dtype):
    """x: (M, K) bf16, w: (K, N) bf16, bias: (1, N) f32 -> (M, N)."""
    M, K = x.shape
    N = w.shape[-1]
    return pl.pallas_call(
        functools.partial(_mm_bias_act_kernel, act=act),
        out_shape=jax.ShapeDtypeStruct((M, N), out_dtype),
        in_specs=[
            pl.BlockSpec((M, K), lambda: (0, 0)),
            pl.BlockSpec((K, N), lambda: (0, 0)),
            pl.BlockSpec(bias.shape, lambda: (0, 0)),
        ],
        out_specs=pl.BlockSpec((M, N), lambda: (0, 0)),
    )(x, w, bias)


def _phase_batched_mm(x_b, w_b, bias, act, out_dtype):
    """Batched matmul over a leading phase axis P, one pallas_call.

    x_b: (P, M, K) bf16, w_b: (P, K, N) bf16, bias: broadcastable (f32).
    Grid over P is marked parallel (megacore on v7x)."""
    P, M, K = x_b.shape
    N = w_b.shape[-1]
    return pl.pallas_call(
        functools.partial(_mm_bias_act_kernel, act=act),
        out_shape=jax.ShapeDtypeStruct((P, M, N), out_dtype),
        grid=(P,),
        in_specs=[
            pl.BlockSpec((None, M, K), lambda p: (p, 0, 0)),
            pl.BlockSpec((None, K, N), lambda p: (p, 0, 0)),
            pl.BlockSpec(bias.shape, lambda p: (0,) * bias.ndim),
        ],
        out_specs=pl.BlockSpec((None, M, N), lambda p: (p, 0, 0)),
        compiler_params=pltpu.CompilerParams(
            dimension_semantics=("parallel",)),
    )(x_b, w_b, bias)


# ----------------------------------------------------------------------------
# Encoder: Conv2d via im2col glue + fused matmul kernel
# ----------------------------------------------------------------------------
def _pad_axis_to(a, axis, mult):
    rem = (-a.shape[axis]) % mult
    if rem == 0:
        return a
    pads = [(0, 0)] * a.ndim
    pads[axis] = (0, rem)
    return jnp.pad(a, pads)


def _im2col(x, k, stride, pad):
    """x: (N, H, W, C) -> patches (N*OH*OW, k*k*C) in (kh, kw, c) order."""
    n, h, w, c = x.shape
    xp = jnp.pad(x, ((0, 0), (pad, pad), (pad, pad), (0, 0)))
    oh = (h + 2 * pad - k) // stride + 1
    ow = (w + 2 * pad - k) // stride + 1
    cols = []
    for kh in range(k):
        for kw in range(k):
            cols.append(xp[:, kh: kh + (oh - 1) * stride + 1: stride,
                           kw: kw + (ow - 1) * stride + 1: stride, :])
    patches = jnp.stack(cols, axis=3).reshape(n * oh * ow, k * k * c)
    return patches, oh, ow


def conv2d_pallas(x_nhwc, w_oihw, b, *, stride, padding, act):
    """PyTorch-semantics Conv2d.  w_oihw: (Cout, Cin, K, K)."""
    cout, cin, k, _ = w_oihw.shape
    n = x_nhwc.shape[0]
    patches, oh, ow = _im2col(x_nhwc.astype(jnp.bfloat16), k, stride, padding)
    w_mat = jnp.transpose(w_oihw, (2, 3, 1, 0)).reshape(k * k * cin, cout)
    w_mat = w_mat.astype(jnp.bfloat16)
    # pad the contraction dim (K=27 for enc1) for bf16 sublane packing
    patches = _pad_axis_to(patches, 1, 16)
    w_mat = _pad_axis_to(w_mat, 0, 16)
    out = _mm_bias_act(patches, w_mat,
                       b.reshape(1, cout).astype(jnp.float32),
                       act, jnp.bfloat16)
    return out.reshape(n, oh, ow, cout)


# ----------------------------------------------------------------------------
# Fused enc4 + dec1 (both are pure matmuls at these shapes)
# ----------------------------------------------------------------------------
def enc4_dec1_pallas(h3, w4_oihw, b4, wd_iohw, bd):
    """enc4: Conv2d(128->256, k=3, s=2, p=0) on a 4x4 map -> 1x1.
    dec1: ConvTranspose2d(256->128, k=4, s=2, p=0) on 1x1 -> 4x4, which is
    just (N, 256) @ (256, 16*128)."""
    n = h3.shape[0]
    cout4, cin4, k4, _ = w4_oihw.shape        # (256, 128, 3, 3)
    cin_d, cout_d, kd, _ = wd_iohw.shape      # (256, 128, 4, 4)

    patches, oh, ow = _im2col(h3.astype(jnp.bfloat16), k4, 2, 0)  # (N, 1152)
    assert oh == 1 and ow == 1, (oh, ow)

    w4 = jnp.transpose(w4_oihw, (2, 3, 1, 0)).reshape(k4 * k4 * cin4, cout4)
    w4 = w4.astype(jnp.bfloat16)
    # dec1 weight -> (Cin, K, K, Cout) -> (Cin, K*K*Cout); bias tiled per (ky,kx)
    wd = jnp.transpose(wd_iohw, (0, 2, 3, 1)).reshape(cin_d, kd * kd * cout_d)
    wd = wd.astype(jnp.bfloat16)
    bd_full = jnp.tile(bd.astype(jnp.float32), kd * kd).reshape(1, kd * kd * cout_d)
    b4_full = b4.reshape(1, cout4).astype(jnp.float32)

    M = patches.shape[0]
    Nout = kd * kd * cout_d
    out = pl.pallas_call(
        _enc4_dec1_kernel,
        out_shape=jax.ShapeDtypeStruct((M, Nout), jnp.bfloat16),
        in_specs=[
            pl.BlockSpec(patches.shape, lambda: (0, 0)),
            pl.BlockSpec(w4.shape, lambda: (0, 0)),
            pl.BlockSpec(b4_full.shape, lambda: (0, 0)),
            pl.BlockSpec(wd.shape, lambda: (0, 0)),
            pl.BlockSpec(bd_full.shape, lambda: (0, 0)),
        ],
        out_specs=pl.BlockSpec((M, Nout), lambda: (0, 0)),
    )(patches, w4, b4_full, wd, bd_full)
    return out.reshape(n, kd, kd, cout_d)     # NHWC (N, 4, 4, 128)


# ----------------------------------------------------------------------------
# Decoder: ConvTranspose2d(k=4, s=2, p=1) via 4-phase (sub-pixel) decomposition
# ----------------------------------------------------------------------------
# Output phase r uses kernel rows (3,1) [r=0] or (2,0) [r=1], indexed by the
# window offset dy in {0,1}; same for columns.  out[2q+0] = in[q-1]W3 + in[q]W1,
# out[2q+1] = in[q]W2 + in[q+1]W0   (verified against PyTorch semantics).
_PHASE_TAPS = ((3, 1), (2, 0))


def _phase_patches(h, ry, rx):
    """2x2 stride-1 patches of h with per-phase one-sided padding."""
    n, H, W, c = h.shape
    pad_t, pad_b = (1, 0) if ry == 0 else (0, 1)
    pad_l, pad_r = (1, 0) if rx == 0 else (0, 1)
    hp = jnp.pad(h, ((0, 0), (pad_t, pad_b), (pad_l, pad_r), (0, 0)))
    cols = [hp[:, dy:dy + H, dx:dx + W, :]
            for dy in range(2) for dx in range(2)]
    return jnp.stack(cols, axis=3).reshape(n * H * W, 4 * c)


def _phase_weight(w_iohw, ry, rx):
    """(Cin, Cout, 4, 4) -> (4*Cin, Cout) sub-kernel for phase (ry, rx)."""
    cin, cout = w_iohw.shape[:2]
    kr, kc = _PHASE_TAPS[ry], _PHASE_TAPS[rx]
    taps = [w_iohw[:, :, kr[dy], kc[dx]]
            for dy in range(2) for dx in range(2)]
    return jnp.stack(taps, axis=0).reshape(4 * cin, cout)


def conv_transpose2d_s2p1_pallas(h, w_iohw, b, *, act):
    """ConvTranspose2d(stride=2, padding=1, k=4), relu fused.  One pallas_call
    with a parallel grid over the 4 output phases."""
    cin, cout = w_iohw.shape[:2]
    n, H, W, _ = h.shape
    hb = h.astype(jnp.bfloat16)
    wb = w_iohw.astype(jnp.bfloat16)
    patches = jnp.stack([_phase_patches(hb, ry, rx)
                         for ry in range(2) for rx in range(2)], 0)  # (4,M,4Cin)
    weights = jnp.stack([_phase_weight(wb, ry, rx)
                         for ry in range(2) for rx in range(2)], 0)  # (4,4Cin,Cout)
    out = _phase_batched_mm(patches, weights,
                            b.reshape(1, cout).astype(jnp.float32),
                            act, jnp.bfloat16)                       # (4,M,Cout)
    out = out.reshape(2, 2, n, H, W, cout)                           # (ry,rx,n,q,p,c)
    out = jnp.transpose(out, (2, 3, 0, 4, 1, 5)).reshape(n, 2 * H, 2 * W, cout)
    return out


def conv_transpose2d_s2p1_final(h, w_iohw, b):
    """Final layer (64 -> 3) + sigmoid, computed transposed so the output is
    lane-dense (pixels on lanes) and already in channels-leading order."""
    cin, cout = w_iohw.shape[:2]              # 64, 3
    n, H, W, _ = h.shape
    hb = h.astype(jnp.bfloat16)
    wb = w_iohw.astype(jnp.bfloat16)
    patches_t = jnp.stack(
        [jnp.transpose(_phase_patches(hb, ry, rx), (1, 0))
         for ry in range(2) for rx in range(2)], 0)      # (4, 4Cin, M)
    weights_t = jnp.stack(
        [jnp.transpose(_phase_weight(wb, ry, rx), (1, 0))
         for ry in range(2) for rx in range(2)], 0)      # (4, Cout, 4Cin)
    out_t = _phase_batched_mm(weights_t, patches_t,
                              b.reshape(cout, 1).astype(jnp.float32),
                              "sigmoid", jnp.float32)    # (4, Cout, M)
    out_t = out_t.reshape(2, 2, cout, n, H, W)           # (ry,rx,c,n,q,p)
    out = jnp.transpose(out_t, (3, 2, 4, 0, 5, 1)).reshape(n, cout, 2 * H, 2 * W)
    return out                                           # NCHW


# ----------------------------------------------------------------------------
# Parameter construction (deterministic, PyTorch-default-style uniform init)
# ----------------------------------------------------------------------------
def _init_conv(key, cout, cin, k):
    kw, kb = jax.random.split(key)
    bound = 1.0 / float(jnp.sqrt(cin * k * k))
    w = jax.random.uniform(kw, (cout, cin, k, k), jnp.float32, -bound, bound)
    b = jax.random.uniform(kb, (cout,), jnp.float32, -bound, bound)
    return w, b


def _init_convT(key, cin, cout, k):
    kw, kb = jax.random.split(key)
    bound = 1.0 / float(jnp.sqrt(cout * k * k))
    w = jax.random.uniform(kw, (cin, cout, k, k), jnp.float32, -bound, bound)
    b = jax.random.uniform(kb, (cout,), jnp.float32, -bound, bound)
    return w, b


def init_ae_cifar_params(key):
    ks = jax.random.split(key, 8)
    return {
        "enc1": _init_conv(ks[0], 64, 3, 3),
        "enc2": _init_conv(ks[1], 128, 64, 3),
        "enc3": _init_conv(ks[2], 128, 128, 3),
        "enc4": _init_conv(ks[3], 256, 128, 3),
        "dec1": _init_convT(ks[4], 256, 128, 4),
        "dec2": _init_convT(ks[5], 128, 128, 4),
        "dec3": _init_convT(ks[6], 128, 64, 4),
        "dec4": _init_convT(ks[7], 64, 3, 4),
    }


# ----------------------------------------------------------------------------
# Forward pass (matches AE_CIFAR.forward; Dropout2d is unused in forward)
# ----------------------------------------------------------------------------
def ae_cifar_forward(params, x_nchw):
    x = jnp.transpose(x_nchw, (0, 2, 3, 1))                   # NCHW -> NHWC
    # encoder
    h = conv2d_pallas(x, *params["enc1"], stride=2, padding=1, act="relu")
    h = conv2d_pallas(h, *params["enc2"], stride=2, padding=1, act="relu")
    h = conv2d_pallas(h, *params["enc3"], stride=2, padding=1, act="relu")
    # enc4 + dec1 fused (1x1 bottleneck never leaves VMEM)
    h = enc4_dec1_pallas(h, *params["enc4"], *params["dec1"])
    # decoder (phase-decomposed transpose convs)
    h = conv_transpose2d_s2p1_pallas(h, *params["dec2"], act="relu")
    h = conv_transpose2d_s2p1_pallas(h, *params["dec3"], act="relu")
    return conv_transpose2d_s2p1_final(h, *params["dec4"])    # NCHW f32


if __name__ == "__main__":
    key = jax.random.PRNGKey(0)
    k_param, k_x = jax.random.split(key)
    params = init_ae_cifar_params(k_param)
    # CIFAR architecture requires 3x32x32 input (enc4 reduces 4 -> 1 spatially).
    x = jax.random.normal(k_x, (2, 3, 32, 32), jnp.float32)

    y = jax.jit(ae_cifar_forward)(params, x)
    y = jax.block_until_ready(y)

    assert y.shape == (2, 3, 32, 32), y.shape
    assert bool(jnp.all(y >= 0.0)) and bool(jnp.all(y <= 1.0))  # sigmoid output
    print("KERNEL_OK")
</pallas_src>

<mosaic_0001>
module attributes {stable_mosaic.version = 11 : i64} {
  func.func @_mm_bias_act_kernel(%arg0: memref<512x32xbf16, #tpu.memory_space<vmem>>, %arg1: memref<32x64xbf16, #tpu.memory_space<vmem>>, %arg2: memref<1x64xf32, #tpu.memory_space<vmem>>, %arg3: memref<512x64xbf16, #tpu.memory_space<vmem>>) attributes {dimension_semantics = [], scalar_prefetch = 0 : i64, scratch_operands = 0 : i64, tpu.core_type = #tpu.core_type<tc>} {
    %c0 = arith.constant 0 : index
    %c0_0 = arith.constant 0 : index
    %0 = vector.load %arg0[%c0, %c0_0] : memref<512x32xbf16, #tpu.memory_space<vmem>>, vector<512x32xbf16>
    %c0_1 = arith.constant 0 : index
    %c0_2 = arith.constant 0 : index
    %1 = vector.load %arg1[%c0_1, %c0_2] : memref<32x64xbf16, #tpu.memory_space<vmem>>, vector<32x64xbf16>
    %cst = arith.constant dense<0.000000e+00> : vector<512x64xf32>
    %2 = tpu.matmul %0, %1, %cst {dimension_numbers = #tpu.dot_dimension_numbers<[1], [0], [0], [1], [0, 0, 1, 1], [], []>} : vector<512x32xbf16>, vector<32x64xbf16>, vector<512x64xf32> -> vector<512x64xf32>
    %c0_3 = arith.constant 0 : index
    %c0_4 = arith.constant 0 : index
    %3 = vector.load %arg2[%c0_3, %c0_4] : memref<1x64xf32, #tpu.memory_space<vmem>>, vector<1x64xf32>
    %4 = vector.broadcast %3 : vector<1x64xf32> to vector<512x64xf32>
    %5 = arith.addf %2, %4 : vector<512x64xf32>
    %cst_5 = arith.constant 0.000000e+00 : f32
    %6 = vector.broadcast %cst_5 : f32 to vector<512x64xf32>
    %7 = arith.maximumf %5, %6 : vector<512x64xf32>
    %8 = arith.truncf %7 : vector<512x64xf32> to vector<512x64xbf16>
    %c0_6 = arith.constant 0 : index
    %c0_7 = arith.constant 0 : index
    %9 = vector.load %arg3[%c0_6, %c0_7] : memref<512x64xbf16, #tpu.memory_space<vmem>>, vector<512x64xbf16>
    tpu.vector_store %arg3[%c0_6, %c0_7], %8 {strides = array<i32>} : memref<512x64xbf16, #tpu.memory_space<vmem>>, vector<512x64xbf16>,
    return
  }
}

module attributes {stable_mosaic.version = 11 : i64} {
  func.func @_mm_bias_act_kernel(%arg0: memref<128x576xbf16, #tpu.memory_space<vmem>>, %arg1: memref<576x128xbf16, #tpu.memory_space<vmem>>, %arg2: memref<1x128xf32, #tpu.memory_space<vmem>>, %arg3: memref<128x128xbf16, #tpu.memory_space<vmem>>) attributes {dimension_semantics = [], scalar_prefetch = 0 : i64, scratch_operands = 0 : i64, tpu.core_type = #tpu.core_type<tc>} {
    %c0 = arith.constant 0 : index
    %c0_0 = arith.constant 0 : index
    %0 = vector.load %arg0[%c0, %c0_0] : memref<128x576xbf16, #tpu.memory_space<vmem>>, vector<128x576xbf16>
    %c0_1 = arith.constant 0 : index
    %c0_2 = arith.constant 0 : index
    %1 = vector.load %arg1[%c0_1, %c0_2] : memref<576x128xbf16, #tpu.memory_space<vmem>>, vector<576x128xbf16>
    %cst = arith.constant dense<0.000000e+00> : vector<128x128xf32>
    %2 = tpu.matmul %0, %1, %cst {dimension_numbers = #tpu.dot_dimension_numbers<[1], [0], [0], [1], [0, 0, 1, 1], [], []>} : vector<128x576xbf16>, vector<576x128xbf16>, vector<128x128xf32> -> vector<128x128xf32>
    %c0_3 = arith.constant 0 : index
    %c0_4 = arith.constant 0 : index
    %3 = vector.load %arg2[%c0_3, %c0_4] : memref<1x128xf32, #tpu.memory_space<vmem>>, vector<1x128xf32>
    %4 = vector.broadcast %3 : vector<1x128xf32> to vector<128x128xf32>
    %5 = arith.addf %2, %4 : vector<128x128xf32>
    %cst_5 = arith.constant 0.000000e+00 : f32
    %6 = vector.broadcast %cst_5 : f32 to vector<128x128xf32>
    %7 = arith.maximumf %5, %6 : vector<128x128xf32>
    %8 = arith.truncf %7 : vector<128x128xf32> to vector<128x128xbf16>
    %c0_6 = arith.constant 0 : index
    %c0_7 = arith.constant 0 : index
    %9 = vector.load %arg3[%c0_6, %c0_7] : memref<128x128xbf16, #tpu.memory_space<vmem>>, vector<128x128xbf16>
    tpu.vector_store %arg3[%c0_6, %c0_7], %8 {strides = array<i32>} : memref<128x128xbf16, #tpu.memory_space<vmem>>, vector<128x128xbf16>,
    return
  }
}

module attributes {stable_mosaic.version = 11 : i64} {
  func.func @_mm_bias_act_kernel(%arg0: memref<32x1152xbf16, #tpu.memory_space<vmem>>, %arg1: memref<1152x128xbf16, #tpu.memory_space<vmem>>, %arg2: memref<1x128xf32, #tpu.memory_space<vmem>>, %arg3: memref<32x128xbf16, #tpu.memory_space<vmem>>) attributes {dimension_semantics = [], scalar_prefetch = 0 : i64, scratch_operands = 0 : i64, tpu.core_type = #tpu.core_type<tc>} {
    %c0 = arith.constant 0 : index
    %c0_0 = arith.constant 0 : index
    %0 = vector.load %arg0[%c0, %c0_0] : memref<32x1152xbf16, #tpu.memory_space<vmem>>, vector<32x1152xbf16>
    %c0_1 = arith.constant 0 : index
    %c0_2 = arith.constant 0 : index
    %1 = vector.load %arg1[%c0_1, %c0_2] : memref<1152x128xbf16, #tpu.memory_space<vmem>>, vector<1152x128xbf16>
    %cst = arith.constant dense<0.000000e+00> : vector<32x128xf32>
    %2 = tpu.matmul %0, %1, %cst {dimension_numbers = #tpu.dot_dimension_numbers<[1], [0], [0], [1], [0, 0, 1, 1], [], []>} : vector<32x1152xbf16>, vector<1152x128xbf16>, vector<32x128xf32> -> vector<32x128xf32>
    %c0_3 = arith.constant 0 : index
    %c0_4 = arith.constant 0 : index
    %3 = vector.load %arg2[%c0_3, %c0_4] : memref<1x128xf32, #tpu.memory_space<vmem>>, vector<1x128xf32>
    %4 = vector.broadcast %3 : vector<1x128xf32> to vector<32x128xf32>
    %5 = arith.addf %2, %4 : vector<32x128xf32>
    %cst_5 = arith.constant 0.000000e+00 : f32
    %6 = vector.broadcast %cst_5 : f32 to vector<32x128xf32>
    %7 = arith.maximumf %5, %6 : vector<32x128xf32>
    %8 = arith.truncf %7 : vector<32x128xf32> to vector<32x128xbf16>
    %c0_6 = arith.constant 0 : index
    %c0_7 = arith.constant 0 : index
    %9 = vector.load %arg3[%c0_6, %c0_7] : memref<32x128xbf16, #tpu.memory_space<vmem>>, vector<32x128xbf16>
    tpu.vector_store %arg3[%c0_6, %c0_7], %8 {strides = array<i32>} : memref<32x128xbf16, #tpu.memory_space<vmem>>, vector<32x128xbf16>,
    return
  }
}

module attributes {stable_mosaic.version = 11 : i64} {
  func.func @_enc4_dec1_kernel(%arg0: memref<2x1152xbf16, #tpu.memory_space<vmem>>, %arg1: memref<1152x256xbf16, #tpu.memory_space<vmem>>, %arg2: memref<1x256xf32, #tpu.memory_space<vmem>>, %arg3: memref<256x2048xbf16, #tpu.memory_space<vmem>>, %arg4: memref<1x2048xf32, #tpu.memory_space<vmem>>, %arg5: memref<2x2048xbf16, #tpu.memory_space<vmem>>) attributes {dimension_semantics = [], scalar_prefetch = 0 : i64, scratch_operands = 0 : i64, tpu.core_type = #tpu.core_type<tc>} {
    %c0 = arith.constant 0 : index
    %c0_0 = arith.constant 0 : index
    %0 = vector.load %arg0[%c0, %c0_0] : memref<2x1152xbf16, #tpu.memory_space<vmem>>, vector<2x1152xbf16>
    %c0_1 = arith.constant 0 : index
    %c0_2 = arith.constant 0 : index
    %1 = vector.load %arg1[%c0_1, %c0_2] : memref<1152x256xbf16, #tpu.memory_space<vmem>>, vector<1152x256xbf16>
    %cst = arith.constant dense<0.000000e+00> : vector<2x256xf32>
    %2 = tpu.matmul %0, %1, %cst {dimension_numbers = #tpu.dot_dimension_numbers<[1], [0], [0], [1], [0, 0, 1, 1], [], []>} : vector<2x1152xbf16>, vector<1152x256xbf16>, vector<2x256xf32> -> vector<2x256xf32>
    %c0_3 = arith.constant 0 : index
    %c0_4 = arith.constant 0 : index
    %3 = vector.load %arg2[%c0_3, %c0_4] : memref<1x256xf32, #tpu.memory_space<vmem>>, vector<1x256xf32>
    %4 = vector.broadcast %3 : vector<1x256xf32> to vector<2x256xf32>
    %5 = arith.addf %2, %4 : vector<2x256xf32>
    %cst_5 = arith.constant 0.000000e+00 : f32
    %6 = vector.broadcast %cst_5 : f32 to vector<2x256xf32>
    %7 = arith.maximumf %5, %6 : vector<2x256xf32>
    %8 = arith.truncf %7 : vector<2x256xf32> to vector<2x256xbf16>
    %c0_6 = arith.constant 0 : index
    %c0_7 = arith.constant 0 : index
    %9 = vector.load %arg3[%c0_6, %c0_7] : memref<256x2048xbf16, #tpu.memory_space<vmem>>, vector<256x2048xbf16>
    %cst_8 = arith.constant dense<0.000000e+00> : vector<2x2048xf32>
    %10 = tpu.matmul %8, %9, %cst_8 {dimension_numbers = #tpu.dot_dimension_numbers<[1], [0], [0], [1], [0, 0, 1, 1], [], []>} : vector<2x256xbf16>, vector<256x2048xbf16>, vector<2x2048xf32> -> vector<2x2048xf32>
    %c0_9 = arith.constant 0 : index
    %c0_10 = arith.constant 0 : index
    %11 = vector.load %arg4[%c0_9, %c0_10] : memref<1x2048xf32, #tpu.memory_space<vmem>>, vector<1x2048xf32>
    %12 = vector.broadcast %11 : vector<1x2048xf32> to vector<2x2048xf32>
    %13 = arith.addf %10, %12 : vector<2x2048xf32>
    %cst_11 = arith.constant 0.000000e+00 : f32
    %14 = vector.broadcast %cst_11 : f32 to vector<2x2048xf32>
    %15 = arith.maximumf %13, %14 : vector<2x2048xf32>
    %16 = arith.truncf %15 : vector<2x2048xf32> to vector<2x2048xbf16>
    %c0_12 = arith.constant 0 : index
    %c0_13 = arith.constant 0 : index
    %17 = vector.load %arg5[%c0_12, %c0_13] : memref<2x2048xbf16, #tpu.memory_space<vmem>>, vector<2x2048xbf16>
    tpu.vector_store %arg5[%c0_12, %c0_13], %16 {strides = array<i32>} : memref<2x2048xbf16, #tpu.memory_space<vmem>>, vector<2x2048xbf16>,
    return
  }
}

module attributes {stable_mosaic.version = 11 : i64} {
  func.func @_mm_bias_act_kernel(%arg0: i32, %arg1: memref<1x32x512xbf16, #tpu.memory_space<vmem>>, %arg2: memref<1x512x128xbf16, #tpu.memory_space<vmem>>, %arg3: memref<1x128xf32, #tpu.memory_space<vmem>>, %arg4: memref<1x32x128xbf16, #tpu.memory_space<vmem>>) attributes {dimension_semantics = [#tpu.dimension_semantics<parallel>], iteration_bounds = array<i64: 4>, scalar_prefetch = 0 : i64, scratch_operands = 0 : i64, tpu.core_type = #tpu.core_type<tc>, window_params = [{transform_indices = @transform_0, window_bounds = array<i64: 1, 32, 512>}, {transform_indices = @transform_1, window_bounds = array<i64: 1, 512, 128>}, {pipeline_mode = #tpu.pipeline_mode<synchronous>, transform_indices = @transform_2, window_bounds = array<i64: 1, 128>}, {transform_indices = @transform_3, window_bounds = array<i64: 1, 32, 128>}]} {
    %c0 = arith.constant 0 : index
    %c0_0 = arith.constant 0 : index
    %c0_1 = arith.constant 0 : index
    %0 = vector.load %arg1[%c0, %c0_0, %c0_1] : memref<1x32x512xbf16, #tpu.memory_space<vmem>>, vector<1x32x512xbf16>
    %1 = vector.shape_cast %0 : vector<1x32x512xbf16> to vector<32x512xbf16>
    %c0_2 = arith.constant 0 : index
    %c0_3 = arith.constant 0 : index
    %c0_4 = arith.constant 0 : index
    %2 = vector.load %arg2[%c0_2, %c0_3, %c0_4] : memref<1x512x128xbf16, #tpu.memory_space<vmem>>, vector<1x512x128xbf16>
    %3 = vector.shape_cast %2 : vector<1x512x128xbf16> to vector<512x128xbf16>
    %cst = arith.constant dense<0.000000e+00> : vector<32x128xf32>
    %4 = tpu.matmul %1, %3, %cst {dimension_numbers = #tpu.dot_dimension_numbers<[1], [0], [0], [1], [0, 0, 1, 1], [], []>} : vector<32x512xbf16>, vector<512x128xbf16>, vector<32x128xf32> -> vector<32x128xf32>
    %c0_5 = arith.constant 0 : index
    %c0_6 = arith.constant 0 : index
    %5 = vector.load %arg3[%c0_5, %c0_6] : memref<1x128xf32, #tpu.memory_space<vmem>>, vector<1x128xf32>
    %6 = vector.broadcast %5 : vector<1x128xf32> to vector<32x128xf32>
    %7 = arith.addf %4, %6 : vector<32x128xf32>
    %cst_7 = arith.constant 0.000000e+00 : f32
    %8 = vector.broadcast %cst_7 : f32 to vector<32x128xf32>
    %9 = arith.maximumf %7, %8 : vector<32x128xf32>
    %10 = arith.truncf %9 : vector<32x128xf32> to vector<32x128xbf16>
    %c0_8 = arith.constant 0 : index
    %c0_9 = arith.constant 0 : index
    %c0_10 = arith.constant 0 : index
    %11 = vector.load %arg4[%c0_8, %c0_9, %c0_10] : memref<1x32x128xbf16, #tpu.memory_space<vmem>>, vector<1x32x128xbf16>
    %12 = vector.shape_cast %11 : vector<1x32x128xbf16> to vector<32x128xbf16>
    %13 = vector.shape_cast %10 : vector<32x128xbf16> to vector<1x32x128xbf16>
    tpu.vector_store %arg4[%c0_8, %c0_9, %c0_10], %13 {strides = array<i32>} : memref<1x32x128xbf16, #tpu.memory_space<vmem>>, vector<1x32x128xbf16>,
    return
  }
  func.func @transform_0(%arg0: i32) -> (i32, i32, i32) {
    %c0_i32 = arith.constant 0 : i32
    %c0_i32_0 = arith.constant 0 : i32
    %c0_i32_1 = arith.constant 0 : i32
    return %arg0, %c0_i32, %c0_i32_0 : i32, i32, i32
  }
  func.func @transform_1(%arg0: i32) -> (i32, i32, i32) {
    %c0_i32 = arith.constant 0 : i32
    %c0_i32_0 = arith.constant 0 : i32
    %c0_i32_1 = arith.constant 0 : i32
    return %arg0, %c0_i32, %c0_i32_0 : i32, i32, i32
  }
  func.func @transform_2(%arg0: i32) -> (i32, i32) {
    %c0_i32 = arith.constant 0 : i32
    %c0_i32_0 = arith.constant 0 : i32
    %c0_i32_1 = arith.constant 0 : i32
    return %c0_i32, %c0_i32_0 : i32, i32
  }
  func.func @transform_3(%arg0: i32) -> (i32, i32, i32) {
    %c0_i32 = arith.constant 0 : i32
    %c0_i32_0 = arith.constant 0 : i32
    %c0_i32_1 = arith.constant 0 : i32
    return %arg0, %c0_i32, %c0_i32_0 : i32, i32, i32
  }
}

module attributes {stable_mosaic.version = 11 : i64} {
  func.func @_mm_bias_act_kernel(%arg0: i32, %arg1: memref<1x128x512xbf16, #tpu.memory_space<vmem>>, %arg2: memref<1x512x64xbf16, #tpu.memory_space<vmem>>, %arg3: memref<1x64xf32, #tpu.memory_space<vmem>>, %arg4: memref<1x128x64xbf16, #tpu.memory_space<vmem>>) attributes {dimension_semantics = [#tpu.dimension_semantics<parallel>], iteration_bounds = array<i64: 4>, scalar_prefetch = 0 : i64, scratch_operands = 0 : i64, tpu.core_type = #tpu.core_type<tc>, window_params = [{transform_indices = @transform_0, window_bounds = array<i64: 1, 128, 512>}, {transform_indices = @transform_1, window_bounds = array<i64: 1, 512, 64>}, {pipeline_mode = #tpu.pipeline_mode<synchronous>, transform_indices = @transform_2, window_bounds = array<i64: 1, 64>}, {transform_indices = @transform_3, window_bounds = array<i64: 1, 128, 64>}]} {
    %c0 = arith.constant 0 : index
    %c0_0 = arith.constant 0 : index
    %c0_1 = arith.constant 0 : index
    %0 = vector.load %arg1[%c0, %c0_0, %c0_1] : memref<1x128x512xbf16, #tpu.memory_space<vmem>>, vector<1x128x512xbf16>
    %1 = vector.shape_cast %0 : vector<1x128x512xbf16> to vector<128x512xbf16>
    %c0_2 = arith.constant 0 : index
    %c0_3 = arith.constant 0 : index
    %c0_4 = arith.constant 0 : index
    %2 = vector.load %arg2[%c0_2, %c0_3, %c0_4] : memref<1x512x64xbf16, #tpu.memory_space<vmem>>, vector<1x512x64xbf16>
    %3 = vector.shape_cast %2 : vector<1x512x64xbf16> to vector<512x64xbf16>
    %cst = arith.constant dense<0.000000e+00> : vector<128x64xf32>
    %4 = tpu.matmul %1, %3, %cst {dimension_numbers = #tpu.dot_dimension_numbers<[1], [0], [0], [1], [0, 0, 1, 1], [], []>} : vector<128x512xbf16>, vector<512x64xbf16>, vector<128x64xf32> -> vector<128x64xf32>
    %c0_5 = arith.constant 0 : index
    %c0_6 = arith.constant 0 : index
    %5 = vector.load %arg3[%c0_5, %c0_6] : memref<1x64xf32, #tpu.memory_space<vmem>>, vector<1x64xf32>
    %6 = vector.broadcast %5 : vector<1x64xf32> to vector<128x64xf32>
    %7 = arith.addf %4, %6 : vector<128x64xf32>
    %cst_7 = arith.constant 0.000000e+00 : f32
    %8 = vector.broadcast %cst_7 : f32 to vector<128x64xf32>
    %9 = arith.maximumf %7, %8 : vector<128x64xf32>
    %10 = arith.truncf %9 : vector<128x64xf32> to vector<128x64xbf16>
    %c0_8 = arith.constant 0 : index
    %c0_9 = arith.constant 0 : index
    %c0_10 = arith.constant 0 : index
    %11 = vector.load %arg4[%c0_8, %c0_9, %c0_10] : memref<1x128x64xbf16, #tpu.memory_space<vmem>>, vector<1x128x64xbf16>
    %12 = vector.shape_cast %11 : vector<1x128x64xbf16> to vector<128x64xbf16>
    %13 = vector.shape_cast %10 : vector<128x64xbf16> to vector<1x128x64xbf16>
    tpu.vector_store %arg4[%c0_8, %c0_9, %c0_10], %13 {strides = array<i32>} : memref<1x128x64xbf16, #tpu.memory_space<vmem>>, vector<1x128x64xbf16>,
    return
  }
  func.func @transform_0(%arg0: i32) -> (i32, i32, i32) {
    %c0_i32 = arith.constant 0 : i32
    %c0_i32_0 = arith.constant 0 : i32
    %c0_i32_1 = arith.constant 0 : i32
    return %arg0, %c0_i32, %c0_i32_0 : i32, i32, i32
  }
  func.func @transform_1(%arg0: i32) -> (i32, i32, i32) {
    %c0_i32 = arith.constant 0 : i32
    %c0_i32_0 = arith.constant 0 : i32
    %c0_i32_1 = arith.constant 0 : i32
    return %arg0, %c0_i32, %c0_i32_0 : i32, i32, i32
  }
  func.func @transform_2(%arg0: i32) -> (i32, i32) {
    %c0_i32 = arith.constant 0 : i32
    %c0_i32_0 = arith.constant 0 : i32
    %c0_i32_1 = arith.constant 0 : i32
    return %c0_i32, %c0_i32_0 : i32, i32
  }
  func.func @transform_3(%arg0: i32) -> (i32, i32, i32) {
    %c0_i32 = arith.constant 0 : i32
    %c0_i32_0 = arith.constant 0 : i32
    %c0_i32_1 = arith.constant 0 : i32
    return %arg0, %c0_i32, %c0_i32_0 : i32, i32, i32
  }
}

module attributes {stable_mosaic.version = 11 : i64} {
  func.func @_mm_bias_act_kernel(%arg0: i32, %arg1: memref<1x3x256xbf16, #tpu.memory_space<vmem>>, %arg2: memref<1x256x512xbf16, #tpu.memory_space<vmem>>, %arg3: memref<3x1xf32, #tpu.memory_space<vmem>>, %arg4: memref<1x3x512xf32, #tpu.memory_space<vmem>>) attributes {dimension_semantics = [#tpu.dimension_semantics<parallel>], iteration_bounds = array<i64: 4>, scalar_prefetch = 0 : i64, scratch_operands = 0 : i64, tpu.core_type = #tpu.core_type<tc>, window_params = [{transform_indices = @transform_0, window_bounds = array<i64: 1, 3, 256>}, {transform_indices = @transform_1, window_bounds = array<i64: 1, 256, 512>}, {pipeline_mode = #tpu.pipeline_mode<synchronous>, transform_indices = @transform_2, window_bounds = array<i64: 3, 1>}, {transform_indices = @transform_3, window_bounds = array<i64: 1, 3, 512>}]} {
    %c0 = arith.constant 0 : index
    %c0_0 = arith.constant 0 : index
    %c0_1 = arith.constant 0 : index
    %0 = vector.load %arg1[%c0, %c0_0, %c0_1] : memref<1x3x256xbf16, #tpu.memory_space<vmem>>, vector<1x3x256xbf16>
    %1 = vector.shape_cast %0 : vector<1x3x256xbf16> to vector<3x256xbf16>
    %c0_2 = arith.constant 0 : index
    %c0_3 = arith.constant 0 : index
    %c0_4 = arith.constant 0 : index
    %2 = vector.load %arg2[%c0_2, %c0_3, %c0_4] : memref<1x256x512xbf16, #tpu.memory_space<vmem>>, vector<1x256x512xbf16>
    %3 = vector.shape_cast %2 : vector<1x256x512xbf16> to vector<256x512xbf16>
    %cst = arith.constant dense<0.000000e+00> : vector<3x512xf32>
    %4 = tpu.matmul %1, %3, %cst {dimension_numbers = #tpu.dot_dimension_numbers<[1], [0], [0], [1], [0, 0, 1, 1], [], []>} : vector<3x256xbf16>, vector<256x512xbf16>, vector<3x512xf32> -> vector<3x512xf32>
    %c0_5 = arith.constant 0 : index
    %c0_6 = arith.constant 0 : index
    %5 = vector.load %arg3[%c0_5, %c0_6] : memref<3x1xf32, #tpu.memory_space<vmem>>, vector<3x1xf32>
    %6 = vector.broadcast %5 : vector<3x1xf32> to vector<3x512xf32>
    %7 = arith.addf %4, %6 : vector<3x512xf32>
    %cst_7 = arith.constant 5.000000e-01 : f32
    %8 = vector.broadcast %cst_7 : f32 to vector<3x512xf32>
    %9 = arith.mulf %8, %7 : vector<3x512xf32>
    %10 = math.tanh %9 : vector<3x512xf32>
    %cst_8 = arith.constant 1.000000e+00 : f32
    %11 = vector.broadcast %cst_8 : f32 to vector<3x512xf32>
    %12 = arith.addf %10, %11 : vector<3x512xf32>
    %cst_9 = arith.constant 5.000000e-01 : f32
    %13 = vector.broadcast %cst_9 : f32 to vector<3x512xf32>
    %14 = arith.mulf %13, %12 : vector<3x512xf32>
    %c0_10 = arith.constant 0 : index
    %c0_11 = arith.constant 0 : index
    %c0_12 = arith.constant 0 : index
    %15 = vector.load %arg4[%c0_10, %c0_11, %c0_12] : memref<1x3x512xf32, #tpu.memory_space<vmem>>, vector<1x3x512xf32>
    %16 = vector.shape_cast %15 : vector<1x3x512xf32> to vector<3x512xf32>
    %17 = vector.shape_cast %14 : vector<3x512xf32> to vector<1x3x512xf32>
    tpu.vector_store %arg4[%c0_10, %c0_11, %c0_12], %17 {strides = array<i32>} : memref<1x3x512xf32, #tpu.memory_space<vmem>>, vector<1x3x512xf32>,
    return
  }
  func.func @transform_0(%arg0: i32) -> (i32, i32, i32) {
    %c0_i32 = arith.constant 0 : i32
    %c0_i32_0 = arith.constant 0 : i32
    %c0_i32_1 = arith.constant 0 : i32
    return %arg0, %c0_i32, %c0_i32_0 : i32, i32, i32
  }
  func.func @transform_1(%arg0: i32) -> (i32, i32, i32) {
    %c0_i32 = arith.constant 0 : i32
    %c0_i32_0 = arith.constant 0 : i32
    %c0_i32_1 = arith.constant 0 : i32
    return %arg0, %c0_i32, %c0_i32_0 : i32, i32, i32
  }
  func.func @transform_2(%arg0: i32) -> (i32, i32) {
    %c0_i32 = arith.constant 0 : i32
    %c0_i32_0 = arith.constant 0 : i32
    %c0_i32_1 = arith.constant 0 : i32
    return %c0_i32, %c0_i32_0 : i32, i32
  }
  func.func @transform_3(%arg0: i32) -> (i32, i32, i32) {
    %c0_i32 = arith.constant 0 : i32
    %c0_i32_0 = arith.constant 0 : i32
    %c0_i32_1 = arith.constant 0 : i32
    return %arg0, %c0_i32, %c0_i32_0 : i32, i32, i32
  }
}

</mosaic_0001>

<llo_original>
// kernel: ae_cifar_forward.7
$region0: #{ae_cifar_forward.7}
  #allocation0 [shape = 'u32[]', space=smem, size = 0x4, offset = 0x4, fixed_abs, tag = 'smem constant byte address 0x4 - core index']
  #allocation1 [shape = 'u32[144,128]{1,0:T(1,128)}', space=vmem, size = 0x12000, scoped, tag = 'internal scratch']
  %s0 = inlined_call_operand.vmem [shape: bf16[512,32], index: 0, kind: input, shape index: {}]
  %s1 = inlined_call_operand.vmem [shape: bf16[32,64], index: 1, kind: input, shape index: {}]
  %s2 = inlined_call_operand.vmem [shape: f32[1,64], index: 2, kind: input, shape index: {}]
  %s3 = inlined_call_operand.vmem [shape: bf16[512,64], index: 3, kind: output, shape index: {}]
  %s4 = sld [smem:[#allocation0]]
  $region22: #{ae_cifar_forward.7} parent=0
    _
  %s6 = ssub.s32 1, %s4
  %s7 = scalar_select 0, %s6, %s4
  // Predicated region
  $region2: #{ae_cifar_forward.7} parent=0 // pred_check
    _
  $region3: #{ae_cifar_forward.7} parent=0 // pred_check_branch
    %9 = sbr.rel (0) target = $region5
  $region4: #{ae_cifar_forward.7} parent=0 // pred_region
    _
  $region5: #{ae_cifar_forward.7} parent=0 // pred_fallthru
    _
  // Predicated region
  $region6: #{ae_cifar_forward.7} parent=0 // pred_check
    _
  $region7: #{ae_cifar_forward.7} parent=0 // pred_check_branch
    %11 = sbr.rel (0) target = $region9
  $region8: #{ae_cifar_forward.7} parent=0 // pred_region
    _
  $region9: #{ae_cifar_forward.7} parent=0 // pred_fallthru
    _
  // Predicated region
  $region10: #{ae_cifar_forward.7} parent=0 // pred_check
    _
  $region11: #{ae_cifar_forward.7} parent=0 // pred_check_branch
    %13 = sbr.rel (0) target = $region13
  $region12: #{ae_cifar_forward.7} parent=0 // pred_region
    _
  $region13: #{ae_cifar_forward.7} parent=0 // pred_fallthru
    _
  %v15 = vld [vmem:[%s0] sm:$0xf]
  %v16 = vld [vmem:[%s0 + $0x4] sm:$0xf]
  %v17 = vld [vmem:[%s0 + $0x8] sm:$0xf]
  %v18 = vld [vmem:[%s0 + $0xc] sm:$0xf]
  %v19 = vld [vmem:[%s0 + $0x10] sm:$0xf]
  %v20 = vld [vmem:[%s0 + $0x14] sm:$0xf]
  %v21 = vld [vmem:[%s0 + $0x18] sm:$0xf]
  %v22 = vld [vmem:[%s0 + $0x1c] sm:$0xf]
  %v23 = vld [vmem:[%s0 + $0x20] sm:$0xf]
  %v24 = vld [vmem:[%s0 + $0x24] sm:$0xf]
  %v25 = vld [vmem:[%s0 + $0x28] sm:$0xf]
  %v26 = vld [vmem:[%s0 + $0x2c] sm:$0xf]
  %v27 = vld [vmem:[%s0 + $0x30] sm:$0xf]
  %v28 = vld [vmem:[%s0 + $0x34] sm:$0xf]
  %v29 = vld [vmem:[%s0 + $0x38] sm:$0xf]
  %v30 = vld [vmem:[%s0 + $0x3c] sm:$0xf]
  %v31 = vld [vmem:[%s0 + $0x40] sm:$0xf]
  %v32 = vld [vmem:[%s0 + $0x44] sm:$0xf]
  %v33 = vld [vmem:[%s0 + $0x48] sm:$0xf]
  %v34 = vld [vmem:[%s0 + $0x4c] sm:$0xf]
  %v35 = vld [vmem:[%s0 + $0x50] sm:$0xf]
  %v36 = vld [vmem:[%s0 + $0x54] sm:$0xf]
  %v37 = vld [vmem:[%s0 + $0x58] sm:$0xf]
  %v38 = vld [vmem:[%s0 + $0x5c] sm:$0xf]
  %v39 = vld [vmem:[%s0 + $0x60] sm:$0xf]
  %v40 = vld [vmem:[%s0 + $0x64] sm:$0xf]
  %v41 = vld [vmem:[%s0 + $0x68] sm:$0xf]
  %v42 = vld [vmem:[%s0 + $0x6c] sm:$0xf]
  %v43 = vld [vmem:[%s0 + $0x70] sm:$0xf]
  %v44 = vld [vmem:[%s0 + $0x74] sm:$0xf]
  %v45 = vld [vmem:[%s0 + $0x78] sm:$0xf]
  %v46 = vld [vmem:[%s0 + $0x7c] sm:$0xf]
  %v47 = vld [vmem:[%s0 + $0x80] sm:$0xf]
  %v48 = vld [vmem:[%s0 + $0x84] sm:$0xf]
  %v49 = vld [vmem:[%s0 + $0x88] sm:$0xf]
  %v50 = vld [vmem:[%s0 + $0x8c] sm:$0xf]
  %v51 = vld [vmem:[%s0 + $0x90] sm:$0xf]
  %v52 = vld [vmem:[%s0 + $0x94] sm:$0xf]
  %v53 = vld [vmem:[%s0 + $0x98] sm:$0xf]
  %v54 = vld [vmem:[%s0 + $0x9c] sm:$0xf]
  %v55 = vld [vmem:[%s0 + $0xa0] sm:$0xf]
  %v56 = vld [vmem:[%s0 + $0xa4] sm:$0xf]
  %v57 = vld [vmem:[%s0 + $0xa8] sm:$0xf]
  %v58 = vld [vmem:[%s0 + $0xac] sm:$0xf]
  %v59 = vld [vmem:[%s0 + $0xb0] sm:$0xf]
  %v60 = vld [vmem:[%s0 + $0xb4] sm:$0xf]
  %v61 = vld [vmem:[%s0 + $0xb8] sm:$0xf]
  %v62 = vld [vmem:[%s0 + $0xbc] sm:$0xf]
  %v63 = vld [vmem:[%s0 + $0xc0] sm:$0xf]
  %v64 = vld [vmem:[%s0 + $0xc4] sm:$0xf]
  %v65 = vld [vmem:[%s0 + $0xc8] sm:$0xf]
  %v66 = vld [vmem:[%s0 + $0xcc] sm:$0xf]
  %v67 = vld [vmem:[%s0 + $0xd0] sm:$0xf]
  %v68 = vld [vmem:[%s0 + $0xd4] sm:$0xf]
  %v69 = vld [vmem:[%s0 + $0xd8] sm:$0xf]
  %v70 = vld [vmem:[%s0 + $0xdc] sm:$0xf]
  %v71 = vld [vmem:[%s0 + $0xe0] sm:$0xf]
  %v72 = vld [vmem:[%s0 + $0xe4] sm:$0xf]
  %v73 = vld [vmem:[%s0 + $0xe8] sm:$0xf]
  %v74 = vld [vmem:[%s0 + $0xec] sm:$0xf]
  %v75 = vld [vmem:[%s0 + $0xf0] sm:$0xf]
  %v76 = vld [vmem:[%s0 + $0xf4] sm:$0xf]
  %v77 = vld [vmem:[%s0 + $0xf8] sm:$0xf]
  %v78 = vld [vmem:[%s0 + $0xfc] sm:$0xf]
  %v79 = vld [vmem:[%s1] sm:$0xf]
  %v80 = vld [vmem:[%s1 + $0x4] sm:$0xf]
  %v81 = vld [vmem:[%s1 + $0x8] sm:$0xf]
  %v82 = vld [vmem:[%s1 + $0xc] sm:$0xf]
  %v83 = vld [vmem:[%s2] sm:$0x1]
  %v85 = vlaneseq
  %v86 = vshrl.u32 %v85, 7
  %v87 = vsub.s32 0, %v86
  %v88 = vrot.slane %v83, %v87
  %v154 = vunpack.c.l.b16 %v15
  %v155 = vunpack.c.l.b16 %v16
  %v156 = vunpack.c.l.b16 %v17
  %v157 = vunpack.c.l.b16 %v18
  %v158 = vunpack.c.l.b16 %v19
  %v159 = vunpack.c.l.b16 %v20
  %v160 = vunpack.c.l.b16 %v21
  %v161 = vunpack.c.l.b16 %v22
  %v162 = vunpack.c.l.b16 %v23
  %v163 = vunpack.c.l.b16 %v24
  %v164 = vunpack.c.l.b16 %v25
  %v165 = vunpack.c.l.b16 %v26
  %v166 = vunpack.c.l.b16 %v27
  %v167 = vunpack.c.l.b16 %v28
  %v168 = vunpack.c.l.b16 %v29
  %v169 = vunpack.c.l.b16 %v30
  %v170 = vunpack.c.l.b16 %v31
  %v171 = vunpack.c.l.b16 %v32
  %v172 = vunpack.c.l.b16 %v33
  %v173 = vunpack.c.l.b16 %v34
  %v174 = vunpack.c.l.b16 %v35
  %v175 = vunpack.c.l.b16 %v36
  %v176 = vunpack.c.l.b16 %v37
  %v177 = vunpack.c.l.b16 %v38
  %v178 = vunpack.c.l.b16 %v39
  %v179 = vunpack.c.l.b16 %v40
  %v180 = vunpack.c.l.b16 %v41
  %v181 = vunpack.c.l.b16 %v42
  %v182 = vunpack.c.l.b16 %v43
  %v183 = vunpack.c.l.b16 %v44
  %v184 = vunpack.c.l.b16 %v45
  %v185 = vunpack.c.l.b16 %v46
  %v186 = vunpack.c.l.b16 %v47
  %v187 = vunpack.c.l.b16 %v48
  %v188 = vunpack.c.l.b16 %v49
  %v189 = vunpack.c.l.b16 %v50
  %v190 = vunpack.c.l.b16 %v51
  %v191 = vunpack.c.l.b16 %v52
  %v192 = vunpack.c.l.b16 %v53
  %v193 = vunpack.c.l.b16 %v54
  %v194 = vunpack.c.l.b16 %v55
  %v195 = vunpack.c.l.b16 %v56
  %v196 = vunpack.c.l.b16 %v57
  %v197 = vunpack.c.l.b16 %v58
  %v198 = vunpack.c.l.b16 %v59
  %v199 = vunpack.c.l.b16 %v60
  %v200 = vunpack.c.l.b16 %v61
  %v201 = vunpack.c.l.b16 %v62
  %v202 = vunpack.c.l.b16 %v63
  %v203 = vunpack.c.l.b16 %v64
  %v204 = vunpack.c.l.b16 %v65
  %v205 = vunpack.c.l.b16 %v66
  %v206 = vunpack.c.l.b16 %v67
  %v207 = vunpack.c.l.b16 %v68
  %v208 = vunpack.c.l.b16 %v69
  %v209 = vunpack.c.l.b16 %v70
  %v210 = vunpack.c.l.b16 %v71
  %v211 = vunpack.c.l.b16 %v72
  %v212 = vunpack.c.l.b16 %v73
  %v213 = vunpack.c.l.b16 %v74
  %v214 = vunpack.c.l.b16 %v75
  %v215 = vunpack.c.l.b16 %v76
  %v216 = vunpack.c.l.b16 %v77
  %v217 = vunpack.c.l.b16 %v78
  %v218 = vpack.c.b16 %v155, %v154
  %v219 = vpack.c.b16 %v157, %v156
  %v220 = vpack.c.b16 %v159, %v158
  %v221 = vpack.c.b16 %v161, %v160
  %v222 = vpack.c.b16 %v163, %v162
  %v223 = vpack.c.b16 %v165, %v164
  %v224 = vpack.c.b16 %v167, %v166
  %v225 = vpack.c.b16 %v169, %v168
  %v226 = vpack.c.b16 %v171, %v170
  %v227 = vpack.c.b16 %v173, %v172
  %v228 = vpack.c.b16 %v175, %v174
  %v229 = vpack.c.b16 %v177, %v176
  %v230 = vpack.c.b16 %v179, %v178
  %v231 = vpack.c.b16 %v181, %v180
  %v232 = vpack.c.b16 %v183, %v182
  %v233 = vpack.c.b16 %v185, %v184
  %v234 = vpack.c.b16 %v187, %v186
  %v235 = vpack.c.b16 %v189, %v188
  %v236 = vpack.c.b16 %v191, %v190
  %v237 = vpack.c.b16 %v193, %v192
  %v238 = vpack.c.b16 %v195, %v194
  %v239 = vpack.c.b16 %v197, %v196
  %v240 = vpack.c.b16 %v199, %v198
  %v241 = vpack.c.b16 %v201, %v200
  %v242 = vpack.c.b16 %v203, %v202
  %v243 = vpack.c.b16 %v205, %v204
  %v244 = vpack.c.b16 %v207, %v206
  %v245 = vpack.c.b16 %v209, %v208
  %v246 = vpack.c.b16 %v211, %v210
  %v247 = vpack.c.b16 %v213, %v212
  %v248 = vpack.c.b16 %v215, %v214
  %v249 = vpack.c.b16 %v217, %v216
  %v254 = vunpack.c.l.b16 %v79
  %v255 = vunpack.c.l.b16 %v80
  %v256 = vunpack.c.l.b16 %v81
  %v257 = vunpack.c.l.b16 %v82
  %v258 = vpack.c.b16 %v255, %v254
  %v259 = vpack.c.b16 %v257, %v256
  %vm262 = vcmask 261120
  %v264 = vsel %vm262, %v218, 0
  %v267 = vsel %vm262, %v219, 0
  %v270 = vsel %vm262, %v220, 0
  %v273 = vsel %vm262, %v221, 0
  %v276 = vsel %vm262, %v222, 0
  %v279 = vsel %vm262, %v223, 0
  %v282 = vsel %vm262, %v224, 0
  %v285 = vsel %vm262, %v225, 0
  %v288 = vsel %vm262, %v226, 0
  %v291 = vsel %vm262, %v227, 0
  %v294 = vsel %vm262, %v228, 0
  %v297 = vsel %vm262, %v229, 0
  %v300 = vsel %vm262, %v230, 0
  %v303 = vsel %vm262, %v231, 0
  %v306 = vsel %vm262, %v232, 0
  %v309 = vsel %vm262, %v233, 0
  %v312 = vsel %vm262, %v234, 0
  %v315 = vsel %vm262, %v235, 0
  %v318 = vsel %vm262, %v236, 0
  %v321 = vsel %vm262, %v237, 0
  %v324 = vsel %vm262, %v238, 0
  %v327 = vsel %vm262, %v239, 0
  %v330 = vsel %vm262, %v240, 0
  %v333 = vsel %vm262, %v241, 0
  %v336 = vsel %vm262, %v242, 0
  %v339 = vsel %vm262, %v243, 0
  %v342 = vsel %vm262, %v244, 0
  %v345 = vsel %vm262, %v245, 0
  %v348 = vsel %vm262, %v246, 0
  %v351 = vsel %vm262, %v247, 0
  %v354 = vsel %vm262, %v248, 0
  %v357 = vsel %vm262, %v249, 0
  %359 = vmatprep.subr.bf16.mxu0 0
  %360 = vmatpush1.bf16.msra.mxu0 %v258
  %361 = vmatprep.subr.bf16.mxu0 0
  %362 = vmatpush1.bf16.msra.mxu0 %v259
  %363 = vmatprep.subr.bf16.mxu0 0
  %364 = vmatpush1.bf16.msra.mxu0 0
  %365 = vmatprep.subr.bf16.mxu0 0
  %366 = vmatpush1.bf16.msra.mxu0 0
  %367 = vmatprep.subr.bf16.mxu0 0
  %368 = vmatpush1.bf16.msra.mxu0 0
  %369 = vmatprep.subr.bf16.mxu0 0
  %370 = vmatpush1.bf16.msra.mxu0 0
  %371 = vmatprep.subr.bf16.mxu0 0
  %372 = vmatpush1.bf16.msra.mxu0 0
  %373 = vmatprep.subr.bf16.mxu0 0
  %374 = vmatpush1.bf16.msra.mxu0 0
  %375 = vmatprep.subr.bf16.mxu0 0
  %376 = vmatpush1.bf16.msra.mxu0 0
  %377 = vmatprep.subr.bf16.mxu0 0
  %378 = vmatpush1.bf16.msra.mxu0 0
  %379 = vmatprep.subr.bf16.mxu0 0
  %380 = vmatpush1.bf16.msra.mxu0 0
  %381 = vmatprep.subr.bf16.mxu0 0
  %382 = vmatpush1.bf16.msra.mxu0 0
  %383 = vmatprep.subr.bf16.mxu0 0
  %384 = vmatpush1.bf16.msra.mxu0 0
  %385 = vmatprep.subr.bf16.mxu0 0
  %386 = vmatpush1.bf16.msra.mxu0 0
  %387 = vmatprep.subr.bf16.mxu0 0
  %388 = vmatpush1.bf16.msra.mxu0 0
  %389 = vmatprep.subr.bf16.mxu0 0
  %390 = vmatpush1.bf16.msra.mxu0 0
  %391 = vmatprep.mubr.bf16.mxu0 0
  %392 = vmatmul.mubr.bf16.gmra.mrb[0].mxu0 %v264
  %v393 = vpop.f32.mrb[0].mxu0
  %v394 = vadd.f32 %v88, %v393
  %v395 = vpop.f32.mrb[0].mxu0
  %v396 = vpop.f32.mrb[0].mxu0
  %v397 = vadd.f32 %v88, %v396
  %v398 = vpop.f32.mrb[0].mxu0
  %399 = vmatprep.mubr.bf16.mxu0 0
  %400 = vmatmul.mubr.bf16.gmra.mrb[0].mxu0 %v267
  %v401 = vpop.f32.mrb[0].mxu0
  %v402 = vadd.f32 %v88, %v401
  %v403 = vpop.f32.mrb[0].mxu0
  %v404 = vpop.f32.mrb[0].mxu0
  %v405 = vadd.f32 %v88, %v404
  %v406 = vpop.f32.mrb[0].mxu0
  %407 = vmatprep.mubr.bf16.mxu0 0
  %408 = vmatmul.mubr.bf16.gmra.mrb[0].mxu0 %v270
  %v409 = vpop.f32.mrb[0].mxu0
  %v410 = vadd.f32 %v88, %v409
  %v411 = vpop.f32.mrb[0].mxu0
  %v412 = vpop.f32.mrb[0].mxu0
  %v413 = vadd.f32 %v88, %v412
  %v414 = vpop.f32.mrb[0].mxu0
  %415 = vmatprep.mubr.bf16.mxu0 0
  %416 = vmatmul.mubr.bf16.gmra.mrb[0].mxu0 %v273
  %v417 = vpop.f32.mrb[0].mxu0
  %v418 = vadd.f32 %v88, %v417
  %v419 = vpop.f32.mrb[0].mxu0
  %v420 = vpop.f32.mrb[0].mxu0
  %v421 = vadd.f32 %v88, %v420
  %v422 = vpop.f32.mrb[0].mxu0
  %423 = vmatprep.mubr.bf16.mxu0 0
  %424 = vmatmul.mubr.bf16.gmra.mrb[0].mxu0 %v276
  %v425 = vpop.f32.mrb[0].mxu0
  %v426 = vadd.f32 %v88, %v425
  %v427 = vpop.f32.mrb[0].mxu0
  %v428 = vpop.f32.mrb[0].mxu0
  %v429 = vadd.f32 %v88, %v428
  %v430 = vpop.f32.mrb[0].mxu0
  %431 = vmatprep.mubr.bf16.mxu0 0
  %432 = vmatmul.mubr.bf16.gmra.mrb[0].mxu0 %v279
  %v433 = vpop.f32.mrb[0].mxu0
  %v434 = vadd.f32 %v88, %v433
  %v435 = vpop.f32.mrb[0].mxu0
  %v436 = vpop.f32.mrb[0].mxu0
  %v437 = vadd.f32 %v88, %v436
  %v438 = vpop.f32.mrb[0].mxu0
  %439 = vmatprep.mubr.bf16.mxu0 0
  %440 = vmatmul.mubr.bf16.gmra.mrb[0].mxu0 %v282
  %v441 = vpop.f32.mrb[0].mxu0
  %v442 = vadd.f32 %v88, %v441
  %v443 = vpop.f32.mrb[0].mxu0
  %v444 = vpop.f32.mrb[0].mxu0
  %v445 = vadd.f32 %v88, %v444
  %v446 = vpop.f32.mrb[0].mxu0
  %447 = vmatprep.mubr.bf16.mxu0 0
  %448 = vmatmul.mubr.bf16.gmra.mrb[0].mxu0 %v285
  %v449 = vpop.f32.mrb[0].mxu0
  %v450 = vadd.f32 %v88, %v449
  %v451 = vpop.f32.mrb[0].mxu0
  %v452 = vpop.f32.mrb[0].mxu0
  %v453 = vadd.f32 %v88, %v452
  %v454 = vpop.f32.mrb[0].mxu0
  %455 = vmatprep.mubr.bf16.mxu0 0
  %456 = vmatmul.mubr.bf16.gmra.mrb[0].mxu0 %v288
  %v457 = vpop.f32.mrb[0].mxu0
  %v458 = vadd.f32 %v88, %v457
  %v459 = vpop.f32.mrb[0].mxu0
  %v460 = vpop.f32.mrb[0].mxu0
  %v461 = vadd.f32 %v88, %v460
  %v462 = vpop.f32.mrb[0].mxu0
  %463 = vmatprep.mubr.bf16.mxu0 0
  %464 = vmatmul.mubr.bf16.gmra.mrb[0].mxu0 %v291
  %v465 = vpop.f32.mrb[0].mxu0
  %v466 = vadd.f32 %v88, %v465
  %v467 = vpop.f32.mrb[0].mxu0
  %v468 = vpop.f32.mrb[0].mxu0
  %v469 = vadd.f32 %v88, %v468
  %v470 = vpop.f32.mrb[0].mxu0
  %471 = vmatprep.mubr.bf16.mxu0 0
  %472 = vmatmul.mubr.bf16.gmra.mrb[0].mxu0 %v294
  %v473 = vpop.f32.mrb[0].mxu0
  %v474 = vadd.f32 %v88, %v473
  %v475 = vpop.f32.mrb[0].mxu0
  %v476 = vpop.f32.mrb[0].mxu0
  %v477 = vadd.f32 %v88, %v476
  %v478 = vpop.f32.mrb[0].mxu0
  %479 = vmatprep.mubr.bf16.mxu0 0
  %480 = vmatmul.mubr.bf16.gmra.mrb[0].mxu0 %v297
  %v481 = vpop.f32.mrb[0].mxu0
  %v482 = vadd.f32 %v88, %v481
  %v483 = vpop.f32.mrb[0].mxu0
  %v484 = vpop.f32.mrb[0].mxu0
  %v485 = vadd.f32 %v88, %v484
  %v486 = vpop.f32.mrb[0].mxu0
  %487 = vmatprep.mubr.bf16.mxu0 0
  %488 = vmatmul.mubr.bf16.gmra.mrb[0].mxu0 %v300
  %v489 = vpop.f32.mrb[0].mxu0
  %v490 = vadd.f32 %v88, %v489
  %v491 = vpop.f32.mrb[0].mxu0
  %v492 = vpop.f32.mrb[0].mxu0
  %v493 = vadd.f32 %v88, %v492
  %v494 = vpop.f32.mrb[0].mxu0
  %495 = vmatprep.mubr.bf16.mxu0 0
  %496 = vmatmul.mubr.bf16.gmra.mrb[0].mxu0 %v303
  %v497 = vpop.f32.mrb[0].mxu0
  %v498 = vadd.f32 %v88, %v497
  %v499 = vpop.f32.mrb[0].mxu0
  %v500 = vpop.f32.mrb[0].mxu0
  %v501 = vadd.f32 %v88, %v500
  %v502 = vpop.f32.mrb[0].mxu0
  %503 = vmatprep.mubr.bf16.mxu0 0
  %504 = vmatmul.mubr.bf16.gmra.mrb[0].mxu0 %v306
  %v505 = vpop.f32.mrb[0].mxu0
  %v506 = vadd.f32 %v88, %v505
  %v507 = vpop.f32.mrb[0].mxu0
  %v508 = vpop.f32.mrb[0].mxu0
  %v509 = vadd.f32 %v88, %v508
  %v510 = vpop.f32.mrb[0].mxu0
  %511 = vmatprep.mubr.bf16.mxu0 0
  %512 = vmatmul.mubr.bf16.gmra.mrb[0].mxu0 %v309
  %v513 = vpop.f32.mrb[0].mxu0
  %v514 = vadd.f32 %v88, %v513
  %v515 = vpop.f32.mrb[0].mxu0
  %v516 = vpop.f32.mrb[0].mxu0
  %v517 = vadd.f32 %v88, %v516
  %v518 = vpop.f32.mrb[0].mxu0
  %519 = vmatprep.mubr.bf16.mxu0 0
  %520 = vmatmul.mubr.bf16.gmra.mrb[0].mxu0 %v312
  %v521 = vpop.f32.mrb[0].mxu0
  %v522 = vadd.f32 %v88, %v521
  %v523 = vpop.f32.mrb[0].mxu0
  %v524 = vpop.f32.mrb[0].mxu0
  %v525 = vadd.f32 %v88, %v524
  %v526 = vpop.f32.mrb[0].mxu0
  %527 = vmatprep.mubr.bf16.mxu0 0
  %528 = vmatmul.mubr.bf16.gmra.mrb[0].mxu0 %v315
  %v529 = vpop.f32.mrb[0].mxu0
  %v530 = vadd.f32 %v88, %v529
  %v531 = vpop.f32.mrb[0].mxu0
  %v532 = vpop.f32.mrb[0].mxu0
  %v533 = vadd.f32 %v88, %v532
  %v534 = vpop.f32.mrb[0].mxu0
  %535 = vmatprep.mubr.bf16.mxu0 0
  %536 = vmatmul.mubr.bf16.gmra.mrb[0].mxu0 %v318
  %v537 = vpop.f32.mrb[0].mxu0
  %v538 = vadd.f32 %v88, %v537
  %v539 = vpop.f32.mrb[0].mxu0
  %v540 = vpop.f32.mrb[0].mxu0
  %v541 = vadd.f32 %v88, %v540
  %v542 = vpop.f32.mrb[0].mxu0
  %543 = vmatprep.mubr.bf16.mxu0 0
  %544 = vmatmul.mubr.bf16.gmra.mrb[0].mxu0 %v321
  %v545 = vpop.f32.mrb[0].mxu0
  %v546 = vadd.f32 %v88, %v545
  %v547 = vpop.f32.mrb[0].mxu0
  %v548 = vpop.f32.mrb[0].mxu0
  %v549 = vadd.f32 %v88, %v548
  %v550 = vpop.f32.mrb[0].mxu0
  %551 = vmatprep.mubr.bf16.mxu0 0
  %552 = vmatmul.mubr.bf16.gmra.mrb[0].mxu0 %v324
  %v553 = vpop.f32.mrb[0].mxu0
  %v554 = vadd.f32 %v88, %v553
  %v555 = vpop.f32.mrb[0].mxu0
  %v556 = vpop.f32.mrb[0].mxu0
  %v557 = vadd.f32 %v88, %v556
  %v558 = vpop.f32.mrb[0].mxu0
  %559 = vmatprep.mubr.bf16.mxu0 0
  %560 = vmatmul.mubr.bf16.gmra.mrb[0].mxu0 %v327
  %v561 = vpop.f32.mrb[0].mxu0
  %v562 = vadd.f32 %v88, %v561
  %v563 = vpop.f32.mrb[0].mxu0
  %v564 = vpop.f32.mrb[0].mxu0
  %v565 = vadd.f32 %v88, %v564
  %v566 = vpop.f32.mrb[0].mxu0
  %567 = vmatprep.mubr.bf16.mxu0 0
  %568 = vmatmul.mubr.bf16.gmra.mrb[0].mxu0 %v330
  %v569 = vpop.f32.mrb[0].mxu0
  %v570 = vadd.f32 %v88, %v569
  %v571 = vpop.f32.mrb[0].mxu0
  %v572 = vpop.f32.mrb[0].mxu0
  %v573 = vadd.f32 %v88, %v572
  %v574 = vpop.f32.mrb[0].mxu0
  %575 = vmatprep.mubr.bf16.mxu0 0
  %576 = vmatmul.mubr.bf16.gmra.mrb[0].mxu0 %v333
  %v577 = vpop.f32.mrb[0].mxu0
  %v578 = vadd.f32 %v88, %v577
  %v579 = vpop.f32.mrb[0].mxu0
  %v580 = vpop.f32.mrb[0].mxu0
  %v581 = vadd.f32 %v88, %v580
  %v582 = vpop.f32.mrb[0].mxu0
  %583 = vmatprep.mubr.bf16.mxu0 0
  %584 = vmatmul.mubr.bf16.gmra.mrb[0].mxu0 %v336
  %v585 = vpop.f32.mrb[0].mxu0
  %v586 = vadd.f32 %v88, %v585
  %v587 = vpop.f32.mrb[0].mxu0
  %v588 = vpop.f32.mrb[0].mxu0
  %v589 = vadd.f32 %v88, %v588
  %v590 = vpop.f32.mrb[0].mxu0
  %591 = vmatprep.mubr.bf16.mxu0 0
  %592 = vmatmul.mubr.bf16.gmra.mrb[0].mxu0 %v339
  %v593 = vpop.f32.mrb[0].mxu0
  %v594 = vadd.f32 %v88, %v593
  %v595 = vpop.f32.mrb[0].mxu0
  %v596 = vpop.f32.mrb[0].mxu0
  %v597 = vadd.f32 %v88, %v596
  %v598 = vpop.f32.mrb[0].mxu0
  %599 = vmatprep.mubr.bf16.mxu0 0
  %600 = vmatmul.mubr.bf16.gmra.mrb[0].mxu0 %v342
  %v601 = vpop.f32.mrb[0].mxu0
  %v602 = vadd.f32 %v88, %v601
  %v603 = vpop.f32.mrb[0].mxu0
  %v604 = vpop.f32.mrb[0].mxu0
  %v605 = vadd.f32 %v88, %v604
  %v606 = vpop.f32.mrb[0].mxu0
  %607 = vmatprep.mubr.bf16.mxu0 0
  %608 = vmatmul.mubr.bf16.gmra.mrb[0].mxu0 %v345
  %v609 = vpop.f32.mrb[0].mxu0
  %v610 = vadd.f32 %v88, %v609
  %v611 = vpop.f32.mrb[0].mxu0
  %v612 = vpop.f32.mrb[0].mxu0
  %v613 = vadd.f32 %v88, %v612
  %v614 = vpop.f32.mrb[0].mxu0
  %615 = vmatprep.mubr.bf16.mxu0 0
  %616 = vmatmul.mubr.bf16.gmra.mrb[0].mxu0 %v348
  %v617 = vpop.f32.mrb[0].mxu0
  %v618 = vadd.f32 %v88, %v617
  %v619 = vpop.f32.mrb[0].mxu0
  %v620 = vpop.f32.mrb[0].mxu0
  %v621 = vadd.f32 %v88, %v620
  %v622 = vpop.f32.mrb[0].mxu0
  %623 = vmatprep.mubr.bf16.mxu0 0
  %624 = vmatmul.mubr.bf16.gmra.mrb[0].mxu0 %v351
  %v625 = vpop.f32.mrb[0].mxu0
  %v626 = vadd.f32 %v88, %v625
  %v627 = vpop.f32.mrb[0].mxu0
  %v628 = vpop.f32.mrb[0].mxu0
  %v629 = vadd.f32 %v88, %v628
  %v630 = vpop.f32.mrb[0].mxu0
  %631 = vmatprep.mubr.bf16.mxu0 0
  %632 = vmatmul.mubr.bf16.gmra.mrb[0].mxu0 %v354
  %v633 = vpop.f32.mrb[0].mxu0
  %v634 = vadd.f32 %v88, %v633
  %v635 = vpop.f32.mrb[0].mxu0
  %v636 = vpop.f32.mrb[0].mxu0
  %v637 = vadd.f32 %v88, %v636
  %v638 = vpop.f32.mrb[0].mxu0
  %639 = vmatprep.mubr.bf16.mxu0 0
  %640 = vmatmul.mubr.bf16.gmra.mrb[0].mxu0 %v357
  %v641 = vpop.f32.mrb[0].mxu0
  %v642 = vadd.f32 %v88, %v641
  %v643 = vpop.f32.mrb[0].mxu0
  %v644 = vpop.f32.mrb[0].mxu0
  %v645 = vadd.f32 %v88, %v644
  %v646 = vpop.f32.mrb[0].mxu0
  %647 = vdwg.mxu0
  %v648 = vmax.f32 %v394, 0.0
  %v649 = vmax.f32 %v397, 0.0
  %v650 = vmax.f32 %v402, 0.0
  %v651 = vmax.f32 %v405, 0.0
  %v652 = vmax.f32 %v410, 0.0
  %v653 = vmax.f32 %v413, 0.0
  %v654 = vmax.f32 %v418, 0.0
  %v655 = vmax.f32 %v421, 0.0
  %v656 = vmax.f32 %v426, 0.0
  %v657 = vmax.f32 %v429, 0.0
  %v658 = vmax.f32 %v434, 0.0
  %v659 = vmax.f32 %v437, 0.0
  %v660 = vmax.f32 %v442, 0.0
  %v661 = vmax.f32 %v445, 0.0
  %v662 = vmax.f32 %v450, 0.0
  %v663 = vmax.f32 %v453, 0.0
  %v664 = vmax.f32 %v458, 0.0
  %v665 = vmax.f32 %v461, 0.0
  %v666 = vmax.f32 %v466, 0.0
  %v667 = vmax.f32 %v469, 0.0
  %v668 = vmax.f32 %v474, 0.0
  %v669 = vmax.f32 %v477, 0.0
  %v670 = vmax.f32 %v482, 0.0
  %v671 = vmax.f32 %v485, 0.0
  %v672 = vmax.f32 %v490, 0.0
  %v673 = vmax.f32 %v493, 0.0
  %v674 = vmax.f32 %v498, 0.0
  %v675 = vmax.f32 %v501, 0.0
  %v676 = vmax.f32 %v506, 0.0
  %v677 = vmax.f32 %v509, 0.0
  %v678 = vmax.f32 %v514, 0.0
  %v679 = vmax.f32 %v517, 0.0
  %v680 = vmax.f32 %v522, 0.0
  %v681 = vmax.f32 %v525, 0.0
  %v682 = vmax.f32 %v530, 0.0
  %v683 = vmax.f32 %v533, 0.0
  %v684 = vmax.f32 %v538, 0.0
  %v685 = vmax.f32 %v541, 0.0
  %v686 = vmax.f32 %v546, 0.0
  %v687 = vmax.f32 %v549, 0.0
  %v688 = vmax.f32 %v554, 0.0
  %v689 = vmax.f32 %v557, 0.0
  %v690 = vmax.f32 %v562, 0.0
  %v691 = vmax.f32 %v565, 0.0
  %v692 = vmax.f32 %v570, 0.0
  %v693 = vmax.f32 %v573, 0.0
  %v694 = vmax.f32 %v578, 0.0
  %v695 = vmax.f32 %v581, 0.0
  %v696 = vmax.f32 %v586, 0.0
  %v697 = vmax.f32 %v589, 0.0
  %v698 = vmax.f32 %v594, 0.0
  %v699 = vmax.f32 %v597, 0.0
  %v700 = vmax.f32 %v602, 0.0
  %v701 = vmax.f32 %v605, 0.0
  %v702 = vmax.f32 %v610, 0.0
  %v703 = vmax.f32 %v613, 0.0
  %v704 = vmax.f32 %v618, 0.0
  %v705 = vmax.f32 %v621, 0.0
  %v706 = vmax.f32 %v626, 0.0
  %v707 = vmax.f32 %v629, 0.0
  %v708 = vmax.f32 %v634, 0.0
  %v709 = vmax.f32 %v637, 0.0
  %v710 = vmax.f32 %v642, 0.0
  %v711 = vmax.f32 %v645, 0.0
  %v712 = vpack.c.bf16 %v649, %v648
  %v713 = vpack.c.bf16 %v651, %v650
  %v714 = vpack.c.bf16 %v653, %v652
  %v715 = vpack.c.bf16 %v655, %v654
  %v716 = vpack.c.bf16 %v657, %v656
  %v717 = vpack.c.bf16 %v659, %v658
  %v718 = vpack.c.bf16 %v661, %v660
  %v719 = vpack.c.bf16 %v663, %v662
  %v720 = vpack.c.bf16 %v665, %v664
  %v721 = vpack.c.bf16 %v667, %v666
  %v722 = vpack.c.bf16 %v669, %v668
  %v723 = vpack.c.bf16 %v671, %v670
  %v724 = vpack.c.bf16 %v673, %v672
  %v725 = vpack.c.bf16 %v675, %v674
  %v726 = vpack.c.bf16 %v677, %v676
  %v727 = vpack.c.bf16 %v679, %v678
  %v728 = vpack.c.bf16 %v681, %v680
  %v729 = vpack.c.bf16 %v683, %v682
  %v730 = vpack.c.bf16 %v685, %v684
  %v731 = vpack.c.bf16 %v687, %v686
  %v732 = vpack.c.bf16 %v689, %v688
  %v733 = vpack.c.bf16 %v691, %v690
  %v734 = vpack.c.bf16 %v693, %v692
  %v735 = vpack.c.bf16 %v695, %v694
  %v736 = vpack.c.bf16 %v697, %v696
  %v737 = vpack.c.bf16 %v699, %v698
  %v738 = vpack.c.bf16 %v701, %v700
  %v739 = vpack.c.bf16 %v703, %v702
  %v740 = vpack.c.bf16 %v705, %v704
  %v741 = vpack.c.bf16 %v707, %v706
  %v742 = vpack.c.bf16 %v709, %v708
  %v743 = vpack.c.bf16 %v711, %v710
  %v776 = vunpack.c.l.b16 %v712
  %v777 = vunpack.c.h.b16 %v712
  %v778 = vunpack.c.l.b16 %v713
  %v779 = vunpack.c.h.b16 %v713
  %v780 = vunpack.c.l.b16 %v714
  %v781 = vunpack.c.h.b16 %v714
  %v782 = vunpack.c.l.b16 %v715
  %v783 = vunpack.c.h.b16 %v715
  %v784 = vunpack.c.l.b16 %v716
  %v785 = vunpack.c.h.b16 %v716
  %v786 = vunpack.c.l.b16 %v717
  %v787 = vunpack.c.h.b16 %v717
  %v788 = vunpack.c.l.b16 %v718
  %v789 = vunpack.c.h.b16 %v718
  %v790 = vunpack.c.l.b16 %v719
  %v791 = vunpack.c.h.b16 %v719
  %v792 = vunpack.c.l.b16 %v720
  %v793 = vunpack.c.h.b16 %v720
  %v794 = vunpack.c.l.b16 %v721
  %v795 = vunpack.c.h.b16 %v721
  %v796 = vunpack.c.l.b16 %v722
  %v797 = vunpack.c.h.b16 %v722
  %v798 = vunpack.c.l.b16 %v723
  %v799 = vunpack.c.h.b16 %v723
  %v800 = vunpack.c.l.b16 %v724
  %v801 = vunpack.c.h.b16 %v724
  %v802 = vunpack.c.l.b16 %v725
  %v803 = vunpack.c.h.b16 %v725
  %v804 = vunpack.c.l.b16 %v726
  %v805 = vunpack.c.h.b16 %v726
  %v806 = vunpack.c.l.b16 %v727
  %v807 = vunpack.c.h.b16 %v727
  %v808 = vunpack.c.l.b16 %v728
  %v809 = vunpack.c.h.b16 %v728
  %v810 = vunpack.c.l.b16 %v729
  %v811 = vunpack.c.h.b16 %v729
  %v812 = vunpack.c.l.b16 %v730
  %v813 = vunpack.c.h.b16 %v730
  %v814 = vunpack.c.l.b16 %v731
  %v815 = vunpack.c.h.b16 %v731
  %v816 = vunpack.c.l.b16 %v732
  %v817 = vunpack.c.h.b16 %v732
  %v818 = vunpack.c.l.b16 %v733
  %v819 = vunpack.c.h.b16 %v733
  %v820 = vunpack.c.l.b16 %v734
  %v821 = vunpack.c.h.b16 %v734
  %v822 = vunpack.c.l.b16 %v735
  %v823 = vunpack.c.h.b16 %v735
  %v824 = vunpack.c.l.b16 %v736
  %v825 = vunpack.c.h.b16 %v736
  %v826 = vunpack.c.l.b16 %v737
  %v827 = vunpack.c.h.b16 %v737
  %v828 = vunpack.c.l.b16 %v738
  %v829 = vunpack.c.h.b16 %v738
  %v830 = vunpack.c.l.b16 %v739
  %v831 = vunpack.c.h.b16 %v739
  %v832 = vunpack.c.l.b16 %v740
  %v833 = vunpack.c.h.b16 %v740
  %v834 = vunpack.c.l.b16 %v741
  %v835 = vunpack.c.h.b16 %v741
  %v836 = vunpack.c.l.b16 %v742
  %v837 = vunpack.c.h.b16 %v742
  %v838 = vunpack.c.l.b16 %v743
  %v839 = vunpack.c.h.b16 %v743
  %v840 = vpack.c.b16 %v776, %v776
  %v841 = vpack.c.b16 %v777, %v777
  %v842 = vpack.c.b16 %v778, %v778
  %v843 = vpack.c.b16 %v779, %v779
  %v844 = vpack.c.b16 %v780, %v780
  %v845 = vpack.c.b16 %v781, %v781
  %v846 = vpack.c.b16 %v782, %v782
  %v847 = vpack.c.b16 %v783, %v783
  %v848 = vpack.c.b16 %v784, %v784
  %v849 = vpack.c.b16 %v785, %v785
  %v850 = vpack.c.b16 %v786, %v786
  %v851 = vpack.c.b16 %v787, %v787
  %v852 = vpack.c.b16 %v788, %v788
  %v853 = vpack.c.b16 %v789, %v789
  %v854 = vpack.c.b16 %v790, %v790
  %v855 = vpack.c.b16 %v791, %v791
  %v856 = vpack.c.b16 %v792, %v792
  %v857 = vpack.c.b16 %v793, %v793
  %v858 = vpack.c.b16 %v794, %v794
  %v859 = vpack.c.b16 %v795, %v795
  %v860 = vpack.c.b16 %v796, %v796
  %v861 = vpack.c.b16 %v797, %v797
  %v862 = vpack.c.b16 %v798, %v798
  %v863 = vpack.c.b16 %v799, %v799
  %v864 = vpack.c.b16 %v800, %v800
  %v865 = vpack.c.b16 %v801, %v801
  %v866 = vpack.c.b16 %v802, %v802
  %v867 = vpack.c.b16 %v803, %v803
  %v868 = vpack.c.b16 %v804, %v804
  %v869 = vpack.c.b16 %v805, %v805
  %v870 = vpack.c.b16 %v806, %v806
  %v871 = vpack.c.b16 %v807, %v807
  %v872 = vpack.c.b16 %v808, %v808
  %v873 = vpack.c.b16 %v809, %v809
  %v874 = vpack.c.b16 %v810, %v810
  %v875 = vpack.c.b16 %v811, %v811
  %v876 = vpack.c.b16 %v812, %v812
  %v877 = vpack.c.b16 %v813, %v813
  %v878 = vpack.c.b16 %v814, %v814
  %v879 = vpack.c.b16 %v815, %v815
  %v880 = vpack.c.b16 %v816, %v816
  %v881 = vpack.c.b16 %v817, %v817
  %v882 = vpack.c.b16 %v818, %v818
  %v883 = vpack.c.b16 %v819, %v819
  %v884 = vpack.c.b16 %v820, %v820
  %v885 = vpack.c.b16 %v821, %v821
  %v886 = vpack.c.b16 %v822, %v822
  %v887 = vpack.c.b16 %v823, %v823
  %v888 = vpack.c.b16 %v824, %v824
  %v889 = vpack.c.b16 %v825, %v825
  %v890 = vpack.c.b16 %v826, %v826
  %v891 = vpack.c.b16 %v827, %v827
  %v892 = vpack.c.b16 %v828, %v828
  %v893 = vpack.c.b16 %v829, %v829
  %v894 = vpack.c.b16 %v830, %v830
  %v895 = vpack.c.b16 %v831, %v831
  %v896 = vpack.c.b16 %v832, %v832
  %v897 = vpack.c.b16 %v833, %v833
  %v898 = vpack.c.b16 %v834, %v834
  %v899 = vpack.c.b16 %v835, %v835
  %v900 = vpack.c.b16 %v836, %v836
  %v901 = vpack.c.b16 %v837, %v837
  %v902 = vpack.c.b16 %v838, %v838
  %v903 = vpack.c.b16 %v839, %v839
  %vm968 = vcmask 519168
  %969 = vst.msk [vmem:[%s3] sm:$0xf] %vm968, %v840
  %970 = vst.msk [vmem:[%s3 + $0x4] sm:$0xf] %vm968, %v841
  %971 = vst.msk [vmem:[%s3 + $0x8] sm:$0xf] %vm968, %v842
  %972 = vst.msk [vmem:[%s3 + $0xc] sm:$0xf] %vm968, %v843
  %973 = vst.msk [vmem:[%s3 + $0x10] sm:$0xf] %vm968, %v844
  %974 = vst.msk [vmem:[%s3 + $0x14] sm:$0xf] %vm968, %v845
  %975 = vst.msk [vmem:[%s3 + $0x18] sm:$0xf] %vm968, %v846
  %976 = vst.msk [vmem:[%s3 + $0x1c] sm:$0xf] %vm968, %v847
  %977 = vst.msk [vmem:[%s3 + $0x20] sm:$0xf] %vm968, %v848
  %978 = vst.msk [vmem:[%s3 + $0x24] sm:$0xf] %vm968, %v849
  %979 = vst.msk [vmem:[%s3 + $0x28] sm:$0xf] %vm968, %v850
  %980 = vst.msk [vmem:[%s3 + $0x2c] sm:$0xf] %vm968, %v851
  %981 = vst.msk [vmem:[%s3 + $0x30] sm:$0xf] %vm968, %v852
  %982 = vst.msk [vmem:[%s3 + $0x34] sm:$0xf] %vm968, %v853
  %983 = vst.msk [vmem:[%s3 + $0x38] sm:$0xf] %vm968, %v854
  %984 = vst.msk [vmem:[%s3 + $0x3c] sm:$0xf] %vm968, %v855
  %985 = vst.msk [vmem:[%s3 + $0x40] sm:$0xf] %vm968, %v856
  %986 = vst.msk [vmem:[%s3 + $0x44] sm:$0xf] %vm968, %v857
  %987 = vst.msk [vmem:[%s3 + $0x48] sm:$0xf] %vm968, %v858
  %988 = vst.msk [vmem:[%s3 + $0x4c] sm:$0xf] %vm968, %v859
  %989 = vst.msk [vmem:[%s3 + $0x50] sm:$0xf] %vm968, %v860
  %990 = vst.msk [vmem:[%s3 + $0x54] sm:$0xf] %vm968, %v861
  %991 = vst.msk [vmem:[%s3 + $0x58] sm:$0xf] %vm968, %v862
  %992 = vst.msk [vmem:[%s3 + $0x5c] sm:$0xf] %vm968, %v863
  %993 = vst.msk [vmem:[%s3 + $0x60] sm:$0xf] %vm968, %v864
  %994 = vst.msk [vmem:[%s3 + $0x64] sm:$0xf] %vm968, %v865
  %995 = vst.msk [vmem:[%s3 + $0x68] sm:$0xf] %vm968, %v866
  %996 = vst.msk [vmem:[%s3 + $0x6c] sm:$0xf] %vm968, %v867
  %997 = vst.msk [vmem:[%s3 + $0x70] sm:$0xf] %vm968, %v868
  %998 = vst.msk [vmem:[%s3 + $0x74] sm:$0xf] %vm968, %v869
  %999 = vst.msk [vmem:[%s3 + $0x78] sm:$0xf] %vm968, %v870
  %1000 = vst.msk [vmem:[%s3 + $0x7c] sm:$0xf] %vm968, %v871
  %1001 = vst.msk [vmem:[%s3 + $0x80] sm:$0xf] %vm968, %v872
  %1002 = vst.msk [vmem:[%s3 + $0x84] sm:$0xf] %vm968, %v873
  %1003 = vst.msk [vmem:[%s3 + $0x88] sm:$0xf] %vm968, %v874
  %1004 = vst.msk [vmem:[%s3 + $0x8c] sm:$0xf] %vm968, %v875
  %1005 = vst.msk [vmem:[%s3 + $0x90] sm:$0xf] %vm968, %v876
  %1006 = vst.msk [vmem:[%s3 + $0x94] sm:$0xf] %vm968, %v877
  %1007 = vst.msk [vmem:[%s3 + $0x98] sm:$0xf] %vm968, %v878
  %1008 = vst.msk [vmem:[%s3 + $0x9c] sm:$0xf] %vm968, %v879
  %1009 = vst.msk [vmem:[%s3 + $0xa0] sm:$0xf] %vm968, %v880
  %1010 = vst.msk [vmem:[%s3 + $0xa4] sm:$0xf] %vm968, %v881
  %1011 = vst.msk [vmem:[%s3 + $0xa8] sm:$0xf] %vm968, %v882
  %1012 = vst.msk [vmem:[%s3 + $0xac] sm:$0xf] %vm968, %v883
  %1013 = vst.msk [vmem:[%s3 + $0xb0] sm:$0xf] %vm968, %v884
  %1014 = vst.msk [vmem:[%s3 + $0xb4] sm:$0xf] %vm968, %v885
  %1015 = vst.msk [vmem:[%s3 + $0xb8] sm:$0xf] %vm968, %v886
  %1016 = vst.msk [vmem:[%s3 + $0xbc] sm:$0xf] %vm968, %v887
  %1017 = vst.msk [vmem:[%s3 + $0xc0] sm:$0xf] %vm968, %v888
  %1018 = vst.msk [vmem:[%s3 + $0xc4] sm:$0xf] %vm968, %v889
  %1019 = vst.msk [vmem:[%s3 + $0xc8] sm:$0xf] %vm968, %v890
  %1020 = vst.msk [vmem:[%s3 + $0xcc] sm:$0xf] %vm968, %v891
  %1021 = vst.msk [vmem:[%s3 + $0xd0] sm:$0xf] %vm968, %v892
  %1022 = vst.msk [vmem:[%s3 + $0xd4] sm:$0xf] %vm968, %v893
  %1023 = vst.msk [vmem:[%s3 + $0xd8] sm:$0xf] %vm968, %v894
  %1024 = vst.msk [vmem:[%s3 + $0xdc] sm:$0xf] %vm968, %v895
  %1025 = vst.msk [vmem:[%s3 + $0xe0] sm:$0xf] %vm968, %v896
  %1026 = vst.msk [vmem:[%s3 + $0xe4] sm:$0xf] %vm968, %v897
  %1027 = vst.msk [vmem:[%s3 + $0xe8] sm:$0xf] %vm968, %v898
  %1028 = vst.msk [vmem:[%s3 + $0xec] sm:$0xf] %vm968, %v899
  %1029 = vst.msk [vmem:[%s3 + $0xf0] sm:$0xf] %vm968, %v900
  %1030 = vst.msk [vmem:[%s3 + $0xf4] sm:$0xf] %vm968, %v901
  %1031 = vst.msk [vmem:[%s3 + $0xf8] sm:$0xf] %vm968, %v902
  %1032 = vst.msk [vmem:[%s3 + $0xfc] sm:$0xf] %vm968, %v903
  // Predicated region
  $region14: #{ae_cifar_forward.7} parent=0 // pred_check
    _
  $region15: #{ae_cifar_forward.7} parent=0 // pred_check_branch
    %1034 = sbr.rel (0) target = $region17
  $region16: #{ae_cifar_forward.7} parent=0 // pred_region
    _
  $region17: #{ae_cifar_forward.7} parent=0 // pred_fallthru
    _
  // Predicated region
  $region18: #{ae_cifar_forward.7} parent=0 // pred_check
    _
  $region19: #{ae_cifar_forward.7} parent=0 // pred_check_branch
    %1036 = sbr.rel (0) target = $region21
  $region20: #{ae_cifar_forward.7} parent=0 // pred_region
    _
  $region21: #{ae_cifar_forward.7} parent=0 // pred_fallthru
    _

// kernel: ae_cifar_forward.8
$region0: #{ae_cifar_forward.8}
  #allocation0 [shape = 'u32[]', space=smem, size = 0x4, offset = 0x4, fixed_abs, tag = 'smem constant byte address 0x4 - core index']
  #allocation1 [shape = 'u32[144,128]{1,0:T(1,128)}', space=vmem, size = 0x12000, scoped, tag = 'internal scratch']
  %s0 = inlined_call_operand.vmem [shape: bf16[128,576], index: 0, kind: input, shape index: {}]
  %s1 = inlined_call_operand.vmem [shape: bf16[576,128], index: 1, kind: input, shape index: {}]
  %s2 = inlined_call_operand.vmem [shape: f32[1,128], index: 2, kind: input, shape index: {}]
  %s3 = inlined_call_operand.vmem [shape: bf16[128,128], index: 3, kind: output, shape index: {}]
  %s4 = sld [smem:[#allocation0]]
  $region22: #{ae_cifar_forward.8} parent=0
    _
  %s6 = ssub.s32 1, %s4
  %s7 = scalar_select 0, %s6, %s4
  // Predicated region
  $region2: #{ae_cifar_forward.8} parent=0 // pred_check
    _
  $region3: #{ae_cifar_forward.8} parent=0 // pred_check_branch
    %9 = sbr.rel (0) target = $region5
  $region4: #{ae_cifar_forward.8} parent=0 // pred_region
    _
  $region5: #{ae_cifar_forward.8} parent=0 // pred_fallthru
    _
  // Predicated region
  $region6: #{ae_cifar_forward.8} parent=0 // pred_check
    _
  $region7: #{ae_cifar_forward.8} parent=0 // pred_check_branch
    %11 = sbr.rel (0) target = $region9
  $region8: #{ae_cifar_forward.8} parent=0 // pred_region
    _
  $region9: #{ae_cifar_forward.8} parent=0 // pred_fallthru
    _
  // Predicated region
  $region10: #{ae_cifar_forward.8} parent=0 // pred_check
    _
  $region11: #{ae_cifar_forward.8} parent=0 // pred_check_branch
    %13 = sbr.rel (0) target = $region13
  $region12: #{ae_cifar_forward.8} parent=0 // pred_region
    _
  $region13: #{ae_cifar_forward.8} parent=0 // pred_fallthru
    _
  %v15 = vld [vmem:[%s0] sm:$0xff]
  %v16 = vld [vmem:[%s0 + $0x8] sm:$0xff]
  %v17 = vld [vmem:[%s0 + $0x10] sm:$0xf]
  %v18 = vld [vmem:[%s0 + $0x14] sm:$0xff]
  %v19 = vld [vmem:[%s0 + $0x1c] sm:$0xff]
  %v20 = vld [vmem:[%s0 + $0x24] sm:$0xf]
  %v21 = vld [vmem:[%s0 + $0x28] sm:$0xff]
  %v22 = vld [vmem:[%s0 + $0x30] sm:$0xff]
  %v23 = vld [vmem:[%s0 + $0x38] sm:$0xf]
  %v24 = vld [vmem:[%s0 + $0x3c] sm:$0xff]
  %v25 = vld [vmem:[%s0 + $0x44] sm:$0xff]
  %v26 = vld [vmem:[%s0 + $0x4c] sm:$0xf]
  %v27 = vld [vmem:[%s0 + $0x50] sm:$0xff]
  %v28 = vld [vmem:[%s0 + $0x58] sm:$0xff]
  %v29 = vld [vmem:[%s0 + $0x60] sm:$0xf]
  %v30 = vld [vmem:[%s0 + $0x64] sm:$0xff]
  %v31 = vld [vmem:[%s0 + $0x6c] sm:$0xff]
  %v32 = vld [vmem:[%s0 + $0x74] sm:$0xf]
  %v33 = vld [vmem:[%s0 + $0x78] sm:$0xff]
  %v34 = vld [vmem:[%s0 + $0x80] sm:$0xff]
  %v35 = vld [vmem:[%s0 + $0x88] sm:$0xf]
  %v36 = vld [vmem:[%s0 + $0x8c] sm:$0xff]
  %v37 = vld [vmem:[%s0 + $0x94] sm:$0xff]
  %v38 = vld [vmem:[%s0 + $0x9c] sm:$0xf]
  %v39 = vld [vmem:[%s0 + $0xa0] sm:$0xff]
  %v40 = vld [vmem:[%s0 + $0xa8] sm:$0xff]
  %v41 = vld [vmem:[%s0 + $0xb0] sm:$0xf]
  %v42 = vld [vmem:[%s0 + $0xb4] sm:$0xff]
  %v43 = vld [vmem:[%s0 + $0xbc] sm:$0xff]
  %v44 = vld [vmem:[%s0 + $0xc4] sm:$0xf]
  %v45 = vld [vmem:[%s0 + $0xc8] sm:$0xff]
  %v46 = vld [vmem:[%s0 + $0xd0] sm:$0xff]
  %v47 = vld [vmem:[%s0 + $0xd8] sm:$0xf]
  %v48 = vld [vmem:[%s0 + $0xdc] sm:$0xff]
  %v49 = vld [vmem:[%s0 + $0xe4] sm:$0xff]
  %v50 = vld [vmem:[%s0 + $0xec] sm:$0xf]
  %v51 = vld [vmem:[%s0 + $0xf0] sm:$0xff]
  %v52 = vld [vmem:[%s0 + $0xf8] sm:$0xff]
  %v53 = vld [vmem:[%s0 + $0x100] sm:$0xf]
  %v54 = vld [vmem:[%s0 + $0x104] sm:$0xff]
  %v55 = vld [vmem:[%s0 + $0x10c] sm:$0xff]
  %v56 = vld [vmem:[%s0 + $0x114] sm:$0xf]
  %v57 = vld [vmem:[%s0 + $0x118] sm:$0xff]
  %v58 = vld [vmem:[%s0 + $0x120] sm:$0xff]
  %v59 = vld [vmem:[%s0 + $0x128] sm:$0xf]
  %v60 = vld [vmem:[%s0 + $0x12c] sm:$0xff]
  %v61 = vld [vmem:[%s0 + $0x134] sm:$0xff]
  %v62 = vld [vmem:[%s0 + $0x13c] sm:$0xf]
  %v63 = vld [vmem:[%s1] sm:$0xf]
  %v64 = vld [vmem:[%s1 + $0x4] sm:$0xf]
  %v65 = vld [vmem:[%s1 + $0x8] sm:$0xf]
  %v66 = vld [vmem:[%s1 + $0xc] sm:$0xf]
  %v67 = vld [vmem:[%s1 + $0x10] sm:$0xf]
  %v68 = vld [vmem:[%s1 + $0x14] sm:$0xf]
  %v69 = vld [vmem:[%s1 + $0x18] sm:$0xf]
  %v70 = vld [vmem:[%s1 + $0x1c] sm:$0xf]
  %v71 = vld [vmem:[%s1 + $0x20] sm:$0xf]
  %v72 = vld [vmem:[%s1 + $0x24] sm:$0xf]
  %v73 = vld [vmem:[%s1 + $0x28] sm:$0xf]
  %v74 = vld [vmem:[%s1 + $0x2c] sm:$0xf]
  %v75 = vld [vmem:[%s1 + $0x30] sm:$0xf]
  %v76 = vld [vmem:[%s1 + $0x34] sm:$0xf]
  %v77 = vld [vmem:[%s1 + $0x38] sm:$0xf]
  %v78 = vld [vmem:[%s1 + $0x3c] sm:$0xf]
  %v79 = vld [vmem:[%s1 + $0x40] sm:$0xf]
  %v80 = vld [vmem:[%s1 + $0x44] sm:$0xf]
  %v81 = vld [vmem:[%s1 + $0x48] sm:$0xf]
  %v82 = vld [vmem:[%s1 + $0x4c] sm:$0xf]
  %v83 = vld [vmem:[%s1 + $0x50] sm:$0xf]
  %v84 = vld [vmem:[%s1 + $0x54] sm:$0xf]
  %v85 = vld [vmem:[%s1 + $0x58] sm:$0xf]
  %v86 = vld [vmem:[%s1 + $0x5c] sm:$0xf]
  %v87 = vld [vmem:[%s1 + $0x60] sm:$0xf]
  %v88 = vld [vmem:[%s1 + $0x64] sm:$0xf]
  %v89 = vld [vmem:[%s1 + $0x68] sm:$0xf]
  %v90 = vld [vmem:[%s1 + $0x6c] sm:$0xf]
  %v91 = vld [vmem:[%s1 + $0x70] sm:$0xf]
  %v92 = vld [vmem:[%s1 + $0x74] sm:$0xf]
  %v93 = vld [vmem:[%s1 + $0x78] sm:$0xf]
  %v94 = vld [vmem:[%s1 + $0x7c] sm:$0xf]
  %v95 = vld [vmem:[%s1 + $0x80] sm:$0xf]
  %v96 = vld [vmem:[%s1 + $0x84] sm:$0xf]
  %v97 = vld [vmem:[%s1 + $0x88] sm:$0xf]
  %v98 = vld [vmem:[%s1 + $0x8c] sm:$0xf]
  %v99 = vld [vmem:[%s1 + $0x90] sm:$0xf]
  %v100 = vld [vmem:[%s1 + $0x94] sm:$0xf]
  %v101 = vld [vmem:[%s1 + $0x98] sm:$0xf]
  %v102 = vld [vmem:[%s1 + $0x9c] sm:$0xf]
  %v103 = vld [vmem:[%s1 + $0xa0] sm:$0xf]
  %v104 = vld [vmem:[%s1 + $0xa4] sm:$0xf]
  %v105 = vld [vmem:[%s1 + $0xa8] sm:$0xf]
  %v106 = vld [vmem:[%s1 + $0xac] sm:$0xf]
  %v107 = vld [vmem:[%s1 + $0xb0] sm:$0xf]
  %v108 = vld [vmem:[%s1 + $0xb4] sm:$0xf]
  %v109 = vld [vmem:[%s1 + $0xb8] sm:$0xf]
  %v110 = vld [vmem:[%s1 + $0xbc] sm:$0xf]
  %v111 = vld [vmem:[%s1 + $0xc0] sm:$0xf]
  %v112 = vld [vmem:[%s1 + $0xc4] sm:$0xf]
  %v113 = vld [vmem:[%s1 + $0xc8] sm:$0xf]
  %v114 = vld [vmem:[%s1 + $0xcc] sm:$0xf]
  %v115 = vld [vmem:[%s1 + $0xd0] sm:$0xf]
  %v116 = vld [vmem:[%s1 + $0xd4] sm:$0xf]
  %v117 = vld [vmem:[%s1 + $0xd8] sm:$0xf]
  %v118 = vld [vmem:[%s1 + $0xdc] sm:$0xf]
  %v119 = vld [vmem:[%s1 + $0xe0] sm:$0xf]
  %v120 = vld [vmem:[%s1 + $0xe4] sm:$0xf]
  %v121 = vld [vmem:[%s1 + $0xe8] sm:$0xf]
  %v122 = vld [vmem:[%s1 + $0xec] sm:$0xf]
  %v123 = vld [vmem:[%s1 + $0xf0] sm:$0xf]
  %v124 = vld [vmem:[%s1 + $0xf4] sm:$0xf]
  %v125 = vld [vmem:[%s1 + $0xf8] sm:$0xf]
  %v126 = vld [vmem:[%s1 + $0xfc] sm:$0xf]
  %v127 = vld [vmem:[%s1 + $0x100] sm:$0xf]
  %v128 = vld [vmem:[%s1 + $0x104] sm:$0xf]
  %v129 = vld [vmem:[%s1 + $0x108] sm:$0xf]
  %v130 = vld [vmem:[%s1 + $0x10c] sm:$0xf]
  %v131 = vld [vmem:[%s1 + $0x110] sm:$0xf]
  %v132 = vld [vmem:[%s1 + $0x114] sm:$0xf]
  %v133 = vld [vmem:[%s1 + $0x118] sm:$0xf]
  %v134 = vld [vmem:[%s1 + $0x11c] sm:$0xf]
  %v135 = vld [vmem:[%s2] sm:$0x1]
  %v137 = vlaneseq
  %v138 = vshrl.u32 %v137, 7
  %v139 = vsub.s32 0, %v138
  %v140 = vrot.slane %v135, %v139
  %v190 = vunpack.c.l.b16 %v15
  %v191 = vunpack.c.h.b16 %v15
  %v192 = vunpack.c.l.b16 %v16
  %v193 = vunpack.c.h.b16 %v16
  %v194 = vunpack.c.l.b16 %v17
  %v195 = vunpack.c.l.b16 %v18
  %v196 = vunpack.c.h.b16 %v18
  %v197 = vunpack.c.l.b16 %v19
  %v198 = vunpack.c.h.b16 %v19
  %v199 = vunpack.c.l.b16 %v20
  %v200 = vunpack.c.l.b16 %v21
  %v201 = vunpack.c.h.b16 %v21
  %v202 = vunpack.c.l.b16 %v22
  %v203 = vunpack.c.h.b16 %v22
  %v204 = vunpack.c.l.b16 %v23
  %v205 = vunpack.c.l.b16 %v24
  %v206 = vunpack.c.h.b16 %v24
  %v207 = vunpack.c.l.b16 %v25
  %v208 = vunpack.c.h.b16 %v25
  %v209 = vunpack.c.l.b16 %v26
  %v210 = vunpack.c.l.b16 %v27
  %v211 = vunpack.c.h.b16 %v27
  %v212 = vunpack.c.l.b16 %v28
  %v213 = vunpack.c.h.b16 %v28
  %v214 = vunpack.c.l.b16 %v29
  %v215 = vunpack.c.l.b16 %v30
  %v216 = vunpack.c.h.b16 %v30
  %v217 = vunpack.c.l.b16 %v31
  %v218 = vunpack.c.h.b16 %v31
  %v219 = vunpack.c.l.b16 %v32
  %v220 = vunpack.c.l.b16 %v33
  %v221 = vunpack.c.h.b16 %v33
  %v222 = vunpack.c.l.b16 %v34
  %v223 = vunpack.c.h.b16 %v34
  %v224 = vunpack.c.l.b16 %v35
  %v225 = vunpack.c.l.b16 %v36
  %v226 = vunpack.c.h.b16 %v36
  %v227 = vunpack.c.l.b16 %v37
  %v228 = vunpack.c.h.b16 %v37
  %v229 = vunpack.c.l.b16 %v38
  %v230 = vunpack.c.l.b16 %v39
  %v231 = vunpack.c.h.b16 %v39
  %v232 = vunpack.c.l.b16 %v40
  %v233 = vunpack.c.h.b16 %v40
  %v234 = vunpack.c.l.b16 %v41
  %v235 = vunpack.c.l.b16 %v42
  %v236 = vunpack.c.h.b16 %v42
  %v237 = vunpack.c.l.b16 %v43
  %v238 = vunpack.c.h.b16 %v43
  %v239 = vunpack.c.l.b16 %v44
  %v240 = vunpack.c.l.b16 %v45
  %v241 = vunpack.c.h.b16 %v45
  %v242 = vunpack.c.l.b16 %v46
  %v243 = vunpack.c.h.b16 %v46
  %v244 = vunpack.c.l.b16 %v47
  %v245 = vunpack.c.l.b16 %v48
  %v246 = vunpack.c.h.b16 %v48
  %v247 = vunpack.c.l.b16 %v49
  %v248 = vunpack.c.h.b16 %v49
  %v249 = vunpack.c.l.b16 %v50
  %v250 = vunpack.c.l.b16 %v51
  %v251 = vunpack.c.h.b16 %v51
  %v252 = vunpack.c.l.b16 %v52
  %v253 = vunpack.c.h.b16 %v52
  %v254 = vunpack.c.l.b16 %v53
  %v255 = vunpack.c.l.b16 %v54
  %v256 = vunpack.c.h.b16 %v54
  %v257 = vunpack.c.l.b16 %v55
  %v258 = vunpack.c.h.b16 %v55
  %v259 = vunpack.c.l.b16 %v56
  %v260 = vunpack.c.l.b16 %v57
  %v261 = vunpack.c.h.b16 %v57
  %v262 = vunpack.c.l.b16 %v58
  %v263 = vunpack.c.h.b16 %v58
  %v264 = vunpack.c.l.b16 %v59
  %v265 = vunpack.c.l.b16 %v60
  %v266 = vunpack.c.h.b16 %v60
  %v267 = vunpack.c.l.b16 %v61
  %v268 = vunpack.c.h.b16 %v61
  %v269 = vunpack.c.l.b16 %v62
  %v270 = vpack.c.b16 %v195, %v190
  %v271 = vpack.c.b16 %v196, %v191
  %v272 = vpack.c.b16 %v197, %v192
  %v273 = vpack.c.b16 %v198, %v193
  %v274 = vpack.c.b16 %v199, %v194
  %v275 = vpack.c.b16 %v205, %v200
  %v276 = vpack.c.b16 %v206, %v201
  %v277 = vpack.c.b16 %v207, %v202
  %v278 = vpack.c.b16 %v208, %v203
  %v279 = vpack.c.b16 %v209, %v204
  %v280 = vpack.c.b16 %v215, %v210
  %v281 = vpack.c.b16 %v216, %v211
  %v282 = vpack.c.b16 %v217, %v212
  %v283 = vpack.c.b16 %v218, %v213
  %v284 = vpack.c.b16 %v219, %v214
  %v285 = vpack.c.b16 %v225, %v220
  %v286 = vpack.c.b16 %v226, %v221
  %v287 = vpack.c.b16 %v227, %v222
  %v288 = vpack.c.b16 %v228, %v223
  %v289 = vpack.c.b16 %v229, %v224
  %v290 = vpack.c.b16 %v235, %v230
  %v291 = vpack.c.b16 %v236, %v231
  %v292 = vpack.c.b16 %v237, %v232
  %v293 = vpack.c.b16 %v238, %v233
  %v294 = vpack.c.b16 %v239, %v234
  %v295 = vpack.c.b16 %v245, %v240
  %v296 = vpack.c.b16 %v246, %v241
  %v297 = vpack.c.b16 %v247, %v242
  %v298 = vpack.c.b16 %v248, %v243
  %v299 = vpack.c.b16 %v249, %v244
  %v300 = vpack.c.b16 %v255, %v250
  %v301 = vpack.c.b16 %v256, %v251
  %v302 = vpack.c.b16 %v257, %v252
  %v303 = vpack.c.b16 %v258, %v253
  %v304 = vpack.c.b16 %v259, %v254
  %v305 = vpack.c.b16 %v265, %v260
  %v306 = vpack.c.b16 %v266, %v261
  %v307 = vpack.c.b16 %v267, %v262
  %v308 = vpack.c.b16 %v268, %v263
  %v309 = vpack.c.b16 %v269, %v264
  %v414 = vunpack.c.l.b16 %v63
  %v415 = vunpack.c.l.b16 %v64
  %v416 = vunpack.c.l.b16 %v65
  %v417 = vunpack.c.l.b16 %v66
  %v418 = vunpack.c.l.b16 %v67
  %v419 = vunpack.c.l.b16 %v68
  %v420 = vunpack.c.l.b16 %v69
  %v421 = vunpack.c.l.b16 %v70
  %v422 = vunpack.c.l.b16 %v71
  %v423 = vunpack.c.l.b16 %v72
  %v424 = vunpack.c.l.b16 %v73
  %v425 = vunpack.c.l.b16 %v74
  %v426 = vunpack.c.l.b16 %v75
  %v427 = vunpack.c.l.b16 %v76
  %v428 = vunpack.c.l.b16 %v77
  %v429 = vunpack.c.l.b16 %v78
  %v430 = vunpack.c.l.b16 %v79
  %v431 = vunpack.c.l.b16 %v80
  %v432 = vunpack.c.l.b16 %v81
  %v433 = vunpack.c.l.b16 %v82
  %v434 = vunpack.c.l.b16 %v83
  %v435 = vunpack.c.l.b16 %v84
  %v436 = vunpack.c.l.b16 %v85
  %v437 = vunpack.c.l.b16 %v86
  %v438 = vunpack.c.l.b16 %v87
  %v439 = vunpack.c.l.b16 %v88
  %v440 = vunpack.c.l.b16 %v89
  %v441 = vunpack.c.l.b16 %v90
  %v442 = vunpack.c.l.b16 %v91
  %v443 = vunpack.c.l.b16 %v92
  %v444 = vunpack.c.l.b16 %v93
  %v445 = vunpack.c.l.b16 %v94
  %v446 = vunpack.c.l.b16 %v95
  %v447 = vunpack.c.l.b16 %v96
  %v448 = vunpack.c.l.b16 %v97
  %v449 = vunpack.c.l.b16 %v98
  %v450 = vunpack.c.l.b16 %v99
  %v451 = vunpack.c.l.b16 %v100
  %v452 = vunpack.c.l.b16 %v101
  %v453 = vunpack.c.l.b16 %v102
  %v454 = vunpack.c.l.b16 %v103
  %v455 = vunpack.c.l.b16 %v104
  %v456 = vunpack.c.l.b16 %v105
  %v457 = vunpack.c.l.b16 %v106
  %v458 = vunpack.c.l.b16 %v107
  %v459 = vunpack.c.l.b16 %v108
  %v460 = vunpack.c.l.b16 %v109
  %v461 = vunpack.c.l.b16 %v110
  %v462 = vunpack.c.l.b16 %v111
  %v463 = vunpack.c.l.b16 %v112
  %v464 = vunpack.c.l.b16 %v113
  %v465 = vunpack.c.l.b16 %v114
  %v466 = vunpack.c.l.b16 %v115
  %v467 = vunpack.c.l.b16 %v116
  %v468 = vunpack.c.l.b16 %v117
  %v469 = vunpack.c.l.b16 %v118
  %v470 = vunpack.c.l.b16 %v119
  %v471 = vunpack.c.l.b16 %v120
  %v472 = vunpack.c.l.b16 %v121
  %v473 = vunpack.c.l.b16 %v122
  %v474 = vunpack.c.l.b16 %v123
  %v475 = vunpack.c.l.b16 %v124
  %v476 = vunpack.c.l.b16 %v125
  %v477 = vunpack.c.l.b16 %v126
  %v478 = vunpack.c.l.b16 %v127
  %v479 = vunpack.c.l.b16 %v128
  %v480 = vunpack.c.l.b16 %v129
  %v481 = vunpack.c.l.b16 %v130
  %v482 = vunpack.c.l.b16 %v131
  %v483 = vunpack.c.l.b16 %v132
  %v484 = vunpack.c.l.b16 %v133
  %v485 = vunpack.c.l.b16 %v134
  %v486 = vpack.c.b16 %v415, %v414
  %v487 = vpack.c.b16 %v417, %v416
  %v488 = vpack.c.b16 %v419, %v418
  %v489 = vpack.c.b16 %v421, %v420
  %v490 = vpack.c.b16 %v423, %v422
  %v491 = vpack.c.b16 %v425, %v424
  %v492 = vpack.c.b16 %v427, %v426
  %v493 = vpack.c.b16 %v429, %v428
  %v494 = vpack.c.b16 %v431, %v430
  %v495 = vpack.c.b16 %v433, %v432
  %v496 = vpack.c.b16 %v435, %v434
  %v497 = vpack.c.b16 %v437, %v436
  %v498 = vpack.c.b16 %v439, %v438
  %v499 = vpack.c.b16 %v441, %v440
  %v500 = vpack.c.b16 %v443, %v442
  %v501 = vpack.c.b16 %v445, %v444
  %v502 = vpack.c.b16 %v447, %v446
  %v503 = vpack.c.b16 %v449, %v448
  %v504 = vpack.c.b16 %v451, %v450
  %v505 = vpack.c.b16 %v453, %v452
  %v506 = vpack.c.b16 %v455, %v454
  %v507 = vpack.c.b16 %v457, %v456
  %v508 = vpack.c.b16 %v459, %v458
  %v509 = vpack.c.b16 %v461, %v460
  %v510 = vpack.c.b16 %v463, %v462
  %v511 = vpack.c.b16 %v465, %v464
  %v512 = vpack.c.b16 %v467, %v466
  %v513 = vpack.c.b16 %v469, %v468
  %v514 = vpack.c.b16 %v471, %v470
  %v515 = vpack.c.b16 %v473, %v472
  %v516 = vpack.c.b16 %v475, %v474
  %v517 = vpack.c.b16 %v477, %v476
  %v518 = vpack.c.b16 %v479, %v478
  %v519 = vpack.c.b16 %v481, %v480
  %v520 = vpack.c.b16 %v483, %v482
  %v521 = vpack.c.b16 %v485, %v484
  %vm558 = vcmask 523264
  %v560 = vsel %vm558, %v274, 0
  %v563 = vsel %vm558, %v279, 0
  %v566 = vsel %vm558, %v284, 0
  %v569 = vsel %vm558, %v289, 0
  %v572 = vsel %vm558, %v294, 0
  %v575 = vsel %vm558, %v299, 0
  %v578 = vsel %vm558, %v304, 0
  %v581 = vsel %vm558, %v309, 0
  %583 = vmatprep.subr.bf16.mxu0 0
  %584 = vmatpush1.bf16.msra.mxu0 %v486
  %585 = vmatprep.subr.bf16.mxu0 0
  %586 = vmatpush1.bf16.msra.mxu0 %v487
  %587 = vmatprep.subr.bf16.mxu0 0
  %588 = vmatpush1.bf16.msra.mxu0 %v488
  %589 = vmatprep.subr.bf16.mxu0 0
  %590 = vmatpush1.bf16.msra.mxu0 %v489
  %591 = vmatprep.subr.bf16.mxu0 0
  %592 = vmatpush1.bf16.msra.mxu0 %v490
  %593 = vmatprep.subr.bf16.mxu0 0
  %594 = vmatpush1.bf16.msra.mxu0 %v491
  %595 = vmatprep.subr.bf16.mxu0 0
  %596 = vmatpush1.bf16.msra.mxu0 %v492
  %597 = vmatprep.subr.bf16.mxu0 0
  %598 = vmatpush1.bf16.msra.mxu0 %v493
  %599 = vmatprep.subr.bf16.mxu0 0
  %600 = vmatpush1.bf16.msra.mxu0 %v494
  %601 = vmatprep.subr.bf16.mxu0 0
  %602 = vmatpush1.bf16.msra.mxu0 %v495
  %603 = vmatprep.subr.bf16.mxu0 0
  %604 = vmatpush1.bf16.msra.mxu0 %v496
  %605 = vmatprep.subr.bf16.mxu0 0
  %606 = vmatpush1.bf16.msra.mxu0 %v497
  %607 = vmatprep.subr.bf16.mxu0 0
  %608 = vmatpush1.bf16.msra.mxu0 %v498
  %609 = vmatprep.subr.bf16.mxu0 0
  %610 = vmatpush1.bf16.msra.mxu0 %v499
  %611 = vmatprep.subr.bf16.mxu0 0
  %612 = vmatpush1.bf16.msra.mxu0 %v500
  %613 = vmatprep.subr.bf16.mxu0 0
  %614 = vmatpush1.bf16.msra.mxu0 %v501
  %615 = vmatprep.mubr.bf16.mxu0 %v271
  %616 = vmatmul.mubr.bf16.gmra.mrb[0].mxu0 %v270
  %v617 = vpop.f32.mrb[0].mxu0
  %v618 = vadd.f32 %v140, %v617
  %v619 = vpop.f32.mrb[0].mxu0
  %v620 = vpop.f32.mrb[0].mxu0
  %v621 = vadd.f32 %v140, %v620
  %v622 = vpop.f32.mrb[0].mxu0
  %623 = vmatprep.mubr.bf16.mxu0 %v276
  %624 = vmatmul.mubr.bf16.gmra.mrb[0].mxu0 %v275
  %v625 = vpop.f32.mrb[0].mxu0
  %v626 = vadd.f32 %v140, %v625
  %v627 = vpop.f32.mrb[0].mxu0
  %v628 = vpop.f32.mrb[0].mxu0
  %v629 = vadd.f32 %v140, %v628
  %v630 = vpop.f32.mrb[0].mxu0
  %631 = vmatprep.mubr.bf16.mxu0 %v281
  %632 = vmatmul.mubr.bf16.gmra.mrb[0].mxu0 %v280
  %v633 = vpop.f32.mrb[0].mxu0
  %v634 = vadd.f32 %v140, %v633
  %v635 = vpop.f32.mrb[0].mxu0
  %v636 = vpop.f32.mrb[0].mxu0
  %v637 = vadd.f32 %v140, %v636
  %v638 = vpop.f32.mrb[0].mxu0
  %639 = vmatprep.mubr.bf16.mxu0 %v286
  %640 = vmatmul.mubr.bf16.gmra.mrb[0].mxu0 %v285
  %v641 = vpop.f32.mrb[0].mxu0
  %v642 = vadd.f32 %v140, %v641
  %v643 = vpop.f32.mrb[0].mxu0
  %v644 = vpop.f32.mrb[0].mxu0
  %v645 = vadd.f32 %v140, %v644
  %v646 = vpop.f32.mrb[0].mxu0
  %647 = vmatprep.mubr.bf16.mxu0 %v291
  %648 = vmatmul.mubr.bf16.gmra.mrb[0].mxu0 %v290
  %v649 = vpop.f32.mrb[0].mxu0
  %v650 = vadd.f32 %v140, %v649
  %v651 = vpop.f32.mrb[0].mxu0
  %v652 = vpop.f32.mrb[0].mxu0
  %v653 = vadd.f32 %v140, %v652
  %v654 = vpop.f32.mrb[0].mxu0
  %655 = vmatprep.mubr.bf16.mxu0 %v296
  %656 = vmatmul.mubr.bf16.gmra.mrb[0].mxu0 %v295
  %v657 = vpop.f32.mrb[0].mxu0
  %v658 = vadd.f32 %v140, %v657
  %v659 = vpop.f32.mrb[0].mxu0
  %v660 = vpop.f32.mrb[0].mxu0
  %v661 = vadd.f32 %v140, %v660
  %v662 = vpop.f32.mrb[0].mxu0
  %663 = vmatprep.mubr.bf16.mxu0 %v301
  %664 = vmatmul.mubr.bf16.gmra.mrb[0].mxu0 %v300
  %v665 = vpop.f32.mrb[0].mxu0
  %v666 = vadd.f32 %v140, %v665
  %v667 = vpop.f32.mrb[0].mxu0
  %v668 = vpop.f32.mrb[0].mxu0
  %v669 = vadd.f32 %v140, %v668
  %v670 = vpop.f32.mrb[0].mxu0
  %671 = vmatprep.mubr.bf16.mxu0 %v306
  %672 = vmatmul.mubr.bf16.gmra.mrb[0].mxu0 %v305
  %v673 = vpop.f32.mrb[0].mxu0
  %v674 = vadd.f32 %v140, %v673
  %v675 = vpop.f32.mrb[0].mxu0
  %v676 = vpop.f32.mrb[0].mxu0
  %v677 = vadd.f32 %v140, %v676
  %v678 = vpop.f32.mrb[0].mxu0
  %679 = vdwg.mxu0
  %680 = vmatprep.subr.bf16.mxu0 0
  %681 = vmatpush1.bf16.msra.mxu0 %v502
  %682 = vmatprep.subr.bf16.mxu0 0
  %683 = vmatpush1.bf16.msra.mxu0 %v503
  %684 = vmatprep.subr.bf16.mxu0 0
  %685 = vmatpush1.bf16.msra.mxu0 %v504
  %686 = vmatprep.subr.bf16.mxu0 0
  %687 = vmatpush1.bf16.msra.mxu0 %v505
  %688 = vmatprep.subr.bf16.mxu0 0
  %689 = vmatpush1.bf16.msra.mxu0 %v506
  %690 = vmatprep.subr.bf16.mxu0 0
  %691 = vmatpush1.bf16.msra.mxu0 %v507
  %692 = vmatprep.subr.bf16.mxu0 0
  %693 = vmatpush1.bf16.msra.mxu0 %v508
  %694 = vmatprep.subr.bf16.mxu0 0
  %695 = vmatpush1.bf16.msra.mxu0 %v509
  %696 = vmatprep.subr.bf16.mxu0 0
  %697 = vmatpush1.bf16.msra.mxu0 %v510
  %698 = vmatprep.subr.bf16.mxu0 0
  %699 = vmatpush1.bf16.msra.mxu0 %v511
  %700 = vmatprep.subr.bf16.mxu0 0
  %701 = vmatpush1.bf16.msra.mxu0 %v512
  %702 = vmatprep.subr.bf16.mxu0 0
  %703 = vmatpush1.bf16.msra.mxu0 %v513
  %704 = vmatprep.subr.bf16.mxu0 0
  %705 = vmatpush1.bf16.msra.mxu0 %v514
  %706 = vmatprep.subr.bf16.mxu0 0
  %707 = vmatpush1.bf16.msra.mxu0 %v515
  %708 = vmatprep.subr.bf16.mxu0 0
  %709 = vmatpush1.bf16.msra.mxu0 %v516
  %710 = vmatprep.subr.bf16.mxu0 0
  %711 = vmatpush1.bf16.msra.mxu0 %v517
  %712 = vmatprep.mubr.bf16.mxu0 %v273
  %713 = vmatmul.mubr.bf16.gmra.mrb[0].mxu0 %v272
  %v714 = vpop.f32.mrb[0].mxu0
  %v715 = vadd.f32 %v618, %v714
  %v716 = vpop.f32.mrb[0].mxu0
  %v717 = vpop.f32.mrb[0].mxu0
  %v718 = vadd.f32 %v621, %v717
  %v719 = vpop.f32.mrb[0].mxu0
  %720 = vmatprep.mubr.bf16.mxu0 %v278
  %721 = vmatmul.mubr.bf16.gmra.mrb[0].mxu0 %v277
  %v722 = vpop.f32.mrb[0].mxu0
  %v723 = vadd.f32 %v626, %v722
  %v724 = vpop.f32.mrb[0].mxu0
  %v725 = vpop.f32.mrb[0].mxu0
  %v726 = vadd.f32 %v629, %v725
  %v727 = vpop.f32.mrb[0].mxu0
  %728 = vmatprep.mubr.bf16.mxu0 %v283
  %729 = vmatmul.mubr.bf16.gmra.mrb[0].mxu0 %v282
  %v730 = vpop.f32.mrb[0].mxu0
  %v731 = vadd.f32 %v634, %v730
  %v732 = vpop.f32.mrb[0].mxu0
  %v733 = vpop.f32.mrb[0].mxu0
  %v734 = vadd.f32 %v637, %v733
  %v735 = vpop.f32.mrb[0].mxu0
  %736 = vmatprep.mubr.bf16.mxu0 %v288
  %737 = vmatmul.mubr.bf16.gmra.mrb[0].mxu0 %v287
  %v738 = vpop.f32.mrb[0].mxu0
  %v739 = vadd.f32 %v642, %v738
  %v740 = vpop.f32.mrb[0].mxu0
  %v741 = vpop.f32.mrb[0].mxu0
  %v742 = vadd.f32 %v645, %v741
  %v743 = vpop.f32.mrb[0].mxu0
  %744 = vmatprep.mubr.bf16.mxu0 %v293
  %745 = vmatmul.mubr.bf16.gmra.mrb[0].mxu0 %v292
  %v746 = vpop.f32.mrb[0].mxu0
  %v747 = vadd.f32 %v650, %v746
  %v748 = vpop.f32.mrb[0].mxu0
  %v749 = vpop.f32.mrb[0].mxu0
  %v750 = vadd.f32 %v653, %v749
  %v751 = vpop.f32.mrb[0].mxu0
  %752 = vmatprep.mubr.bf16.mxu0 %v298
  %753 = vmatmul.mubr.bf16.gmra.mrb[0].mxu0 %v297
  %v754 = vpop.f32.mrb[0].mxu0
  %v755 = vadd.f32 %v658, %v754
  %v756 = vpop.f32.mrb[0].mxu0
  %v757 = vpop.f32.mrb[0].mxu0
  %v758 = vadd.f32 %v661, %v757
  %v759 = vpop.f32.mrb[0].mxu0
  %760 = vmatprep.mubr.bf16.mxu0 %v303
  %761 = vmatmul.mubr.bf16.gmra.mrb[0].mxu0 %v302
  %v762 = vpop.f32.mrb[0].mxu0
  %v763 = vadd.f32 %v666, %v762
  %v764 = vpop.f32.mrb[0].mxu0
  %v765 = vpop.f32.mrb[0].mxu0
  %v766 = vadd.f32 %v669, %v765
  %v767 = vpop.f32.mrb[0].mxu0
  %768 = vmatprep.mubr.bf16.mxu0 %v308
  %769 = vmatmul.mubr.bf16.gmra.mrb[0].mxu0 %v307
  %v770 = vpop.f32.mrb[0].mxu0
  %v771 = vadd.f32 %v674, %v770
  %v772 = vpop.f32.mrb[0].mxu0
  %v773 = vpop.f32.mrb[0].mxu0
  %v774 = vadd.f32 %v677, %v773
  %v775 = vpop.f32.mrb[0].mxu0
  %776 = vdwg.mxu0
  %777 = vmatprep.subr.bf16.mxu0 0
  %778 = vmatpush1.bf16.msra.mxu0 %v518
  %779 = vmatprep.subr.bf16.mxu0 0
  %780 = vmatpush1.bf16.msra.mxu0 %v519
  %781 = vmatprep.subr.bf16.mxu0 0
  %782 = vmatpush1.bf16.msra.mxu0 %v520
  %783 = vmatprep.subr.bf16.mxu0 0
  %784 = vmatpush1.bf16.msra.mxu0 %v521
  %785 = vmatprep.subr.bf16.mxu0 0
  %786 = vmatpush1.bf16.msra.mxu0 0
  %787 = vmatprep.subr.bf16.mxu0 0
  %788 = vmatpush1.bf16.msra.mxu0 0
  %789 = vmatprep.subr.bf16.mxu0 0
  %790 = vmatpush1.bf16.msra.mxu0 0
  %791 = vmatprep.subr.bf16.mxu0 0
  %792 = vmatpush1.bf16.msra.mxu0 0
  %793 = vmatprep.subr.bf16.mxu0 0
  %794 = vmatpush1.bf16.msra.mxu0 0
  %795 = vmatprep.subr.bf16.mxu0 0
  %796 = vmatpush1.bf16.msra.mxu0 0
  %797 = vmatprep.subr.bf16.mxu0 0
  %798 = vmatpush1.bf16.msra.mxu0 0
  %799 = vmatprep.subr.bf16.mxu0 0
  %800 = vmatpush1.bf16.msra.mxu0 0
  %801 = vmatprep.subr.bf16.mxu0 0
  %802 = vmatpush1.bf16.msra.mxu0 0
  %803 = vmatprep.subr.bf16.mxu0 0
  %804 = vmatpush1.bf16.msra.mxu0 0
  %805 = vmatprep.subr.bf16.mxu0 0
  %806 = vmatpush1.bf16.msra.mxu0 0
  %807 = vmatprep.subr.bf16.mxu0 0
  %808 = vmatpush1.bf16.msra.mxu0 0
  %809 = vmatprep.mubr.bf16.mxu0 0
  %810 = vmatmul.mubr.bf16.gmra.mrb[0].mxu0 %v560
  %v811 = vpop.f32.mrb[0].mxu0
  %v812 = vadd.f32 %v715, %v811
  %v813 = vpop.f32.mrb[0].mxu0
  %v814 = vpop.f32.mrb[0].mxu0
  %v815 = vadd.f32 %v718, %v814
  %v816 = vpop.f32.mrb[0].mxu0
  %817 = vmatprep.mubr.bf16.mxu0 0
  %818 = vmatmul.mubr.bf16.gmra.mrb[0].mxu0 %v563
  %v819 = vpop.f32.mrb[0].mxu0
  %v820 = vadd.f32 %v723, %v819
  %v821 = vpop.f32.mrb[0].mxu0
  %v822 = vpop.f32.mrb[0].mxu0
  %v823 = vadd.f32 %v726, %v822
  %v824 = vpop.f32.mrb[0].mxu0
  %825 = vmatprep.mubr.bf16.mxu0 0
  %826 = vmatmul.mubr.bf16.gmra.mrb[0].mxu0 %v566
  %v827 = vpop.f32.mrb[0].mxu0
  %v828 = vadd.f32 %v731, %v827
  %v829 = vpop.f32.mrb[0].mxu0
  %v830 = vpop.f32.mrb[0].mxu0
  %v831 = vadd.f32 %v734, %v830
  %v832 = vpop.f32.mrb[0].mxu0
  %833 = vmatprep.mubr.bf16.mxu0 0
  %834 = vmatmul.mubr.bf16.gmra.mrb[0].mxu0 %v569
  %v835 = vpop.f32.mrb[0].mxu0
  %v836 = vadd.f32 %v739, %v835
  %v837 = vpop.f32.mrb[0].mxu0
  %v838 = vpop.f32.mrb[0].mxu0
  %v839 = vadd.f32 %v742, %v838
  %v840 = vpop.f32.mrb[0].mxu0
  %841 = vmatprep.mubr.bf16.mxu0 0
  %842 = vmatmul.mubr.bf16.gmra.mrb[0].mxu0 %v572
  %v843 = vpop.f32.mrb[0].mxu0
  %v844 = vadd.f32 %v747, %v843
  %v845 = vpop.f32.mrb[0].mxu0
  %v846 = vpop.f32.mrb[0].mxu0
  %v847 = vadd.f32 %v750, %v846
  %v848 = vpop.f32.mrb[0].mxu0
  %849 = vmatprep.mubr.bf16.mxu0 0
  %850 = vmatmul.mubr.bf16.gmra.mrb[0].mxu0 %v575
  %v851 = vpop.f32.mrb[0].mxu0
  %v852 = vadd.f32 %v755, %v851
  %v853 = vpop.f32.mrb[0].mxu0
  %v854 = vpop.f32.mrb[0].mxu0
  %v855 = vadd.f32 %v758, %v854
  %v856 = vpop.f32.mrb[0].mxu0
  %857 = vmatprep.mubr.bf16.mxu0 0
  %858 = vmatmul.mubr.bf16.gmra.mrb[0].mxu0 %v578
  %v859 = vpop.f32.mrb[0].mxu0
  %v860 = vadd.f32 %v763, %v859
  %v861 = vpop.f32.mrb[0].mxu0
  %v862 = vpop.f32.mrb[0].mxu0
  %v863 = vadd.f32 %v766, %v862
  %v864 = vpop.f32.mrb[0].mxu0
  %865 = vmatprep.mubr.bf16.mxu0 0
  %866 = vmatmul.mubr.bf16.gmra.mrb[0].mxu0 %v581
  %v867 = vpop.f32.mrb[0].mxu0
  %v868 = vadd.f32 %v771, %v867
  %v869 = vpop.f32.mrb[0].mxu0
  %v870 = vpop.f32.mrb[0].mxu0
  %v871 = vadd.f32 %v774, %v870
  %v872 = vpop.f32.mrb[0].mxu0
  %873 = vdwg.mxu0
  %v874 = vmax.f32 %v812, 0.0
  %v875 = vmax.f32 %v815, 0.0
  %v876 = vmax.f32 %v820, 0.0
  %v877 = vmax.f32 %v823, 0.0
  %v878 = vmax.f32 %v828, 0.0
  %v879 = vmax.f32 %v831, 0.0
  %v880 = vmax.f32 %v836, 0.0
  %v881 = vmax.f32 %v839, 0.0
  %v882 = vmax.f32 %v844, 0.0
  %v883 = vmax.f32 %v847, 0.0
  %v884 = vmax.f32 %v852, 0.0
  %v885 = vmax.f32 %v855, 0.0
  %v886 = vmax.f32 %v860, 0.0
  %v887 = vmax.f32 %v863, 0.0
  %v888 = vmax.f32 %v868, 0.0
  %v889 = vmax.f32 %v871, 0.0
  %v890 = vpack.c.bf16 %v875, %v874
  %v891 = vpack.c.bf16 %v877, %v876
  %v892 = vpack.c.bf16 %v879, %v878
  %v893 = vpack.c.bf16 %v881, %v880
  %v894 = vpack.c.bf16 %v883, %v882
  %v895 = vpack.c.bf16 %v885, %v884
  %v896 = vpack.c.bf16 %v887, %v886
  %v897 = vpack.c.bf16 %v889, %v888
  %v906 = vunpack.c.l.b16 %v890
  %v907 = vunpack.c.h.b16 %v890
  %v908 = vunpack.c.l.b16 %v891
  %v909 = vunpack.c.h.b16 %v891
  %v910 = vunpack.c.l.b16 %v892
  %v911 = vunpack.c.h.b16 %v892
  %v912 = vunpack.c.l.b16 %v893
  %v913 = vunpack.c.h.b16 %v893
  %v914 = vunpack.c.l.b16 %v894
  %v915 = vunpack.c.h.b16 %v894
  %v916 = vunpack.c.l.b16 %v895
  %v917 = vunpack.c.h.b16 %v895
  %v918 = vunpack.c.l.b16 %v896
  %v919 = vunpack.c.h.b16 %v896
  %v920 = vunpack.c.l.b16 %v897
  %v921 = vunpack.c.h.b16 %v897
  %v922 = vpack.c.b16 %v906, %v906
  %v923 = vpack.c.b16 %v907, %v907
  %v924 = vpack.c.b16 %v908, %v908
  %v925 = vpack.c.b16 %v909, %v909
  %v926 = vpack.c.b16 %v910, %v910
  %v927 = vpack.c.b16 %v911, %v911
  %v928 = vpack.c.b16 %v912, %v912
  %v929 = vpack.c.b16 %v913, %v913
  %v930 = vpack.c.b16 %v914, %v914
  %v931 = vpack.c.b16 %v915, %v915
  %v932 = vpack.c.b16 %v916, %v916
  %v933 = vpack.c.b16 %v917, %v917
  %v934 = vpack.c.b16 %v918, %v918
  %v935 = vpack.c.b16 %v919, %v919
  %v936 = vpack.c.b16 %v920, %v920
  %v937 = vpack.c.b16 %v921, %v921
  %954 = vst [vmem:[%s3] sm:$0xf] %v922
  %955 = vst [vmem:[%s3 + $0x4] sm:$0xf] %v923
  %956 = vst [vmem:[%s3 + $0x8] sm:$0xf] %v924
  %957 = vst [vmem:[%s3 + $0xc] sm:$0xf] %v925
  %958 = vst [vmem:[%s3 + $0x10] sm:$0xf] %v926
  %959 = vst [vmem:[%s3 + $0x14] sm:$0xf] %v927
  %960 = vst [vmem:[%s3 + $0x18] sm:$0xf] %v928
  %961 = vst [vmem:[%s3 + $0x1c] sm:$0xf] %v929
  %962 = vst [vmem:[%s3 + $0x20] sm:$0xf] %v930
  %963 = vst [vmem:[%s3 + $0x24] sm:$0xf] %v931
  %964 = vst [vmem:[%s3 + $0x28] sm:$0xf] %v932
  %965 = vst [vmem:[%s3 + $0x2c] sm:$0xf] %v933
  %966 = vst [vmem:[%s3 + $0x30] sm:$0xf] %v934
  %967 = vst [vmem:[%s3 + $0x34] sm:$0xf] %v935
  %968 = vst [vmem:[%s3 + $0x38] sm:$0xf] %v936
  %969 = vst [vmem:[%s3 + $0x3c] sm:$0xf] %v937
  // Predicated region
  $region14: #{ae_cifar_forward.8} parent=0 // pred_check
    _
  $region15: #{ae_cifar_forward.8} parent=0 // pred_check_branch
    %971 = sbr.rel (0) target = $region17
  $region16: #{ae_cifar_forward.8} parent=0 // pred_region
    _
  $region17: #{ae_cifar_forward.8} parent=0 // pred_fallthru
    _
  // Predicated region
  $region18: #{ae_cifar_forward.8} parent=0 // pred_check
    _
  $region19: #{ae_cifar_forward.8} parent=0 // pred_check_branch
    %973 = sbr.rel (0) target = $region21
  $region20: #{ae_cifar_forward.8} parent=0 // pred_region
    _
  $region21: #{ae_cifar_forward.8} parent=0 // pred_fallthru
    _

// kernel: ae_cifar_forward.9
$region0: #{ae_cifar_forward.9}
  #allocation0 [shape = 'u32[]', space=smem, size = 0x4, offset = 0x4, fixed_abs, tag = 'smem constant byte address 0x4 - core index']
  #allocation1 [shape = 'u32[144,128]{1,0:T(1,128)}', space=vmem, size = 0x12000, scoped, tag = 'internal scratch']
  %s0 = inlined_call_operand.vmem [shape: bf16[32,1152], index: 0, kind: input, shape index: {}]
  %s1 = inlined_call_operand.vmem [shape: bf16[1152,128], index: 1, kind: input, shape index: {}]
  %s2 = inlined_call_operand.vmem [shape: f32[1,128], index: 2, kind: input, shape index: {}]
  %s3 = inlined_call_operand.vmem [shape: bf16[32,128], index: 3, kind: output, shape index: {}]
  %s4 = sld [smem:[#allocation0]]
  $region22: #{ae_cifar_forward.9} parent=0
    _
  %s6 = ssub.s32 1, %s4
  %s7 = scalar_select 0, %s6, %s4
  // Predicated region
  $region2: #{ae_cifar_forward.9} parent=0 // pred_check
    _
  $region3: #{ae_cifar_forward.9} parent=0 // pred_check_branch
    %9 = sbr.rel (0) target = $region5
  $region4: #{ae_cifar_forward.9} parent=0 // pred_region
    _
  $region5: #{ae_cifar_forward.9} parent=0 // pred_fallthru
    _
  // Predicated region
  $region6: #{ae_cifar_forward.9} parent=0 // pred_check
    _
  $region7: #{ae_cifar_forward.9} parent=0 // pred_check_branch
    %11 = sbr.rel (0) target = $region9
  $region8: #{ae_cifar_forward.9} parent=0 // pred_region
    _
  $region9: #{ae_cifar_forward.9} parent=0 // pred_fallthru
    _
  // Predicated region
  $region10: #{ae_cifar_forward.9} parent=0 // pred_check
    _
  $region11: #{ae_cifar_forward.9} parent=0 // pred_check_branch
    %13 = sbr.rel (0) target = $region13
  $region12: #{ae_cifar_forward.9} parent=0 // pred_region
    _
  $region13: #{ae_cifar_forward.9} parent=0 // pred_fallthru
    _
  %v15 = vld [vmem:[%s0] sm:$0xff]
  %v16 = vld [vmem:[%s0 + $0x8] sm:$0xff]
  %v17 = vld [vmem:[%s0 + $0x10] sm:$0xff]
  %v18 = vld [vmem:[%s0 + $0x18] sm:$0xff]
  %v19 = vld [vmem:[%s0 + $0x20] sm:$0xf]
  %v20 = vld [vmem:[%s0 + $0x24] sm:$0xff]
  %v21 = vld [vmem:[%s0 + $0x2c] sm:$0xff]
  %v22 = vld [vmem:[%s0 + $0x34] sm:$0xff]
  %v23 = vld [vmem:[%s0 + $0x3c] sm:$0xff]
  %v24 = vld [vmem:[%s0 + $0x44] sm:$0xf]
  %v25 = vld [vmem:[%s0 + $0x48] sm:$0xff]
  %v26 = vld [vmem:[%s0 + $0x50] sm:$0xff]
  %v27 = vld [vmem:[%s0 + $0x58] sm:$0xff]
  %v28 = vld [vmem:[%s0 + $0x60] sm:$0xff]
  %v29 = vld [vmem:[%s0 + $0x68] sm:$0xf]
  %v30 = vld [vmem:[%s0 + $0x6c] sm:$0xff]
  %v31 = vld [vmem:[%s0 + $0x74] sm:$0xff]
  %v32 = vld [vmem:[%s0 + $0x7c] sm:$0xff]
  %v33 = vld [vmem:[%s0 + $0x84] sm:$0xff]
  %v34 = vld [vmem:[%s0 + $0x8c] sm:$0xf]
  %v35 = vld [vmem:[%s1] sm:$0xf]
  %v36 = vld [vmem:[%s1 + $0x4] sm:$0xf]
  %v37 = vld [vmem:[%s1 + $0x8] sm:$0xf]
  %v38 = vld [vmem:[%s1 + $0xc] sm:$0xf]
  %v39 = vld [vmem:[%s1 + $0x10] sm:$0xf]
  %v40 = vld [vmem:[%s1 + $0x14] sm:$0xf]
  %v41 = vld [vmem:[%s1 + $0x18] sm:$0xf]
  %v42 = vld [vmem:[%s1 + $0x1c] sm:$0xf]
  %v43 = vld [vmem:[%s1 + $0x20] sm:$0xf]
  %v44 = vld [vmem:[%s1 + $0x24] sm:$0xf]
  %v45 = vld [vmem:[%s1 + $0x28] sm:$0xf]
  %v46 = vld [vmem:[%s1 + $0x2c] sm:$0xf]
  %v47 = vld [vmem:[%s1 + $0x30] sm:$0xf]
  %v48 = vld [vmem:[%s1 + $0x34] sm:$0xf]
  %v49 = vld [vmem:[%s1 + $0x38] sm:$0xf]
  %v50 = vld [vmem:[%s1 + $0x3c] sm:$0xf]
  %v51 = vld [vmem:[%s1 + $0x40] sm:$0xf]
  %v52 = vld [vmem:[%s1 + $0x44] sm:$0xf]
  %v53 = vld [vmem:[%s1 + $0x48] sm:$0xf]
  %v54 = vld [vmem:[%s1 + $0x4c] sm:$0xf]
  %v55 = vld [vmem:[%s1 + $0x50] sm:$0xf]
  %v56 = vld [vmem:[%s1 + $0x54] sm:$0xf]
  %v57 = vld [vmem:[%s1 + $0x58] sm:$0xf]
  %v58 = vld [vmem:[%s1 + $0x5c] sm:$0xf]
  %v59 = vld [vmem:[%s1 + $0x60] sm:$0xf]
  %v60 = vld [vmem:[%s1 + $0x64] sm:$0xf]
  %v61 = vld [vmem:[%s1 + $0x68] sm:$0xf]
  %v62 = vld [vmem:[%s1 + $0x6c] sm:$0xf]
  %v63 = vld [vmem:[%s1 + $0x70] sm:$0xf]
  %v64 = vld [vmem:[%s1 + $0x74] sm:$0xf]
  %v65 = vld [vmem:[%s1 + $0x78] sm:$0xf]
  %v66 = vld [vmem:[%s1 + $0x7c] sm:$0xf]
  %v67 = vld [vmem:[%s1 + $0x80] sm:$0xf]
  %v68 = vld [vmem:[%s1 + $0x84] sm:$0xf]
  %v69 = vld [vmem:[%s1 + $0x88] sm:$0xf]
  %v70 = vld [vmem:[%s1 + $0x8c] sm:$0xf]
  %v71 = vld [vmem:[%s1 + $0x90] sm:$0xf]
  %v72 = vld [vmem:[%s1 + $0x94] sm:$0xf]
  %v73 = vld [vmem:[%s1 + $0x98] sm:$0xf]
  %v74 = vld [vmem:[%s1 + $0x9c] sm:$0xf]
  %v75 = vld [vmem:[%s1 + $0xa0] sm:$0xf]
  %v76 = vld [vmem:[%s1 + $0xa4] sm:$0xf]
  %v77 = vld [vmem:[%s1 + $0xa8] sm:$0xf]
  %v78 = vld [vmem:[%s1 + $0xac] sm:$0xf]
  %v79 = vld [vmem:[%s1 + $0xb0] sm:$0xf]
  %v80 = vld [vmem:[%s1 + $0xb4] sm:$0xf]
  %v81 = vld [vmem:[%s1 + $0xb8] sm:$0xf]
  %v82 = vld [vmem:[%s1 + $0xbc] sm:$0xf]
  %v83 = vld [vmem:[%s1 + $0xc0] sm:$0xf]
  %v84 = vld [vmem:[%s1 + $0xc4] sm:$0xf]
  %v85 = vld [vmem:[%s1 + $0xc8] sm:$0xf]
  %v86 = vld [vmem:[%s1 + $0xcc] sm:$0xf]
  %v87 = vld [vmem:[%s1 + $0xd0] sm:$0xf]
  %v88 = vld [vmem:[%s1 + $0xd4] sm:$0xf]
  %v89 = vld [vmem:[%s1 + $0xd8] sm:$0xf]
  %v90 = vld [vmem:[%s1 + $0xdc] sm:$0xf]
  %v91 = vld [vmem:[%s1 + $0xe0] sm:$0xf]
  %v92 = vld [vmem:[%s1 + $0xe4] sm:$0xf]
  %v93 = vld [vmem:[%s1 + $0xe8] sm:$0xf]
  %v94 = vld [vmem:[%s1 + $0xec] sm:$0xf]
  %v95 = vld [vmem:[%s1 + $0xf0] sm:$0xf]
  %v96 = vld [vmem:[%s1 + $0xf4] sm:$0xf]
  %v97 = vld [vmem:[%s1 + $0xf8] sm:$0xf]
  %v98 = vld [vmem:[%s1 + $0xfc] sm:$0xf]
  %v99 = vld [vmem:[%s1 + $0x100] sm:$0xf]
  %v100 = vld [vmem:[%s1 + $0x104] sm:$0xf]
  %v101 = vld [vmem:[%s1 + $0x108] sm:$0xf]
  %v102 = vld [vmem:[%s1 + $0x10c] sm:$0xf]
  %v103 = vld [vmem:[%s1 + $0x110] sm:$0xf]
  %v104 = vld [vmem:[%s1 + $0x114] sm:$0xf]
  %v105 = vld [vmem:[%s1 + $0x118] sm:$0xf]
  %v106 = vld [vmem:[%s1 + $0x11c] sm:$0xf]
  %v107 = vld [vmem:[%s1 + $0x120] sm:$0xf]
  %v108 = vld [vmem:[%s1 + $0x124] sm:$0xf]
  %v109 = vld [vmem:[%s1 + $0x128] sm:$0xf]
  %v110 = vld [vmem:[%s1 + $0x12c] sm:$0xf]
  %v111 = vld [vmem:[%s1 + $0x130] sm:$0xf]
  %v112 = vld [vmem:[%s1 + $0x134] sm:$0xf]
  %v113 = vld [vmem:[%s1 + $0x138] sm:$0xf]
  %v114 = vld [vmem:[%s1 + $0x13c] sm:$0xf]
  %v115 = vld [vmem:[%s1 + $0x140] sm:$0xf]
  %v116 = vld [vmem:[%s1 + $0x144] sm:$0xf]
  %v117 = vld [vmem:[%s1 + $0x148] sm:$0xf]
  %v118 = vld [vmem:[%s1 + $0x14c] sm:$0xf]
  %v119 = vld [vmem:[%s1 + $0x150] sm:$0xf]
  %v120 = vld [vmem:[%s1 + $0x154] sm:$0xf]
  %v121 = vld [vmem:[%s1 + $0x158] sm:$0xf]
  %v122 = vld [vmem:[%s1 + $0x15c] sm:$0xf]
  %v123 = vld [vmem:[%s1 + $0x160] sm:$0xf]
  %v124 = vld [vmem:[%s1 + $0x164] sm:$0xf]
  %v125 = vld [vmem:[%s1 + $0x168] sm:$0xf]
  %v126 = vld [vmem:[%s1 + $0x16c] sm:$0xf]
  %v127 = vld [vmem:[%s1 + $0x170] sm:$0xf]
  %v128 = vld [vmem:[%s1 + $0x174] sm:$0xf]
  %v129 = vld [vmem:[%s1 + $0x178] sm:$0xf]
  %v130 = vld [vmem:[%s1 + $0x17c] sm:$0xf]
  %v131 = vld [vmem:[%s1 + $0x180] sm:$0xf]
  %v132 = vld [vmem:[%s1 + $0x184] sm:$0xf]
  %v133 = vld [vmem:[%s1 + $0x188] sm:$0xf]
  %v134 = vld [vmem:[%s1 + $0x18c] sm:$0xf]
  %v135 = vld [vmem:[%s1 + $0x190] sm:$0xf]
  %v136 = vld [vmem:[%s1 + $0x194] sm:$0xf]
  %v137 = vld [vmem:[%s1 + $0x198] sm:$0xf]
  %v138 = vld [vmem:[%s1 + $0x19c] sm:$0xf]
  %v139 = vld [vmem:[%s1 + $0x1a0] sm:$0xf]
  %v140 = vld [vmem:[%s1 + $0x1a4] sm:$0xf]
  %v141 = vld [vmem:[%s1 + $0x1a8] sm:$0xf]
  %v142 = vld [vmem:[%s1 + $0x1ac] sm:$0xf]
  %v143 = vld [vmem:[%s1 + $0x1b0] sm:$0xf]
  %v144 = vld [vmem:[%s1 + $0x1b4] sm:$0xf]
  %v145 = vld [vmem:[%s1 + $0x1b8] sm:$0xf]
  %v146 = vld [vmem:[%s1 + $0x1bc] sm:$0xf]
  %v147 = vld [vmem:[%s1 + $0x1c0] sm:$0xf]
  %v148 = vld [vmem:[%s1 + $0x1c4] sm:$0xf]
  %v149 = vld [vmem:[%s1 + $0x1c8] sm:$0xf]
  %v150 = vld [vmem:[%s1 + $0x1cc] sm:$0xf]
  %v151 = vld [vmem:[%s1 + $0x1d0] sm:$0xf]
  %v152 = vld [vmem:[%s1 + $0x1d4] sm:$0xf]
  %v153 = vld [vmem:[%s1 + $0x1d8] sm:$0xf]
  %v154 = vld [vmem:[%s1 + $0x1dc] sm:$0xf]
  %v155 = vld [vmem:[%s1 + $0x1e0] sm:$0xf]
  %v156 = vld [vmem:[%s1 + $0x1e4] sm:$0xf]
  %v157 = vld [vmem:[%s1 + $0x1e8] sm:$0xf]
  %v158 = vld [vmem:[%s1 + $0x1ec] sm:$0xf]
  %v159 = vld [vmem:[%s1 + $0x1f0] sm:$0xf]
  %v160 = vld [vmem:[%s1 + $0x1f4] sm:$0xf]
  %v161 = vld [vmem:[%s1 + $0x1f8] sm:$0xf]
  %v162 = vld [vmem:[%s1 + $0x1fc] sm:$0xf]
  %v163 = vld [vmem:[%s1 + $0x200] sm:$0xf]
  %v164 = vld [vmem:[%s1 + $0x204] sm:$0xf]
  %v165 = vld [vmem:[%s1 + $0x208] sm:$0xf]
  %v166 = vld [vmem:[%s1 + $0x20c] sm:$0xf]
  %v167 = vld [vmem:[%s1 + $0x210] sm:$0xf]
  %v168 = vld [vmem:[%s1 + $0x214] sm:$0xf]
  %v169 = vld [vmem:[%s1 + $0x218] sm:$0xf]
  %v170 = vld [vmem:[%s1 + $0x21c] sm:$0xf]
  %v171 = vld [vmem:[%s1 + $0x220] sm:$0xf]
  %v172 = vld [vmem:[%s1 + $0x224] sm:$0xf]
  %v173 = vld [vmem:[%s1 + $0x228] sm:$0xf]
  %v174 = vld [vmem:[%s1 + $0x22c] sm:$0xf]
  %v175 = vld [vmem:[%s1 + $0x230] sm:$0xf]
  %v176 = vld [vmem:[%s1 + $0x234] sm:$0xf]
  %v177 = vld [vmem:[%s1 + $0x238] sm:$0xf]
  %v178 = vld [vmem:[%s1 + $0x23c] sm:$0xf]
  %v179 = vld [vmem:[%s2] sm:$0x1]
  %v181 = vlaneseq
  %v182 = vshrl.u32 %v181, 7
  %v183 = vsub.s32 0, %v182
  %v184 = vrot.slane %v179, %v183
  %v206 = vunpack.c.l.b16 %v15
  %v207 = vunpack.c.h.b16 %v15
  %v208 = vunpack.c.l.b16 %v16
  %v209 = vunpack.c.h.b16 %v16
  %v210 = vunpack.c.l.b16 %v17
  %v211 = vunpack.c.h.b16 %v17
  %v212 = vunpack.c.l.b16 %v18
  %v213 = vunpack.c.h.b16 %v18
  %v214 = vunpack.c.l.b16 %v19
  %v215 = vunpack.c.l.b16 %v20
  %v216 = vunpack.c.h.b16 %v20
  %v217 = vunpack.c.l.b16 %v21
  %v218 = vunpack.c.h.b16 %v21
  %v219 = vunpack.c.l.b16 %v22
  %v220 = vunpack.c.h.b16 %v22
  %v221 = vunpack.c.l.b16 %v23
  %v222 = vunpack.c.h.b16 %v23
  %v223 = vunpack.c.l.b16 %v24
  %v224 = vunpack.c.l.b16 %v25
  %v225 = vunpack.c.h.b16 %v25
  %v226 = vunpack.c.l.b16 %v26
  %v227 = vunpack.c.h.b16 %v26
  %v228 = vunpack.c.l.b16 %v27
  %v229 = vunpack.c.h.b16 %v27
  %v230 = vunpack.c.l.b16 %v28
  %v231 = vunpack.c.h.b16 %v28
  %v232 = vunpack.c.l.b16 %v29
  %v233 = vunpack.c.l.b16 %v30
  %v234 = vunpack.c.h.b16 %v30
  %v235 = vunpack.c.l.b16 %v31
  %v236 = vunpack.c.h.b16 %v31
  %v237 = vunpack.c.l.b16 %v32
  %v238 = vunpack.c.h.b16 %v32
  %v239 = vunpack.c.l.b16 %v33
  %v240 = vunpack.c.h.b16 %v33
  %v241 = vunpack.c.l.b16 %v34
  %v242 = vpack.c.b16 %v215, %v206
  %v243 = vpack.c.b16 %v216, %v207
  %v244 = vpack.c.b16 %v217, %v208
  %v245 = vpack.c.b16 %v218, %v209
  %v246 = vpack.c.b16 %v219, %v210
  %v247 = vpack.c.b16 %v220, %v211
  %v248 = vpack.c.b16 %v221, %v212
  %v249 = vpack.c.b16 %v222, %v213
  %v250 = vpack.c.b16 %v223, %v214
  %v251 = vpack.c.b16 %v233, %v224
  %v252 = vpack.c.b16 %v234, %v225
  %v253 = vpack.c.b16 %v235, %v226
  %v254 = vpack.c.b16 %v236, %v227
  %v255 = vpack.c.b16 %v237, %v228
  %v256 = vpack.c.b16 %v238, %v229
  %v257 = vpack.c.b16 %v239, %v230
  %v258 = vpack.c.b16 %v240, %v231
  %v259 = vpack.c.b16 %v241, %v232
  %v422 = vunpack.c.l.b16 %v35
  %v423 = vunpack.c.l.b16 %v36
  %v424 = vunpack.c.l.b16 %v37
  %v425 = vunpack.c.l.b16 %v38
  %v426 = vunpack.c.l.b16 %v39
  %v427 = vunpack.c.l.b16 %v40
  %v428 = vunpack.c.l.b16 %v41
  %v429 = vunpack.c.l.b16 %v42
  %v430 = vunpack.c.l.b16 %v43
  %v431 = vunpack.c.l.b16 %v44
  %v432 = vunpack.c.l.b16 %v45
  %v433 = vunpack.c.l.b16 %v46
  %v434 = vunpack.c.l.b16 %v47
  %v435 = vunpack.c.l.b16 %v48
  %v436 = vunpack.c.l.b16 %v49
  %v437 = vunpack.c.l.b16 %v50
  %v438 = vunpack.c.l.b16 %v51
  %v439 = vunpack.c.l.b16 %v52
  %v440 = vunpack.c.l.b16 %v53
  %v441 = vunpack.c.l.b16 %v54
  %v442 = vunpack.c.l.b16 %v55
  %v443 = vunpack.c.l.b16 %v56
  %v444 = vunpack.c.l.b16 %v57
  %v445 = vunpack.c.l.b16 %v58
  %v446 = vunpack.c.l.b16 %v59
  %v447 = vunpack.c.l.b16 %v60
  %v448 = vunpack.c.l.b16 %v61
  %v449 = vunpack.c.l.b16 %v62
  %v450 = vunpack.c.l.b16 %v63
  %v451 = vunpack.c.l.b16 %v64
  %v452 = vunpack.c.l.b16 %v65
  %v453 = vunpack.c.l.b16 %v66
  %v454 = vunpack.c.l.b16 %v67
  %v455 = vunpack.c.l.b16 %v68
  %v456 = vunpack.c.l.b16 %v69
  %v457 = vunpack.c.l.b16 %v70
  %v458 = vunpack.c.l.b16 %v71
  %v459 = vunpack.c.l.b16 %v72
  %v460 = vunpack.c.l.b16 %v73
  %v461 = vunpack.c.l.b16 %v74
  %v462 = vunpack.c.l.b16 %v75
  %v463 = vunpack.c.l.b16 %v76
  %v464 = vunpack.c.l.b16 %v77
  %v465 = vunpack.c.l.b16 %v78
  %v466 = vunpack.c.l.b16 %v79
  %v467 = vunpack.c.l.b16 %v80
  %v468 = vunpack.c.l.b16 %v81
  %v469 = vunpack.c.l.b16 %v82
  %v470 = vunpack.c.l.b16 %v83
  %v471 = vunpack.c.l.b16 %v84
  %v472 = vunpack.c.l.b16 %v85
  %v473 = vunpack.c.l.b16 %v86
  %v474 = vunpack.c.l.b16 %v87
  %v475 = vunpack.c.l.b16 %v88
  %v476 = vunpack.c.l.b16 %v89
  %v477 = vunpack.c.l.b16 %v90
  %v478 = vunpack.c.l.b16 %v91
  %v479 = vunpack.c.l.b16 %v92
  %v480 = vunpack.c.l.b16 %v93
  %v481 = vunpack.c.l.b16 %v94
  %v482 = vunpack.c.l.b16 %v95
  %v483 = vunpack.c.l.b16 %v96
  %v484 = vunpack.c.l.b16 %v97
  %v485 = vunpack.c.l.b16 %v98
  %v486 = vunpack.c.l.b16 %v99
  %v487 = vunpack.c.l.b16 %v100
  %v488 = vunpack.c.l.b16 %v101
  %v489 = vunpack.c.l.b16 %v102
  %v490 = vunpack.c.l.b16 %v103
  %v491 = vunpack.c.l.b16 %v104
  %v492 = vunpack.c.l.b16 %v105
  %v493 = vunpack.c.l.b16 %v106
  %v494 = vunpack.c.l.b16 %v107
  %v495 = vunpack.c.l.b16 %v108
  %v496 = vunpack.c.l.b16 %v109
  %v497 = vunpack.c.l.b16 %v110
  %v498 = vunpack.c.l.b16 %v111
  %v499 = vunpack.c.l.b16 %v112
  %v500 = vunpack.c.l.b16 %v113
  %v501 = vunpack.c.l.b16 %v114
  %v502 = vunpack.c.l.b16 %v115
  %v503 = vunpack.c.l.b16 %v116
  %v504 = vunpack.c.l.b16 %v117
  %v505 = vunpack.c.l.b16 %v118
  %v506 = vunpack.c.l.b16 %v119
  %v507 = vunpack.c.l.b16 %v120
  %v508 = vunpack.c.l.b16 %v121
  %v509 = vunpack.c.l.b16 %v122
  %v510 = vunpack.c.l.b16 %v123
  %v511 = vunpack.c.l.b16 %v124
  %v512 = vunpack.c.l.b16 %v125
  %v513 = vunpack.c.l.b16 %v126
  %v514 = vunpack.c.l.b16 %v127
  %v515 = vunpack.c.l.b16 %v128
  %v516 = vunpack.c.l.b16 %v129
  %v517 = vunpack.c.l.b16 %v130
  %v518 = vunpack.c.l.b16 %v131
  %v519 = vunpack.c.l.b16 %v132
  %v520 = vunpack.c.l.b16 %v133
  %v521 = vunpack.c.l.b16 %v134
  %v522 = vunpack.c.l.b16 %v135
  %v523 = vunpack.c.l.b16 %v136
  %v524 = vunpack.c.l.b16 %v137
  %v525 = vunpack.c.l.b16 %v138
  %v526 = vunpack.c.l.b16 %v139
  %v527 = vunpack.c.l.b16 %v140
  %v528 = vunpack.c.l.b16 %v141
  %v529 = vunpack.c.l.b16 %v142
  %v530 = vunpack.c.l.b16 %v143
  %v531 = vunpack.c.l.b16 %v144
  %v532 = vunpack.c.l.b16 %v145
  %v533 = vunpack.c.l.b16 %v146
  %v534 = vunpack.c.l.b16 %v147
  %v535 = vunpack.c.l.b16 %v148
  %v536 = vunpack.c.l.b16 %v149
  %v537 = vunpack.c.l.b16 %v150
  %v538 = vunpack.c.l.b16 %v151
  %v539 = vunpack.c.l.b16 %v152
  %v540 = vunpack.c.l.b16 %v153
  %v541 = vunpack.c.l.b16 %v154
  %v542 = vunpack.c.l.b16 %v155
  %v543 = vunpack.c.l.b16 %v156
  %v544 = vunpack.c.l.b16 %v157
  %v545 = vunpack.c.l.b16 %v158
  %v546 = vunpack.c.l.b16 %v159
  %v547 = vunpack.c.l.b16 %v160
  %v548 = vunpack.c.l.b16 %v161
  %v549 = vunpack.c.l.b16 %v162
  %v550 = vunpack.c.l.b16 %v163
  %v551 = vunpack.c.l.b16 %v164
  %v552 = vunpack.c.l.b16 %v165
  %v553 = vunpack.c.l.b16 %v166
  %v554 = vunpack.c.l.b16 %v167
  %v555 = vunpack.c.l.b16 %v168
  %v556 = vunpack.c.l.b16 %v169
  %v557 = vunpack.c.l.b16 %v170
  %v558 = vunpack.c.l.b16 %v171
  %v559 = vunpack.c.l.b16 %v172
  %v560 = vunpack.c.l.b16 %v173
  %v561 = vunpack.c.l.b16 %v174
  %v562 = vunpack.c.l.b16 %v175
  %v563 = vunpack.c.l.b16 %v176
  %v564 = vunpack.c.l.b16 %v177
  %v565 = vunpack.c.l.b16 %v178
  %v566 = vpack.c.b16 %v423, %v422
  %v567 = vpack.c.b16 %v425, %v424
  %v568 = vpack.c.b16 %v427, %v426
  %v569 = vpack.c.b16 %v429, %v428
  %v570 = vpack.c.b16 %v431, %v430
  %v571 = vpack.c.b16 %v433, %v432
  %v572 = vpack.c.b16 %v435, %v434
  %v573 = vpack.c.b16 %v437, %v436
  %v574 = vpack.c.b16 %v439, %v438
  %v575 = vpack.c.b16 %v441, %v440
  %v576 = vpack.c.b16 %v443, %v442
  %v577 = vpack.c.b16 %v445, %v444
  %v578 = vpack.c.b16 %v447, %v446
  %v579 = vpack.c.b16 %v449, %v448
  %v580 = vpack.c.b16 %v451, %v450
  %v581 = vpack.c.b16 %v453, %v452
  %v582 = vpack.c.b16 %v455, %v454
  %v583 = vpack.c.b16 %v457, %v456
  %v584 = vpack.c.b16 %v459, %v458
  %v585 = vpack.c.b16 %v461, %v460
  %v586 = vpack.c.b16 %v463, %v462
  %v587 = vpack.c.b16 %v465, %v464
  %v588 = vpack.c.b16 %v467, %v466
  %v589 = vpack.c.b16 %v469, %v468
  %v590 = vpack.c.b16 %v471, %v470
  %v591 = vpack.c.b16 %v473, %v472
  %v592 = vpack.c.b16 %v475, %v474
  %v593 = vpack.c.b16 %v477, %v476
  %v594 = vpack.c.b16 %v479, %v478
  %v595 = vpack.c.b16 %v481, %v480
  %v596 = vpack.c.b16 %v483, %v482
  %v597 = vpack.c.b16 %v485, %v484
  %v598 = vpack.c.b16 %v487, %v486
  %v599 = vpack.c.b16 %v489, %v488
  %v600 = vpack.c.b16 %v491, %v490
  %v601 = vpack.c.b16 %v493, %v492
  %v602 = vpack.c.b16 %v495, %v494
  %v603 = vpack.c.b16 %v497, %v496
  %v604 = vpack.c.b16 %v499, %v498
  %v605 = vpack.c.b16 %v501, %v500
  %v606 = vpack.c.b16 %v503, %v502
  %v607 = vpack.c.b16 %v505, %v504
  %v608 = vpack.c.b16 %v507, %v506
  %v609 = vpack.c.b16 %v509, %v508
  %v610 = vpack.c.b16 %v511, %v510
  %v611 = vpack.c.b16 %v513, %v512
  %v612 = vpack.c.b16 %v515, %v514
  %v613 = vpack.c.b16 %v517, %v516
  %v614 = vpack.c.b16 %v519, %v518
  %v615 = vpack.c.b16 %v521, %v520
  %v616 = vpack.c.b16 %v523, %v522
  %v617 = vpack.c.b16 %v525, %v524
  %v618 = vpack.c.b16 %v527, %v526
  %v619 = vpack.c.b16 %v529, %v528
  %v620 = vpack.c.b16 %v531, %v530
  %v621 = vpack.c.b16 %v533, %v532
  %v622 = vpack.c.b16 %v535, %v534
  %v623 = vpack.c.b16 %v537, %v536
  %v624 = vpack.c.b16 %v539, %v538
  %v625 = vpack.c.b16 %v541, %v540
  %v626 = vpack.c.b16 %v543, %v542
  %v627 = vpack.c.b16 %v545, %v544
  %v628 = vpack.c.b16 %v547, %v546
  %v629 = vpack.c.b16 %v549, %v548
  %v630 = vpack.c.b16 %v551, %v550
  %v631 = vpack.c.b16 %v553, %v552
  %v632 = vpack.c.b16 %v555, %v554
  %v633 = vpack.c.b16 %v557, %v556
  %v634 = vpack.c.b16 %v559, %v558
  %v635 = vpack.c.b16 %v561, %v560
  %v636 = vpack.c.b16 %v563, %v562
  %v637 = vpack.c.b16 %v565, %v564
  %710 = vmatprep.subr.bf16.mxu0 0
  %711 = vmatpush1.bf16.msra.mxu0 %v566
  %712 = vmatprep.subr.bf16.mxu0 0
  %713 = vmatpush1.bf16.msra.mxu0 %v567
  %714 = vmatprep.subr.bf16.mxu0 0
  %715 = vmatpush1.bf16.msra.mxu0 %v568
  %716 = vmatprep.subr.bf16.mxu0 0
  %717 = vmatpush1.bf16.msra.mxu0 %v569
  %718 = vmatprep.subr.bf16.mxu0 0
  %719 = vmatpush1.bf16.msra.mxu0 %v570
  %720 = vmatprep.subr.bf16.mxu0 0
  %721 = vmatpush1.bf16.msra.mxu0 %v571
  %722 = vmatprep.subr.bf16.mxu0 0
  %723 = vmatpush1.bf16.msra.mxu0 %v572
  %724 = vmatprep.subr.bf16.mxu0 0
  %725 = vmatpush1.bf16.msra.mxu0 %v573
  %726 = vmatprep.subr.bf16.mxu0 0
  %727 = vmatpush1.bf16.msra.mxu0 %v574
  %728 = vmatprep.subr.bf16.mxu0 0
  %729 = vmatpush1.bf16.msra.mxu0 %v575
  %730 = vmatprep.subr.bf16.mxu0 0
  %731 = vmatpush1.bf16.msra.mxu0 %v576
  %732 = vmatprep.subr.bf16.mxu0 0
  %733 = vmatpush1.bf16.msra.mxu0 %v577
  %734 = vmatprep.subr.bf16.mxu0 0
  %735 = vmatpush1.bf16.msra.mxu0 %v578
  %736 = vmatprep.subr.bf16.mxu0 0
  %737 = vmatpush1.bf16.msra.mxu0 %v579
  %738 = vmatprep.subr.bf16.mxu0 0
  %739 = vmatpush1.bf16.msra.mxu0 %v580
  %740 = vmatprep.subr.bf16.mxu0 0
  %741 = vmatpush1.bf16.msra.mxu0 %v581
  %742 = vmatprep.mubr.bf16.mxu0 %v243
  %743 = vmatmul.mubr.bf16.gmra.mrb[0].mxu0 %v242
  %v744 = vpop.f32.mrb[0].mxu0
  %v745 = vadd.f32 %v184, %v744
  %v746 = vpop.f32.mrb[0].mxu0
  %v747 = vpop.f32.mrb[0].mxu0
  %v748 = vadd.f32 %v184, %v747
  %v749 = vpop.f32.mrb[0].mxu0
  %750 = vmatprep.mubr.bf16.mxu0 %v252
  %751 = vmatmul.mubr.bf16.gmra.mrb[0].mxu0 %v251
  %v752 = vpop.f32.mrb[0].mxu0
  %v753 = vadd.f32 %v184, %v752
  %v754 = vpop.f32.mrb[0].mxu0
  %v755 = vpop.f32.mrb[0].mxu0
  %v756 = vadd.f32 %v184, %v755
  %v757 = vpop.f32.mrb[0].mxu0
  %758 = vdwg.mxu0
  %759 = vmatprep.subr.bf16.mxu0 0
  %760 = vmatpush1.bf16.msra.mxu0 %v582
  %761 = vmatprep.subr.bf16.mxu0 0
  %762 = vmatpush1.bf16.msra.mxu0 %v583
  %763 = vmatprep.subr.bf16.mxu0 0
  %764 = vmatpush1.bf16.msra.mxu0 %v584
  %765 = vmatprep.subr.bf16.mxu0 0
  %766 = vmatpush1.bf16.msra.mxu0 %v585
  %767 = vmatprep.subr.bf16.mxu0 0
  %768 = vmatpush1.bf16.msra.mxu0 %v586
  %769 = vmatprep.subr.bf16.mxu0 0
  %770 = vmatpush1.bf16.msra.mxu0 %v587
  %771 = vmatprep.subr.bf16.mxu0 0
  %772 = vmatpush1.bf16.msra.mxu0 %v588
  %773 = vmatprep.subr.bf16.mxu0 0
  %774 = vmatpush1.bf16.msra.mxu0 %v589
  %775 = vmatprep.subr.bf16.mxu0 0
  %776 = vmatpush1.bf16.msra.mxu0 %v590
  %777 = vmatprep.subr.bf16.mxu0 0
  %778 = vmatpush1.bf16.msra.mxu0 %v591
  %779 = vmatprep.subr.bf16.mxu0 0
  %780 = vmatpush1.bf16.msra.mxu0 %v592
  %781 = vmatprep.subr.bf16.mxu0 0
  %782 = vmatpush1.bf16.msra.mxu0 %v593
  %783 = vmatprep.subr.bf16.mxu0 0
  %784 = vmatpush1.bf16.msra.mxu0 %v594
  %785 = vmatprep.subr.bf16.mxu0 0
  %786 = vmatpush1.bf16.msra.mxu0 %v595
  %787 = vmatprep.subr.bf16.mxu0 0
  %788 = vmatpush1.bf16.msra.mxu0 %v596
  %789 = vmatprep.subr.bf16.mxu0 0
  %790 = vmatpush1.bf16.msra.mxu0 %v597
  %791 = vmatprep.mubr.bf16.mxu0 %v245
  %792 = vmatmul.mubr.bf16.gmra.mrb[0].mxu0 %v244
  %v793 = vpop.f32.mrb[0].mxu0
  %v794 = vadd.f32 %v745, %v793
  %v795 = vpop.f32.mrb[0].mxu0
  %v796 = vpop.f32.mrb[0].mxu0
  %v797 = vadd.f32 %v748, %v796
  %v798 = vpop.f32.mrb[0].mxu0
  %799 = vmatprep.mubr.bf16.mxu0 %v254
  %800 = vmatmul.mubr.bf16.gmra.mrb[0].mxu0 %v253
  %v801 = vpop.f32.mrb[0].mxu0
  %v802 = vadd.f32 %v753, %v801
  %v803 = vpop.f32.mrb[0].mxu0
  %v804 = vpop.f32.mrb[0].mxu0
  %v805 = vadd.f32 %v756, %v804
  %v806 = vpop.f32.mrb[0].mxu0
  %807 = vdwg.mxu0
  %808 = vmatprep.subr.bf16.mxu0 0
  %809 = vmatpush1.bf16.msra.mxu0 %v598
  %810 = vmatprep.subr.bf16.mxu0 0
  %811 = vmatpush1.bf16.msra.mxu0 %v599
  %812 = vmatprep.subr.bf16.mxu0 0
  %813 = vmatpush1.bf16.msra.mxu0 %v600
  %814 = vmatprep.subr.bf16.mxu0 0
  %815 = vmatpush1.bf16.msra.mxu0 %v601
  %816 = vmatprep.subr.bf16.mxu0 0
  %817 = vmatpush1.bf16.msra.mxu0 %v602
  %818 = vmatprep.subr.bf16.mxu0 0
  %819 = vmatpush1.bf16.msra.mxu0 %v603
  %820 = vmatprep.subr.bf16.mxu0 0
  %821 = vmatpush1.bf16.msra.mxu0 %v604
  %822 = vmatprep.subr.bf16.mxu0 0
  %823 = vmatpush1.bf16.msra.mxu0 %v605
  %824 = vmatprep.subr.bf16.mxu0 0
  %825 = vmatpush1.bf16.msra.mxu0 %v606
  %826 = vmatprep.subr.bf16.mxu0 0
  %827 = vmatpush1.bf16.msra.mxu0 %v607
  %828 = vmatprep.subr.bf16.mxu0 0
  %829 = vmatpush1.bf16.msra.mxu0 %v608
  %830 = vmatprep.subr.bf16.mxu0 0
  %831 = vmatpush1.bf16.msra.mxu0 %v609
  %832 = vmatprep.subr.bf16.mxu0 0
  %833 = vmatpush1.bf16.msra.mxu0 %v610
  %834 = vmatprep.subr.bf16.mxu0 0
  %835 = vmatpush1.bf16.msra.mxu0 %v611
  %836 = vmatprep.subr.bf16.mxu0 0
  %837 = vmatpush1.bf16.msra.mxu0 %v612
  %838 = vmatprep.subr.bf16.mxu0 0
  %839 = vmatpush1.bf16.msra.mxu0 %v613
  %840 = vmatprep.mubr.bf16.mxu0 %v247
  %841 = vmatmul.mubr.bf16.gmra.mrb[0].mxu0 %v246
  %v842 = vpop.f32.mrb[0].mxu0
  %v843 = vadd.f32 %v794, %v842
  %v844 = vpop.f32.mrb[0].mxu0
  %v845 = vpop.f32.mrb[0].mxu0
  %v846 = vadd.f32 %v797, %v845
  %v847 = vpop.f32.mrb[0].mxu0
  %848 = vmatprep.mubr.bf16.mxu0 %v256
  %849 = vmatmul.mubr.bf16.gmra.mrb[0].mxu0 %v255
  %v850 = vpop.f32.mrb[0].mxu0
  %v851 = vadd.f32 %v802, %v850
  %v852 = vpop.f32.mrb[0].mxu0
  %v853 = vpop.f32.mrb[0].mxu0
  %v854 = vadd.f32 %v805, %v853
  %v855 = vpop.f32.mrb[0].mxu0
  %856 = vdwg.mxu0
  %857 = vmatprep.subr.bf16.mxu0 0
  %858 = vmatpush1.bf16.msra.mxu0 %v614
  %859 = vmatprep.subr.bf16.mxu0 0
  %860 = vmatpush1.bf16.msra.mxu0 %v615
  %861 = vmatprep.subr.bf16.mxu0 0
  %862 = vmatpush1.bf16.msra.mxu0 %v616
  %863 = vmatprep.subr.bf16.mxu0 0
  %864 = vmatpush1.bf16.msra.mxu0 %v617
  %865 = vmatprep.subr.bf16.mxu0 0
  %866 = vmatpush1.bf16.msra.mxu0 %v618
  %867 = vmatprep.subr.bf16.mxu0 0
  %868 = vmatpush1.bf16.msra.mxu0 %v619
  %869 = vmatprep.subr.bf16.mxu0 0
  %870 = vmatpush1.bf16.msra.mxu0 %v620
  %871 = vmatprep.subr.bf16.mxu0 0
  %872 = vmatpush1.bf16.msra.mxu0 %v621
  %873 = vmatprep.subr.bf16.mxu0 0
  %874 = vmatpush1.bf16.msra.mxu0 %v622
  %875 = vmatprep.subr.bf16.mxu0 0
  %876 = vmatpush1.bf16.msra.mxu0 %v623
  %877 = vmatprep.subr.bf16.mxu0 0
  %878 = vmatpush1.bf16.msra.mxu0 %v624
  %879 = vmatprep.subr.bf16.mxu0 0
  %880 = vmatpush1.bf16.msra.mxu0 %v625
  %881 = vmatprep.subr.bf16.mxu0 0
  %882 = vmatpush1.bf16.msra.mxu0 %v626
  %883 = vmatprep.subr.bf16.mxu0 0
  %884 = vmatpush1.bf16.msra.mxu0 %v627
  %885 = vmatprep.subr.bf16.mxu0 0
  %886 = vmatpush1.bf16.msra.mxu0 %v628
  %887 = vmatprep.subr.bf16.mxu0 0
  %888 = vmatpush1.bf16.msra.mxu0 %v629
  %889 = vmatprep.mubr.bf16.mxu0 %v249
  %890 = vmatmul.mubr.bf16.gmra.mrb[0].mxu0 %v248
  %v891 = vpop.f32.mrb[0].mxu0
  %v892 = vadd.f32 %v843, %v891
  %v893 = vpop.f32.mrb[0].mxu0
  %v894 = vpop.f32.mrb[0].mxu0
  %v895 = vadd.f32 %v846, %v894
  %v896 = vpop.f32.mrb[0].mxu0
  %897 = vmatprep.mubr.bf16.mxu0 %v258
  %898 = vmatmul.mubr.bf16.gmra.mrb[0].mxu0 %v257
  %v899 = vpop.f32.mrb[0].mxu0
  %v900 = vadd.f32 %v851, %v899
  %v901 = vpop.f32.mrb[0].mxu0
  %v902 = vpop.f32.mrb[0].mxu0
  %v903 = vadd.f32 %v854, %v902
  %v904 = vpop.f32.mrb[0].mxu0
  %905 = vdwg.mxu0
  %906 = vmatprep.subr.bf16.mxu0 0
  %907 = vmatpush1.bf16.msra.mxu0 %v630
  %908 = vmatprep.subr.bf16.mxu0 0
  %909 = vmatpush1.bf16.msra.mxu0 %v631
  %910 = vmatprep.subr.bf16.mxu0 0
  %911 = vmatpush1.bf16.msra.mxu0 %v632
  %912 = vmatprep.subr.bf16.mxu0 0
  %913 = vmatpush1.bf16.msra.mxu0 %v633
  %914 = vmatprep.subr.bf16.mxu0 0
  %915 = vmatpush1.bf16.msra.mxu0 %v634
  %916 = vmatprep.subr.bf16.mxu0 0
  %917 = vmatpush1.bf16.msra.mxu0 %v635
  %918 = vmatprep.subr.bf16.mxu0 0
  %919 = vmatpush1.bf16.msra.mxu0 %v636
  %920 = vmatprep.subr.bf16.mxu0 0
  %921 = vmatpush1.bf16.msra.mxu0 %v637
  %922 = vmatprep.subr.bf16.mxu0 0
  %923 = vmatpush1.bf16.msra.mxu0 0
  %924 = vmatprep.subr.bf16.mxu0 0
  %925 = vmatpush1.bf16.msra.mxu0 0
  %926 = vmatprep.subr.bf16.mxu0 0
  %927 = vmatpush1.bf16.msra.mxu0 0
  %928 = vmatprep.subr.bf16.mxu0 0
  %929 = vmatpush1.bf16.msra.mxu0 0
  %930 = vmatprep.subr.bf16.mxu0 0
  %931 = vmatpush1.bf16.msra.mxu0 0
  %932 = vmatprep.subr.bf16.mxu0 0
  %933 = vmatpush1.bf16.msra.mxu0 0
  %934 = vmatprep.subr.bf16.mxu0 0
  %935 = vmatpush1.bf16.msra.mxu0 0
  %936 = vmatprep.subr.bf16.mxu0 0
  %937 = vmatpush1.bf16.msra.mxu0 0
  %938 = vmatprep.mubr.bf16.mxu0 0
  %939 = vmatmul.mubr.bf16.gmra.mrb[0].mxu0 %v250
  %v940 = vpop.f32.mrb[0].mxu0
  %v941 = vadd.f32 %v892, %v940
  %v942 = vpop.f32.mrb[0].mxu0
  %v943 = vpop.f32.mrb[0].mxu0
  %v944 = vadd.f32 %v895, %v943
  %v945 = vpop.f32.mrb[0].mxu0
  %946 = vmatprep.mubr.bf16.mxu0 0
  %947 = vmatmul.mubr.bf16.gmra.mrb[0].mxu0 %v259
  %v948 = vpop.f32.mrb[0].mxu0
  %v949 = vadd.f32 %v900, %v948
  %v950 = vpop.f32.mrb[0].mxu0
  %v951 = vpop.f32.mrb[0].mxu0
  %v952 = vadd.f32 %v903, %v951
  %v953 = vpop.f32.mrb[0].mxu0
  %954 = vdwg.mxu0
  %v955 = vmax.f32 %v941, 0.0
  %v956 = vmax.f32 %v944, 0.0
  %v957 = vmax.f32 %v949, 0.0
  %v958 = vmax.f32 %v952, 0.0
  %v959 = vpack.c.bf16 %v956, %v955
  %v960 = vpack.c.bf16 %v958, %v957
  %v963 = vunpack.c.l.b16 %v959
  %v964 = vunpack.c.h.b16 %v959
  %v965 = vunpack.c.l.b16 %v960
  %v966 = vunpack.c.h.b16 %v960
  %v967 = vpack.c.b16 %v963, %v963
  %v968 = vpack.c.b16 %v964, %v964
  %v969 = vpack.c.b16 %v965, %v965
  %v970 = vpack.c.b16 %v966, %v966
  %975 = vst [vmem:[%s3] sm:$0xf] %v967
  %976 = vst [vmem:[%s3 + $0x4] sm:$0xf] %v968
  %977 = vst [vmem:[%s3 + $0x8] sm:$0xf] %v969
  %978 = vst [vmem:[%s3 + $0xc] sm:$0xf] %v970
  // Predicated region
  $region14: #{ae_cifar_forward.9} parent=0 // pred_check
    _
  $region15: #{ae_cifar_forward.9} parent=0 // pred_check_branch
    %980 = sbr.rel (0) target = $region17
  $region16: #{ae_cifar_forward.9} parent=0 // pred_region
    _
  $region17: #{ae_cifar_forward.9} parent=0 // pred_fallthru
    _
  // Predicated region
  $region18: #{ae_cifar_forward.9} parent=0 // pred_check
    _
  $region19: #{ae_cifar_forward.9} parent=0 // pred_check_branch
    %982 = sbr.rel (0) target = $region21
  $region20: #{ae_cifar_forward.9} parent=0 // pred_region
    _
  $region21: #{ae_cifar_forward.9} parent=0 // pred_fallthru
    _

// kernel: tile.8
$region0: #{tile.8}
  #allocation0 [shape = 's32[1]{0}', space=sflag, size = 0x4, scoped, tag = 'scoped memory for tile.8']
  %s0 = inlined_call_operand.vmem [shape: f32[128], index: 0, kind: input, shape index: {}]
  %s1 = inlined_call_operand.vmem [shape: f32[16,128], index: 1, kind: output, shape index: {}]
  // Predicated region
  $region2: #{tile.8} parent=0 // pred_check
    _
  $region3: #{tile.8} parent=0 // pred_check_branch
    %3 = sbr.rel (0) target = $region5
  $region4: #{tile.8} parent=0 // pred_region
    _
  $region5: #{tile.8} parent=0 // pred_fallthru
    _
  %v4 = vld [vmem:[%s0] ss:$0 sm:$0xff]
  %5 = vst [vmem:[%s1] sm:$0xff] %v4
  %s6 = scalar_lea.vmem %s1, 8
  %7 = vst [vmem:[%s6] sm:$0xff] %v4

// kernel: ae_cifar_forward.11
$region0: #{ae_cifar_forward.11}
  #allocation0 [shape = 'u32[]', space=smem, size = 0x4, offset = 0x4, fixed_abs, tag = 'smem constant byte address 0x4 - core index']
  #allocation1 [shape = 'u32[144,128]{1,0:T(1,128)}', space=vmem, size = 0x12000, scoped, tag = 'internal scratch']
  %s0 = inlined_call_operand.vmem [shape: bf16[4,32,512], index: 0, kind: input, shape index: {}]
  %s1 = inlined_call_operand.vmem [shape: bf16[4,512,128], index: 1, kind: input, shape index: {}]
  %s2 = inlined_call_operand.vmem [shape: f32[1,128], index: 2, kind: input, shape index: {}]
  %s3 = inlined_call_operand.vmem [shape: bf16[4,32,128], index: 3, kind: output, shape index: {}]
  %s4 = sld [smem:[#allocation0]]
  $region45: #{ae_cifar_forward.11} parent=0
    _
  %s6 = ssub.s32 1, %s4
  %s7 = scalar_select 0, %s6, %s4
  loop: start=0, step=1, limit=6
  $region2: #{ae_cifar_forward.11} parent=0 // loop_pre_header
    _
  $region3: #{ae_cifar_forward.11} parent=0 // loop_header
    %s9 = sphi 0, %s13
    %p10 = scmp.ge.s32.totalorder %s9, 6
    %s19 = sphi 0, %s21
    %s22 = sphi 0, %s19
    %s23 = sphi 0, %s22
    %s39 = sphi 0, %s23
    %s45 = sphi 0, %s47
    %s48 = sphi 0, %s45
    %s49 = sphi 0, %s48
    %s65 = sphi 0, %s49
    %s69 = sphi 0, %s69
    %s71 = sphi 0, %s69
    %s72 = sphi 0, %s71
    %s86 = sphi 0, %s72
    %s92 = sphi 0, %s94
    %s95 = sphi 0, %s92
    %s96 = sphi 0, %s95
    %s112 = sphi 0, %s96
  $region4: #{ae_cifar_forward.11} parent=0 // loop_header_branch
    %12 = sbr.rel (%p10) target = $region8
  $region5: #{ae_cifar_forward.11} parent=0 // loop_body
    %s14 = ssub.s32 %s9, 1
    %s15 = ssub.s32 %s9, 2
    %s16 = sadd.s32 %s9, 1
    %s17 = ssub.s32 %s9, %s16
    %p18 = scmp.eq.s32.totalorder %s17, 0
    %s20 = sadd.s32 %s19, 1
    %s21 = scalar_select %p18, %s19, %s20
    %p24 = pneg %p18
    %p25 = scmp.eq.s32.totalorder %s9, 3
    %p26 = por %p24, %p25
    %p27 = scmp.ne.s32.totalorder %s19, %s22
    %p28 = scmp.eq.s32.totalorder %s9, 0
    %p29 = por %p27, %p28
    %p30 = scmp.ne.s32.totalorder %s19, %s22
    %p31 = scmp.eq.s32.totalorder %s14, 3
    %p32 = por %p30, %p31
    %p33 = scmp.ne.s32.totalorder %s22, %s23
    %p34 = scmp.eq.s32.totalorder %s14, 0
    %p35 = por %p33, %p34
    %p36 = scmp.ne.s32.totalorder %s22, %s23
    %p37 = scmp.eq.s32.totalorder %s15, 3
    %p38 = por %p36, %p37
    %p40 = scmp.ne.s32.totalorder %s23, %s39
    %p41 = scmp.eq.s32.totalorder %s15, 0
    %p42 = por %p40, %p41
    %s43 = ssub.s32 %s9, %s16
    %p44 = scmp.eq.s32.totalorder %s43, 0
    %s46 = sadd.s32 %s45, 1
    %s47 = scalar_select %p44, %s45, %s46
    %p50 = pneg %p44
    %p51 = scmp.eq.s32.totalorder %s9, 3
    %p52 = por %p50, %p51
    %p53 = scmp.ne.s32.totalorder %s45, %s48
    %p54 = scmp.eq.s32.totalorder %s9, 0
    %p55 = por %p53, %p54
    %p56 = scmp.ne.s32.totalorder %s45, %s48
    %p57 = scmp.eq.s32.totalorder %s14, 3
    %p58 = por %p56, %p57
    %p59 = scmp.ne.s32.totalorder %s48, %s49
    %p60 = scmp.eq.s32.totalorder %s14, 0
    %p61 = por %p59, %p60
    %p62 = scmp.ne.s32.totalorder %s48, %s49
    %p63 = scmp.eq.s32.totalorder %s15, 3
    %p64 = por %p62, %p63
    %p66 = scmp.ne.s32.totalorder %s49, %s65
    %p67 = scmp.eq.s32.totalorder %s15, 0
    %p68 = por %p66, %p67
    %s70 = sadd.s32 %s69, 1
    %p73 = scmp.eq.s32.totalorder %s9, 3
    %p74 = scmp.ne.s32.totalorder %s69, %s71
    %p75 = scmp.eq.s32.totalorder %s9, 0
    %p76 = por %p74, %p75
    %p77 = scmp.ne.s32.totalorder %s69, %s71
    %p78 = scmp.eq.s32.totalorder %s14, 3
    %p79 = por %p77, %p78
    %p80 = scmp.ne.s32.totalorder %s71, %s72
    %p81 = scmp.eq.s32.totalorder %s14, 0
    %p82 = por %p80, %p81
    %p83 = scmp.ne.s32.totalorder %s71, %s72
    %p84 = scmp.eq.s32.totalorder %s15, 3
    %p85 = por %p83, %p84
    %p87 = scmp.ne.s32.totalorder %s72, %s86
    %p88 = scmp.eq.s32.totalorder %s15, 0
    %p89 = por %p87, %p88
    %s90 = ssub.s32 %s9, %s16
    %p91 = scmp.eq.s32.totalorder %s90, 0
    %s93 = sadd.s32 %s92, 1
    %s94 = scalar_select %p91, %s92, %s93
    %p97 = pneg %p91
    %p98 = scmp.eq.s32.totalorder %s9, 3
    %p99 = por %p97, %p98
    %p100 = scmp.ne.s32.totalorder %s92, %s95
    %p101 = scmp.eq.s32.totalorder %s9, 0
    %p102 = por %p100, %p101
    %p103 = scmp.ne.s32.totalorder %s92, %s95
    %p104 = scmp.eq.s32.totalorder %s14, 3
    %p105 = por %p103, %p104
    %p106 = scmp.ne.s32.totalorder %s95, %s96
    %p107 = scmp.eq.s32.totalorder %s14, 0
    %p108 = por %p106, %p107
    %p109 = scmp.ne.s32.totalorder %s95, %s96
    %p110 = scmp.eq.s32.totalorder %s15, 3
    %p111 = por %p109, %p110
    %p113 = scmp.ne.s32.totalorder %s96, %s112
    %p114 = scmp.eq.s32.totalorder %s15, 0
    %p115 = por %p113, %p114
    %p116 = scmp.le.s32.totalorder 1, %s9
    %p117 = scmp.lt.s32.totalorder %s9, 5
    %p118 = pnand %p116, %p117
    %p119 = pneg %p118
    // Predicated region
    $region9: #{ae_cifar_forward.11} parent=5 // pred_check
      _
    $region10: #{ae_cifar_forward.11} parent=5 // pred_check_branch
      %121 = sbr.rel (%p118) target = $region12
    $region11: #{ae_cifar_forward.11} parent=5 // pred_region
      %s122 = ssub.s32 %s9, 1
      // Predicated region
      $region13: #{ae_cifar_forward.11} parent=11 // pred_check
        %p123 = pneg %p82
      $region14: #{ae_cifar_forward.11} parent=11 // pred_check_branch
        %125 = sbr.rel (%p123) target = $region16
      $region15: #{ae_cifar_forward.11} parent=11 // pred_region
        _
      $region16: #{ae_cifar_forward.11} parent=11 // pred_fallthru
        _
    $region12: #{ae_cifar_forward.11} parent=5 // pred_fallthru
      _
    %p126 = scmp.lt.s32.totalorder %s9, 4
    // Predicated region
    $region17: #{ae_cifar_forward.11} parent=5 // pred_check
      %p127 = pneg %p126
    $region18: #{ae_cifar_forward.11} parent=5 // pred_check_branch
      %129 = sbr.rel (%p127) target = $region20
    $region19: #{ae_cifar_forward.11} parent=5 // pred_region
      // Predicated region
      $region21: #{ae_cifar_forward.11} parent=19 // pred_check
        %p130 = pneg %p29
      $region22: #{ae_cifar_forward.11} parent=19 // pred_check_branch
        %132 = sbr.rel (%p130) target = $region24
      $region23: #{ae_cifar_forward.11} parent=19 // pred_region
        %p133 = scmp.lt.s32.totalorder %s9, 3
        %s134 = scalar_select %p133, %s9, 3
        %s135 = smul.addr %s134, 16
        %s136 = smul.addr %s135, 4
        %s137 = scalar_lea.vmem %s0, %s136
      $region24: #{ae_cifar_forward.11} parent=19 // pred_fallthru
        _
      // Predicated region
      $region25: #{ae_cifar_forward.11} parent=19 // pred_check
        %p138 = pneg %p55
      $region26: #{ae_cifar_forward.11} parent=19 // pred_check_branch
        %140 = sbr.rel (%p138) target = $region28
      $region27: #{ae_cifar_forward.11} parent=19 // pred_region
        %p141 = scmp.lt.s32.totalorder %s9, 3
        %s142 = scalar_select %p141, %s9, 3
        %s143 = smul.addr %s142, 64
        %s144 = smul.addr %s143, 4
        %s145 = scalar_lea.vmem %s1, %s144
      $region28: #{ae_cifar_forward.11} parent=19 // pred_fallthru
        _
    $region20: #{ae_cifar_forward.11} parent=5 // pred_fallthru
      _
    %p146 = scmp.le.s32.totalorder 1, %s9
    %p147 = scmp.lt.s32.totalorder %s9, 5
    %p148 = pnand %p146, %p147
    %p149 = pneg %p148
    // Predicated region
    $region29: #{ae_cifar_forward.11} parent=5 // pred_check
      _
    $region30: #{ae_cifar_forward.11} parent=5 // pred_check_branch
      %151 = sbr.rel (%p148) target = $region32
    $region31: #{ae_cifar_forward.11} parent=5 // pred_region
      %s152 = ssub.s32 %s9, 1
      %p153 = scmp.lt.s32.totalorder %s14, 3
      %s154 = scalar_select %p153, %s14, 3
      %s155 = smul.addr %s154, 16
      %s156 = smul.addr %s155, 4
      %s157 = scalar_lea.vmem %s0, %s156
      %p158 = pneg %p35
      %p159 = pneg %p32
      %p160 = scmp.lt.s32.totalorder %s14, 3
      %s161 = scalar_select %p160, %s14, 3
      %s162 = smul.addr %s161, 64
      %s163 = smul.addr %s162, 4
      %s164 = scalar_lea.vmem %s1, %s163
      %p165 = pneg %p61
      %p166 = pneg %p58
      %p167 = pneg %p82
      %p168 = pneg %p79
      %p169 = pneg %p108
      %p170 = pneg %p105
      %p171 = scmp.lt.s32.totalorder %s14, 3
      %s172 = scalar_select %p171, %s14, 3
      %s173 = smul.addr %s172, 4
      %s174 = smul.addr %s173, 4
      %s175 = scalar_lea.vmem %s3, %s174
      %p176 = scmp.lt.s32.totalorder %s14, 3
      %s177 = scalar_select %p176, %s14, 3
      %s178 = smul.addr %s177, 16
      %s179 = smul.addr %s178, 4
      %s180 = scalar_lea.vmem %s0, %s179
      %p181 = scmp.lt.s32.totalorder %s14, 3
      %s182 = scalar_select %p181, %s14, 3
      %s183 = smul.addr %s182, 64
      %s184 = smul.addr %s183, 4
      %s185 = scalar_lea.vmem %s1, %s184
      %p186 = scmp.lt.s32.totalorder %s14, 3
      %s187 = scalar_select %p186, %s14, 3
      %s188 = smul.addr %s187, 4
      %s189 = smul.addr %s188, 4
      %s190 = scalar_lea.vmem %s3, %s189
      %v192 = vld [vmem:[%s180] sm:$0xff]
      %v193 = vld [vmem:[%s180 + $0x8] sm:$0xff]
      %v194 = vld [vmem:[%s180 + $0x10] sm:$0xff]
      %v195 = vld [vmem:[%s180 + $0x18] sm:$0xff]
      %v196 = vld [vmem:[%s180 + $0x20] sm:$0xff]
      %v197 = vld [vmem:[%s180 + $0x28] sm:$0xff]
      %v198 = vld [vmem:[%s180 + $0x30] sm:$0xff]
      %v199 = vld [vmem:[%s180 + $0x38] sm:$0xff]
      %v200 = vld [vmem:[%s185] sm:$0xf]
      %v201 = vld [vmem:[%s185 + $0x4] sm:$0xf]
      %v202 = vld [vmem:[%s185 + $0x8] sm:$0xf]
      %v203 = vld [vmem:[%s185 + $0xc] sm:$0xf]
      %v204 = vld [vmem:[%s185 + $0x10] sm:$0xf]
      %v205 = vld [vmem:[%s185 + $0x14] sm:$0xf]
      %v206 = vld [vmem:[%s185 + $0x18] sm:$0xf]
      %v207 = vld [vmem:[%s185 + $0x1c] sm:$0xf]
      %v208 = vld [vmem:[%s185 + $0x20] sm:$0xf]
      %v209 = vld [vmem:[%s185 + $0x24] sm:$0xf]
      %v210 = vld [vmem:[%s185 + $0x28] sm:$0xf]
      %v211 = vld [vmem:[%s185 + $0x2c] sm:$0xf]
      %v212 = vld [vmem:[%s185 + $0x30] sm:$0xf]
      %v213 = vld [vmem:[%s185 + $0x34] sm:$0xf]
      %v214 = vld [vmem:[%s185 + $0x38] sm:$0xf]
      %v215 = vld [vmem:[%s185 + $0x3c] sm:$0xf]
      %v216 = vld [vmem:[%s185 + $0x40] sm:$0xf]
      %v217 = vld [vmem:[%s185 + $0x44] sm:$0xf]
      %v218 = vld [vmem:[%s185 + $0x48] sm:$0xf]
      %v219 = vld [vmem:[%s185 + $0x4c] sm:$0xf]
      %v220 = vld [vmem:[%s185 + $0x50] sm:$0xf]
      %v221 = vld [vmem:[%s185 + $0x54] sm:$0xf]
      %v222 = vld [vmem:[%s185 + $0x58] sm:$0xf]
      %v223 = vld [vmem:[%s185 + $0x5c] sm:$0xf]
      %v224 = vld [vmem:[%s185 + $0x60] sm:$0xf]
      %v225 = vld [vmem:[%s185 + $0x64] sm:$0xf]
      %v226 = vld [vmem:[%s185 + $0x68] sm:$0xf]
      %v227 = vld [vmem:[%s185 + $0x6c] sm:$0xf]
      %v228 = vld [vmem:[%s185 + $0x70] sm:$0xf]
      %v229 = vld [vmem:[%s185 + $0x74] sm:$0xf]
      %v230 = vld [vmem:[%s185 + $0x78] sm:$0xf]
      %v231 = vld [vmem:[%s185 + $0x7c] sm:$0xf]
      %v232 = vld [vmem:[%s185 + $0x80] sm:$0xf]
      %v233 = vld [vmem:[%s185 + $0x84] sm:$0xf]
      %v234 = vld [vmem:[%s185 + $0x88] sm:$0xf]
      %v235 = vld [vmem:[%s185 + $0x8c] sm:$0xf]
      %v236 = vld [vmem:[%s185 + $0x90] sm:$0xf]
      %v237 = vld [vmem:[%s185 + $0x94] sm:$0xf]
      %v238 = vld [vmem:[%s185 + $0x98] sm:$0xf]
      %v239 = vld [vmem:[%s185 + $0x9c] sm:$0xf]
      %v240 = vld [vmem:[%s185 + $0xa0] sm:$0xf]
      %v241 = vld [vmem:[%s185 + $0xa4] sm:$0xf]
      %v242 = vld [vmem:[%s185 + $0xa8] sm:$0xf]
      %v243 = vld [vmem:[%s185 + $0xac] sm:$0xf]
      %v244 = vld [vmem:[%s185 + $0xb0] sm:$0xf]
      %v245 = vld [vmem:[%s185 + $0xb4] sm:$0xf]
      %v246 = vld [vmem:[%s185 + $0xb8] sm:$0xf]
      %v247 = vld [vmem:[%s185 + $0xbc] sm:$0xf]
      %v248 = vld [vmem:[%s185 + $0xc0] sm:$0xf]
      %v249 = vld [vmem:[%s185 + $0xc4] sm:$0xf]
      %v250 = vld [vmem:[%s185 + $0xc8] sm:$0xf]
      %v251 = vld [vmem:[%s185 + $0xcc] sm:$0xf]
      %v252 = vld [vmem:[%s185 + $0xd0] sm:$0xf]
      %v253 = vld [vmem:[%s185 + $0xd4] sm:$0xf]
      %v254 = vld [vmem:[%s185 + $0xd8] sm:$0xf]
      %v255 = vld [vmem:[%s185 + $0xdc] sm:$0xf]
      %v256 = vld [vmem:[%s185 + $0xe0] sm:$0xf]
      %v257 = vld [vmem:[%s185 + $0xe4] sm:$0xf]
      %v258 = vld [vmem:[%s185 + $0xe8] sm:$0xf]
      %v259 = vld [vmem:[%s185 + $0xec] sm:$0xf]
      %v260 = vld [vmem:[%s185 + $0xf0] sm:$0xf]
      %v261 = vld [vmem:[%s185 + $0xf4] sm:$0xf]
      %v262 = vld [vmem:[%s185 + $0xf8] sm:$0xf]
      %v263 = vld [vmem:[%s185 + $0xfc] sm:$0xf]
      %v264 = vld [vmem:[%s2] sm:$0x1]
      %v266 = vlaneseq
      %v267 = vshrl.u32 %v266, 7
      %v268 = vsub.s32 0, %v267
      %v269 = vrot.slane %v264, %v268
      %v279 = vunpack.c.l.b16 %v192
      %v280 = vunpack.c.h.b16 %v192
      %v281 = vunpack.c.l.b16 %v193
      %v282 = vunpack.c.h.b16 %v193
      %v283 = vunpack.c.l.b16 %v194
      %v284 = vunpack.c.h.b16 %v194
      %v285 = vunpack.c.l.b16 %v195
      %v286 = vunpack.c.h.b16 %v195
      %v287 = vunpack.c.l.b16 %v196
      %v288 = vunpack.c.h.b16 %v196
      %v289 = vunpack.c.l.b16 %v197
      %v290 = vunpack.c.h.b16 %v197
      %v291 = vunpack.c.l.b16 %v198
      %v292 = vunpack.c.h.b16 %v198
      %v293 = vunpack.c.l.b16 %v199
      %v294 = vunpack.c.h.b16 %v199
      %v295 = vpack.c.b16 %v283, %v279
      %v296 = vpack.c.b16 %v284, %v280
      %v297 = vpack.c.b16 %v285, %v281
      %v298 = vpack.c.b16 %v286, %v282
      %v299 = vpack.c.b16 %v291, %v287
      %v300 = vpack.c.b16 %v292, %v288
      %v301 = vpack.c.b16 %v293, %v289
      %v302 = vpack.c.b16 %v294, %v290
      %v375 = vunpack.c.l.b16 %v200
      %v376 = vunpack.c.l.b16 %v201
      %v377 = vunpack.c.l.b16 %v202
      %v378 = vunpack.c.l.b16 %v203
      %v379 = vunpack.c.l.b16 %v204
      %v380 = vunpack.c.l.b16 %v205
      %v381 = vunpack.c.l.b16 %v206
      %v382 = vunpack.c.l.b16 %v207
      %v383 = vunpack.c.l.b16 %v208
      %v384 = vunpack.c.l.b16 %v209
      %v385 = vunpack.c.l.b16 %v210
      %v386 = vunpack.c.l.b16 %v211
      %v387 = vunpack.c.l.b16 %v212
      %v388 = vunpack.c.l.b16 %v213
      %v389 = vunpack.c.l.b16 %v214
      %v390 = vunpack.c.l.b16 %v215
      %v391 = vunpack.c.l.b16 %v216
      %v392 = vunpack.c.l.b16 %v217
      %v393 = vunpack.c.l.b16 %v218
      %v394 = vunpack.c.l.b16 %v219
      %v395 = vunpack.c.l.b16 %v220
      %v396 = vunpack.c.l.b16 %v221
      %v397 = vunpack.c.l.b16 %v222
      %v398 = vunpack.c.l.b16 %v223
      %v399 = vunpack.c.l.b16 %v224
      %v400 = vunpack.c.l.b16 %v225
      %v401 = vunpack.c.l.b16 %v226
      %v402 = vunpack.c.l.b16 %v227
      %v403 = vunpack.c.l.b16 %v228
      %v404 = vunpack.c.l.b16 %v229
      %v405 = vunpack.c.l.b16 %v230
      %v406 = vunpack.c.l.b16 %v231
      %v407 = vunpack.c.l.b16 %v232
      %v408 = vunpack.c.l.b16 %v233
      %v409 = vunpack.c.l.b16 %v234
      %v410 = vunpack.c.l.b16 %v235
      %v411 = vunpack.c.l.b16 %v236
      %v412 = vunpack.c.l.b16 %v237
      %v413 = vunpack.c.l.b16 %v238
      %v414 = vunpack.c.l.b16 %v239
      %v415 = vunpack.c.l.b16 %v240
      %v416 = vunpack.c.l.b16 %v241
      %v417 = vunpack.c.l.b16 %v242
      %v418 = vunpack.c.l.b16 %v243
      %v419 = vunpack.c.l.b16 %v244
      %v420 = vunpack.c.l.b16 %v245
      %v421 = vunpack.c.l.b16 %v246
      %v422 = vunpack.c.l.b16 %v247
      %v423 = vunpack.c.l.b16 %v248
      %v424 = vunpack.c.l.b16 %v249
      %v425 = vunpack.c.l.b16 %v250
      %v426 = vunpack.c.l.b16 %v251
      %v427 = vunpack.c.l.b16 %v252
      %v428 = vunpack.c.l.b16 %v253
      %v429 = vunpack.c.l.b16 %v254
      %v430 = vunpack.c.l.b16 %v255
      %v431 = vunpack.c.l.b16 %v256
      %v432 = vunpack.c.l.b16 %v257
      %v433 = vunpack.c.l.b16 %v258
      %v434 = vunpack.c.l.b16 %v259
      %v435 = vunpack.c.l.b16 %v260
      %v436 = vunpack.c.l.b16 %v261
      %v437 = vunpack.c.l.b16 %v262
      %v438 = vunpack.c.l.b16 %v263
      %v439 = vpack.c.b16 %v376, %v375
      %v440 = vpack.c.b16 %v378, %v377
      %v441 = vpack.c.b16 %v380, %v379
      %v442 = vpack.c.b16 %v382, %v381
      %v443 = vpack.c.b16 %v384, %v383
      %v444 = vpack.c.b16 %v386, %v385
      %v445 = vpack.c.b16 %v388, %v387
      %v446 = vpack.c.b16 %v390, %v389
      %v447 = vpack.c.b16 %v392, %v391
      %v448 = vpack.c.b16 %v394, %v393
      %v449 = vpack.c.b16 %v396, %v395
      %v450 = vpack.c.b16 %v398, %v397
      %v451 = vpack.c.b16 %v400, %v399
      %v452 = vpack.c.b16 %v402, %v401
      %v453 = vpack.c.b16 %v404, %v403
      %v454 = vpack.c.b16 %v406, %v405
      %v455 = vpack.c.b16 %v408, %v407
      %v456 = vpack.c.b16 %v410, %v409
      %v457 = vpack.c.b16 %v412, %v411
      %v458 = vpack.c.b16 %v414, %v413
      %v459 = vpack.c.b16 %v416, %v415
      %v460 = vpack.c.b16 %v418, %v417
      %v461 = vpack.c.b16 %v420, %v419
      %v462 = vpack.c.b16 %v422, %v421
      %v463 = vpack.c.b16 %v424, %v423
      %v464 = vpack.c.b16 %v426, %v425
      %v465 = vpack.c.b16 %v428, %v427
      %v466 = vpack.c.b16 %v430, %v429
      %v467 = vpack.c.b16 %v432, %v431
      %v468 = vpack.c.b16 %v434, %v433
      %v469 = vpack.c.b16 %v436, %v435
      %v470 = vpack.c.b16 %v438, %v437
      %503 = vmatprep.subr.bf16.mxu0 0
      %504 = vmatpush1.bf16.msra.mxu0 %v439
      %505 = vmatprep.subr.bf16.mxu0 0
      %506 = vmatpush1.bf16.msra.mxu0 %v440
      %507 = vmatprep.subr.bf16.mxu0 0
      %508 = vmatpush1.bf16.msra.mxu0 %v441
      %509 = vmatprep.subr.bf16.mxu0 0
      %510 = vmatpush1.bf16.msra.mxu0 %v442
      %511 = vmatprep.subr.bf16.mxu0 0
      %512 = vmatpush1.bf16.msra.mxu0 %v443
      %513 = vmatprep.subr.bf16.mxu0 0
      %514 = vmatpush1.bf16.msra.mxu0 %v444
      %515 = vmatprep.subr.bf16.mxu0 0
      %516 = vmatpush1.bf16.msra.mxu0 %v445
      %517 = vmatprep.subr.bf16.mxu0 0
      %518 = vmatpush1.bf16.msra.mxu0 %v446
      %519 = vmatprep.subr.bf16.mxu0 0
      %520 = vmatpush1.bf16.msra.mxu0 %v447
      %521 = vmatprep.subr.bf16.mxu0 0
      %522 = vmatpush1.bf16.msra.mxu0 %v448
      %523 = vmatprep.subr.bf16.mxu0 0
      %524 = vmatpush1.bf16.msra.mxu0 %v449
      %525 = vmatprep.subr.bf16.mxu0 0
      %526 = vmatpush1.bf16.msra.mxu0 %v450
      %527 = vmatprep.subr.bf16.mxu0 0
      %528 = vmatpush1.bf16.msra.mxu0 %v451
      %529 = vmatprep.subr.bf16.mxu0 0
      %530 = vmatpush1.bf16.msra.mxu0 %v452
      %531 = vmatprep.subr.bf16.mxu0 0
      %532 = vmatpush1.bf16.msra.mxu0 %v453
      %533 = vmatprep.subr.bf16.mxu0 0
      %534 = vmatpush1.bf16.msra.mxu0 %v454
      %535 = vmatprep.mubr.bf16.mxu0 %v296
      %536 = vmatmul.mubr.bf16.gmra.mrb[0].mxu0 %v295
      %v537 = vpop.f32.mrb[0].mxu0
      %v538 = vadd.f32 %v269, %v537
      %v539 = vpop.f32.mrb[0].mxu0
      %v540 = vpop.f32.mrb[0].mxu0
      %v541 = vadd.f32 %v269, %v540
      %v542 = vpop.f32.mrb[0].mxu0
      %543 = vmatprep.mubr.bf16.mxu0 %v300
      %544 = vmatmul.mubr.bf16.gmra.mrb[0].mxu0 %v299
      %v545 = vpop.f32.mrb[0].mxu0
      %v546 = vadd.f32 %v269, %v545
      %v547 = vpop.f32.mrb[0].mxu0
      %v548 = vpop.f32.mrb[0].mxu0
      %v549 = vadd.f32 %v269, %v548
      %v550 = vpop.f32.mrb[0].mxu0
      %551 = vdwg.mxu0
      %552 = vmatprep.subr.bf16.mxu0 0
      %553 = vmatpush1.bf16.msra.mxu0 %v455
      %554 = vmatprep.subr.bf16.mxu0 0
      %555 = vmatpush1.bf16.msra.mxu0 %v456
      %556 = vmatprep.subr.bf16.mxu0 0
      %557 = vmatpush1.bf16.msra.mxu0 %v457
      %558 = vmatprep.subr.bf16.mxu0 0
      %559 = vmatpush1.bf16.msra.mxu0 %v458
      %560 = vmatprep.subr.bf16.mxu0 0
      %561 = vmatpush1.bf16.msra.mxu0 %v459
      %562 = vmatprep.subr.bf16.mxu0 0
      %563 = vmatpush1.bf16.msra.mxu0 %v460
      %564 = vmatprep.subr.bf16.mxu0 0
      %565 = vmatpush1.bf16.msra.mxu0 %v461
      %566 = vmatprep.subr.bf16.mxu0 0
      %567 = vmatpush1.bf16.msra.mxu0 %v462
      %568 = vmatprep.subr.bf16.mxu0 0
      %569 = vmatpush1.bf16.msra.mxu0 %v463
      %570 = vmatprep.subr.bf16.mxu0 0
      %571 = vmatpush1.bf16.msra.mxu0 %v464
      %572 = vmatprep.subr.bf16.mxu0 0
      %573 = vmatpush1.bf16.msra.mxu0 %v465
      %574 = vmatprep.subr.bf16.mxu0 0
      %575 = vmatpush1.bf16.msra.mxu0 %v466
      %576 = vmatprep.subr.bf16.mxu0 0
      %577 = vmatpush1.bf16.msra.mxu0 %v467
      %578 = vmatprep.subr.bf16.mxu0 0
      %579 = vmatpush1.bf16.msra.mxu0 %v468
      %580 = vmatprep.subr.bf16.mxu0 0
      %581 = vmatpush1.bf16.msra.mxu0 %v469
      %582 = vmatprep.subr.bf16.mxu0 0
      %583 = vmatpush1.bf16.msra.mxu0 %v470
      %584 = vmatprep.mubr.bf16.mxu0 %v298
      %585 = vmatmul.mubr.bf16.gmra.mrb[0].mxu0 %v297
      %v586 = vpop.f32.mrb[0].mxu0
      %v587 = vadd.f32 %v538, %v586
      %v588 = vpop.f32.mrb[0].mxu0
      %v589 = vpop.f32.mrb[0].mxu0
      %v590 = vadd.f32 %v541, %v589
      %v591 = vpop.f32.mrb[0].mxu0
      %592 = vmatprep.mubr.bf16.mxu0 %v302
      %593 = vmatmul.mubr.bf16.gmra.mrb[0].mxu0 %v301
      %v594 = vpop.f32.mrb[0].mxu0
      %v595 = vadd.f32 %v546, %v594
      %v596 = vpop.f32.mrb[0].mxu0
      %v597 = vpop.f32.mrb[0].mxu0
      %v598 = vadd.f32 %v549, %v597
      %v599 = vpop.f32.mrb[0].mxu0
      %600 = vdwg.mxu0
      %v601 = vmax.f32 %v587, 0.0
      %v602 = vmax.f32 %v590, 0.0
      %v603 = vmax.f32 %v595, 0.0
      %v604 = vmax.f32 %v598, 0.0
      %v605 = vpack.c.bf16 %v602, %v601
      %v606 = vpack.c.bf16 %v604, %v603
      %v609 = vunpack.c.l.b16 %v605
      %v610 = vunpack.c.h.b16 %v605
      %v611 = vunpack.c.l.b16 %v606
      %v612 = vunpack.c.h.b16 %v606
      %v613 = vpack.c.b16 %v609, %v609
      %v614 = vpack.c.b16 %v610, %v610
      %v615 = vpack.c.b16 %v611, %v611
      %v616 = vpack.c.b16 %v612, %v612
      %621 = vst [vmem:[%s190] sm:$0xf] %v613
      %622 = vst [vmem:[%s190 + $0x4] sm:$0xf] %v614
      %623 = vst [vmem:[%s190 + $0x8] sm:$0xf] %v615
      %624 = vst [vmem:[%s190 + $0xc] sm:$0xf] %v616
      %p625 = scmp.lt.s32.totalorder %s14, 3
      %s626 = scalar_select %p625, %s14, 3
      %s627 = smul.addr %s626, 4
      %s628 = smul.addr %s627, 4
      %s629 = scalar_lea.vmem %s3, %s628
      // Predicated region
      $region33: #{ae_cifar_forward.11} parent=31 // pred_check
        %p630 = pneg %p105
      $region34: #{ae_cifar_forward.11} parent=31 // pred_check_branch
        %632 = sbr.rel (%p630) target = $region36
      $region35: #{ae_cifar_forward.11} parent=31 // pred_region
        _
      $region36: #{ae_cifar_forward.11} parent=31 // pred_fallthru
        _
    $region32: #{ae_cifar_forward.11} parent=5 // pred_fallthru
      _
    %p633 = scmp.le.s32.totalorder 2, %s9
    // Predicated region
    $region37: #{ae_cifar_forward.11} parent=5 // pred_check
      %p634 = pneg %p633
    $region38: #{ae_cifar_forward.11} parent=5 // pred_check_branch
      %636 = sbr.rel (%p634) target = $region40
    $region39: #{ae_cifar_forward.11} parent=5 // pred_region
      %s637 = ssub.s32 %s9, 2
      // Predicated region
      $region41: #{ae_cifar_forward.11} parent=39 // pred_check
        %p638 = pneg %p111
      $region42: #{ae_cifar_forward.11} parent=39 // pred_check_branch
        %640 = sbr.rel (%p638) target = $region44
      $region43: #{ae_cifar_forward.11} parent=39 // pred_region
        %p641 = scmp.lt.s32.totalorder %s15, 3
        %s642 = scalar_select %p641, %s15, 3
        %s643 = smul.addr %s642, 4
        %s644 = smul.addr %s643, 4
        %s645 = scalar_lea.vmem %s3, %s644
      $region44: #{ae_cifar_forward.11} parent=39 // pred_fallthru
        _
    $region40: #{ae_cifar_forward.11} parent=5 // pred_fallthru
      _
  $region6: #{ae_cifar_forward.11} parent=0 // loop_footer
    %s13 = sadd.s32 1, %s9
  $region7: #{ae_cifar_forward.11} parent=0 // loop_footer_branch
    %8 = sbr.rel target = $region3
  $region8: #{ae_cifar_forward.11} parent=0 // loop_exit
    _

// kernel: ae_cifar_forward.10
$region0: #{ae_cifar_forward.10}
  #allocation0 [shape = 'u32[]', space=smem, size = 0x4, offset = 0x4, fixed_abs, tag = 'smem constant byte address 0x4 - core index']
  #allocation1 [shape = 'u32[144,128]{1,0:T(1,128)}', space=vmem, size = 0x12000, scoped, tag = 'internal scratch']
  %s0 = inlined_call_operand.vmem [shape: bf16[2,1152], index: 0, kind: input, shape index: {}]
  %s1 = inlined_call_operand.vmem [shape: bf16[1152,256], index: 1, kind: input, shape index: {}]
  %s2 = inlined_call_operand.vmem [shape: f32[1,256], index: 2, kind: input, shape index: {}]
  %s3 = inlined_call_operand.vmem [shape: bf16[256,2048], index: 3, kind: input, shape index: {}]
  %s4 = inlined_call_operand.vmem [shape: f32[1,2048], index: 4, kind: input, shape index: {}]
  %s5 = inlined_call_operand.vmem [shape: bf16[2,2048], index: 5, kind: output, shape index: {}]
  %s6 = sld [smem:[#allocation0]]
  $region30: #{ae_cifar_forward.10} parent=0
    _
  %s8 = ssub.s32 1, %s6
  %s9 = scalar_select 0, %s8, %s6
  // Predicated region
  $region2: #{ae_cifar_forward.10} parent=0 // pred_check
    _
  $region3: #{ae_cifar_forward.10} parent=0 // pred_check_branch
    %11 = sbr.rel (0) target = $region5
  $region4: #{ae_cifar_forward.10} parent=0 // pred_region
    _
  $region5: #{ae_cifar_forward.10} parent=0 // pred_fallthru
    _
  // Predicated region
  $region6: #{ae_cifar_forward.10} parent=0 // pred_check
    _
  $region7: #{ae_cifar_forward.10} parent=0 // pred_check_branch
    %13 = sbr.rel (0) target = $region9
  $region8: #{ae_cifar_forward.10} parent=0 // pred_region
    _
  $region9: #{ae_cifar_forward.10} parent=0 // pred_fallthru
    _
  // Predicated region
  $region10: #{ae_cifar_forward.10} parent=0 // pred_check
    _
  $region11: #{ae_cifar_forward.10} parent=0 // pred_check_branch
    %15 = sbr.rel (0) target = $region13
  $region12: #{ae_cifar_forward.10} parent=0 // pred_region
    _
  $region13: #{ae_cifar_forward.10} parent=0 // pred_fallthru
    _
  // Predicated region
  $region14: #{ae_cifar_forward.10} parent=0 // pred_check
    _
  $region15: #{ae_cifar_forward.10} parent=0 // pred_check_branch
    %17 = sbr.rel (0) target = $region17
  $region16: #{ae_cifar_forward.10} parent=0 // pred_region
    _
  $region17: #{ae_cifar_forward.10} parent=0 // pred_fallthru
    _
  // Predicated region
  $region18: #{ae_cifar_forward.10} parent=0 // pred_check
    _
  $region19: #{ae_cifar_forward.10} parent=0 // pred_check_branch
    %19 = sbr.rel (0) target = $region21
  $region20: #{ae_cifar_forward.10} parent=0 // pred_region
    _
  $region21: #{ae_cifar_forward.10} parent=0 // pred_fallthru
    _
  %v21 = vld [vmem:[%s0] sm:$0xff]
  %v22 = vld [vmem:[%s0 + $0x8] sm:$0x1]
  %v23 = vld [vmem:[%s1] sm:$0xff]
  %v24 = vld [vmem:[%s1 + $0x8] sm:$0xff]
  %v25 = vld [vmem:[%s1 + $0x10] sm:$0xff]
  %v26 = vld [vmem:[%s1 + $0x18] sm:$0xff]
  %v27 = vld [vmem:[%s1 + $0x20] sm:$0xff]
  %v28 = vld [vmem:[%s1 + $0x28] sm:$0xff]
  %v29 = vld [vmem:[%s1 + $0x30] sm:$0xff]
  %v30 = vld [vmem:[%s1 + $0x38] sm:$0xff]
  %v31 = vld [vmem:[%s1 + $0x40] sm:$0xff]
  %v32 = vld [vmem:[%s1 + $0x48] sm:$0xff]
  %v33 = vld [vmem:[%s1 + $0x50] sm:$0xff]
  %v34 = vld [vmem:[%s1 + $0x58] sm:$0xff]
  %v35 = vld [vmem:[%s1 + $0x60] sm:$0xff]
  %v36 = vld [vmem:[%s1 + $0x68] sm:$0xff]
  %v37 = vld [vmem:[%s1 + $0x70] sm:$0xff]
  %v38 = vld [vmem:[%s1 + $0x78] sm:$0xff]
  %v39 = vld [vmem:[%s1 + $0x80] sm:$0xff]
  %v40 = vld [vmem:[%s1 + $0x88] sm:$0xff]
  %v41 = vld [vmem:[%s1 + $0x90] sm:$0xff]
  %v42 = vld [vmem:[%s1 + $0x98] sm:$0xff]
  %v43 = vld [vmem:[%s1 + $0xa0] sm:$0xff]
  %v44 = vld [vmem:[%s1 + $0xa8] sm:$0xff]
  %v45 = vld [vmem:[%s1 + $0xb0] sm:$0xff]
  %v46 = vld [vmem:[%s1 + $0xb8] sm:$0xff]
  %v47 = vld [vmem:[%s1 + $0xc0] sm:$0xff]
  %v48 = vld [vmem:[%s1 + $0xc8] sm:$0xff]
  %v49 = vld [vmem:[%s1 + $0xd0] sm:$0xff]
  %v50 = vld [vmem:[%s1 + $0xd8] sm:$0xff]
  %v51 = vld [vmem:[%s1 + $0xe0] sm:$0xff]
  %v52 = vld [vmem:[%s1 + $0xe8] sm:$0xff]
  %v53 = vld [vmem:[%s1 + $0xf0] sm:$0xff]
  %v54 = vld [vmem:[%s1 + $0xf8] sm:$0xff]
  %v55 = vld [vmem:[%s1 + $0x100] sm:$0xff]
  %v56 = vld [vmem:[%s1 + $0x108] sm:$0xff]
  %v57 = vld [vmem:[%s1 + $0x110] sm:$0xff]
  %v58 = vld [vmem:[%s1 + $0x118] sm:$0xff]
  %v59 = vld [vmem:[%s1 + $0x120] sm:$0xff]
  %v60 = vld [vmem:[%s1 + $0x128] sm:$0xff]
  %v61 = vld [vmem:[%s1 + $0x130] sm:$0xff]
  %v62 = vld [vmem:[%s1 + $0x138] sm:$0xff]
  %v63 = vld [vmem:[%s1 + $0x140] sm:$0xff]
  %v64 = vld [vmem:[%s1 + $0x148] sm:$0xff]
  %v65 = vld [vmem:[%s1 + $0x150] sm:$0xff]
  %v66 = vld [vmem:[%s1 + $0x158] sm:$0xff]
  %v67 = vld [vmem:[%s1 + $0x160] sm:$0xff]
  %v68 = vld [vmem:[%s1 + $0x168] sm:$0xff]
  %v69 = vld [vmem:[%s1 + $0x170] sm:$0xff]
  %v70 = vld [vmem:[%s1 + $0x178] sm:$0xff]
  %v71 = vld [vmem:[%s1 + $0x180] sm:$0xff]
  %v72 = vld [vmem:[%s1 + $0x188] sm:$0xff]
  %v73 = vld [vmem:[%s1 + $0x190] sm:$0xff]
  %v74 = vld [vmem:[%s1 + $0x198] sm:$0xff]
  %v75 = vld [vmem:[%s1 + $0x1a0] sm:$0xff]
  %v76 = vld [vmem:[%s1 + $0x1a8] sm:$0xff]
  %v77 = vld [vmem:[%s1 + $0x1b0] sm:$0xff]
  %v78 = vld [vmem:[%s1 + $0x1b8] sm:$0xff]
  %v79 = vld [vmem:[%s1 + $0x1c0] sm:$0xff]
  %v80 = vld [vmem:[%s1 + $0x1c8] sm:$0xff]
  %v81 = vld [vmem:[%s1 + $0x1d0] sm:$0xff]
  %v82 = vld [vmem:[%s1 + $0x1d8] sm:$0xff]
  %v83 = vld [vmem:[%s1 + $0x1e0] sm:$0xff]
  %v84 = vld [vmem:[%s1 + $0x1e8] sm:$0xff]
  %v85 = vld [vmem:[%s1 + $0x1f0] sm:$0xff]
  %v86 = vld [vmem:[%s1 + $0x1f8] sm:$0xff]
  %v87 = vld [vmem:[%s1 + $0x200] sm:$0xff]
  %v88 = vld [vmem:[%s1 + $0x208] sm:$0xff]
  %v89 = vld [vmem:[%s1 + $0x210] sm:$0xff]
  %v90 = vld [vmem:[%s1 + $0x218] sm:$0xff]
  %v91 = vld [vmem:[%s1 + $0x220] sm:$0xff]
  %v92 = vld [vmem:[%s1 + $0x228] sm:$0xff]
  %v93 = vld [vmem:[%s1 + $0x230] sm:$0xff]
  %v94 = vld [vmem:[%s1 + $0x238] sm:$0xff]
  %v95 = vld [vmem:[%s1 + $0x240] sm:$0xff]
  %v96 = vld [vmem:[%s1 + $0x248] sm:$0xff]
  %v97 = vld [vmem:[%s1 + $0x250] sm:$0xff]
  %v98 = vld [vmem:[%s1 + $0x258] sm:$0xff]
  %v99 = vld [vmem:[%s1 + $0x260] sm:$0xff]
  %v100 = vld [vmem:[%s1 + $0x268] sm:$0xff]
  %v101 = vld [vmem:[%s1 + $0x270] sm:$0xff]
  %v102 = vld [vmem:[%s1 + $0x278] sm:$0xff]
  %v103 = vld [vmem:[%s1 + $0x280] sm:$0xff]
  %v104 = vld [vmem:[%s1 + $0x288] sm:$0xff]
  %v105 = vld [vmem:[%s1 + $0x290] sm:$0xff]
  %v106 = vld [vmem:[%s1 + $0x298] sm:$0xff]
  %v107 = vld [vmem:[%s1 + $0x2a0] sm:$0xff]
  %v108 = vld [vmem:[%s1 + $0x2a8] sm:$0xff]
  %v109 = vld [vmem:[%s1 + $0x2b0] sm:$0xff]
  %v110 = vld [vmem:[%s1 + $0x2b8] sm:$0xff]
  %v111 = vld [vmem:[%s1 + $0x2c0] sm:$0xff]
  %v112 = vld [vmem:[%s1 + $0x2c8] sm:$0xff]
  %v113 = vld [vmem:[%s1 + $0x2d0] sm:$0xff]
  %v114 = vld [vmem:[%s1 + $0x2d8] sm:$0xff]
  %v115 = vld [vmem:[%s1 + $0x2e0] sm:$0xff]
  %v116 = vld [vmem:[%s1 + $0x2e8] sm:$0xff]
  %v117 = vld [vmem:[%s1 + $0x2f0] sm:$0xff]
  %v118 = vld [vmem:[%s1 + $0x2f8] sm:$0xff]
  %v119 = vld [vmem:[%s1 + $0x300] sm:$0xff]
  %v120 = vld [vmem:[%s1 + $0x308] sm:$0xff]
  %v121 = vld [vmem:[%s1 + $0x310] sm:$0xff]
  %v122 = vld [vmem:[%s1 + $0x318] sm:$0xff]
  %v123 = vld [vmem:[%s1 + $0x320] sm:$0xff]
  %v124 = vld [vmem:[%s1 + $0x328] sm:$0xff]
  %v125 = vld [vmem:[%s1 + $0x330] sm:$0xff]
  %v126 = vld [vmem:[%s1 + $0x338] sm:$0xff]
  %v127 = vld [vmem:[%s1 + $0x340] sm:$0xff]
  %v128 = vld [vmem:[%s1 + $0x348] sm:$0xff]
  %v129 = vld [vmem:[%s1 + $0x350] sm:$0xff]
  %v130 = vld [vmem:[%s1 + $0x358] sm:$0xff]
  %v131 = vld [vmem:[%s1 + $0x360] sm:$0xff]
  %v132 = vld [vmem:[%s1 + $0x368] sm:$0xff]
  %v133 = vld [vmem:[%s1 + $0x370] sm:$0xff]
  %v134 = vld [vmem:[%s1 + $0x378] sm:$0xff]
  %v135 = vld [vmem:[%s1 + $0x380] sm:$0xff]
  %v136 = vld [vmem:[%s1 + $0x388] sm:$0xff]
  %v137 = vld [vmem:[%s1 + $0x390] sm:$0xff]
  %v138 = vld [vmem:[%s1 + $0x398] sm:$0xff]
  %v139 = vld [vmem:[%s1 + $0x3a0] sm:$0xff]
  %v140 = vld [vmem:[%s1 + $0x3a8] sm:$0xff]
  %v141 = vld [vmem:[%s1 + $0x3b0] sm:$0xff]
  %v142 = vld [vmem:[%s1 + $0x3b8] sm:$0xff]
  %v143 = vld [vmem:[%s1 + $0x3c0] sm:$0xff]
  %v144 = vld [vmem:[%s1 + $0x3c8] sm:$0xff]
  %v145 = vld [vmem:[%s1 + $0x3d0] sm:$0xff]
  %v146 = vld [vmem:[%s1 + $0x3d8] sm:$0xff]
  %v147 = vld [vmem:[%s1 + $0x3e0] sm:$0xff]
  %v148 = vld [vmem:[%s1 + $0x3e8] sm:$0xff]
  %v149 = vld [vmem:[%s1 + $0x3f0] sm:$0xff]
  %v150 = vld [vmem:[%s1 + $0x3f8] sm:$0xff]
  %v151 = vld [vmem:[%s1 + $0x400] sm:$0xff]
  %v152 = vld [vmem:[%s1 + $0x408] sm:$0xff]
  %v153 = vld [vmem:[%s1 + $0x410] sm:$0xff]
  %v154 = vld [vmem:[%s1 + $0x418] sm:$0xff]
  %v155 = vld [vmem:[%s1 + $0x420] sm:$0xff]
  %v156 = vld [vmem:[%s1 + $0x428] sm:$0xff]
  %v157 = vld [vmem:[%s1 + $0x430] sm:$0xff]
  %v158 = vld [vmem:[%s1 + $0x438] sm:$0xff]
  %v159 = vld [vmem:[%s1 + $0x440] sm:$0xff]
  %v160 = vld [vmem:[%s1 + $0x448] sm:$0xff]
  %v161 = vld [vmem:[%s1 + $0x450] sm:$0xff]
  %v162 = vld [vmem:[%s1 + $0x458] sm:$0xff]
  %v163 = vld [vmem:[%s1 + $0x460] sm:$0xff]
  %v164 = vld [vmem:[%s1 + $0x468] sm:$0xff]
  %v165 = vld [vmem:[%s1 + $0x470] sm:$0xff]
  %v166 = vld [vmem:[%s1 + $0x478] sm:$0xff]
  %v167 = vld [vmem:[%s2] sm:$0x3]
  %v169 = vlaneseq
  %v170 = vshrl.u32 %v169, 7
  %v171 = vsub.s32 0, %v170
  %v172 = vrot.slane %v167, %v171
  %v173 = vlaneseq
  %v174 = vshrl.u32 %v173, 7
  %v175 = vsub.s32 1, %v174
  %v176 = vrot.slane %v167, %v175
  %v181 = vcombine.high %v21, %v21
  %v183 = vunpack.c.l.s4 1966171168
  %v184 = vunpack.c.0.s8 %v183
  %v185 = vlaneseq
  %v186 = vshrl.u32 %v185, 7
  %v187 = vsub.s32 %v184, %v186
  %v188 = vrot.slane %v21, %v187
  %v190 = vunpack.c.l.s4 1966171168
  %v191 = vunpack.c.0.s8 %v190
  %v192 = vlaneseq
  %v193 = vshrl.u32 %v192, 7
  %v194 = vsub.s32 %v191, %v193
  %v195 = vrot.slane %v181, %v194
  %v196 = vcombine.high %v188, %v188
  %v197 = vcombine.high %v195, %v195
  %v199 = vunpack.c.l.s4 1966171168
  %v200 = vunpack.c.0.s8 %v199
  %v201 = vlaneseq
  %v202 = vshrl.u32 %v201, 7
  %v203 = vsub.s32 %v200, %v202
  %v204 = vrot.slane %v188, %v203
  %v206 = vunpack.c.l.s4 1966171168
  %v207 = vunpack.c.0.s8 %v206
  %v208 = vlaneseq
  %v209 = vshrl.u32 %v208, 7
  %v210 = vsub.s32 %v207, %v209
  %v211 = vrot.slane %v195, %v210
  %v213 = vunpack.c.l.s4 1966171168
  %v214 = vunpack.c.0.s8 %v213
  %v215 = vlaneseq
  %v216 = vshrl.u32 %v215, 7
  %v217 = vsub.s32 %v214, %v216
  %v218 = vrot.slane %v196, %v217
  %v220 = vunpack.c.l.s4 1966171168
  %v221 = vunpack.c.0.s8 %v220
  %v222 = vlaneseq
  %v223 = vshrl.u32 %v222, 7
  %v224 = vsub.s32 %v221, %v223
  %v225 = vrot.slane %v197, %v224
  %v226 = vcombine.high %v204, %v204
  %v227 = vcombine.high %v211, %v211
  %v228 = vcombine.high %v218, %v218
  %v229 = vcombine.high %v225, %v225
  %v231 = vunpack.c.l.s4 1966171168
  %v232 = vunpack.c.0.s8 %v231
  %v233 = vlaneseq
  %v234 = vshrl.u32 %v233, 7
  %v235 = vsub.s32 %v232, %v234
  %v236 = vrot.slane %v22, %v235
  %v238 = vunpack.c.l.s4 1966171168
  %v239 = vunpack.c.0.s8 %v238
  %v240 = vlaneseq
  %v241 = vshrl.u32 %v240, 7
  %v242 = vsub.s32 %v239, %v241
  %v243 = vrot.slane %v236, %v242
  %v397 = vunpack.c.l.b16 %v23
  %v398 = vunpack.c.h.b16 %v23
  %v399 = vunpack.c.l.b16 %v24
  %v400 = vunpack.c.h.b16 %v24
  %v401 = vunpack.c.l.b16 %v25
  %v402 = vunpack.c.h.b16 %v25
  %v403 = vunpack.c.l.b16 %v26
  %v404 = vunpack.c.h.b16 %v26
  %v405 = vunpack.c.l.b16 %v27
  %v406 = vunpack.c.h.b16 %v27
  %v407 = vunpack.c.l.b16 %v28
  %v408 = vunpack.c.h.b16 %v28
  %v409 = vunpack.c.l.b16 %v29
  %v410 = vunpack.c.h.b16 %v29
  %v411 = vunpack.c.l.b16 %v30
  %v412 = vunpack.c.h.b16 %v30
  %v413 = vunpack.c.l.b16 %v31
  %v414 = vunpack.c.h.b16 %v31
  %v415 = vunpack.c.l.b16 %v32
  %v416 = vunpack.c.h.b16 %v32
  %v417 = vunpack.c.l.b16 %v33
  %v418 = vunpack.c.h.b16 %v33
  %v419 = vunpack.c.l.b16 %v34
  %v420 = vunpack.c.h.b16 %v34
  %v421 = vunpack.c.l.b16 %v35
  %v422 = vunpack.c.h.b16 %v35
  %v423 = vunpack.c.l.b16 %v36
  %v424 = vunpack.c.h.b16 %v36
  %v425 = vunpack.c.l.b16 %v37
  %v426 = vunpack.c.h.b16 %v37
  %v427 = vunpack.c.l.b16 %v38
  %v428 = vunpack.c.h.b16 %v38
  %v429 = vunpack.c.l.b16 %v39
  %v430 = vunpack.c.h.b16 %v39
  %v431 = vunpack.c.l.b16 %v40
  %v432 = vunpack.c.h.b16 %v40
  %v433 = vunpack.c.l.b16 %v41
  %v434 = vunpack.c.h.b16 %v41
  %v435 = vunpack.c.l.b16 %v42
  %v436 = vunpack.c.h.b16 %v42
  %v437 = vunpack.c.l.b16 %v43
  %v438 = vunpack.c.h.b16 %v43
  %v439 = vunpack.c.l.b16 %v44
  %v440 = vunpack.c.h.b16 %v44
  %v441 = vunpack.c.l.b16 %v45
  %v442 = vunpack.c.h.b16 %v45
  %v443 = vunpack.c.l.b16 %v46
  %v444 = vunpack.c.h.b16 %v46
  %v445 = vunpack.c.l.b16 %v47
  %v446 = vunpack.c.h.b16 %v47
  %v447 = vunpack.c.l.b16 %v48
  %v448 = vunpack.c.h.b16 %v48
  %v449 = vunpack.c.l.b16 %v49
  %v450 = vunpack.c.h.b16 %v49
  %v451 = vunpack.c.l.b16 %v50
  %v452 = vunpack.c.h.b16 %v50
  %v453 = vunpack.c.l.b16 %v51
  %v454 = vunpack.c.h.b16 %v51
  %v455 = vunpack.c.l.b16 %v52
  %v456 = vunpack.c.h.b16 %v52
  %v457 = vunpack.c.l.b16 %v53
  %v458 = vunpack.c.h.b16 %v53
  %v459 = vunpack.c.l.b16 %v54
  %v460 = vunpack.c.h.b16 %v54
  %v461 = vunpack.c.l.b16 %v55
  %v462 = vunpack.c.h.b16 %v55
  %v463 = vunpack.c.l.b16 %v56
  %v464 = vunpack.c.h.b16 %v56
  %v465 = vunpack.c.l.b16 %v57
  %v466 = vunpack.c.h.b16 %v57
  %v467 = vunpack.c.l.b16 %v58
  %v468 = vunpack.c.h.b16 %v58
  %v469 = vunpack.c.l.b16 %v59
  %v470 = vunpack.c.h.b16 %v59
  %v471 = vunpack.c.l.b16 %v60
  %v472 = vunpack.c.h.b16 %v60
  %v473 = vunpack.c.l.b16 %v61
  %v474 = vunpack.c.h.b16 %v61
  %v475 = vunpack.c.l.b16 %v62
  %v476 = vunpack.c.h.b16 %v62
  %v477 = vunpack.c.l.b16 %v63
  %v478 = vunpack.c.h.b16 %v63
  %v479 = vunpack.c.l.b16 %v64
  %v480 = vunpack.c.h.b16 %v64
  %v481 = vunpack.c.l.b16 %v65
  %v482 = vunpack.c.h.b16 %v65
  %v483 = vunpack.c.l.b16 %v66
  %v484 = vunpack.c.h.b16 %v66
  %v485 = vunpack.c.l.b16 %v67
  %v486 = vunpack.c.h.b16 %v67
  %v487 = vunpack.c.l.b16 %v68
  %v488 = vunpack.c.h.b16 %v68
  %v489 = vunpack.c.l.b16 %v69
  %v490 = vunpack.c.h.b16 %v69
  %v491 = vunpack.c.l.b16 %v70
  %v492 = vunpack.c.h.b16 %v70
  %v493 = vunpack.c.l.b16 %v71
  %v494 = vunpack.c.h.b16 %v71
  %v495 = vunpack.c.l.b16 %v72
  %v496 = vunpack.c.h.b16 %v72
  %v497 = vunpack.c.l.b16 %v73
  %v498 = vunpack.c.h.b16 %v73
  %v499 = vunpack.c.l.b16 %v74
  %v500 = vunpack.c.h.b16 %v74
  %v501 = vunpack.c.l.b16 %v75
  %v502 = vunpack.c.h.b16 %v75
  %v503 = vunpack.c.l.b16 %v76
  %v504 = vunpack.c.h.b16 %v76
  %v505 = vunpack.c.l.b16 %v77
  %v506 = vunpack.c.h.b16 %v77
  %v507 = vunpack.c.l.b16 %v78
  %v508 = vunpack.c.h.b16 %v78
  %v509 = vunpack.c.l.b16 %v79
  %v510 = vunpack.c.h.b16 %v79
  %v511 = vunpack.c.l.b16 %v80
  %v512 = vunpack.c.h.b16 %v80
  %v513 = vunpack.c.l.b16 %v81
  %v514 = vunpack.c.h.b16 %v81
  %v515 = vunpack.c.l.b16 %v82
  %v516 = vunpack.c.h.b16 %v82
  %v517 = vunpack.c.l.b16 %v83
  %v518 = vunpack.c.h.b16 %v83
  %v519 = vunpack.c.l.b16 %v84
  %v520 = vunpack.c.h.b16 %v84
  %v521 = vunpack.c.l.b16 %v85
  %v522 = vunpack.c.h.b16 %v85
  %v523 = vunpack.c.l.b16 %v86
  %v524 = vunpack.c.h.b16 %v86
  %v525 = vunpack.c.l.b16 %v87
  %v526 = vunpack.c.h.b16 %v87
  %v527 = vunpack.c.l.b16 %v88
  %v528 = vunpack.c.h.b16 %v88
  %v529 = vunpack.c.l.b16 %v89
  %v530 = vunpack.c.h.b16 %v89
  %v531 = vunpack.c.l.b16 %v90
  %v532 = vunpack.c.h.b16 %v90
  %v533 = vunpack.c.l.b16 %v91
  %v534 = vunpack.c.h.b16 %v91
  %v535 = vunpack.c.l.b16 %v92
  %v536 = vunpack.c.h.b16 %v92
  %v537 = vunpack.c.l.b16 %v93
  %v538 = vunpack.c.h.b16 %v93
  %v539 = vunpack.c.l.b16 %v94
  %v540 = vunpack.c.h.b16 %v94
  %v541 = vunpack.c.l.b16 %v95
  %v542 = vunpack.c.h.b16 %v95
  %v543 = vunpack.c.l.b16 %v96
  %v544 = vunpack.c.h.b16 %v96
  %v545 = vunpack.c.l.b16 %v97
  %v546 = vunpack.c.h.b16 %v97
  %v547 = vunpack.c.l.b16 %v98
  %v548 = vunpack.c.h.b16 %v98
  %v549 = vunpack.c.l.b16 %v99
  %v550 = vunpack.c.h.b16 %v99
  %v551 = vunpack.c.l.b16 %v100
  %v552 = vunpack.c.h.b16 %v100
  %v553 = vunpack.c.l.b16 %v101
  %v554 = vunpack.c.h.b16 %v101
  %v555 = vunpack.c.l.b16 %v102
  %v556 = vunpack.c.h.b16 %v102
  %v557 = vunpack.c.l.b16 %v103
  %v558 = vunpack.c.h.b16 %v103
  %v559 = vunpack.c.l.b16 %v104
  %v560 = vunpack.c.h.b16 %v104
  %v561 = vunpack.c.l.b16 %v105
  %v562 = vunpack.c.h.b16 %v105
  %v563 = vunpack.c.l.b16 %v106
  %v564 = vunpack.c.h.b16 %v106
  %v565 = vunpack.c.l.b16 %v107
  %v566 = vunpack.c.h.b16 %v107
  %v567 = vunpack.c.l.b16 %v108
  %v568 = vunpack.c.h.b16 %v108
  %v569 = vunpack.c.l.b16 %v109
  %v570 = vunpack.c.h.b16 %v109
  %v571 = vunpack.c.l.b16 %v110
  %v572 = vunpack.c.h.b16 %v110
  %v573 = vunpack.c.l.b16 %v111
  %v574 = vunpack.c.h.b16 %v111
  %v575 = vunpack.c.l.b16 %v112
  %v576 = vunpack.c.h.b16 %v112
  %v577 = vunpack.c.l.b16 %v113
  %v578 = vunpack.c.h.b16 %v113
  %v579 = vunpack.c.l.b16 %v114
  %v580 = vunpack.c.h.b16 %v114
  %v581 = vunpack.c.l.b16 %v115
  %v582 = vunpack.c.h.b16 %v115
  %v583 = vunpack.c.l.b16 %v116
  %v584 = vunpack.c.h.b16 %v116
  %v585 = vunpack.c.l.b16 %v117
  %v586 = vunpack.c.h.b16 %v117
  %v587 = vunpack.c.l.b16 %v118
  %v588 = vunpack.c.h.b16 %v118
  %v589 = vunpack.c.l.b16 %v119
  %v590 = vunpack.c.h.b16 %v119
  %v591 = vunpack.c.l.b16 %v120
  %v592 = vunpack.c.h.b16 %v120
  %v593 = vunpack.c.l.b16 %v121
  %v594 = vunpack.c.h.b16 %v121
  %v595 = vunpack.c.l.b16 %v122
  %v596 = vunpack.c.h.b16 %v122
  %v597 = vunpack.c.l.b16 %v123
  %v598 = vunpack.c.h.b16 %v123
  %v599 = vunpack.c.l.b16 %v124
  %v600 = vunpack.c.h.b16 %v124
  %v601 = vunpack.c.l.b16 %v125
  %v602 = vunpack.c.h.b16 %v125
  %v603 = vunpack.c.l.b16 %v126
  %v604 = vunpack.c.h.b16 %v126
  %v605 = vunpack.c.l.b16 %v127
  %v606 = vunpack.c.h.b16 %v127
  %v607 = vunpack.c.l.b16 %v128
  %v608 = vunpack.c.h.b16 %v128
  %v609 = vunpack.c.l.b16 %v129
  %v610 = vunpack.c.h.b16 %v129
  %v611 = vunpack.c.l.b16 %v130
  %v612 = vunpack.c.h.b16 %v130
  %v613 = vunpack.c.l.b16 %v131
  %v614 = vunpack.c.h.b16 %v131
  %v615 = vunpack.c.l.b16 %v132
  %v616 = vunpack.c.h.b16 %v132
  %v617 = vunpack.c.l.b16 %v133
  %v618 = vunpack.c.h.b16 %v133
  %v619 = vunpack.c.l.b16 %v134
  %v620 = vunpack.c.h.b16 %v134
  %v621 = vunpack.c.l.b16 %v135
  %v622 = vunpack.c.h.b16 %v135
  %v623 = vunpack.c.l.b16 %v136
  %v624 = vunpack.c.h.b16 %v136
  %v625 = vunpack.c.l.b16 %v137
  %v626 = vunpack.c.h.b16 %v137
  %v627 = vunpack.c.l.b16 %v138
  %v628 = vunpack.c.h.b16 %v138
  %v629 = vunpack.c.l.b16 %v139
  %v630 = vunpack.c.h.b16 %v139
  %v631 = vunpack.c.l.b16 %v140
  %v632 = vunpack.c.h.b16 %v140
  %v633 = vunpack.c.l.b16 %v141
  %v634 = vunpack.c.h.b16 %v141
  %v635 = vunpack.c.l.b16 %v142
  %v636 = vunpack.c.h.b16 %v142
  %v637 = vunpack.c.l.b16 %v143
  %v638 = vunpack.c.h.b16 %v143
  %v639 = vunpack.c.l.b16 %v144
  %v640 = vunpack.c.h.b16 %v144
  %v641 = vunpack.c.l.b16 %v145
  %v642 = vunpack.c.h.b16 %v145
  %v643 = vunpack.c.l.b16 %v146
  %v644 = vunpack.c.h.b16 %v146
  %v645 = vunpack.c.l.b16 %v147
  %v646 = vunpack.c.h.b16 %v147
  %v647 = vunpack.c.l.b16 %v148
  %v648 = vunpack.c.h.b16 %v148
  %v649 = vunpack.c.l.b16 %v149
  %v650 = vunpack.c.h.b16 %v149
  %v651 = vunpack.c.l.b16 %v150
  %v652 = vunpack.c.h.b16 %v150
  %v653 = vunpack.c.l.b16 %v151
  %v654 = vunpack.c.h.b16 %v151
  %v655 = vunpack.c.l.b16 %v152
  %v656 = vunpack.c.h.b16 %v152
  %v657 = vunpack.c.l.b16 %v153
  %v658 = vunpack.c.h.b16 %v153
  %v659 = vunpack.c.l.b16 %v154
  %v660 = vunpack.c.h.b16 %v154
  %v661 = vunpack.c.l.b16 %v155
  %v662 = vunpack.c.h.b16 %v155
  %v663 = vunpack.c.l.b16 %v156
  %v664 = vunpack.c.h.b16 %v156
  %v665 = vunpack.c.l.b16 %v157
  %v666 = vunpack.c.h.b16 %v157
  %v667 = vunpack.c.l.b16 %v158
  %v668 = vunpack.c.h.b16 %v158
  %v669 = vunpack.c.l.b16 %v159
  %v670 = vunpack.c.h.b16 %v159
  %v671 = vunpack.c.l.b16 %v160
  %v672 = vunpack.c.h.b16 %v160
  %v673 = vunpack.c.l.b16 %v161
  %v674 = vunpack.c.h.b16 %v161
  %v675 = vunpack.c.l.b16 %v162
  %v676 = vunpack.c.h.b16 %v162
  %v677 = vunpack.c.l.b16 %v163
  %v678 = vunpack.c.h.b16 %v163
  %v679 = vunpack.c.l.b16 %v164
  %v680 = vunpack.c.h.b16 %v164
  %v681 = vunpack.c.l.b16 %v165
  %v682 = vunpack.c.h.b16 %v165
  %v683 = vunpack.c.l.b16 %v166
  %v684 = vunpack.c.h.b16 %v166
  %v685 = vpack.c.b16 %v399, %v397
  %v686 = vpack.c.b16 %v400, %v398
  %v687 = vpack.c.b16 %v403, %v401
  %v688 = vpack.c.b16 %v404, %v402
  %v689 = vpack.c.b16 %v407, %v405
  %v690 = vpack.c.b16 %v408, %v406
  %v691 = vpack.c.b16 %v411, %v409
  %v692 = vpack.c.b16 %v412, %v410
  %v693 = vpack.c.b16 %v415, %v413
  %v694 = vpack.c.b16 %v416, %v414
  %v695 = vpack.c.b16 %v419, %v417
  %v696 = vpack.c.b16 %v420, %v418
  %v697 = vpack.c.b16 %v423, %v421
  %v698 = vpack.c.b16 %v424, %v422
  %v699 = vpack.c.b16 %v427, %v425
  %v700 = vpack.c.b16 %v428, %v426
  %v701 = vpack.c.b16 %v431, %v429
  %v702 = vpack.c.b16 %v432, %v430
  %v703 = vpack.c.b16 %v435, %v433
  %v704 = vpack.c.b16 %v436, %v434
  %v705 = vpack.c.b16 %v439, %v437
  %v706 = vpack.c.b16 %v440, %v438
  %v707 = vpack.c.b16 %v443, %v441
  %v708 = vpack.c.b16 %v444, %v442
  %v709 = vpack.c.b16 %v447, %v445
  %v710 = vpack.c.b16 %v448, %v446
  %v711 = vpack.c.b16 %v451, %v449
  %v712 = vpack.c.b16 %v452, %v450
  %v713 = vpack.c.b16 %v455, %v453
  %v714 = vpack.c.b16 %v456, %v454
  %v715 = vpack.c.b16 %v459, %v457
  %v716 = vpack.c.b16 %v460, %v458
  %v717 = vpack.c.b16 %v463, %v461
  %v718 = vpack.c.b16 %v464, %v462
  %v719 = vpack.c.b16 %v467, %v465
  %v720 = vpack.c.b16 %v468, %v466
  %v721 = vpack.c.b16 %v471, %v469
  %v722 = vpack.c.b16 %v472, %v470
  %v723 = vpack.c.b16 %v475, %v473
  %v724 = vpack.c.b16 %v476, %v474
  %v725 = vpack.c.b16 %v479, %v477
  %v726 = vpack.c.b16 %v480, %v478
  %v727 = vpack.c.b16 %v483, %v481
  %v728 = vpack.c.b16 %v484, %v482
  %v729 = vpack.c.b16 %v487, %v485
  %v730 = vpack.c.b16 %v488, %v486
  %v731 = vpack.c.b16 %v491, %v489
  %v732 = vpack.c.b16 %v492, %v490
  %v733 = vpack.c.b16 %v495, %v493
  %v734 = vpack.c.b16 %v496, %v494
  %v735 = vpack.c.b16 %v499, %v497
  %v736 = vpack.c.b16 %v500, %v498
  %v737 = vpack.c.b16 %v503, %v501
  %v738 = vpack.c.b16 %v504, %v502
  %v739 = vpack.c.b16 %v507, %v505
  %v740 = vpack.c.b16 %v508, %v506
  %v741 = vpack.c.b16 %v511, %v509
  %v742 = vpack.c.b16 %v512, %v510
  %v743 = vpack.c.b16 %v515, %v513
  %v744 = vpack.c.b16 %v516, %v514
  %v745 = vpack.c.b16 %v519, %v517
  %v746 = vpack.c.b16 %v520, %v518
  %v747 = vpack.c.b16 %v523, %v521
  %v748 = vpack.c.b16 %v524, %v522
  %v749 = vpack.c.b16 %v527, %v525
  %v750 = vpack.c.b16 %v528, %v526
  %v751 = vpack.c.b16 %v531, %v529
  %v752 = vpack.c.b16 %v532, %v530
  %v753 = vpack.c.b16 %v535, %v533
  %v754 = vpack.c.b16 %v536, %v534
  %v755 = vpack.c.b16 %v539, %v537
  %v756 = vpack.c.b16 %v540, %v538
  %v757 = vpack.c.b16 %v543, %v541
  %v758 = vpack.c.b16 %v544, %v542
  %v759 = vpack.c.b16 %v547, %v545
  %v760 = vpack.c.b16 %v548, %v546
  %v761 = vpack.c.b16 %v551, %v549
  %v762 = vpack.c.b16 %v552, %v550
  %v763 = vpack.c.b16 %v555, %v553
  %v764 = vpack.c.b16 %v556, %v554
  %v765 = vpack.c.b16 %v559, %v557
  %v766 = vpack.c.b16 %v560, %v558
  %v767 = vpack.c.b16 %v563, %v561
  %v768 = vpack.c.b16 %v564, %v562
  %v769 = vpack.c.b16 %v567, %v565
  %v770 = vpack.c.b16 %v568, %v566
  %v771 = vpack.c.b16 %v571, %v569
  %v772 = vpack.c.b16 %v572, %v570
  %v773 = vpack.c.b16 %v575, %v573
  %v774 = vpack.c.b16 %v576, %v574
  %v775 = vpack.c.b16 %v579, %v577
  %v776 = vpack.c.b16 %v580, %v578
  %v777 = vpack.c.b16 %v583, %v581
  %v778 = vpack.c.b16 %v584, %v582
  %v779 = vpack.c.b16 %v587, %v585
  %v780 = vpack.c.b16 %v588, %v586
  %v781 = vpack.c.b16 %v591, %v589
  %v782 = vpack.c.b16 %v592, %v590
  %v783 = vpack.c.b16 %v595, %v593
  %v784 = vpack.c.b16 %v596, %v594
  %v785 = vpack.c.b16 %v599, %v597
  %v786 = vpack.c.b16 %v600, %v598
  %v787 = vpack.c.b16 %v603, %v601
  %v788 = vpack.c.b16 %v604, %v602
  %v789 = vpack.c.b16 %v607, %v605
  %v790 = vpack.c.b16 %v608, %v606
  %v791 = vpack.c.b16 %v611, %v609
  %v792 = vpack.c.b16 %v612, %v610
  %v793 = vpack.c.b16 %v615, %v613
  %v794 = vpack.c.b16 %v616, %v614
  %v795 = vpack.c.b16 %v619, %v617
  %v796 = vpack.c.b16 %v620, %v618
  %v797 = vpack.c.b16 %v623, %v621
  %v798 = vpack.c.b16 %v624, %v622
  %v799 = vpack.c.b16 %v627, %v625
  %v800 = vpack.c.b16 %v628, %v626
  %v801 = vpack.c.b16 %v631, %v629
  %v802 = vpack.c.b16 %v632, %v630
  %v803 = vpack.c.b16 %v635, %v633
  %v804 = vpack.c.b16 %v636, %v634
  %v805 = vpack.c.b16 %v639, %v637
  %v806 = vpack.c.b16 %v640, %v638
  %v807 = vpack.c.b16 %v643, %v641
  %v808 = vpack.c.b16 %v644, %v642
  %v809 = vpack.c.b16 %v647, %v645
  %v810 = vpack.c.b16 %v648, %v646
  %v811 = vpack.c.b16 %v651, %v649
  %v812 = vpack.c.b16 %v652, %v650
  %v813 = vpack.c.b16 %v655, %v653
  %v814 = vpack.c.b16 %v656, %v654
  %v815 = vpack.c.b16 %v659, %v657
  %v816 = vpack.c.b16 %v660, %v658
  %v817 = vpack.c.b16 %v663, %v661
  %v818 = vpack.c.b16 %v664, %v662
  %v819 = vpack.c.b16 %v667, %v665
  %v820 = vpack.c.b16 %v668, %v666
  %v821 = vpack.c.b16 %v671, %v669
  %v822 = vpack.c.b16 %v672, %v670
  %v823 = vpack.c.b16 %v675, %v673
  %v824 = vpack.c.b16 %v676, %v674
  %v825 = vpack.c.b16 %v679, %v677
  %v826 = vpack.c.b16 %v680, %v678
  %v827 = vpack.c.b16 %v683, %v681
  %v828 = vpack.c.b16 %v684, %v682
  %973 = vmatprep.subr.bf16.mxu0 %v686
  %974 = vmatpush1.bf16.msra.mxu0 %v685
  %975 = vmatprep.subr.bf16.mxu0 %v688
  %976 = vmatpush1.bf16.msra.mxu0 %v687
  %977 = vmatprep.subr.bf16.mxu0 %v690
  %978 = vmatpush1.bf16.msra.mxu0 %v689
  %979 = vmatprep.subr.bf16.mxu0 %v692
  %980 = vmatpush1.bf16.msra.mxu0 %v691
  %981 = vmatprep.subr.bf16.mxu0 %v694
  %982 = vmatpush1.bf16.msra.mxu0 %v693
  %983 = vmatprep.subr.bf16.mxu0 %v696
  %984 = vmatpush1.bf16.msra.mxu0 %v695
  %985 = vmatprep.subr.bf16.mxu0 %v698
  %986 = vmatpush1.bf16.msra.mxu0 %v697
  %987 = vmatprep.subr.bf16.mxu0 %v700
  %988 = vmatpush1.bf16.msra.mxu0 %v699
  %989 = vmatprep.subr.bf16.mxu0 %v702
  %990 = vmatpush1.bf16.msra.mxu0 %v701
  %991 = vmatprep.subr.bf16.mxu0 %v704
  %992 = vmatpush1.bf16.msra.mxu0 %v703
  %993 = vmatprep.subr.bf16.mxu0 %v706
  %994 = vmatpush1.bf16.msra.mxu0 %v705
  %995 = vmatprep.subr.bf16.mxu0 %v708
  %996 = vmatpush1.bf16.msra.mxu0 %v707
  %997 = vmatprep.subr.bf16.mxu0 %v710
  %998 = vmatpush1.bf16.msra.mxu0 %v709
  %999 = vmatprep.subr.bf16.mxu0 %v712
  %1000 = vmatpush1.bf16.msra.mxu0 %v711
  %1001 = vmatprep.subr.bf16.mxu0 %v714
  %1002 = vmatpush1.bf16.msra.mxu0 %v713
  %1003 = vmatprep.subr.bf16.mxu0 %v716
  %1004 = vmatpush1.bf16.msra.mxu0 %v715
  %1005 = vmatprep.mubr.bf16.mxu0 %v218
  %1006 = vmatmul.mubr.bf16.gmra.mrb[0].mxu0 %v204
  %v1007 = vpop.f32.mrb[0].mxu0
  %v1008 = vadd.f32 %v172, %v1007
  %v1009 = vpop.f32.mrb[0].mxu0
  %v1010 = vadd.f32 %v176, %v1009
  %v1011 = vpop.f32.mrb[0].mxu0
  %v1012 = vpop.f32.mrb[0].mxu0
  %1013 = vdwg.mxu0
  %1014 = vmatprep.subr.bf16.mxu0 %v718
  %1015 = vmatpush1.bf16.msra.mxu0 %v717
  %1016 = vmatprep.subr.bf16.mxu0 %v720
  %1017 = vmatpush1.bf16.msra.mxu0 %v719
  %1018 = vmatprep.subr.bf16.mxu0 %v722
  %1019 = vmatpush1.bf16.msra.mxu0 %v721
  %1020 = vmatprep.subr.bf16.mxu0 %v724
  %1021 = vmatpush1.bf16.msra.mxu0 %v723
  %1022 = vmatprep.subr.bf16.mxu0 %v726
  %1023 = vmatpush1.bf16.msra.mxu0 %v725
  %1024 = vmatprep.subr.bf16.mxu0 %v728
  %1025 = vmatpush1.bf16.msra.mxu0 %v727
  %1026 = vmatprep.subr.bf16.mxu0 %v730
  %1027 = vmatpush1.bf16.msra.mxu0 %v729
  %1028 = vmatprep.subr.bf16.mxu0 %v732
  %1029 = vmatpush1.bf16.msra.mxu0 %v731
  %1030 = vmatprep.subr.bf16.mxu0 %v734
  %1031 = vmatpush1.bf16.msra.mxu0 %v733
  %1032 = vmatprep.subr.bf16.mxu0 %v736
  %1033 = vmatpush1.bf16.msra.mxu0 %v735
  %1034 = vmatprep.subr.bf16.mxu0 %v738
  %1035 = vmatpush1.bf16.msra.mxu0 %v737
  %1036 = vmatprep.subr.bf16.mxu0 %v740
  %1037 = vmatpush1.bf16.msra.mxu0 %v739
  %1038 = vmatprep.subr.bf16.mxu0 %v742
  %1039 = vmatpush1.bf16.msra.mxu0 %v741
  %1040 = vmatprep.subr.bf16.mxu0 %v744
  %1041 = vmatpush1.bf16.msra.mxu0 %v743
  %1042 = vmatprep.subr.bf16.mxu0 %v746
  %1043 = vmatpush1.bf16.msra.mxu0 %v745
  %1044 = vmatprep.subr.bf16.mxu0 %v748
  %1045 = vmatpush1.bf16.msra.mxu0 %v747
  %1046 = vmatprep.mubr.bf16.mxu0 %v228
  %1047 = vmatmul.mubr.bf16.gmra.mrb[0].mxu0 %v226
  %v1048 = vpop.f32.mrb[0].mxu0
  %v1049 = vadd.f32 %v1008, %v1048
  %v1050 = vpop.f32.mrb[0].mxu0
  %v1051 = vadd.f32 %v1010, %v1050
  %v1052 = vpop.f32.mrb[0].mxu0
  %v1053 = vpop.f32.mrb[0].mxu0
  %1054 = vdwg.mxu0
  %1055 = vmatprep.subr.bf16.mxu0 %v750
  %1056 = vmatpush1.bf16.msra.mxu0 %v749
  %1057 = vmatprep.subr.bf16.mxu0 %v752
  %1058 = vmatpush1.bf16.msra.mxu0 %v751
  %1059 = vmatprep.subr.bf16.mxu0 %v754
  %1060 = vmatpush1.bf16.msra.mxu0 %v753
  %1061 = vmatprep.subr.bf16.mxu0 %v756
  %1062 = vmatpush1.bf16.msra.mxu0 %v755
  %1063 = vmatprep.subr.bf16.mxu0 %v758
  %1064 = vmatpush1.bf16.msra.mxu0 %v757
  %1065 = vmatprep.subr.bf16.mxu0 %v760
  %1066 = vmatpush1.bf16.msra.mxu0 %v759
  %1067 = vmatprep.subr.bf16.mxu0 %v762
  %1068 = vmatpush1.bf16.msra.mxu0 %v761
  %1069 = vmatprep.subr.bf16.mxu0 %v764
  %1070 = vmatpush1.bf16.msra.mxu0 %v763
  %1071 = vmatprep.subr.bf16.mxu0 %v766
  %1072 = vmatpush1.bf16.msra.mxu0 %v765
  %1073 = vmatprep.subr.bf16.mxu0 %v768
  %1074 = vmatpush1.bf16.msra.mxu0 %v767
  %1075 = vmatprep.subr.bf16.mxu0 %v770
  %1076 = vmatpush1.bf16.msra.mxu0 %v769
  %1077 = vmatprep.subr.bf16.mxu0 %v772
  %1078 = vmatpush1.bf16.msra.mxu0 %v771
  %1079 = vmatprep.subr.bf16.mxu0 %v774
  %1080 = vmatpush1.bf16.msra.mxu0 %v773
  %1081 = vmatprep.subr.bf16.mxu0 %v776
  %1082 = vmatpush1.bf16.msra.mxu0 %v775
  %1083 = vmatprep.subr.bf16.mxu0 %v778
  %1084 = vmatpush1.bf16.msra.mxu0 %v777
  %1085 = vmatprep.subr.bf16.mxu0 %v780
  %1086 = vmatpush1.bf16.msra.mxu0 %v779
  %1087 = vmatprep.mubr.bf16.mxu0 %v225
  %1088 = vmatmul.mubr.bf16.gmra.mrb[0].mxu0 %v211
  %v1089 = vpop.f32.mrb[0].mxu0
  %v1090 = vadd.f32 %v1049, %v1089
  %v1091 = vpop.f32.mrb[0].mxu0
  %v1092 = vadd.f32 %v1051, %v1091
  %v1093 = vpop.f32.mrb[0].mxu0
  %v1094 = vpop.f32.mrb[0].mxu0
  %1095 = vdwg.mxu0
  %1096 = vmatprep.subr.bf16.mxu0 %v782
  %1097 = vmatpush1.bf16.msra.mxu0 %v781
  %1098 = vmatprep.subr.bf16.mxu0 %v784
  %1099 = vmatpush1.bf16.msra.mxu0 %v783
  %1100 = vmatprep.subr.bf16.mxu0 %v786
  %1101 = vmatpush1.bf16.msra.mxu0 %v785
  %1102 = vmatprep.subr.bf16.mxu0 %v788
  %1103 = vmatpush1.bf16.msra.mxu0 %v787
  %1104 = vmatprep.subr.bf16.mxu0 %v790
  %1105 = vmatpush1.bf16.msra.mxu0 %v789
  %1106 = vmatprep.subr.bf16.mxu0 %v792
  %1107 = vmatpush1.bf16.msra.mxu0 %v791
  %1108 = vmatprep.subr.bf16.mxu0 %v794
  %1109 = vmatpush1.bf16.msra.mxu0 %v793
  %1110 = vmatprep.subr.bf16.mxu0 %v796
  %1111 = vmatpush1.bf16.msra.mxu0 %v795
  %1112 = vmatprep.subr.bf16.mxu0 %v798
  %1113 = vmatpush1.bf16.msra.mxu0 %v797
  %1114 = vmatprep.subr.bf16.mxu0 %v800
  %1115 = vmatpush1.bf16.msra.mxu0 %v799
  %1116 = vmatprep.subr.bf16.mxu0 %v802
  %1117 = vmatpush1.bf16.msra.mxu0 %v801
  %1118 = vmatprep.subr.bf16.mxu0 %v804
  %1119 = vmatpush1.bf16.msra.mxu0 %v803
  %1120 = vmatprep.subr.bf16.mxu0 %v806
  %1121 = vmatpush1.bf16.msra.mxu0 %v805
  %1122 = vmatprep.subr.bf16.mxu0 %v808
  %1123 = vmatpush1.bf16.msra.mxu0 %v807
  %1124 = vmatprep.subr.bf16.mxu0 %v810
  %1125 = vmatpush1.bf16.msra.mxu0 %v809
  %1126 = vmatprep.subr.bf16.mxu0 %v812
  %1127 = vmatpush1.bf16.msra.mxu0 %v811
  %1128 = vmatprep.mubr.bf16.mxu0 %v229
  %1129 = vmatmul.mubr.bf16.gmra.mrb[0].mxu0 %v227
  %v1130 = vpop.f32.mrb[0].mxu0
  %v1131 = vadd.f32 %v1090, %v1130
  %v1132 = vpop.f32.mrb[0].mxu0
  %v1133 = vadd.f32 %v1092, %v1132
  %v1134 = vpop.f32.mrb[0].mxu0
  %v1135 = vpop.f32.mrb[0].mxu0
  %1136 = vdwg.mxu0
  %1137 = vmatprep.subr.bf16.mxu0 %v814
  %1138 = vmatpush1.bf16.msra.mxu0 %v813
  %1139 = vmatprep.subr.bf16.mxu0 %v816
  %1140 = vmatpush1.bf16.msra.mxu0 %v815
  %1141 = vmatprep.subr.bf16.mxu0 %v818
  %1142 = vmatpush1.bf16.msra.mxu0 %v817
  %1143 = vmatprep.subr.bf16.mxu0 %v820
  %1144 = vmatpush1.bf16.msra.mxu0 %v819
  %1145 = vmatprep.subr.bf16.mxu0 %v822
  %1146 = vmatpush1.bf16.msra.mxu0 %v821
  %1147 = vmatprep.subr.bf16.mxu0 %v824
  %1148 = vmatpush1.bf16.msra.mxu0 %v823
  %1149 = vmatprep.subr.bf16.mxu0 %v826
  %1150 = vmatpush1.bf16.msra.mxu0 %v825
  %1151 = vmatprep.subr.bf16.mxu0 %v828
  %1152 = vmatpush1.bf16.msra.mxu0 %v827
  %1153 = vmatprep.subr.bf16.mxu0 0
  %1154 = vmatpush1.bf16.msra.mxu0 0
  %1155 = vmatprep.subr.bf16.mxu0 0
  %1156 = vmatpush1.bf16.msra.mxu0 0
  %1157 = vmatprep.subr.bf16.mxu0 0
  %1158 = vmatpush1.bf16.msra.mxu0 0
  %1159 = vmatprep.subr.bf16.mxu0 0
  %1160 = vmatpush1.bf16.msra.mxu0 0
  %1161 = vmatprep.subr.bf16.mxu0 0
  %1162 = vmatpush1.bf16.msra.mxu0 0
  %1163 = vmatprep.subr.bf16.mxu0 0
  %1164 = vmatpush1.bf16.msra.mxu0 0
  %1165 = vmatprep.subr.bf16.mxu0 0
  %1166 = vmatpush1.bf16.msra.mxu0 0
  %1167 = vmatprep.subr.bf16.mxu0 0
  %1168 = vmatpush1.bf16.msra.mxu0 0
  %1169 = vmatprep.mubr.bf16.mxu0 0
  %1170 = vmatmul.mubr.bf16.gmra.mrb[0].mxu0 %v243
  %v1171 = vpop.f32.mrb[0].mxu0
  %v1172 = vadd.f32 %v1131, %v1171
  %v1173 = vpop.f32.mrb[0].mxu0
  %v1174 = vadd.f32 %v1133, %v1173
  %v1175 = vpop.f32.mrb[0].mxu0
  %v1176 = vpop.f32.mrb[0].mxu0
  %1177 = vdwg.mxu0
  %v1178 = vmax.f32 %v1172, 0.0
  %v1179 = vmax.f32 %v1174, 0.0
  %v1180 = vpack.c.bf16 %v1178, %v1178
  %v1181 = vpack.c.bf16 %v1179, %v1179
  %v1182 = vld [vmem:[%s3] sm:$0xff]
  %v1183 = vld [vmem:[%s3 + $0x8] sm:$0xff]
  %v1184 = vld [vmem:[%s3 + $0x10] sm:$0xff]
  %v1185 = vld [vmem:[%s3 + $0x18] sm:$0xff]
  %v1186 = vld [vmem:[%s3 + $0x20] sm:$0xff]
  %v1187 = vld [vmem:[%s3 + $0x28] sm:$0xff]
  %v1188 = vld [vmem:[%s3 + $0x30] sm:$0xff]
  %v1189 = vld [vmem:[%s3 + $0x38] sm:$0xff]
  %v1190 = vld [vmem:[%s3 + $0x40] sm:$0xff]
  %v1191 = vld [vmem:[%s3 + $0x48] sm:$0xff]
  %v1192 = vld [vmem:[%s3 + $0x50] sm:$0xff]
  %v1193 = vld [vmem:[%s3 + $0x58] sm:$0xff]
  %v1194 = vld [vmem:[%s3 + $0x60] sm:$0xff]
  %v1195 = vld [vmem:[%s3 + $0x68] sm:$0xff]
  %v1196 = vld [vmem:[%s3 + $0x70] sm:$0xff]
  %v1197 = vld [vmem:[%s3 + $0x78] sm:$0xff]
  %v1198 = vld [vmem:[%s3 + $0x80] sm:$0xff]
  %v1199 = vld [vmem:[%s3 + $0x88] sm:$0xff]
  %v1200 = vld [vmem:[%s3 + $0x90] sm:$0xff]
  %v1201 = vld [vmem:[%s3 + $0x98] sm:$0xff]
  %v1202 = vld [vmem:[%s3 + $0xa0] sm:$0xff]
  %v1203 = vld [vmem:[%s3 + $0xa8] sm:$0xff]
  %v1204 = vld [vmem:[%s3 + $0xb0] sm:$0xff]
  %v1205 = vld [vmem:[%s3 + $0xb8] sm:$0xff]
  %v1206 = vld [vmem:[%s3 + $0xc0] sm:$0xff]
  %v1207 = vld [vmem:[%s3 + $0xc8] sm:$0xff]
  %v1208 = vld [vmem:[%s3 + $0xd0] sm:$0xff]
  %v1209 = vld [vmem:[%s3 + $0xd8] sm:$0xff]
  %v1210 = vld [vmem:[%s3 + $0xe0] sm:$0xff]
  %v1211 = vld [vmem:[%s3 + $0xe8] sm:$0xff]
  %v1212 = vld [vmem:[%s3 + $0xf0] sm:$0xff]
  %v1213 = vld [vmem:[%s3 + $0xf8] sm:$0xff]
  %v1214 = vld [vmem:[%s3 + $0x100] sm:$0xff]
  %v1215 = vld [vmem:[%s3 + $0x108] sm:$0xff]
  %v1216 = vld [vmem:[%s3 + $0x110] sm:$0xff]
  %v1217 = vld [vmem:[%s3 + $0x118] sm:$0xff]
  %v1218 = vld [vmem:[%s3 + $0x120] sm:$0xff]
  %v1219 = vld [vmem:[%s3 + $0x128] sm:$0xff]
  %v1220 = vld [vmem:[%s3 + $0x130] sm:$0xff]
  %v1221 = vld [vmem:[%s3 + $0x138] sm:$0xff]
  %v1222 = vld [vmem:[%s3 + $0x140] sm:$0xff]
  %v1223 = vld [vmem:[%s3 + $0x148] sm:$0xff]
  %v1224 = vld [vmem:[%s3 + $0x150] sm:$0xff]
  %v1225 = vld [vmem:[%s3 + $0x158] sm:$0xff]
  %v1226 = vld [vmem:[%s3 + $0x160] sm:$0xff]
  %v1227 = vld [vmem:[%s3 + $0x168] sm:$0xff]
  %v1228 = vld [vmem:[%s3 + $0x170] sm:$0xff]
  %v1229 = vld [vmem:[%s3 + $0x178] sm:$0xff]
  %v1230 = vld [vmem:[%s3 + $0x180] sm:$0xff]
  %v1231 = vld [vmem:[%s3 + $0x188] sm:$0xff]
  %v1232 = vld [vmem:[%s3 + $0x190] sm:$0xff]
  %v1233 = vld [vmem:[%s3 + $0x198] sm:$0xff]
  %v1234 = vld [vmem:[%s3 + $0x1a0] sm:$0xff]
  %v1235 = vld [vmem:[%s3 + $0x1a8] sm:$0xff]
  %v1236 = vld [vmem:[%s3 + $0x1b0] sm:$0xff]
  %v1237 = vld [vmem:[%s3 + $0x1b8] sm:$0xff]
  %v1238 = vld [vmem:[%s3 + $0x1c0] sm:$0xff]
  %v1239 = vld [vmem:[%s3 + $0x1c8] sm:$0xff]
  %v1240 = vld [vmem:[%s3 + $0x1d0] sm:$0xff]
  %v1241 = vld [vmem:[%s3 + $0x1d8] sm:$0xff]
  %v1242 = vld [vmem:[%s3 + $0x1e0] sm:$0xff]
  %v1243 = vld [vmem:[%s3 + $0x1e8] sm:$0xff]
  %v1244 = vld [vmem:[%s3 + $0x1f0] sm:$0xff]
  %v1245 = vld [vmem:[%s3 + $0x1f8] sm:$0xff]
  %v1246 = vld [vmem:[%s3 + $0x200] sm:$0xff]
  %v1247 = vld [vmem:[%s3 + $0x208] sm:$0xff]
  %v1248 = vld [vmem:[%s3 + $0x210] sm:$0xff]
  %v1249 = vld [vmem:[%s3 + $0x218] sm:$0xff]
  %v1250 = vld [vmem:[%s3 + $0x220] sm:$0xff]
  %v1251 = vld [vmem:[%s3 + $0x228] sm:$0xff]
  %v1252 = vld [vmem:[%s3 + $0x230] sm:$0xff]
  %v1253 = vld [vmem:[%s3 + $0x238] sm:$0xff]
  %v1254 = vld [vmem:[%s3 + $0x240] sm:$0xff]
  %v1255 = vld [vmem:[%s3 + $0x248] sm:$0xff]
  %v1256 = vld [vmem:[%s3 + $0x250] sm:$0xff]
  %v1257 = vld [vmem:[%s3 + $0x258] sm:$0xff]
  %v1258 = vld [vmem:[%s3 + $0x260] sm:$0xff]
  %v1259 = vld [vmem:[%s3 + $0x268] sm:$0xff]
  %v1260 = vld [vmem:[%s3 + $0x270] sm:$0xff]
  %v1261 = vld [vmem:[%s3 + $0x278] sm:$0xff]
  %v1262 = vld [vmem:[%s3 + $0x280] sm:$0xff]
  %v1263 = vld [vmem:[%s3 + $0x288] sm:$0xff]
  %v1264 = vld [vmem:[%s3 + $0x290] sm:$0xff]
  %v1265 = vld [vmem:[%s3 + $0x298] sm:$0xff]
  %v1266 = vld [vmem:[%s3 + $0x2a0] sm:$0xff]
  %v1267 = vld [vmem:[%s3 + $0x2a8] sm:$0xff]
  %v1268 = vld [vmem:[%s3 + $0x2b0] sm:$0xff]
  %v1269 = vld [vmem:[%s3 + $0x2b8] sm:$0xff]
  %v1270 = vld [vmem:[%s3 + $0x2c0] sm:$0xff]
  %v1271 = vld [vmem:[%s3 + $0x2c8] sm:$0xff]
  %v1272 = vld [vmem:[%s3 + $0x2d0] sm:$0xff]
  %v1273 = vld [vmem:[%s3 + $0x2d8] sm:$0xff]
  %v1274 = vld [vmem:[%s3 + $0x2e0] sm:$0xff]
  %v1275 = vld [vmem:[%s3 + $0x2e8] sm:$0xff]
  %v1276 = vld [vmem:[%s3 + $0x2f0] sm:$0xff]
  %v1277 = vld [vmem:[%s3 + $0x2f8] sm:$0xff]
  %v1278 = vld [vmem:[%s3 + $0x300] sm:$0xff]
  %v1279 = vld [vmem:[%s3 + $0x308] sm:$0xff]
  %v1280 = vld [vmem:[%s3 + $0x310] sm:$0xff]
  %v1281 = vld [vmem:[%s3 + $0x318] sm:$0xff]
  %v1282 = vld [vmem:[%s3 + $0x320] sm:$0xff]
  %v1283 = vld [vmem:[%s3 + $0x328] sm:$0xff]
  %v1284 = vld [vmem:[%s3 + $0x330] sm:$0xff]
  %v1285 = vld [vmem:[%s3 + $0x338] sm:$0xff]
  %v1286 = vld [vmem:[%s3 + $0x340] sm:$0xff]
  %v1287 = vld [vmem:[%s3 + $0x348] sm:$0xff]
  %v1288 = vld [vmem:[%s3 + $0x350] sm:$0xff]
  %v1289 = vld [vmem:[%s3 + $0x358] sm:$0xff]
  %v1290 = vld [vmem:[%s3 + $0x360] sm:$0xff]
  %v1291 = vld [vmem:[%s3 + $0x368] sm:$0xff]
  %v1292 = vld [vmem:[%s3 + $0x370] sm:$0xff]
  %v1293 = vld [vmem:[%s3 + $0x378] sm:$0xff]
  %v1294 = vld [vmem:[%s3 + $0x380] sm:$0xff]
  %v1295 = vld [vmem:[%s3 + $0x388] sm:$0xff]
  %v1296 = vld [vmem:[%s3 + $0x390] sm:$0xff]
  %v1297 = vld [vmem:[%s3 + $0x398] sm:$0xff]
  %v1298 = vld [vmem:[%s3 + $0x3a0] sm:$0xff]
  %v1299 = vld [vmem:[%s3 + $0x3a8] sm:$0xff]
  %v1300 = vld [vmem:[%s3 + $0x3b0] sm:$0xff]
  %v1301 = vld [vmem:[%s3 + $0x3b8] sm:$0xff]
  %v1302 = vld [vmem:[%s3 + $0x3c0] sm:$0xff]
  %v1303 = vld [vmem:[%s3 + $0x3c8] sm:$0xff]
  %v1304 = vld [vmem:[%s3 + $0x3d0] sm:$0xff]
  %v1305 = vld [vmem:[%s3 + $0x3d8] sm:$0xff]
  %v1306 = vld [vmem:[%s3 + $0x3e0] sm:$0xff]
  %v1307 = vld [vmem:[%s3 + $0x3e8] sm:$0xff]
  %v1308 = vld [vmem:[%s3 + $0x3f0] sm:$0xff]
  %v1309 = vld [vmem:[%s3 + $0x3f8] sm:$0xff]
  %v1310 = vld [vmem:[%s3 + $0x400] sm:$0xff]
  %v1311 = vld [vmem:[%s3 + $0x408] sm:$0xff]
  %v1312 = vld [vmem:[%s3 + $0x410] sm:$0xff]
  %v1313 = vld [vmem:[%s3 + $0x418] sm:$0xff]
  %v1314 = vld [vmem:[%s3 + $0x420] sm:$0xff]
  %v1315 = vld [vmem:[%s3 + $0x428] sm:$0xff]
  %v1316 = vld [vmem:[%s3 + $0x430] sm:$0xff]
  %v1317 = vld [vmem:[%s3 + $0x438] sm:$0xff]
  %v1318 = vld [vmem:[%s3 + $0x440] sm:$0xff]
  %v1319 = vld [vmem:[%s3 + $0x448] sm:$0xff]
  %v1320 = vld [vmem:[%s3 + $0x450] sm:$0xff]
  %v1321 = vld [vmem:[%s3 + $0x458] sm:$0xff]
  %v1322 = vld [vmem:[%s3 + $0x460] sm:$0xff]
  %v1323 = vld [vmem:[%s3 + $0x468] sm:$0xff]
  %v1324 = vld [vmem:[%s3 + $0x470] sm:$0xff]
  %v1325 = vld [vmem:[%s3 + $0x478] sm:$0xff]
  %v1326 = vld [vmem:[%s3 + $0x480] sm:$0xff]
  %v1327 = vld [vmem:[%s3 + $0x488] sm:$0xff]
  %v1328 = vld [vmem:[%s3 + $0x490] sm:$0xff]
  %v1329 = vld [vmem:[%s3 + $0x498] sm:$0xff]
  %v1330 = vld [vmem:[%s3 + $0x4a0] sm:$0xff]
  %v1331 = vld [vmem:[%s3 + $0x4a8] sm:$0xff]
  %v1332 = vld [vmem:[%s3 + $0x4b0] sm:$0xff]
  %v1333 = vld [vmem:[%s3 + $0x4b8] sm:$0xff]
  %v1334 = vld [vmem:[%s3 + $0x4c0] sm:$0xff]
  %v1335 = vld [vmem:[%s3 + $0x4c8] sm:$0xff]
  %v1336 = vld [vmem:[%s3 + $0x4d0] sm:$0xff]
  %v1337 = vld [vmem:[%s3 + $0x4d8] sm:$0xff]
  %v1338 = vld [vmem:[%s3 + $0x4e0] sm:$0xff]
  %v1339 = vld [vmem:[%s3 + $0x4e8] sm:$0xff]
  %v1340 = vld [vmem:[%s3 + $0x4f0] sm:$0xff]
  %v1341 = vld [vmem:[%s3 + $0x4f8] sm:$0xff]
  %v1342 = vld [vmem:[%s3 + $0x500] sm:$0xff]
  %v1343 = vld [vmem:[%s3 + $0x508] sm:$0xff]
  %v1344 = vld [vmem:[%s3 + $0x510] sm:$0xff]
  %v1345 = vld [vmem:[%s3 + $0x518] sm:$0xff]
  %v1346 = vld [vmem:[%s3 + $0x520] sm:$0xff]
  %v1347 = vld [vmem:[%s3 + $0x528] sm:$0xff]
  %v1348 = vld [vmem:[%s3 + $0x530] sm:$0xff]
  %v1349 = vld [vmem:[%s3 + $0x538] sm:$0xff]
  %v1350 = vld [vmem:[%s3 + $0x540] sm:$0xff]
  %v1351 = vld [vmem:[%s3 + $0x548] sm:$0xff]
  %v1352 = vld [vmem:[%s3 + $0x550] sm:$0xff]
  %v1353 = vld [vmem:[%s3 + $0x558] sm:$0xff]
  %v1354 = vld [vmem:[%s3 + $0x560] sm:$0xff]
  %v1355 = vld [vmem:[%s3 + $0x568] sm:$0xff]
  %v1356 = vld [vmem:[%s3 + $0x570] sm:$0xff]
  %v1357 = vld [vmem:[%s3 + $0x578] sm:$0xff]
  %v1358 = vld [vmem:[%s3 + $0x580] sm:$0xff]
  %v1359 = vld [vmem:[%s3 + $0x588] sm:$0xff]
  %v1360 = vld [vmem:[%s3 + $0x590] sm:$0xff]
  %v1361 = vld [vmem:[%s3 + $0x598] sm:$0xff]
  %v1362 = vld [vmem:[%s3 + $0x5a0] sm:$0xff]
  %v1363 = vld [vmem:[%s3 + $0x5a8] sm:$0xff]
  %v1364 = vld [vmem:[%s3 + $0x5b0] sm:$0xff]
  %v1365 = vld [vmem:[%s3 + $0x5b8] sm:$0xff]
  %v1366 = vld [vmem:[%s3 + $0x5c0] sm:$0xff]
  %v1367 = vld [vmem:[%s3 + $0x5c8] sm:$0xff]
  %v1368 = vld [vmem:[%s3 + $0x5d0] sm:$0xff]
  %v1369 = vld [vmem:[%s3 + $0x5d8] sm:$0xff]
  %v1370 = vld [vmem:[%s3 + $0x5e0] sm:$0xff]
  %v1371 = vld [vmem:[%s3 + $0x5e8] sm:$0xff]
  %v1372 = vld [vmem:[%s3 + $0x5f0] sm:$0xff]
  %v1373 = vld [vmem:[%s3 + $0x5f8] sm:$0xff]
  %v1374 = vld [vmem:[%s3 + $0x600] sm:$0xff]
  %v1375 = vld [vmem:[%s3 + $0x608] sm:$0xff]
  %v1376 = vld [vmem:[%s3 + $0x610] sm:$0xff]
  %v1377 = vld [vmem:[%s3 + $0x618] sm:$0xff]
  %v1378 = vld [vmem:[%s3 + $0x620] sm:$0xff]
  %v1379 = vld [vmem:[%s3 + $0x628] sm:$0xff]
  %v1380 = vld [vmem:[%s3 + $0x630] sm:$0xff]
  %v1381 = vld [vmem:[%s3 + $0x638] sm:$0xff]
  %v1382 = vld [vmem:[%s3 + $0x640] sm:$0xff]
  %v1383 = vld [vmem:[%s3 + $0x648] sm:$0xff]
  %v1384 = vld [vmem:[%s3 + $0x650] sm:$0xff]
  %v1385 = vld [vmem:[%s3 + $0x658] sm:$0xff]
  %v1386 = vld [vmem:[%s3 + $0x660] sm:$0xff]
  %v1387 = vld [vmem:[%s3 + $0x668] sm:$0xff]
  %v1388 = vld [vmem:[%s3 + $0x670] sm:$0xff]
  %v1389 = vld [vmem:[%s3 + $0x678] sm:$0xff]
  %v1390 = vld [vmem:[%s3 + $0x680] sm:$0xff]
  %v1391 = vld [vmem:[%s3 + $0x688] sm:$0xff]
  %v1392 = vld [vmem:[%s3 + $0x690] sm:$0xff]
  %v1393 = vld [vmem:[%s3 + $0x698] sm:$0xff]
  %v1394 = vld [vmem:[%s3 + $0x6a0] sm:$0xff]
  %v1395 = vld [vmem:[%s3 + $0x6a8] sm:$0xff]
  %v1396 = vld [vmem:[%s3 + $0x6b0] sm:$0xff]
  %v1397 = vld [vmem:[%s3 + $0x6b8] sm:$0xff]
  %v1398 = vld [vmem:[%s3 + $0x6c0] sm:$0xff]
  %v1399 = vld [vmem:[%s3 + $0x6c8] sm:$0xff]
  %v1400 = vld [vmem:[%s3 + $0x6d0] sm:$0xff]
  %v1401 = vld [vmem:[%s3 + $0x6d8] sm:$0xff]
  %v1402 = vld [vmem:[%s3 + $0x6e0] sm:$0xff]
  %v1403 = vld [vmem:[%s3 + $0x6e8] sm:$0xff]
  %v1404 = vld [vmem:[%s3 + $0x6f0] sm:$0xff]
  %v1405 = vld [vmem:[%s3 + $0x6f8] sm:$0xff]
  %v1406 = vld [vmem:[%s3 + $0x700] sm:$0xff]
  %v1407 = vld [vmem:[%s3 + $0x708] sm:$0xff]
  %v1408 = vld [vmem:[%s3 + $0x710] sm:$0xff]
  %v1409 = vld [vmem:[%s3 + $0x718] sm:$0xff]
  %v1410 = vld [vmem:[%s3 + $0x720] sm:$0xff]
  %v1411 = vld [vmem:[%s3 + $0x728] sm:$0xff]
  %v1412 = vld [vmem:[%s3 + $0x730] sm:$0xff]
  %v1413 = vld [vmem:[%s3 + $0x738] sm:$0xff]
  %v1414 = vld [vmem:[%s3 + $0x740] sm:$0xff]
  %v1415 = vld [vmem:[%s3 + $0x748] sm:$0xff]
  %v1416 = vld [vmem:[%s3 + $0x750] sm:$0xff]
  %v1417 = vld [vmem:[%s3 + $0x758] sm:$0xff]
  %v1418 = vld [vmem:[%s3 + $0x760] sm:$0xff]
  %v1419 = vld [vmem:[%s3 + $0x768] sm:$0xff]
  %v1420 = vld [vmem:[%s3 + $0x770] sm:$0xff]
  %v1421 = vld [vmem:[%s3 + $0x778] sm:$0xff]
  %v1422 = vld [vmem:[%s3 + $0x780] sm:$0xff]
  %v1423 = vld [vmem:[%s3 + $0x788] sm:$0xff]
  %v1424 = vld [vmem:[%s3 + $0x790] sm:$0xff]
  %v1425 = vld [vmem:[%s3 + $0x798] sm:$0xff]
  %v1426 = vld [vmem:[%s3 + $0x7a0] sm:$0xff]
  %v1427 = vld [vmem:[%s3 + $0x7a8] sm:$0xff]
  %v1428 = vld [vmem:[%s3 + $0x7b0] sm:$0xff]
  %v1429 = vld [vmem:[%s3 + $0x7b8] sm:$0xff]
  %v1430 = vld [vmem:[%s3 + $0x7c0] sm:$0xff]
  %v1431 = vld [vmem:[%s3 + $0x7c8] sm:$0xff]
  %v1432 = vld [vmem:[%s3 + $0x7d0] sm:$0xff]
  %v1433 = vld [vmem:[%s3 + $0x7d8] sm:$0xff]
  %v1434 = vld [vmem:[%s3 + $0x7e0] sm:$0xff]
  %v1435 = vld [vmem:[%s3 + $0x7e8] sm:$0xff]
  %v1436 = vld [vmem:[%s3 + $0x7f0] sm:$0xff]
  %v1437 = vld [vmem:[%s3 + $0x7f8] sm:$0xff]
  %v1438 = vld [vmem:[%s4] sm:$0xff]
  %v1439 = vld [vmem:[%s4 + $0x8] sm:$0xff]
  %v1442 = vlaneseq
  %v1443 = vshrl.u32 %v1442, 7
  %v1444 = vsub.s32 0, %v1443
  %v1445 = vrot.slane %v1438, %v1444
  %v1446 = vlaneseq
  %v1447 = vshrl.u32 %v1446, 7
  %v1448 = vsub.s32 1, %v1447
  %v1449 = vrot.slane %v1438, %v1448
  %v1450 = vlaneseq
  %v1451 = vshrl.u32 %v1450, 7
  %v1452 = vsub.s32 2, %v1451
  %v1453 = vrot.slane %v1438, %v1452
  %v1454 = vlaneseq
  %v1455 = vshrl.u32 %v1454, 7
  %v1456 = vsub.s32 3, %v1455
  %v1457 = vrot.slane %v1438, %v1456
  %v1458 = vlaneseq
  %v1459 = vshrl.u32 %v1458, 7
  %v1460 = vsub.s32 4, %v1459
  %v1461 = vrot.slane %v1438, %v1460
  %v1462 = vlaneseq
  %v1463 = vshrl.u32 %v1462, 7
  %v1464 = vsub.s32 5, %v1463
  %v1465 = vrot.slane %v1438, %v1464
  %v1466 = vlaneseq
  %v1467 = vshrl.u32 %v1466, 7
  %v1468 = vsub.s32 6, %v1467
  %v1469 = vrot.slane %v1438, %v1468
  %v1470 = vlaneseq
  %v1471 = vshrl.u32 %v1470, 7
  %v1472 = vsub.s32 7, %v1471
  %v1473 = vrot.slane %v1438, %v1472
  %v1474 = vlaneseq
  %v1475 = vshrl.u32 %v1474, 7
  %v1476 = vsub.s32 0, %v1475
  %v1477 = vrot.slane %v1439, %v1476
  %v1478 = vlaneseq
  %v1479 = vshrl.u32 %v1478, 7
  %v1480 = vsub.s32 1, %v1479
  %v1481 = vrot.slane %v1439, %v1480
  %v1482 = vlaneseq
  %v1483 = vshrl.u32 %v1482, 7
  %v1484 = vsub.s32 2, %v1483
  %v1485 = vrot.slane %v1439, %v1484
  %v1486 = vlaneseq
  %v1487 = vshrl.u32 %v1486, 7
  %v1488 = vsub.s32 3, %v1487
  %v1489 = vrot.slane %v1439, %v1488
  %v1490 = vlaneseq
  %v1491 = vshrl.u32 %v1490, 7
  %v1492 = vsub.s32 4, %v1491
  %v1493 = vrot.slane %v1439, %v1492
  %v1494 = vlaneseq
  %v1495 = vshrl.u32 %v1494, 7
  %v1496 = vsub.s32 5, %v1495
  %v1497 = vrot.slane %v1439, %v1496
  %v1498 = vlaneseq
  %v1499 = vshrl.u32 %v1498, 7
  %v1500 = vsub.s32 6, %v1499
  %v1501 = vrot.slane %v1439, %v1500
  %v1502 = vlaneseq
  %v1503 = vshrl.u32 %v1502, 7
  %v1504 = vsub.s32 7, %v1503
  %v1505 = vrot.slane %v1439, %v1504
  %v1778 = vunpack.c.l.b16 %v1182
  %v1779 = vunpack.c.h.b16 %v1182
  %v1780 = vunpack.c.l.b16 %v1183
  %v1781 = vunpack.c.h.b16 %v1183
  %v1782 = vunpack.c.l.b16 %v1184
  %v1783 = vunpack.c.h.b16 %v1184
  %v1784 = vunpack.c.l.b16 %v1185
  %v1785 = vunpack.c.h.b16 %v1185
  %v1786 = vunpack.c.l.b16 %v1186
  %v1787 = vunpack.c.h.b16 %v1186
  %v1788 = vunpack.c.l.b16 %v1187
  %v1789 = vunpack.c.h.b16 %v1187
  %v1790 = vunpack.c.l.b16 %v1188
  %v1791 = vunpack.c.h.b16 %v1188
  %v1792 = vunpack.c.l.b16 %v1189
  %v1793 = vunpack.c.h.b16 %v1189
  %v1794 = vunpack.c.l.b16 %v1190
  %v1795 = vunpack.c.h.b16 %v1190
  %v1796 = vunpack.c.l.b16 %v1191
  %v1797 = vunpack.c.h.b16 %v1191
  %v1798 = vunpack.c.l.b16 %v1192
  %v1799 = vunpack.c.h.b16 %v1192
  %v1800 = vunpack.c.l.b16 %v1193
  %v1801 = vunpack.c.h.b16 %v1193
  %v1802 = vunpack.c.l.b16 %v1194
  %v1803 = vunpack.c.h.b16 %v1194
  %v1804 = vunpack.c.l.b16 %v1195
  %v1805 = vunpack.c.h.b16 %v1195
  %v1806 = vunpack.c.l.b16 %v1196
  %v1807 = vunpack.c.h.b16 %v1196
  %v1808 = vunpack.c.l.b16 %v1197
  %v1809 = vunpack.c.h.b16 %v1197
  %v1810 = vunpack.c.l.b16 %v1198
  %v1811 = vunpack.c.h.b16 %v1198
  %v1812 = vunpack.c.l.b16 %v1199
  %v1813 = vunpack.c.h.b16 %v1199
  %v1814 = vunpack.c.l.b16 %v1200
  %v1815 = vunpack.c.h.b16 %v1200
  %v1816 = vunpack.c.l.b16 %v1201
  %v1817 = vunpack.c.h.b16 %v1201
  %v1818 = vunpack.c.l.b16 %v1202
  %v1819 = vunpack.c.h.b16 %v1202
  %v1820 = vunpack.c.l.b16 %v1203
  %v1821 = vunpack.c.h.b16 %v1203
  %v1822 = vunpack.c.l.b16 %v1204
  %v1823 = vunpack.c.h.b16 %v1204
  %v1824 = vunpack.c.l.b16 %v1205
  %v1825 = vunpack.c.h.b16 %v1205
  %v1826 = vunpack.c.l.b16 %v1206
  %v1827 = vunpack.c.h.b16 %v1206
  %v1828 = vunpack.c.l.b16 %v1207
  %v1829 = vunpack.c.h.b16 %v1207
  %v1830 = vunpack.c.l.b16 %v1208
  %v1831 = vunpack.c.h.b16 %v1208
  %v1832 = vunpack.c.l.b16 %v1209
  %v1833 = vunpack.c.h.b16 %v1209
  %v1834 = vunpack.c.l.b16 %v1210
  %v1835 = vunpack.c.h.b16 %v1210
  %v1836 = vunpack.c.l.b16 %v1211
  %v1837 = vunpack.c.h.b16 %v1211
  %v1838 = vunpack.c.l.b16 %v1212
  %v1839 = vunpack.c.h.b16 %v1212
  %v1840 = vunpack.c.l.b16 %v1213
  %v1841 = vunpack.c.h.b16 %v1213
  %v1842 = vunpack.c.l.b16 %v1214
  %v1843 = vunpack.c.h.b16 %v1214
  %v1844 = vunpack.c.l.b16 %v1215
  %v1845 = vunpack.c.h.b16 %v1215
  %v1846 = vunpack.c.l.b16 %v1216
  %v1847 = vunpack.c.h.b16 %v1216
  %v1848 = vunpack.c.l.b16 %v1217
  %v1849 = vunpack.c.h.b16 %v1217
  %v1850 = vunpack.c.l.b16 %v1218
  %v1851 = vunpack.c.h.b16 %v1218
  %v1852 = vunpack.c.l.b16 %v1219
  %v1853 = vunpack.c.h.b16 %v1219
  %v1854 = vunpack.c.l.b16 %v1220
  %v1855 = vunpack.c.h.b16 %v1220
  %v1856 = vunpack.c.l.b16 %v1221
  %v1857 = vunpack.c.h.b16 %v1221
  %v1858 = vunpack.c.l.b16 %v1222
  %v1859 = vunpack.c.h.b16 %v1222
  %v1860 = vunpack.c.l.b16 %v1223
  %v1861 = vunpack.c.h.b16 %v1223
  %v1862 = vunpack.c.l.b16 %v1224
  %v1863 = vunpack.c.h.b16 %v1224
  %v1864 = vunpack.c.l.b16 %v1225
  %v1865 = vunpack.c.h.b16 %v1225
  %v1866 = vunpack.c.l.b16 %v1226
  %v1867 = vunpack.c.h.b16 %v1226
  %v1868 = vunpack.c.l.b16 %v1227
  %v1869 = vunpack.c.h.b16 %v1227
  %v1870 = vunpack.c.l.b16 %v1228
  %v1871 = vunpack.c.h.b16 %v1228
  %v1872 = vunpack.c.l.b16 %v1229
  %v1873 = vunpack.c.h.b16 %v1229
  %v1874 = vunpack.c.l.b16 %v1230
  %v1875 = vunpack.c.h.b16 %v1230
  %v1876 = vunpack.c.l.b16 %v1231
  %v1877 = vunpack.c.h.b16 %v1231
  %v1878 = vunpack.c.l.b16 %v1232
  %v1879 = vunpack.c.h.b16 %v1232
  %v1880 = vunpack.c.l.b16 %v1233
  %v1881 = vunpack.c.h.b16 %v1233
  %v1882 = vunpack.c.l.b16 %v1234
  %v1883 = vunpack.c.h.b16 %v1234
  %v1884 = vunpack.c.l.b16 %v1235
  %v1885 = vunpack.c.h.b16 %v1235
  %v1886 = vunpack.c.l.b16 %v1236
  %v1887 = vunpack.c.h.b16 %v1236
  %v1888 = vunpack.c.l.b16 %v1237
  %v1889 = vunpack.c.h.b16 %v1237
  %v1890 = vunpack.c.l.b16 %v1238
  %v1891 = vunpack.c.h.b16 %v1238
  %v1892 = vunpack.c.l.b16 %v1239
  %v1893 = vunpack.c.h.b16 %v1239
  %v1894 = vunpack.c.l.b16 %v1240
  %v1895 = vunpack.c.h.b16 %v1240
  %v1896 = vunpack.c.l.b16 %v1241
  %v1897 = vunpack.c.h.b16 %v1241
  %v1898 = vunpack.c.l.b16 %v1242
  %v1899 = vunpack.c.h.b16 %v1242
  %v1900 = vunpack.c.l.b16 %v1243
  %v1901 = vunpack.c.h.b16 %v1243
  %v1902 = vunpack.c.l.b16 %v1244
  %v1903 = vunpack.c.h.b16 %v1244
  %v1904 = vunpack.c.l.b16 %v1245
  %v1905 = vunpack.c.h.b16 %v1245
  %v1906 = vunpack.c.l.b16 %v1246
  %v1907 = vunpack.c.h.b16 %v1246
  %v1908 = vunpack.c.l.b16 %v1247
  %v1909 = vunpack.c.h.b16 %v1247
  %v1910 = vunpack.c.l.b16 %v1248
  %v1911 = vunpack.c.h.b16 %v1248
  %v1912 = vunpack.c.l.b16 %v1249
  %v1913 = vunpack.c.h.b16 %v1249
  %v1914 = vunpack.c.l.b16 %v1250
  %v1915 = vunpack.c.h.b16 %v1250
  %v1916 = vunpack.c.l.b16 %v1251
  %v1917 = vunpack.c.h.b16 %v1251
  %v1918 = vunpack.c.l.b16 %v1252
  %v1919 = vunpack.c.h.b16 %v1252
  %v1920 = vunpack.c.l.b16 %v1253
  %v1921 = vunpack.c.h.b16 %v1253
  %v1922 = vunpack.c.l.b16 %v1254
  %v1923 = vunpack.c.h.b16 %v1254
  %v1924 = vunpack.c.l.b16 %v1255
  %v1925 = vunpack.c.h.b16 %v1255
  %v1926 = vunpack.c.l.b16 %v1256
  %v1927 = vunpack.c.h.b16 %v1256
  %v1928 = vunpack.c.l.b16 %v1257
  %v1929 = vunpack.c.h.b16 %v1257
  %v1930 = vunpack.c.l.b16 %v1258
  %v1931 = vunpack.c.h.b16 %v1258
  %v1932 = vunpack.c.l.b16 %v1259
  %v1933 = vunpack.c.h.b16 %v1259
  %v1934 = vunpack.c.l.b16 %v1260
  %v1935 = vunpack.c.h.b16 %v1260
  %v1936 = vunpack.c.l.b16 %v1261
  %v1937 = vunpack.c.h.b16 %v1261
  %v1938 = vunpack.c.l.b16 %v1262
  %v1939 = vunpack.c.h.b16 %v1262
  %v1940 = vunpack.c.l.b16 %v1263
  %v1941 = vunpack.c.h.b16 %v1263
  %v1942 = vunpack.c.l.b16 %v1264
  %v1943 = vunpack.c.h.b16 %v1264
  %v1944 = vunpack.c.l.b16 %v1265
  %v1945 = vunpack.c.h.b16 %v1265
  %v1946 = vunpack.c.l.b16 %v1266
  %v1947 = vunpack.c.h.b16 %v1266
  %v1948 = vunpack.c.l.b16 %v1267
  %v1949 = vunpack.c.h.b16 %v1267
  %v1950 = vunpack.c.l.b16 %v1268
  %v1951 = vunpack.c.h.b16 %v1268
  %v1952 = vunpack.c.l.b16 %v1269
  %v1953 = vunpack.c.h.b16 %v1269
  %v1954 = vunpack.c.l.b16 %v1270
  %v1955 = vunpack.c.h.b16 %v1270
  %v1956 = vunpack.c.l.b16 %v1271
  %v1957 = vunpack.c.h.b16 %v1271
  %v1958 = vunpack.c.l.b16 %v1272
  %v1959 = vunpack.c.h.b16 %v1272
  %v1960 = vunpack.c.l.b16 %v1273
  %v1961 = vunpack.c.h.b16 %v1273
  %v1962 = vunpack.c.l.b16 %v1274
  %v1963 = vunpack.c.h.b16 %v1274
  %v1964 = vunpack.c.l.b16 %v1275
  %v1965 = vunpack.c.h.b16 %v1275
  %v1966 = vunpack.c.l.b16 %v1276
  %v1967 = vunpack.c.h.b16 %v1276
  %v1968 = vunpack.c.l.b16 %v1277
  %v1969 = vunpack.c.h.b16 %v1277
  %v1970 = vunpack.c.l.b16 %v1278
  %v1971 = vunpack.c.h.b16 %v1278
  %v1972 = vunpack.c.l.b16 %v1279
  %v1973 = vunpack.c.h.b16 %v1279
  %v1974 = vunpack.c.l.b16 %v1280
  %v1975 = vunpack.c.h.b16 %v1280
  %v1976 = vunpack.c.l.b16 %v1281
  %v1977 = vunpack.c.h.b16 %v1281
  %v1978 = vunpack.c.l.b16 %v1282
  %v1979 = vunpack.c.h.b16 %v1282
  %v1980 = vunpack.c.l.b16 %v1283
  %v1981 = vunpack.c.h.b16 %v1283
  %v1982 = vunpack.c.l.b16 %v1284
  %v1983 = vunpack.c.h.b16 %v1284
  %v1984 = vunpack.c.l.b16 %v1285
  %v1985 = vunpack.c.h.b16 %v1285
  %v1986 = vunpack.c.l.b16 %v1286
  %v1987 = vunpack.c.h.b16 %v1286
  %v1988 = vunpack.c.l.b16 %v1287
  %v1989 = vunpack.c.h.b16 %v1287
  %v1990 = vunpack.c.l.b16 %v1288
  %v1991 = vunpack.c.h.b16 %v1288
  %v1992 = vunpack.c.l.b16 %v1289
  %v1993 = vunpack.c.h.b16 %v1289
  %v1994 = vunpack.c.l.b16 %v1290
  %v1995 = vunpack.c.h.b16 %v1290
  %v1996 = vunpack.c.l.b16 %v1291
  %v1997 = vunpack.c.h.b16 %v1291
  %v1998 = vunpack.c.l.b16 %v1292
  %v1999 = vunpack.c.h.b16 %v1292
  %v2000 = vunpack.c.l.b16 %v1293
  %v2001 = vunpack.c.h.b16 %v1293
  %v2002 = vunpack.c.l.b16 %v1294
  %v2003 = vunpack.c.h.b16 %v1294
  %v2004 = vunpack.c.l.b16 %v1295
  %v2005 = vunpack.c.h.b16 %v1295
  %v2006 = vunpack.c.l.b16 %v1296
  %v2007 = vunpack.c.h.b16 %v1296
  %v2008 = vunpack.c.l.b16 %v1297
  %v2009 = vunpack.c.h.b16 %v1297
  %v2010 = vunpack.c.l.b16 %v1298
  %v2011 = vunpack.c.h.b16 %v1298
  %v2012 = vunpack.c.l.b16 %v1299
  %v2013 = vunpack.c.h.b16 %v1299
  %v2014 = vunpack.c.l.b16 %v1300
  %v2015 = vunpack.c.h.b16 %v1300
  %v2016 = vunpack.c.l.b16 %v1301
  %v2017 = vunpack.c.h.b16 %v1301
  %v2018 = vunpack.c.l.b16 %v1302
  %v2019 = vunpack.c.h.b16 %v1302
  %v2020 = vunpack.c.l.b16 %v1303
  %v2021 = vunpack.c.h.b16 %v1303
  %v2022 = vunpack.c.l.b16 %v1304
  %v2023 = vunpack.c.h.b16 %v1304
  %v2024 = vunpack.c.l.b16 %v1305
  %v2025 = vunpack.c.h.b16 %v1305
  %v2026 = vunpack.c.l.b16 %v1306
  %v2027 = vunpack.c.h.b16 %v1306
  %v2028 = vunpack.c.l.b16 %v1307
  %v2029 = vunpack.c.h.b16 %v1307
  %v2030 = vunpack.c.l.b16 %v1308
  %v2031 = vunpack.c.h.b16 %v1308
  %v2032 = vunpack.c.l.b16 %v1309
  %v2033 = vunpack.c.h.b16 %v1309
  %v2034 = vunpack.c.l.b16 %v1310
  %v2035 = vunpack.c.h.b16 %v1310
  %v2036 = vunpack.c.l.b16 %v1311
  %v2037 = vunpack.c.h.b16 %v1311
  %v2038 = vunpack.c.l.b16 %v1312
  %v2039 = vunpack.c.h.b16 %v1312
  %v2040 = vunpack.c.l.b16 %v1313
  %v2041 = vunpack.c.h.b16 %v1313
  %v2042 = vunpack.c.l.b16 %v1314
  %v2043 = vunpack.c.h.b16 %v1314
  %v2044 = vunpack.c.l.b16 %v1315
  %v2045 = vunpack.c.h.b16 %v1315
  %v2046 = vunpack.c.l.b16 %v1316
  %v2047 = vunpack.c.h.b16 %v1316
  %v2048 = vunpack.c.l.b16 %v1317
  %v2049 = vunpack.c.h.b16 %v1317
  %v2050 = vunpack.c.l.b16 %v1318
  %v2051 = vunpack.c.h.b16 %v1318
  %v2052 = vunpack.c.l.b16 %v1319
  %v2053 = vunpack.c.h.b16 %v1319
  %v2054 = vunpack.c.l.b16 %v1320
  %v2055 = vunpack.c.h.b16 %v1320
  %v2056 = vunpack.c.l.b16 %v1321
  %v2057 = vunpack.c.h.b16 %v1321
  %v2058 = vunpack.c.l.b16 %v1322
  %v2059 = vunpack.c.h.b16 %v1322
  %v2060 = vunpack.c.l.b16 %v1323
  %v2061 = vunpack.c.h.b16 %v1323
  %v2062 = vunpack.c.l.b16 %v1324
  %v2063 = vunpack.c.h.b16 %v1324
  %v2064 = vunpack.c.l.b16 %v1325
  %v2065 = vunpack.c.h.b16 %v1325
  %v2066 = vunpack.c.l.b16 %v1326
  %v2067 = vunpack.c.h.b16 %v1326
  %v2068 = vunpack.c.l.b16 %v1327
  %v2069 = vunpack.c.h.b16 %v1327
  %v2070 = vunpack.c.l.b16 %v1328
  %v2071 = vunpack.c.h.b16 %v1328
  %v2072 = vunpack.c.l.b16 %v1329
  %v2073 = vunpack.c.h.b16 %v1329
  %v2074 = vunpack.c.l.b16 %v1330
  %v2075 = vunpack.c.h.b16 %v1330
  %v2076 = vunpack.c.l.b16 %v1331
  %v2077 = vunpack.c.h.b16 %v1331
  %v2078 = vunpack.c.l.b16 %v1332
  %v2079 = vunpack.c.h.b16 %v1332
  %v2080 = vunpack.c.l.b16 %v1333
  %v2081 = vunpack.c.h.b16 %v1333
  %v2082 = vunpack.c.l.b16 %v1334
  %v2083 = vunpack.c.h.b16 %v1334
  %v2084 = vunpack.c.l.b16 %v1335
  %v2085 = vunpack.c.h.b16 %v1335
  %v2086 = vunpack.c.l.b16 %v1336
  %v2087 = vunpack.c.h.b16 %v1336
  %v2088 = vunpack.c.l.b16 %v1337
  %v2089 = vunpack.c.h.b16 %v1337
  %v2090 = vunpack.c.l.b16 %v1338
  %v2091 = vunpack.c.h.b16 %v1338
  %v2092 = vunpack.c.l.b16 %v1339
  %v2093 = vunpack.c.h.b16 %v1339
  %v2094 = vunpack.c.l.b16 %v1340
  %v2095 = vunpack.c.h.b16 %v1340
  %v2096 = vunpack.c.l.b16 %v1341
  %v2097 = vunpack.c.h.b16 %v1341
  %v2098 = vunpack.c.l.b16 %v1342
  %v2099 = vunpack.c.h.b16 %v1342
  %v2100 = vunpack.c.l.b16 %v1343
  %v2101 = vunpack.c.h.b16 %v1343
  %v2102 = vunpack.c.l.b16 %v1344
  %v2103 = vunpack.c.h.b16 %v1344
  %v2104 = vunpack.c.l.b16 %v1345
  %v2105 = vunpack.c.h.b16 %v1345
  %v2106 = vunpack.c.l.b16 %v1346
  %v2107 = vunpack.c.h.b16 %v1346
  %v2108 = vunpack.c.l.b16 %v1347
  %v2109 = vunpack.c.h.b16 %v1347
  %v2110 = vunpack.c.l.b16 %v1348
  %v2111 = vunpack.c.h.b16 %v1348
  %v2112 = vunpack.c.l.b16 %v1349
  %v2113 = vunpack.c.h.b16 %v1349
  %v2114 = vunpack.c.l.b16 %v1350
  %v2115 = vunpack.c.h.b16 %v1350
  %v2116 = vunpack.c.l.b16 %v1351
  %v2117 = vunpack.c.h.b16 %v1351
  %v2118 = vunpack.c.l.b16 %v1352
  %v2119 = vunpack.c.h.b16 %v1352
  %v2120 = vunpack.c.l.b16 %v1353
  %v2121 = vunpack.c.h.b16 %v1353
  %v2122 = vunpack.c.l.b16 %v1354
  %v2123 = vunpack.c.h.b16 %v1354
  %v2124 = vunpack.c.l.b16 %v1355
  %v2125 = vunpack.c.h.b16 %v1355
  %v2126 = vunpack.c.l.b16 %v1356
  %v2127 = vunpack.c.h.b16 %v1356
  %v2128 = vunpack.c.l.b16 %v1357
  %v2129 = vunpack.c.h.b16 %v1357
  %v2130 = vunpack.c.l.b16 %v1358
  %v2131 = vunpack.c.h.b16 %v1358
  %v2132 = vunpack.c.l.b16 %v1359
  %v2133 = vunpack.c.h.b16 %v1359
  %v2134 = vunpack.c.l.b16 %v1360
  %v2135 = vunpack.c.h.b16 %v1360
  %v2136 = vunpack.c.l.b16 %v1361
  %v2137 = vunpack.c.h.b16 %v1361
  %v2138 = vunpack.c.l.b16 %v1362
  %v2139 = vunpack.c.h.b16 %v1362
  %v2140 = vunpack.c.l.b16 %v1363
  %v2141 = vunpack.c.h.b16 %v1363
  %v2142 = vunpack.c.l.b16 %v1364
  %v2143 = vunpack.c.h.b16 %v1364
  %v2144 = vunpack.c.l.b16 %v1365
  %v2145 = vunpack.c.h.b16 %v1365
  %v2146 = vunpack.c.l.b16 %v1366
  %v2147 = vunpack.c.h.b16 %v1366
  %v2148 = vunpack.c.l.b16 %v1367
  %v2149 = vunpack.c.h.b16 %v1367
  %v2150 = vunpack.c.l.b16 %v1368
  %v2151 = vunpack.c.h.b16 %v1368
  %v2152 = vunpack.c.l.b16 %v1369
  %v2153 = vunpack.c.h.b16 %v1369
  %v2154 = vunpack.c.l.b16 %v1370
  %v2155 = vunpack.c.h.b16 %v1370
  %v2156 = vunpack.c.l.b16 %v1371
  %v2157 = vunpack.c.h.b16 %v1371
  %v2158 = vunpack.c.l.b16 %v1372
  %v2159 = vunpack.c.h.b16 %v1372
  %v2160 = vunpack.c.l.b16 %v1373
  %v2161 = vunpack.c.h.b16 %v1373
  %v2162 = vunpack.c.l.b16 %v1374
  %v2163 = vunpack.c.h.b16 %v1374
  %v2164 = vunpack.c.l.b16 %v1375
  %v2165 = vunpack.c.h.b16 %v1375
  %v2166 = vunpack.c.l.b16 %v1376
  %v2167 = vunpack.c.h.b16 %v1376
  %v2168 = vunpack.c.l.b16 %v1377
  %v2169 = vunpack.c.h.b16 %v1377
  %v2170 = vunpack.c.l.b16 %v1378
  %v2171 = vunpack.c.h.b16 %v1378
  %v2172 = vunpack.c.l.b16 %v1379
  %v2173 = vunpack.c.h.b16 %v1379
  %v2174 = vunpack.c.l.b16 %v1380
  %v2175 = vunpack.c.h.b16 %v1380
  %v2176 = vunpack.c.l.b16 %v1381
  %v2177 = vunpack.c.h.b16 %v1381
  %v2178 = vunpack.c.l.b16 %v1382
  %v2179 = vunpack.c.h.b16 %v1382
  %v2180 = vunpack.c.l.b16 %v1383
  %v2181 = vunpack.c.h.b16 %v1383
  %v2182 = vunpack.c.l.b16 %v1384
  %v2183 = vunpack.c.h.b16 %v1384
  %v2184 = vunpack.c.l.b16 %v1385
  %v2185 = vunpack.c.h.b16 %v1385
  %v2186 = vunpack.c.l.b16 %v1386
  %v2187 = vunpack.c.h.b16 %v1386
  %v2188 = vunpack.c.l.b16 %v1387
  %v2189 = vunpack.c.h.b16 %v1387
  %v2190 = vunpack.c.l.b16 %v1388
  %v2191 = vunpack.c.h.b16 %v1388
  %v2192 = vunpack.c.l.b16 %v1389
  %v2193 = vunpack.c.h.b16 %v1389
  %v2194 = vunpack.c.l.b16 %v1390
  %v2195 = vunpack.c.h.b16 %v1390
  %v2196 = vunpack.c.l.b16 %v1391
  %v2197 = vunpack.c.h.b16 %v1391
  %v2198 = vunpack.c.l.b16 %v1392
  %v2199 = vunpack.c.h.b16 %v1392
  %v2200 = vunpack.c.l.b16 %v1393
  %v2201 = vunpack.c.h.b16 %v1393
  %v2202 = vunpack.c.l.b16 %v1394
  %v2203 = vunpack.c.h.b16 %v1394
  %v2204 = vunpack.c.l.b16 %v1395
  %v2205 = vunpack.c.h.b16 %v1395
  %v2206 = vunpack.c.l.b16 %v1396
  %v2207 = vunpack.c.h.b16 %v1396
  %v2208 = vunpack.c.l.b16 %v1397
  %v2209 = vunpack.c.h.b16 %v1397
  %v2210 = vunpack.c.l.b16 %v1398
  %v2211 = vunpack.c.h.b16 %v1398
  %v2212 = vunpack.c.l.b16 %v1399
  %v2213 = vunpack.c.h.b16 %v1399
  %v2214 = vunpack.c.l.b16 %v1400
  %v2215 = vunpack.c.h.b16 %v1400
  %v2216 = vunpack.c.l.b16 %v1401
  %v2217 = vunpack.c.h.b16 %v1401
  %v2218 = vunpack.c.l.b16 %v1402
  %v2219 = vunpack.c.h.b16 %v1402
  %v2220 = vunpack.c.l.b16 %v1403
  %v2221 = vunpack.c.h.b16 %v1403
  %v2222 = vunpack.c.l.b16 %v1404
  %v2223 = vunpack.c.h.b16 %v1404
  %v2224 = vunpack.c.l.b16 %v1405
  %v2225 = vunpack.c.h.b16 %v1405
  %v2226 = vunpack.c.l.b16 %v1406
  %v2227 = vunpack.c.h.b16 %v1406
  %v2228 = vunpack.c.l.b16 %v1407
  %v2229 = vunpack.c.h.b16 %v1407
  %v2230 = vunpack.c.l.b16 %v1408
  %v2231 = vunpack.c.h.b16 %v1408
  %v2232 = vunpack.c.l.b16 %v1409
  %v2233 = vunpack.c.h.b16 %v1409
  %v2234 = vunpack.c.l.b16 %v1410
  %v2235 = vunpack.c.h.b16 %v1410
  %v2236 = vunpack.c.l.b16 %v1411
  %v2237 = vunpack.c.h.b16 %v1411
  %v2238 = vunpack.c.l.b16 %v1412
  %v2239 = vunpack.c.h.b16 %v1412
  %v2240 = vunpack.c.l.b16 %v1413
  %v2241 = vunpack.c.h.b16 %v1413
  %v2242 = vunpack.c.l.b16 %v1414
  %v2243 = vunpack.c.h.b16 %v1414
  %v2244 = vunpack.c.l.b16 %v1415
  %v2245 = vunpack.c.h.b16 %v1415
  %v2246 = vunpack.c.l.b16 %v1416
  %v2247 = vunpack.c.h.b16 %v1416
  %v2248 = vunpack.c.l.b16 %v1417
  %v2249 = vunpack.c.h.b16 %v1417
  %v2250 = vunpack.c.l.b16 %v1418
  %v2251 = vunpack.c.h.b16 %v1418
  %v2252 = vunpack.c.l.b16 %v1419
  %v2253 = vunpack.c.h.b16 %v1419
  %v2254 = vunpack.c.l.b16 %v1420
  %v2255 = vunpack.c.h.b16 %v1420
  %v2256 = vunpack.c.l.b16 %v1421
  %v2257 = vunpack.c.h.b16 %v1421
  %v2258 = vunpack.c.l.b16 %v1422
  %v2259 = vunpack.c.h.b16 %v1422
  %v2260 = vunpack.c.l.b16 %v1423
  %v2261 = vunpack.c.h.b16 %v1423
  %v2262 = vunpack.c.l.b16 %v1424
  %v2263 = vunpack.c.h.b16 %v1424
  %v2264 = vunpack.c.l.b16 %v1425
  %v2265 = vunpack.c.h.b16 %v1425
  %v2266 = vunpack.c.l.b16 %v1426
  %v2267 = vunpack.c.h.b16 %v1426
  %v2268 = vunpack.c.l.b16 %v1427
  %v2269 = vunpack.c.h.b16 %v1427
  %v2270 = vunpack.c.l.b16 %v1428
  %v2271 = vunpack.c.h.b16 %v1428
  %v2272 = vunpack.c.l.b16 %v1429
  %v2273 = vunpack.c.h.b16 %v1429
  %v2274 = vunpack.c.l.b16 %v1430
  %v2275 = vunpack.c.h.b16 %v1430
  %v2276 = vunpack.c.l.b16 %v1431
  %v2277 = vunpack.c.h.b16 %v1431
  %v2278 = vunpack.c.l.b16 %v1432
  %v2279 = vunpack.c.h.b16 %v1432
  %v2280 = vunpack.c.l.b16 %v1433
  %v2281 = vunpack.c.h.b16 %v1433
  %v2282 = vunpack.c.l.b16 %v1434
  %v2283 = vunpack.c.h.b16 %v1434
  %v2284 = vunpack.c.l.b16 %v1435
  %v2285 = vunpack.c.h.b16 %v1435
  %v2286 = vunpack.c.l.b16 %v1436
  %v2287 = vunpack.c.h.b16 %v1436
  %v2288 = vunpack.c.l.b16 %v1437
  %v2289 = vunpack.c.h.b16 %v1437
  %v2290 = vpack.c.b16 %v1794, %v1778
  %v2291 = vpack.c.b16 %v1795, %v1779
  %v2292 = vpack.c.b16 %v1796, %v1780
  %v2293 = vpack.c.b16 %v1797, %v1781
  %v2294 = vpack.c.b16 %v1798, %v1782
  %v2295 = vpack.c.b16 %v1799, %v1783
  %v2296 = vpack.c.b16 %v1800, %v1784
  %v2297 = vpack.c.b16 %v1801, %v1785
  %v2298 = vpack.c.b16 %v1802, %v1786
  %v2299 = vpack.c.b16 %v1803, %v1787
  %v2300 = vpack.c.b16 %v1804, %v1788
  %v2301 = vpack.c.b16 %v1805, %v1789
  %v2302 = vpack.c.b16 %v1806, %v1790
  %v2303 = vpack.c.b16 %v1807, %v1791
  %v2304 = vpack.c.b16 %v1808, %v1792
  %v2305 = vpack.c.b16 %v1809, %v1793
  %v2306 = vpack.c.b16 %v1826, %v1810
  %v2307 = vpack.c.b16 %v1827, %v1811
  %v2308 = vpack.c.b16 %v1828, %v1812
  %v2309 = vpack.c.b16 %v1829, %v1813
  %v2310 = vpack.c.b16 %v1830, %v1814
  %v2311 = vpack.c.b16 %v1831, %v1815
  %v2312 = vpack.c.b16 %v1832, %v1816
  %v2313 = vpack.c.b16 %v1833, %v1817
  %v2314 = vpack.c.b16 %v1834, %v1818
  %v2315 = vpack.c.b16 %v1835, %v1819
  %v2316 = vpack.c.b16 %v1836, %v1820
  %v2317 = vpack.c.b16 %v1837, %v1821
  %v2318 = vpack.c.b16 %v1838, %v1822
  %v2319 = vpack.c.b16 %v1839, %v1823
  %v2320 = vpack.c.b16 %v1840, %v1824
  %v2321 = vpack.c.b16 %v1841, %v1825
  %v2322 = vpack.c.b16 %v1858, %v1842
  %v2323 = vpack.c.b16 %v1859, %v1843
  %v2324 = vpack.c.b16 %v1860, %v1844
  %v2325 = vpack.c.b16 %v1861, %v1845
  %v2326 = vpack.c.b16 %v1862, %v1846
  %v2327 = vpack.c.b16 %v1863, %v1847
  %v2328 = vpack.c.b16 %v1864, %v1848
  %v2329 = vpack.c.b16 %v1865, %v1849
  %v2330 = vpack.c.b16 %v1866, %v1850
  %v2331 = vpack.c.b16 %v1867, %v1851
  %v2332 = vpack.c.b16 %v1868, %v1852
  %v2333 = vpack.c.b16 %v1869, %v1853
  %v2334 = vpack.c.b16 %v1870, %v1854
  %v2335 = vpack.c.b16 %v1871, %v1855
  %v2336 = vpack.c.b16 %v1872, %v1856
  %v2337 = vpack.c.b16 %v1873, %v1857
  %v2338 = vpack.c.b16 %v1890, %v1874
  %v2339 = vpack.c.b16 %v1891, %v1875
  %v2340 = vpack.c.b16 %v1892, %v1876
  %v2341 = vpack.c.b16 %v1893, %v1877
  %v2342 = vpack.c.b16 %v1894, %v1878
  %v2343 = vpack.c.b16 %v1895, %v1879
  %v2344 = vpack.c.b16 %v1896, %v1880
  %v2345 = vpack.c.b16 %v1897, %v1881
  %v2346 = vpack.c.b16 %v1898, %v1882
  %v2347 = vpack.c.b16 %v1899, %v1883
  %v2348 = vpack.c.b16 %v1900, %v1884
  %v2349 = vpack.c.b16 %v1901, %v1885
  %v2350 = vpack.c.b16 %v1902, %v1886
  %v2351 = vpack.c.b16 %v1903, %v1887
  %v2352 = vpack.c.b16 %v1904, %v1888
  %v2353 = vpack.c.b16 %v1905, %v1889
  %v2354 = vpack.c.b16 %v1922, %v1906
  %v2355 = vpack.c.b16 %v1923, %v1907
  %v2356 = vpack.c.b16 %v1924, %v1908
  %v2357 = vpack.c.b16 %v1925, %v1909
  %v2358 = vpack.c.b16 %v1926, %v1910
  %v2359 = vpack.c.b16 %v1927, %v1911
  %v2360 = vpack.c.b16 %v1928, %v1912
  %v2361 = vpack.c.b16 %v1929, %v1913
  %v2362 = vpack.c.b16 %v1930, %v1914
  %v2363 = vpack.c.b16 %v1931, %v1915
  %v2364 = vpack.c.b16 %v1932, %v1916
  %v2365 = vpack.c.b16 %v1933, %v1917
  %v2366 = vpack.c.b16 %v1934, %v1918
  %v2367 = vpack.c.b16 %v1935, %v1919
  %v2368 = vpack.c.b16 %v1936, %v1920
  %v2369 = vpack.c.b16 %v1937, %v1921
  %v2370 = vpack.c.b16 %v1954, %v1938
  %v2371 = vpack.c.b16 %v1955, %v1939
  %v2372 = vpack.c.b16 %v1956, %v1940
  %v2373 = vpack.c.b16 %v1957, %v1941
  %v2374 = vpack.c.b16 %v1958, %v1942
  %v2375 = vpack.c.b16 %v1959, %v1943
  %v2376 = vpack.c.b16 %v1960, %v1944
  %v2377 = vpack.c.b16 %v1961, %v1945
  %v2378 = vpack.c.b16 %v1962, %v1946
  %v2379 = vpack.c.b16 %v1963, %v1947
  %v2380 = vpack.c.b16 %v1964, %v1948
  %v2381 = vpack.c.b16 %v1965, %v1949
  %v2382 = vpack.c.b16 %v1966, %v1950
  %v2383 = vpack.c.b16 %v1967, %v1951
  %v2384 = vpack.c.b16 %v1968, %v1952
  %v2385 = vpack.c.b16 %v1969, %v1953
  %v2386 = vpack.c.b16 %v1986, %v1970
  %v2387 = vpack.c.b16 %v1987, %v1971
  %v2388 = vpack.c.b16 %v1988, %v1972
  %v2389 = vpack.c.b16 %v1989, %v1973
  %v2390 = vpack.c.b16 %v1990, %v1974
  %v2391 = vpack.c.b16 %v1991, %v1975
  %v2392 = vpack.c.b16 %v1992, %v1976
  %v2393 = vpack.c.b16 %v1993, %v1977
  %v2394 = vpack.c.b16 %v1994, %v1978
  %v2395 = vpack.c.b16 %v1995, %v1979
  %v2396 = vpack.c.b16 %v1996, %v1980
  %v2397 = vpack.c.b16 %v1997, %v1981
  %v2398 = vpack.c.b16 %v1998, %v1982
  %v2399 = vpack.c.b16 %v1999, %v1983
  %v2400 = vpack.c.b16 %v2000, %v1984
  %v2401 = vpack.c.b16 %v2001, %v1985
  %v2402 = vpack.c.b16 %v2018, %v2002
  %v2403 = vpack.c.b16 %v2019, %v2003
  %v2404 = vpack.c.b16 %v2020, %v2004
  %v2405 = vpack.c.b16 %v2021, %v2005
  %v2406 = vpack.c.b16 %v2022, %v2006
  %v2407 = vpack.c.b16 %v2023, %v2007
  %v2408 = vpack.c.b16 %v2024, %v2008
  %v2409 = vpack.c.b16 %v2025, %v2009
  %v2410 = vpack.c.b16 %v2026, %v2010
  %v2411 = vpack.c.b16 %v2027, %v2011
  %v2412 = vpack.c.b16 %v2028, %v2012
  %v2413 = vpack.c.b16 %v2029, %v2013
  %v2414 = vpack.c.b16 %v2030, %v2014
  %v2415 = vpack.c.b16 %v2031, %v2015
  %v2416 = vpack.c.b16 %v2032, %v2016
  %v2417 = vpack.c.b16 %v2033, %v2017
  %v2418 = vpack.c.b16 %v2050, %v2034
  %v2419 = vpack.c.b16 %v2051, %v2035
  %v2420 = vpack.c.b16 %v2052, %v2036
  %v2421 = vpack.c.b16 %v2053, %v2037
  %v2422 = vpack.c.b16 %v2054, %v2038
  %v2423 = vpack.c.b16 %v2055, %v2039
  %v2424 = vpack.c.b16 %v2056, %v2040
  %v2425 = vpack.c.b16 %v2057, %v2041
  %v2426 = vpack.c.b16 %v2058, %v2042
  %v2427 = vpack.c.b16 %v2059, %v2043
  %v2428 = vpack.c.b16 %v2060, %v2044
  %v2429 = vpack.c.b16 %v2061, %v2045
  %v2430 = vpack.c.b16 %v2062, %v2046
  %v2431 = vpack.c.b16 %v2063, %v2047
  %v2432 = vpack.c.b16 %v2064, %v2048
  %v2433 = vpack.c.b16 %v2065, %v2049
  %v2434 = vpack.c.b16 %v2082, %v2066
  %v2435 = vpack.c.b16 %v2083, %v2067
  %v2436 = vpack.c.b16 %v2084, %v2068
  %v2437 = vpack.c.b16 %v2085, %v2069
  %v2438 = vpack.c.b16 %v2086, %v2070
  %v2439 = vpack.c.b16 %v2087, %v2071
  %v2440 = vpack.c.b16 %v2088, %v2072
  %v2441 = vpack.c.b16 %v2089, %v2073
  %v2442 = vpack.c.b16 %v2090, %v2074
  %v2443 = vpack.c.b16 %v2091, %v2075
  %v2444 = vpack.c.b16 %v2092, %v2076
  %v2445 = vpack.c.b16 %v2093, %v2077
  %v2446 = vpack.c.b16 %v2094, %v2078
  %v2447 = vpack.c.b16 %v2095, %v2079
  %v2448 = vpack.c.b16 %v2096, %v2080
  %v2449 = vpack.c.b16 %v2097, %v2081
  %v2450 = vpack.c.b16 %v2114, %v2098
  %v2451 = vpack.c.b16 %v2115, %v2099
  %v2452 = vpack.c.b16 %v2116, %v2100
  %v2453 = vpack.c.b16 %v2117, %v2101
  %v2454 = vpack.c.b16 %v2118, %v2102
  %v2455 = vpack.c.b16 %v2119, %v2103
  %v2456 = vpack.c.b16 %v2120, %v2104
  %v2457 = vpack.c.b16 %v2121, %v2105
  %v2458 = vpack.c.b16 %v2122, %v2106
  %v2459 = vpack.c.b16 %v2123, %v2107
  %v2460 = vpack.c.b16 %v2124, %v2108
  %v2461 = vpack.c.b16 %v2125, %v2109
  %v2462 = vpack.c.b16 %v2126, %v2110
  %v2463 = vpack.c.b16 %v2127, %v2111
  %v2464 = vpack.c.b16 %v2128, %v2112
  %v2465 = vpack.c.b16 %v2129, %v2113
  %v2466 = vpack.c.b16 %v2146, %v2130
  %v2467 = vpack.c.b16 %v2147, %v2131
  %v2468 = vpack.c.b16 %v2148, %v2132
  %v2469 = vpack.c.b16 %v2149, %v2133
  %v2470 = vpack.c.b16 %v2150, %v2134
  %v2471 = vpack.c.b16 %v2151, %v2135
  %v2472 = vpack.c.b16 %v2152, %v2136
  %v2473 = vpack.c.b16 %v2153, %v2137
  %v2474 = vpack.c.b16 %v2154, %v2138
  %v2475 = vpack.c.b16 %v2155, %v2139
  %v2476 = vpack.c.b16 %v2156, %v2140
  %v2477 = vpack.c.b16 %v2157, %v2141
  %v2478 = vpack.c.b16 %v2158, %v2142
  %v2479 = vpack.c.b16 %v2159, %v2143
  %v2480 = vpack.c.b16 %v2160, %v2144
  %v2481 = vpack.c.b16 %v2161, %v2145
  %v2482 = vpack.c.b16 %v2178, %v2162
  %v2483 = vpack.c.b16 %v2179, %v2163
  %v2484 = vpack.c.b16 %v2180, %v2164
  %v2485 = vpack.c.b16 %v2181, %v2165
  %v2486 = vpack.c.b16 %v2182, %v2166
  %v2487 = vpack.c.b16 %v2183, %v2167
  %v2488 = vpack.c.b16 %v2184, %v2168
  %v2489 = vpack.c.b16 %v2185, %v2169
  %v2490 = vpack.c.b16 %v2186, %v2170
  %v2491 = vpack.c.b16 %v2187, %v2171
  %v2492 = vpack.c.b16 %v2188, %v2172
  %v2493 = vpack.c.b16 %v2189, %v2173
  %v2494 = vpack.c.b16 %v2190, %v2174
  %v2495 = vpack.c.b16 %v2191, %v2175
  %v2496 = vpack.c.b16 %v2192, %v2176
  %v2497 = vpack.c.b16 %v2193, %v2177
  %v2498 = vpack.c.b16 %v2210, %v2194
  %v2499 = vpack.c.b16 %v2211, %v2195
  %v2500 = vpack.c.b16 %v2212, %v2196
  %v2501 = vpack.c.b16 %v2213, %v2197
  %v2502 = vpack.c.b16 %v2214, %v2198
  %v2503 = vpack.c.b16 %v2215, %v2199
  %v2504 = vpack.c.b16 %v2216, %v2200
  %v2505 = vpack.c.b16 %v2217, %v2201
  %v2506 = vpack.c.b16 %v2218, %v2202
  %v2507 = vpack.c.b16 %v2219, %v2203
  %v2508 = vpack.c.b16 %v2220, %v2204
  %v2509 = vpack.c.b16 %v2221, %v2205
  %v2510 = vpack.c.b16 %v2222, %v2206
  %v2511 = vpack.c.b16 %v2223, %v2207
  %v2512 = vpack.c.b16 %v2224, %v2208
  %v2513 = vpack.c.b16 %v2225, %v2209
  %v2514 = vpack.c.b16 %v2242, %v2226
  %v2515 = vpack.c.b16 %v2243, %v2227
  %v2516 = vpack.c.b16 %v2244, %v2228
  %v2517 = vpack.c.b16 %v2245, %v2229
  %v2518 = vpack.c.b16 %v2246, %v2230
  %v2519 = vpack.c.b16 %v2247, %v2231
  %v2520 = vpack.c.b16 %v2248, %v2232
  %v2521 = vpack.c.b16 %v2249, %v2233
  %v2522 = vpack.c.b16 %v2250, %v2234
  %v2523 = vpack.c.b16 %v2251, %v2235
  %v2524 = vpack.c.b16 %v2252, %v2236
  %v2525 = vpack.c.b16 %v2253, %v2237
  %v2526 = vpack.c.b16 %v2254, %v2238
  %v2527 = vpack.c.b16 %v2255, %v2239
  %v2528 = vpack.c.b16 %v2256, %v2240
  %v2529 = vpack.c.b16 %v2257, %v2241
  %v2530 = vpack.c.b16 %v2274, %v2258
  %v2531 = vpack.c.b16 %v2275, %v2259
  %v2532 = vpack.c.b16 %v2276, %v2260
  %v2533 = vpack.c.b16 %v2277, %v2261
  %v2534 = vpack.c.b16 %v2278, %v2262
  %v2535 = vpack.c.b16 %v2279, %v2263
  %v2536 = vpack.c.b16 %v2280, %v2264
  %v2537 = vpack.c.b16 %v2281, %v2265
  %v2538 = vpack.c.b16 %v2282, %v2266
  %v2539 = vpack.c.b16 %v2283, %v2267
  %v2540 = vpack.c.b16 %v2284, %v2268
  %v2541 = vpack.c.b16 %v2285, %v2269
  %v2542 = vpack.c.b16 %v2286, %v2270
  %v2543 = vpack.c.b16 %v2287, %v2271
  %v2544 = vpack.c.b16 %v2288, %v2272
  %v2545 = vpack.c.b16 %v2289, %v2273
  %2802 = vmatprep.subr.bf16.mxu0 %v2291
  %2803 = vmatpush1.bf16.msra.mxu0 %v2290
  %2804 = vmatprep.subr.bf16.mxu0 %v2307
  %2805 = vmatpush1.bf16.msra.mxu0 %v2306
  %2806 = vmatprep.subr.bf16.mxu0 %v2323
  %2807 = vmatpush1.bf16.msra.mxu0 %v2322
  %2808 = vmatprep.subr.bf16.mxu0 %v2339
  %2809 = vmatpush1.bf16.msra.mxu0 %v2338
  %2810 = vmatprep.subr.bf16.mxu0 %v2355
  %2811 = vmatpush1.bf16.msra.mxu0 %v2354
  %2812 = vmatprep.subr.bf16.mxu0 %v2371
  %2813 = vmatpush1.bf16.msra.mxu0 %v2370
  %2814 = vmatprep.subr.bf16.mxu0 %v2387
  %2815 = vmatpush1.bf16.msra.mxu0 %v2386
  %2816 = vmatprep.subr.bf16.mxu0 %v2403
  %2817 = vmatpush1.bf16.msra.mxu0 %v2402
  %2818 = vmatprep.subr.bf16.mxu0 %v2419
  %2819 = vmatpush1.bf16.msra.mxu0 %v2418
  %2820 = vmatprep.subr.bf16.mxu0 %v2435
  %2821 = vmatpush1.bf16.msra.mxu0 %v2434
  %2822 = vmatprep.subr.bf16.mxu0 %v2451
  %2823 = vmatpush1.bf16.msra.mxu0 %v2450
  %2824 = vmatprep.subr.bf16.mxu0 %v2467
  %2825 = vmatpush1.bf16.msra.mxu0 %v2466
  %2826 = vmatprep.subr.bf16.mxu0 %v2483
  %2827 = vmatpush1.bf16.msra.mxu0 %v2482
  %2828 = vmatprep.subr.bf16.mxu0 %v2499
  %2829 = vmatpush1.bf16.msra.mxu0 %v2498
  %2830 = vmatprep.subr.bf16.mxu0 %v2515
  %2831 = vmatpush1.bf16.msra.mxu0 %v2514
  %2832 = vmatprep.subr.bf16.mxu0 %v2531
  %2833 = vmatpush1.bf16.msra.mxu0 %v2530
  %2834 = vmatprep.mubr.bf16.mxu0 %v1181
  %2835 = vmatmul.mubr.bf16.gmra.mrb[0].mxu0 %v1180
  %v2836 = vpop.f32.mrb[0].mxu0
  %v2837 = vadd.f32 %v1445, %v2836
  %v2838 = vpop.f32.mrb[0].mxu0
  %v2839 = vadd.f32 %v1449, %v2838
  %v2840 = vpop.f32.mrb[0].mxu0
  %v2841 = vpop.f32.mrb[0].mxu0
  %2842 = vdwg.mxu0
  %2843 = vmatprep.subr.bf16.mxu0 %v2293
  %2844 = vmatpush1.bf16.msra.mxu0 %v2292
  %2845 = vmatprep.subr.bf16.mxu0 %v2309
  %2846 = vmatpush1.bf16.msra.mxu0 %v2308
  %2847 = vmatprep.subr.bf16.mxu0 %v2325
  %2848 = vmatpush1.bf16.msra.mxu0 %v2324
  %2849 = vmatprep.subr.bf16.mxu0 %v2341
  %2850 = vmatpush1.bf16.msra.mxu0 %v2340
  %2851 = vmatprep.subr.bf16.mxu0 %v2357
  %2852 = vmatpush1.bf16.msra.mxu0 %v2356
  %2853 = vmatprep.subr.bf16.mxu0 %v2373
  %2854 = vmatpush1.bf16.msra.mxu0 %v2372
  %2855 = vmatprep.subr.bf16.mxu0 %v2389
  %2856 = vmatpush1.bf16.msra.mxu0 %v2388
  %2857 = vmatprep.subr.bf16.mxu0 %v2405
  %2858 = vmatpush1.bf16.msra.mxu0 %v2404
  %2859 = vmatprep.subr.bf16.mxu0 %v2421
  %2860 = vmatpush1.bf16.msra.mxu0 %v2420
  %2861 = vmatprep.subr.bf16.mxu0 %v2437
  %2862 = vmatpush1.bf16.msra.mxu0 %v2436
  %2863 = vmatprep.subr.bf16.mxu0 %v2453
  %2864 = vmatpush1.bf16.msra.mxu0 %v2452
  %2865 = vmatprep.subr.bf16.mxu0 %v2469
  %2866 = vmatpush1.bf16.msra.mxu0 %v2468
  %2867 = vmatprep.subr.bf16.mxu0 %v2485
  %2868 = vmatpush1.bf16.msra.mxu0 %v2484
  %2869 = vmatprep.subr.bf16.mxu0 %v2501
  %2870 = vmatpush1.bf16.msra.mxu0 %v2500
  %2871 = vmatprep.subr.bf16.mxu0 %v2517
  %2872 = vmatpush1.bf16.msra.mxu0 %v2516
  %2873 = vmatprep.subr.bf16.mxu0 %v2533
  %2874 = vmatpush1.bf16.msra.mxu0 %v2532
  %2875 = vmatprep.mubr.bf16.mxu0 %v1181
  %2876 = vmatmul.mubr.bf16.gmra.mrb[0].mxu0 %v1180
  %v2877 = vpop.f32.mrb[0].mxu0
  %v2878 = vadd.f32 %v1453, %v2877
  %v2879 = vpop.f32.mrb[0].mxu0
  %v2880 = vadd.f32 %v1457, %v2879
  %v2881 = vpop.f32.mrb[0].mxu0
  %v2882 = vpop.f32.mrb[0].mxu0
  %2883 = vdwg.mxu0
  %2884 = vmatprep.subr.bf16.mxu0 %v2295
  %2885 = vmatpush1.bf16.msra.mxu0 %v2294
  %2886 = vmatprep.subr.bf16.mxu0 %v2311
  %2887 = vmatpush1.bf16.msra.mxu0 %v2310
  %2888 = vmatprep.subr.bf16.mxu0 %v2327
  %2889 = vmatpush1.bf16.msra.mxu0 %v2326
  %2890 = vmatprep.subr.bf16.mxu0 %v2343
  %2891 = vmatpush1.bf16.msra.mxu0 %v2342
  %2892 = vmatprep.subr.bf16.mxu0 %v2359
  %2893 = vmatpush1.bf16.msra.mxu0 %v2358
  %2894 = vmatprep.subr.bf16.mxu0 %v2375
  %2895 = vmatpush1.bf16.msra.mxu0 %v2374
  %2896 = vmatprep.subr.bf16.mxu0 %v2391
  %2897 = vmatpush1.bf16.msra.mxu0 %v2390
  %2898 = vmatprep.subr.bf16.mxu0 %v2407
  %2899 = vmatpush1.bf16.msra.mxu0 %v2406
  %2900 = vmatprep.subr.bf16.mxu0 %v2423
  %2901 = vmatpush1.bf16.msra.mxu0 %v2422
  %2902 = vmatprep.subr.bf16.mxu0 %v2439
  %2903 = vmatpush1.bf16.msra.mxu0 %v2438
  %2904 = vmatprep.subr.bf16.mxu0 %v2455
  %2905 = vmatpush1.bf16.msra.mxu0 %v2454
  %2906 = vmatprep.subr.bf16.mxu0 %v2471
  %2907 = vmatpush1.bf16.msra.mxu0 %v2470
  %2908 = vmatprep.subr.bf16.mxu0 %v2487
  %2909 = vmatpush1.bf16.msra.mxu0 %v2486
  %2910 = vmatprep.subr.bf16.mxu0 %v2503
  %2911 = vmatpush1.bf16.msra.mxu0 %v2502
  %2912 = vmatprep.subr.bf16.mxu0 %v2519
  %2913 = vmatpush1.bf16.msra.mxu0 %v2518
  %2914 = vmatprep.subr.bf16.mxu0 %v2535
  %2915 = vmatpush1.bf16.msra.mxu0 %v2534
  %2916 = vmatprep.mubr.bf16.mxu0 %v1181
  %2917 = vmatmul.mubr.bf16.gmra.mrb[0].mxu0 %v1180
  %v2918 = vpop.f32.mrb[0].mxu0
  %v2919 = vadd.f32 %v1461, %v2918
  %v2920 = vpop.f32.mrb[0].mxu0
  %v2921 = vadd.f32 %v1465, %v2920
  %v2922 = vpop.f32.mrb[0].mxu0
  %v2923 = vpop.f32.mrb[0].mxu0
  %2924 = vdwg.mxu0
  %2925 = vmatprep.subr.bf16.mxu0 %v2297
  %2926 = vmatpush1.bf16.msra.mxu0 %v2296
  %2927 = vmatprep.subr.bf16.mxu0 %v2313
  %2928 = vmatpush1.bf16.msra.mxu0 %v2312
  %2929 = vmatprep.subr.bf16.mxu0 %v2329
  %2930 = vmatpush1.bf16.msra.mxu0 %v2328
  %2931 = vmatprep.subr.bf16.mxu0 %v2345
  %2932 = vmatpush1.bf16.msra.mxu0 %v2344
  %2933 = vmatprep.subr.bf16.mxu0 %v2361
  %2934 = vmatpush1.bf16.msra.mxu0 %v2360
  %2935 = vmatprep.subr.bf16.mxu0 %v2377
  %2936 = vmatpush1.bf16.msra.mxu0 %v2376
  %2937 = vmatprep.subr.bf16.mxu0 %v2393
  %2938 = vmatpush1.bf16.msra.mxu0 %v2392
  %2939 = vmatprep.subr.bf16.mxu0 %v2409
  %2940 = vmatpush1.bf16.msra.mxu0 %v2408
  %2941 = vmatprep.subr.bf16.mxu0 %v2425
  %2942 = vmatpush1.bf16.msra.mxu0 %v2424
  %2943 = vmatprep.subr.bf16.mxu0 %v2441
  %2944 = vmatpush1.bf16.msra.mxu0 %v2440
  %2945 = vmatprep.subr.bf16.mxu0 %v2457
  %2946 = vmatpush1.bf16.msra.mxu0 %v2456
  %2947 = vmatprep.subr.bf16.mxu0 %v2473
  %2948 = vmatpush1.bf16.msra.mxu0 %v2472
  %2949 = vmatprep.subr.bf16.mxu0 %v2489
  %2950 = vmatpush1.bf16.msra.mxu0 %v2488
  %2951 = vmatprep.subr.bf16.mxu0 %v2505
  %2952 = vmatpush1.bf16.msra.mxu0 %v2504
  %2953 = vmatprep.subr.bf16.mxu0 %v2521
  %2954 = vmatpush1.bf16.msra.mxu0 %v2520
  %2955 = vmatprep.subr.bf16.mxu0 %v2537
  %2956 = vmatpush1.bf16.msra.mxu0 %v2536
  %2957 = vmatprep.mubr.bf16.mxu0 %v1181
  %2958 = vmatmul.mubr.bf16.gmra.mrb[0].mxu0 %v1180
  %v2959 = vpop.f32.mrb[0].mxu0
  %v2960 = vadd.f32 %v1469, %v2959
  %v2961 = vpop.f32.mrb[0].mxu0
  %v2962 = vadd.f32 %v1473, %v2961
  %v2963 = vpop.f32.mrb[0].mxu0
  %v2964 = vpop.f32.mrb[0].mxu0
  %2965 = vdwg.mxu0
  %2966 = vmatprep.subr.bf16.mxu0 %v2299
  %2967 = vmatpush1.bf16.msra.mxu0 %v2298
  %2968 = vmatprep.subr.bf16.mxu0 %v2315
  %2969 = vmatpush1.bf16.msra.mxu0 %v2314
  %2970 = vmatprep.subr.bf16.mxu0 %v2331
  %2971 = vmatpush1.bf16.msra.mxu0 %v2330
  %2972 = vmatprep.subr.bf16.mxu0 %v2347
  %2973 = vmatpush1.bf16.msra.mxu0 %v2346
  %2974 = vmatprep.subr.bf16.mxu0 %v2363
  %2975 = vmatpush1.bf16.msra.mxu0 %v2362
  %2976 = vmatprep.subr.bf16.mxu0 %v2379
  %2977 = vmatpush1.bf16.msra.mxu0 %v2378
  %2978 = vmatprep.subr.bf16.mxu0 %v2395
  %2979 = vmatpush1.bf16.msra.mxu0 %v2394
  %2980 = vmatprep.subr.bf16.mxu0 %v2411
  %2981 = vmatpush1.bf16.msra.mxu0 %v2410
  %2982 = vmatprep.subr.bf16.mxu0 %v2427
  %2983 = vmatpush1.bf16.msra.mxu0 %v2426
  %2984 = vmatprep.subr.bf16.mxu0 %v2443
  %2985 = vmatpush1.bf16.msra.mxu0 %v2442
  %2986 = vmatprep.subr.bf16.mxu0 %v2459
  %2987 = vmatpush1.bf16.msra.mxu0 %v2458
  %2988 = vmatprep.subr.bf16.mxu0 %v2475
  %2989 = vmatpush1.bf16.msra.mxu0 %v2474
  %2990 = vmatprep.subr.bf16.mxu0 %v2491
  %2991 = vmatpush1.bf16.msra.mxu0 %v2490
  %2992 = vmatprep.subr.bf16.mxu0 %v2507
  %2993 = vmatpush1.bf16.msra.mxu0 %v2506
  %2994 = vmatprep.subr.bf16.mxu0 %v2523
  %2995 = vmatpush1.bf16.msra.mxu0 %v2522
  %2996 = vmatprep.subr.bf16.mxu0 %v2539
  %2997 = vmatpush1.bf16.msra.mxu0 %v2538
  %2998 = vmatprep.mubr.bf16.mxu0 %v1181
  %2999 = vmatmul.mubr.bf16.gmra.mrb[0].mxu0 %v1180
  %v3000 = vpop.f32.mrb[0].mxu0
  %v3001 = vadd.f32 %v1477, %v3000
  %v3002 = vpop.f32.mrb[0].mxu0
  %v3003 = vadd.f32 %v1481, %v3002
  %v3004 = vpop.f32.mrb[0].mxu0
  %v3005 = vpop.f32.mrb[0].mxu0
  %3006 = vdwg.mxu0
  %3007 = vmatprep.subr.bf16.mxu0 %v2301
  %3008 = vmatpush1.bf16.msra.mxu0 %v2300
  %3009 = vmatprep.subr.bf16.mxu0 %v2317
  %3010 = vmatpush1.bf16.msra.mxu0 %v2316
  %3011 = vmatprep.subr.bf16.mxu0 %v2333
  %3012 = vmatpush1.bf16.msra.mxu0 %v2332
  %3013 = vmatprep.subr.bf16.mxu0 %v2349
  %3014 = vmatpush1.bf16.msra.mxu0 %v2348
  %3015 = vmatprep.subr.bf16.mxu0 %v2365
  %3016 = vmatpush1.bf16.msra.mxu0 %v2364
  %3017 = vmatprep.subr.bf16.mxu0 %v2381
  %3018 = vmatpush1.bf16.msra.mxu0 %v2380
  %3019 = vmatprep.subr.bf16.mxu0 %v2397
  %3020 = vmatpush1.bf16.msra.mxu0 %v2396
  %3021 = vmatprep.subr.bf16.mxu0 %v2413
  %3022 = vmatpush1.bf16.msra.mxu0 %v2412
  %3023 = vmatprep.subr.bf16.mxu0 %v2429
  %3024 = vmatpush1.bf16.msra.mxu0 %v2428
  %3025 = vmatprep.subr.bf16.mxu0 %v2445
  %3026 = vmatpush1.bf16.msra.mxu0 %v2444
  %3027 = vmatprep.subr.bf16.mxu0 %v2461
  %3028 = vmatpush1.bf16.msra.mxu0 %v2460
  %3029 = vmatprep.subr.bf16.mxu0 %v2477
  %3030 = vmatpush1.bf16.msra.mxu0 %v2476
  %3031 = vmatprep.subr.bf16.mxu0 %v2493
  %3032 = vmatpush1.bf16.msra.mxu0 %v2492
  %3033 = vmatprep.subr.bf16.mxu0 %v2509
  %3034 = vmatpush1.bf16.msra.mxu0 %v2508
  %3035 = vmatprep.subr.bf16.mxu0 %v2525
  %3036 = vmatpush1.bf16.msra.mxu0 %v2524
  %3037 = vmatprep.subr.bf16.mxu0 %v2541
  %3038 = vmatpush1.bf16.msra.mxu0 %v2540
  %3039 = vmatprep.mubr.bf16.mxu0 %v1181
  %3040 = vmatmul.mubr.bf16.gmra.mrb[0].mxu0 %v1180
  %v3041 = vpop.f32.mrb[0].mxu0
  %v3042 = vadd.f32 %v1485, %v3041
  %v3043 = vpop.f32.mrb[0].mxu0
  %v3044 = vadd.f32 %v1489, %v3043
  %v3045 = vpop.f32.mrb[0].mxu0
  %v3046 = vpop.f32.mrb[0].mxu0
  %3047 = vdwg.mxu0
  %3048 = vmatprep.subr.bf16.mxu0 %v2303
  %3049 = vmatpush1.bf16.msra.mxu0 %v2302
  %3050 = vmatprep.subr.bf16.mxu0 %v2319
  %3051 = vmatpush1.bf16.msra.mxu0 %v2318
  %3052 = vmatprep.subr.bf16.mxu0 %v2335
  %3053 = vmatpush1.bf16.msra.mxu0 %v2334
  %3054 = vmatprep.subr.bf16.mxu0 %v2351
  %3055 = vmatpush1.bf16.msra.mxu0 %v2350
  %3056 = vmatprep.subr.bf16.mxu0 %v2367
  %3057 = vmatpush1.bf16.msra.mxu0 %v2366
  %3058 = vmatprep.subr.bf16.mxu0 %v2383
  %3059 = vmatpush1.bf16.msra.mxu0 %v2382
  %3060 = vmatprep.subr.bf16.mxu0 %v2399
  %3061 = vmatpush1.bf16.msra.mxu0 %v2398
  %3062 = vmatprep.subr.bf16.mxu0 %v2415
  %3063 = vmatpush1.bf16.msra.mxu0 %v2414
  %3064 = vmatprep.subr.bf16.mxu0 %v2431
  %3065 = vmatpush1.bf16.msra.mxu0 %v2430
  %3066 = vmatprep.subr.bf16.mxu0 %v2447
  %3067 = vmatpush1.bf16.msra.mxu0 %v2446
  %3068 = vmatprep.subr.bf16.mxu0 %v2463
  %3069 = vmatpush1.bf16.msra.mxu0 %v2462
  %3070 = vmatprep.subr.bf16.mxu0 %v2479
  %3071 = vmatpush1.bf16.msra.mxu0 %v2478
  %3072 = vmatprep.subr.bf16.mxu0 %v2495
  %3073 = vmatpush1.bf16.msra.mxu0 %v2494
  %3074 = vmatprep.subr.bf16.mxu0 %v2511
  %3075 = vmatpush1.bf16.msra.mxu0 %v2510
  %3076 = vmatprep.subr.bf16.mxu0 %v2527
  %3077 = vmatpush1.bf16.msra.mxu0 %v2526
  %3078 = vmatprep.subr.bf16.mxu0 %v2543
  %3079 = vmatpush1.bf16.msra.mxu0 %v2542
  %3080 = vmatprep.mubr.bf16.mxu0 %v1181
  %3081 = vmatmul.mubr.bf16.gmra.mrb[0].mxu0 %v1180
  %v3082 = vpop.f32.mrb[0].mxu0
  %v3083 = vadd.f32 %v1493, %v3082
  %v3084 = vpop.f32.mrb[0].mxu0
  %v3085 = vadd.f32 %v1497, %v3084
  %v3086 = vpop.f32.mrb[0].mxu0
  %v3087 = vpop.f32.mrb[0].mxu0
  %3088 = vdwg.mxu0
  %3089 = vmatprep.subr.bf16.mxu0 %v2305
  %3090 = vmatpush1.bf16.msra.mxu0 %v2304
  %3091 = vmatprep.subr.bf16.mxu0 %v2321
  %3092 = vmatpush1.bf16.msra.mxu0 %v2320
  %3093 = vmatprep.subr.bf16.mxu0 %v2337
  %3094 = vmatpush1.bf16.msra.mxu0 %v2336
  %3095 = vmatprep.subr.bf16.mxu0 %v2353
  %3096 = vmatpush1.bf16.msra.mxu0 %v2352
  %3097 = vmatprep.subr.bf16.mxu0 %v2369
  %3098 = vmatpush1.bf16.msra.mxu0 %v2368
  %3099 = vmatprep.subr.bf16.mxu0 %v2385
  %3100 = vmatpush1.bf16.msra.mxu0 %v2384
  %3101 = vmatprep.subr.bf16.mxu0 %v2401
  %3102 = vmatpush1.bf16.msra.mxu0 %v2400
  %3103 = vmatprep.subr.bf16.mxu0 %v2417
  %3104 = vmatpush1.bf16.msra.mxu0 %v2416
  %3105 = vmatprep.subr.bf16.mxu0 %v2433
  %3106 = vmatpush1.bf16.msra.mxu0 %v2432
  %3107 = vmatprep.subr.bf16.mxu0 %v2449
  %3108 = vmatpush1.bf16.msra.mxu0 %v2448
  %3109 = vmatprep.subr.bf16.mxu0 %v2465
  %3110 = vmatpush1.bf16.msra.mxu0 %v2464
  %3111 = vmatprep.subr.bf16.mxu0 %v2481
  %3112 = vmatpush1.bf16.msra.mxu0 %v2480
  %3113 = vmatprep.subr.bf16.mxu0 %v2497
  %3114 = vmatpush1.bf16.msra.mxu0 %v2496
  %3115 = vmatprep.subr.bf16.mxu0 %v2513
  %3116 = vmatpush1.bf16.msra.mxu0 %v2512
  %3117 = vmatprep.subr.bf16.mxu0 %v2529
  %3118 = vmatpush1.bf16.msra.mxu0 %v2528
  %3119 = vmatprep.subr.bf16.mxu0 %v2545
  %3120 = vmatpush1.bf16.msra.mxu0 %v2544
  %3121 = vmatprep.mubr.bf16.mxu0 %v1181
  %3122 = vmatmul.mubr.bf16.gmra.mrb[0].mxu0 %v1180
  %v3123 = vpop.f32.mrb[0].mxu0
  %v3124 = vadd.f32 %v1501, %v3123
  %v3125 = vpop.f32.mrb[0].mxu0
  %v3126 = vadd.f32 %v1505, %v3125
  %v3127 = vpop.f32.mrb[0].mxu0
  %v3128 = vpop.f32.mrb[0].mxu0
  %3129 = vdwg.mxu0
  %v3130 = vmax.f32 %v2837, 0.0
  %v3131 = vmax.f32 %v2839, 0.0
  %v3132 = vmax.f32 %v2878, 0.0
  %v3133 = vmax.f32 %v2880, 0.0
  %v3134 = vmax.f32 %v2919, 0.0
  %v3135 = vmax.f32 %v2921, 0.0
  %v3136 = vmax.f32 %v2960, 0.0
  %v3137 = vmax.f32 %v2962, 0.0
  %v3138 = vmax.f32 %v3001, 0.0
  %v3139 = vmax.f32 %v3003, 0.0
  %v3140 = vmax.f32 %v3042, 0.0
  %v3141 = vmax.f32 %v3044, 0.0
  %v3142 = vmax.f32 %v3083, 0.0
  %v3143 = vmax.f32 %v3085, 0.0
  %v3144 = vmax.f32 %v3124, 0.0
  %v3145 = vmax.f32 %v3126, 0.0
  %v3146 = vpack.c.bf16 %v3130, %v3130
  %v3147 = vpack.c.bf16 %v3131, %v3131
  %v3148 = vpack.c.bf16 %v3132, %v3132
  %v3149 = vpack.c.bf16 %v3133, %v3133
  %v3150 = vpack.c.bf16 %v3134, %v3134
  %v3151 = vpack.c.bf16 %v3135, %v3135
  %v3152 = vpack.c.bf16 %v3136, %v3136
  %v3153 = vpack.c.bf16 %v3137, %v3137
  %v3154 = vpack.c.bf16 %v3138, %v3138
  %v3155 = vpack.c.bf16 %v3139, %v3139
  %v3156 = vpack.c.bf16 %v3140, %v3140
  %v3157 = vpack.c.bf16 %v3141, %v3141
  %v3158 = vpack.c.bf16 %v3142, %v3142
  %v3159 = vpack.c.bf16 %v3143, %v3143
  %v3160 = vpack.c.bf16 %v3144, %v3144
  %v3161 = vpack.c.bf16 %v3145, %v3145
  %v3178 = vcombine.low %v3146, %v3147
  %v3179 = vcombine.low %v3148, %v3149
  %v3180 = vcombine.low %v3150, %v3151
  %v3181 = vcombine.low %v3152, %v3153
  %v3183 = vunpack.c.l.s4 1966171168
  %v3184 = vunpack.c.0.s8 %v3183
  %v3185 = vlaneseq
  %v3186 = vshrl.u32 %v3185, 7
  %v3187 = vsub.s32 %v3184, %v3186
  %v3188 = vrot.slane %v3178, %v3187
  %v3190 = vunpack.c.l.s4 1966171168
  %v3191 = vunpack.c.0.s8 %v3190
  %v3192 = vlaneseq
  %v3193 = vshrl.u32 %v3192, 7
  %v3194 = vsub.s32 %v3191, %v3193
  %v3195 = vrot.slane %v3179, %v3194
  %v3197 = vunpack.c.l.s4 1966171168
  %v3198 = vunpack.c.0.s8 %v3197
  %v3199 = vlaneseq
  %v3200 = vshrl.u32 %v3199, 7
  %v3201 = vsub.s32 %v3198, %v3200
  %v3202 = vrot.slane %v3180, %v3201
  %v3204 = vunpack.c.l.s4 1966171168
  %v3205 = vunpack.c.0.s8 %v3204
  %v3206 = vlaneseq
  %v3207 = vshrl.u32 %v3206, 7
  %v3208 = vsub.s32 %v3205, %v3207
  %v3209 = vrot.slane %v3181, %v3208
  %v3210 = vcombine.low %v3188, %v3195
  %v3211 = vcombine.low %v3202, %v3209
  %v3213 = vunpack.c.l.s4 1966171168
  %v3214 = vunpack.c.0.s8 %v3213
  %v3215 = vlaneseq
  %v3216 = vshrl.u32 %v3215, 7
  %v3217 = vsub.s32 %v3214, %v3216
  %v3218 = vrot.slane %v3210, %v3217
  %v3220 = vunpack.c.l.s4 1966171168
  %v3221 = vunpack.c.0.s8 %v3220
  %v3222 = vlaneseq
  %v3223 = vshrl.u32 %v3222, 7
  %v3224 = vsub.s32 %v3221, %v3223
  %v3225 = vrot.slane %v3211, %v3224
  %v3226 = vcombine.low %v3218, %v3225
  %v3227 = vcombine.low %v3154, %v3155
  %v3228 = vcombine.low %v3156, %v3157
  %v3229 = vcombine.low %v3158, %v3159
  %v3230 = vcombine.low %v3160, %v3161
  %v3232 = vunpack.c.l.s4 1966171168
  %v3233 = vunpack.c.0.s8 %v3232
  %v3234 = vlaneseq
  %v3235 = vshrl.u32 %v3234, 7
  %v3236 = vsub.s32 %v3233, %v3235
  %v3237 = vrot.slane %v3227, %v3236
  %v3239 = vunpack.c.l.s4 1966171168
  %v3240 = vunpack.c.0.s8 %v3239
  %v3241 = vlaneseq
  %v3242 = vshrl.u32 %v3241, 7
  %v3243 = vsub.s32 %v3240, %v3242
  %v3244 = vrot.slane %v3228, %v3243
  %v3246 = vunpack.c.l.s4 1966171168
  %v3247 = vunpack.c.0.s8 %v3246
  %v3248 = vlaneseq
  %v3249 = vshrl.u32 %v3248, 7
  %v3250 = vsub.s32 %v3247, %v3249
  %v3251 = vrot.slane %v3229, %v3250
  %v3253 = vunpack.c.l.s4 1966171168
  %v3254 = vunpack.c.0.s8 %v3253
  %v3255 = vlaneseq
  %v3256 = vshrl.u32 %v3255, 7
  %v3257 = vsub.s32 %v3254, %v3256
  %v3258 = vrot.slane %v3230, %v3257
  %v3259 = vcombine.low %v3237, %v3244
  %v3260 = vcombine.low %v3251, %v3258
  %v3262 = vunpack.c.l.s4 1966171168
  %v3263 = vunpack.c.0.s8 %v3262
  %v3264 = vlaneseq
  %v3265 = vshrl.u32 %v3264, 7
  %v3266 = vsub.s32 %v3263, %v3265
  %v3267 = vrot.slane %v3259, %v3266
  %v3269 = vunpack.c.l.s4 1966171168
  %v3270 = vunpack.c.0.s8 %v3269
  %v3271 = vlaneseq
  %v3272 = vshrl.u32 %v3271, 7
  %v3273 = vsub.s32 %v3270, %v3272
  %v3274 = vrot.slane %v3260, %v3273
  %v3275 = vcombine.low %v3267, %v3274
  %3278 = vst [vmem:[%s5] sm:$0xff] %v3226
  %3279 = vst [vmem:[%s5 + $0x8] sm:$0xff] %v3275
  // Predicated region
  $region22: #{ae_cifar_forward.10} parent=0 // pred_check
    _
  $region23: #{ae_cifar_forward.10} parent=0 // pred_check_branch
    %3281 = sbr.rel (0) target = $region25
  $region24: #{ae_cifar_forward.10} parent=0 // pred_region
    _
  $region25: #{ae_cifar_forward.10} parent=0 // pred_fallthru
    _
  // Predicated region
  $region26: #{ae_cifar_forward.10} parent=0 // pred_check
    _
  $region27: #{ae_cifar_forward.10} parent=0 // pred_check_branch
    %3283 = sbr.rel (0) target = $region29
  $region28: #{ae_cifar_forward.10} parent=0 // pred_region
    _
  $region29: #{ae_cifar_forward.10} parent=0 // pred_fallthru
    _

// kernel: ae_cifar_forward.12
$region0: #{ae_cifar_forward.12}
  #allocation0 [shape = 'u32[]', space=smem, size = 0x4, offset = 0x4, fixed_abs, tag = 'smem constant byte address 0x4 - core index']
  #allocation1 [shape = 'u32[144,128]{1,0:T(1,128)}', space=vmem, size = 0x12000, scoped, tag = 'internal scratch']
  %s0 = inlined_call_operand.vmem [shape: bf16[4,128,512], index: 0, kind: input, shape index: {}]
  %s1 = inlined_call_operand.vmem [shape: bf16[4,512,64], index: 1, kind: input, shape index: {}]
  %s2 = inlined_call_operand.vmem [shape: f32[1,64], index: 2, kind: input, shape index: {}]
  %s3 = inlined_call_operand.vmem [shape: bf16[4,128,64], index: 3, kind: output, shape index: {}]
  %s4 = sld [smem:[#allocation0]]
  $region45: #{ae_cifar_forward.12} parent=0
    _
  %s6 = ssub.s32 1, %s4
  %s7 = scalar_select 0, %s6, %s4
  loop: start=0, step=1, limit=6
  $region2: #{ae_cifar_forward.12} parent=0 // loop_pre_header
    _
  $region3: #{ae_cifar_forward.12} parent=0 // loop_header
    %s9 = sphi 0, %s13
    %p10 = scmp.ge.s32.totalorder %s9, 6
    %s19 = sphi 0, %s21
    %s22 = sphi 0, %s19
    %s23 = sphi 0, %s22
    %s39 = sphi 0, %s23
    %s45 = sphi 0, %s47
    %s48 = sphi 0, %s45
    %s49 = sphi 0, %s48
    %s65 = sphi 0, %s49
    %s69 = sphi 0, %s69
    %s71 = sphi 0, %s69
    %s72 = sphi 0, %s71
    %s86 = sphi 0, %s72
    %s92 = sphi 0, %s94
    %s95 = sphi 0, %s92
    %s96 = sphi 0, %s95
    %s112 = sphi 0, %s96
  $region4: #{ae_cifar_forward.12} parent=0 // loop_header_branch
    %12 = sbr.rel (%p10) target = $region8
  $region5: #{ae_cifar_forward.12} parent=0 // loop_body
    %s14 = ssub.s32 %s9, 1
    %s15 = ssub.s32 %s9, 2
    %s16 = sadd.s32 %s9, 1
    %s17 = ssub.s32 %s9, %s16
    %p18 = scmp.eq.s32.totalorder %s17, 0
    %s20 = sadd.s32 %s19, 1
    %s21 = scalar_select %p18, %s19, %s20
    %p24 = pneg %p18
    %p25 = scmp.eq.s32.totalorder %s9, 3
    %p26 = por %p24, %p25
    %p27 = scmp.ne.s32.totalorder %s19, %s22
    %p28 = scmp.eq.s32.totalorder %s9, 0
    %p29 = por %p27, %p28
    %p30 = scmp.ne.s32.totalorder %s19, %s22
    %p31 = scmp.eq.s32.totalorder %s14, 3
    %p32 = por %p30, %p31
    %p33 = scmp.ne.s32.totalorder %s22, %s23
    %p34 = scmp.eq.s32.totalorder %s14, 0
    %p35 = por %p33, %p34
    %p36 = scmp.ne.s32.totalorder %s22, %s23
    %p37 = scmp.eq.s32.totalorder %s15, 3
    %p38 = por %p36, %p37
    %p40 = scmp.ne.s32.totalorder %s23, %s39
    %p41 = scmp.eq.s32.totalorder %s15, 0
    %p42 = por %p40, %p41
    %s43 = ssub.s32 %s9, %s16
    %p44 = scmp.eq.s32.totalorder %s43, 0
    %s46 = sadd.s32 %s45, 1
    %s47 = scalar_select %p44, %s45, %s46
    %p50 = pneg %p44
    %p51 = scmp.eq.s32.totalorder %s9, 3
    %p52 = por %p50, %p51
    %p53 = scmp.ne.s32.totalorder %s45, %s48
    %p54 = scmp.eq.s32.totalorder %s9, 0
    %p55 = por %p53, %p54
    %p56 = scmp.ne.s32.totalorder %s45, %s48
    %p57 = scmp.eq.s32.totalorder %s14, 3
    %p58 = por %p56, %p57
    %p59 = scmp.ne.s32.totalorder %s48, %s49
    %p60 = scmp.eq.s32.totalorder %s14, 0
    %p61 = por %p59, %p60
    %p62 = scmp.ne.s32.totalorder %s48, %s49
    %p63 = scmp.eq.s32.totalorder %s15, 3
    %p64 = por %p62, %p63
    %p66 = scmp.ne.s32.totalorder %s49, %s65
    %p67 = scmp.eq.s32.totalorder %s15, 0
    %p68 = por %p66, %p67
    %s70 = sadd.s32 %s69, 1
    %p73 = scmp.eq.s32.totalorder %s9, 3
    %p74 = scmp.ne.s32.totalorder %s69, %s71
    %p75 = scmp.eq.s32.totalorder %s9, 0
    %p76 = por %p74, %p75
    %p77 = scmp.ne.s32.totalorder %s69, %s71
    %p78 = scmp.eq.s32.totalorder %s14, 3
    %p79 = por %p77, %p78
    %p80 = scmp.ne.s32.totalorder %s71, %s72
    %p81 = scmp.eq.s32.totalorder %s14, 0
    %p82 = por %p80, %p81
    %p83 = scmp.ne.s32.totalorder %s71, %s72
    %p84 = scmp.eq.s32.totalorder %s15, 3
    %p85 = por %p83, %p84
    %p87 = scmp.ne.s32.totalorder %s72, %s86
    %p88 = scmp.eq.s32.totalorder %s15, 0
    %p89 = por %p87, %p88
    %s90 = ssub.s32 %s9, %s16
    %p91 = scmp.eq.s32.totalorder %s90, 0
    %s93 = sadd.s32 %s92, 1
    %s94 = scalar_select %p91, %s92, %s93
    %p97 = pneg %p91
    %p98 = scmp.eq.s32.totalorder %s9, 3
    %p99 = por %p97, %p98
    %p100 = scmp.ne.s32.totalorder %s92, %s95
    %p101 = scmp.eq.s32.totalorder %s9, 0
    %p102 = por %p100, %p101
    %p103 = scmp.ne.s32.totalorder %s92, %s95
    %p104 = scmp.eq.s32.totalorder %s14, 3
    %p105 = por %p103, %p104
    %p106 = scmp.ne.s32.totalorder %s95, %s96
    %p107 = scmp.eq.s32.totalorder %s14, 0
    %p108 = por %p106, %p107
    %p109 = scmp.ne.s32.totalorder %s95, %s96
    %p110 = scmp.eq.s32.totalorder %s15, 3
    %p111 = por %p109, %p110
    %p113 = scmp.ne.s32.totalorder %s96, %s112
    %p114 = scmp.eq.s32.totalorder %s15, 0
    %p115 = por %p113, %p114
    %p116 = scmp.le.s32.totalorder 1, %s9
    %p117 = scmp.lt.s32.totalorder %s9, 5
    %p118 = pnand %p116, %p117
    %p119 = pneg %p118
    // Predicated region
    $region9: #{ae_cifar_forward.12} parent=5 // pred_check
      _
    $region10: #{ae_cifar_forward.12} parent=5 // pred_check_branch
      %121 = sbr.rel (%p118) target = $region12
    $region11: #{ae_cifar_forward.12} parent=5 // pred_region
      %s122 = ssub.s32 %s9, 1
      // Predicated region
      $region13: #{ae_cifar_forward.12} parent=11 // pred_check
        %p123 = pneg %p82
      $region14: #{ae_cifar_forward.12} parent=11 // pred_check_branch
        %125 = sbr.rel (%p123) target = $region16
      $region15: #{ae_cifar_forward.12} parent=11 // pred_region
        _
      $region16: #{ae_cifar_forward.12} parent=11 // pred_fallthru
        _
    $region12: #{ae_cifar_forward.12} parent=5 // pred_fallthru
      _
    %p126 = scmp.lt.s32.totalorder %s9, 4
    // Predicated region
    $region17: #{ae_cifar_forward.12} parent=5 // pred_check
      %p127 = pneg %p126
    $region18: #{ae_cifar_forward.12} parent=5 // pred_check_branch
      %129 = sbr.rel (%p127) target = $region20
    $region19: #{ae_cifar_forward.12} parent=5 // pred_region
      // Predicated region
      $region21: #{ae_cifar_forward.12} parent=19 // pred_check
        %p130 = pneg %p29
      $region22: #{ae_cifar_forward.12} parent=19 // pred_check_branch
        %132 = sbr.rel (%p130) target = $region24
      $region23: #{ae_cifar_forward.12} parent=19 // pred_region
        %p133 = scmp.lt.s32.totalorder %s9, 3
        %s134 = scalar_select %p133, %s9, 3
        %s135 = smul.addr %s134, 64
        %s136 = smul.addr %s135, 4
        %s137 = scalar_lea.vmem %s0, %s136
      $region24: #{ae_cifar_forward.12} parent=19 // pred_fallthru
        _
      // Predicated region
      $region25: #{ae_cifar_forward.12} parent=19 // pred_check
        %p138 = pneg %p55
      $region26: #{ae_cifar_forward.12} parent=19 // pred_check_branch
        %140 = sbr.rel (%p138) target = $region28
      $region27: #{ae_cifar_forward.12} parent=19 // pred_region
        %p141 = scmp.lt.s32.totalorder %s9, 3
        %s142 = scalar_select %p141, %s9, 3
        %s143 = smul.addr %s142, 64
        %s144 = smul.addr %s143, 4
        %s145 = scalar_lea.vmem %s1, %s144
      $region28: #{ae_cifar_forward.12} parent=19 // pred_fallthru
        _
    $region20: #{ae_cifar_forward.12} parent=5 // pred_fallthru
      _
    %p146 = scmp.le.s32.totalorder 1, %s9
    %p147 = scmp.lt.s32.totalorder %s9, 5
    %p148 = pnand %p146, %p147
    %p149 = pneg %p148
    // Predicated region
    $region29: #{ae_cifar_forward.12} parent=5 // pred_check
      _
    $region30: #{ae_cifar_forward.12} parent=5 // pred_check_branch
      %151 = sbr.rel (%p148) target = $region32
    $region31: #{ae_cifar_forward.12} parent=5 // pred_region
      %s152 = ssub.s32 %s9, 1
      %p153 = scmp.lt.s32.totalorder %s14, 3
      %s154 = scalar_select %p153, %s14, 3
      %s155 = smul.addr %s154, 64
      %s156 = smul.addr %s155, 4
      %s157 = scalar_lea.vmem %s0, %s156
      %p158 = pneg %p35
      %p159 = pneg %p32
      %p160 = scmp.lt.s32.totalorder %s14, 3
      %s161 = scalar_select %p160, %s14, 3
      %s162 = smul.addr %s161, 64
      %s163 = smul.addr %s162, 4
      %s164 = scalar_lea.vmem %s1, %s163
      %p165 = pneg %p61
      %p166 = pneg %p58
      %p167 = pneg %p82
      %p168 = pneg %p79
      %p169 = pneg %p108
      %p170 = pneg %p105
      %p171 = scmp.lt.s32.totalorder %s14, 3
      %s172 = scalar_select %p171, %s14, 3
      %s173 = smul.addr %s172, 16
      %s174 = smul.addr %s173, 4
      %s175 = scalar_lea.vmem %s3, %s174
      %p176 = scmp.lt.s32.totalorder %s14, 3
      %s177 = scalar_select %p176, %s14, 3
      %s178 = smul.addr %s177, 64
      %s179 = smul.addr %s178, 4
      %s180 = scalar_lea.vmem %s0, %s179
      %p181 = scmp.lt.s32.totalorder %s14, 3
      %s182 = scalar_select %p181, %s14, 3
      %s183 = smul.addr %s182, 64
      %s184 = smul.addr %s183, 4
      %s185 = scalar_lea.vmem %s1, %s184
      %p186 = scmp.lt.s32.totalorder %s14, 3
      %s187 = scalar_select %p186, %s14, 3
      %s188 = smul.addr %s187, 16
      %s189 = smul.addr %s188, 4
      %s190 = scalar_lea.vmem %s3, %s189
      %v192 = vld [vmem:[%s180] sm:$0xff]
      %v193 = vld [vmem:[%s180 + $0x8] sm:$0xff]
      %v194 = vld [vmem:[%s180 + $0x10] sm:$0xff]
      %v195 = vld [vmem:[%s180 + $0x18] sm:$0xff]
      %v196 = vld [vmem:[%s180 + $0x20] sm:$0xff]
      %v197 = vld [vmem:[%s180 + $0x28] sm:$0xff]
      %v198 = vld [vmem:[%s180 + $0x30] sm:$0xff]
      %v199 = vld [vmem:[%s180 + $0x38] sm:$0xff]
      %v200 = vld [vmem:[%s180 + $0x40] sm:$0xff]
      %v201 = vld [vmem:[%s180 + $0x48] sm:$0xff]
      %v202 = vld [vmem:[%s180 + $0x50] sm:$0xff]
      %v203 = vld [vmem:[%s180 + $0x58] sm:$0xff]
      %v204 = vld [vmem:[%s180 + $0x60] sm:$0xff]
      %v205 = vld [vmem:[%s180 + $0x68] sm:$0xff]
      %v206 = vld [vmem:[%s180 + $0x70] sm:$0xff]
      %v207 = vld [vmem:[%s180 + $0x78] sm:$0xff]
      %v208 = vld [vmem:[%s180 + $0x80] sm:$0xff]
      %v209 = vld [vmem:[%s180 + $0x88] sm:$0xff]
      %v210 = vld [vmem:[%s180 + $0x90] sm:$0xff]
      %v211 = vld [vmem:[%s180 + $0x98] sm:$0xff]
      %v212 = vld [vmem:[%s180 + $0xa0] sm:$0xff]
      %v213 = vld [vmem:[%s180 + $0xa8] sm:$0xff]
      %v214 = vld [vmem:[%s180 + $0xb0] sm:$0xff]
      %v215 = vld [vmem:[%s180 + $0xb8] sm:$0xff]
      %v216 = vld [vmem:[%s180 + $0xc0] sm:$0xff]
      %v217 = vld [vmem:[%s180 + $0xc8] sm:$0xff]
      %v218 = vld [vmem:[%s180 + $0xd0] sm:$0xff]
      %v219 = vld [vmem:[%s180 + $0xd8] sm:$0xff]
      %v220 = vld [vmem:[%s180 + $0xe0] sm:$0xff]
      %v221 = vld [vmem:[%s180 + $0xe8] sm:$0xff]
      %v222 = vld [vmem:[%s180 + $0xf0] sm:$0xff]
      %v223 = vld [vmem:[%s180 + $0xf8] sm:$0xff]
      %v224 = vld [vmem:[%s185] sm:$0xf]
      %v225 = vld [vmem:[%s185 + $0x4] sm:$0xf]
      %v226 = vld [vmem:[%s185 + $0x8] sm:$0xf]
      %v227 = vld [vmem:[%s185 + $0xc] sm:$0xf]
      %v228 = vld [vmem:[%s185 + $0x10] sm:$0xf]
      %v229 = vld [vmem:[%s185 + $0x14] sm:$0xf]
      %v230 = vld [vmem:[%s185 + $0x18] sm:$0xf]
      %v231 = vld [vmem:[%s185 + $0x1c] sm:$0xf]
      %v232 = vld [vmem:[%s185 + $0x20] sm:$0xf]
      %v233 = vld [vmem:[%s185 + $0x24] sm:$0xf]
      %v234 = vld [vmem:[%s185 + $0x28] sm:$0xf]
      %v235 = vld [vmem:[%s185 + $0x2c] sm:$0xf]
      %v236 = vld [vmem:[%s185 + $0x30] sm:$0xf]
      %v237 = vld [vmem:[%s185 + $0x34] sm:$0xf]
      %v238 = vld [vmem:[%s185 + $0x38] sm:$0xf]
      %v239 = vld [vmem:[%s185 + $0x3c] sm:$0xf]
      %v240 = vld [vmem:[%s185 + $0x40] sm:$0xf]
      %v241 = vld [vmem:[%s185 + $0x44] sm:$0xf]
      %v242 = vld [vmem:[%s185 + $0x48] sm:$0xf]
      %v243 = vld [vmem:[%s185 + $0x4c] sm:$0xf]
      %v244 = vld [vmem:[%s185 + $0x50] sm:$0xf]
      %v245 = vld [vmem:[%s185 + $0x54] sm:$0xf]
      %v246 = vld [vmem:[%s185 + $0x58] sm:$0xf]
      %v247 = vld [vmem:[%s185 + $0x5c] sm:$0xf]
      %v248 = vld [vmem:[%s185 + $0x60] sm:$0xf]
      %v249 = vld [vmem:[%s185 + $0x64] sm:$0xf]
      %v250 = vld [vmem:[%s185 + $0x68] sm:$0xf]
      %v251 = vld [vmem:[%s185 + $0x6c] sm:$0xf]
      %v252 = vld [vmem:[%s185 + $0x70] sm:$0xf]
      %v253 = vld [vmem:[%s185 + $0x74] sm:$0xf]
      %v254 = vld [vmem:[%s185 + $0x78] sm:$0xf]
      %v255 = vld [vmem:[%s185 + $0x7c] sm:$0xf]
      %v256 = vld [vmem:[%s185 + $0x80] sm:$0xf]
      %v257 = vld [vmem:[%s185 + $0x84] sm:$0xf]
      %v258 = vld [vmem:[%s185 + $0x88] sm:$0xf]
      %v259 = vld [vmem:[%s185 + $0x8c] sm:$0xf]
      %v260 = vld [vmem:[%s185 + $0x90] sm:$0xf]
      %v261 = vld [vmem:[%s185 + $0x94] sm:$0xf]
      %v262 = vld [vmem:[%s185 + $0x98] sm:$0xf]
      %v263 = vld [vmem:[%s185 + $0x9c] sm:$0xf]
      %v264 = vld [vmem:[%s185 + $0xa0] sm:$0xf]
      %v265 = vld [vmem:[%s185 + $0xa4] sm:$0xf]
      %v266 = vld [vmem:[%s185 + $0xa8] sm:$0xf]
      %v267 = vld [vmem:[%s185 + $0xac] sm:$0xf]
      %v268 = vld [vmem:[%s185 + $0xb0] sm:$0xf]
      %v269 = vld [vmem:[%s185 + $0xb4] sm:$0xf]
      %v270 = vld [vmem:[%s185 + $0xb8] sm:$0xf]
      %v271 = vld [vmem:[%s185 + $0xbc] sm:$0xf]
      %v272 = vld [vmem:[%s185 + $0xc0] sm:$0xf]
      %v273 = vld [vmem:[%s185 + $0xc4] sm:$0xf]
      %v274 = vld [vmem:[%s185 + $0xc8] sm:$0xf]
      %v275 = vld [vmem:[%s185 + $0xcc] sm:$0xf]
      %v276 = vld [vmem:[%s185 + $0xd0] sm:$0xf]
      %v277 = vld [vmem:[%s185 + $0xd4] sm:$0xf]
      %v278 = vld [vmem:[%s185 + $0xd8] sm:$0xf]
      %v279 = vld [vmem:[%s185 + $0xdc] sm:$0xf]
      %v280 = vld [vmem:[%s185 + $0xe0] sm:$0xf]
      %v281 = vld [vmem:[%s185 + $0xe4] sm:$0xf]
      %v282 = vld [vmem:[%s185 + $0xe8] sm:$0xf]
      %v283 = vld [vmem:[%s185 + $0xec] sm:$0xf]
      %v284 = vld [vmem:[%s185 + $0xf0] sm:$0xf]
      %v285 = vld [vmem:[%s185 + $0xf4] sm:$0xf]
      %v286 = vld [vmem:[%s185 + $0xf8] sm:$0xf]
      %v287 = vld [vmem:[%s185 + $0xfc] sm:$0xf]
      %v288 = vld [vmem:[%s2] sm:$0x1]
      %v290 = vlaneseq
      %v291 = vshrl.u32 %v290, 7
      %v292 = vsub.s32 0, %v291
      %v293 = vrot.slane %v288, %v292
      %v327 = vunpack.c.l.b16 %v192
      %v328 = vunpack.c.h.b16 %v192
      %v329 = vunpack.c.l.b16 %v193
      %v330 = vunpack.c.h.b16 %v193
      %v331 = vunpack.c.l.b16 %v194
      %v332 = vunpack.c.h.b16 %v194
      %v333 = vunpack.c.l.b16 %v195
      %v334 = vunpack.c.h.b16 %v195
      %v335 = vunpack.c.l.b16 %v196
      %v336 = vunpack.c.h.b16 %v196
      %v337 = vunpack.c.l.b16 %v197
      %v338 = vunpack.c.h.b16 %v197
      %v339 = vunpack.c.l.b16 %v198
      %v340 = vunpack.c.h.b16 %v198
      %v341 = vunpack.c.l.b16 %v199
      %v342 = vunpack.c.h.b16 %v199
      %v343 = vunpack.c.l.b16 %v200
      %v344 = vunpack.c.h.b16 %v200
      %v345 = vunpack.c.l.b16 %v201
      %v346 = vunpack.c.h.b16 %v201
      %v347 = vunpack.c.l.b16 %v202
      %v348 = vunpack.c.h.b16 %v202
      %v349 = vunpack.c.l.b16 %v203
      %v350 = vunpack.c.h.b16 %v203
      %v351 = vunpack.c.l.b16 %v204
      %v352 = vunpack.c.h.b16 %v204
      %v353 = vunpack.c.l.b16 %v205
      %v354 = vunpack.c.h.b16 %v205
      %v355 = vunpack.c.l.b16 %v206
      %v356 = vunpack.c.h.b16 %v206
      %v357 = vunpack.c.l.b16 %v207
      %v358 = vunpack.c.h.b16 %v207
      %v359 = vunpack.c.l.b16 %v208
      %v360 = vunpack.c.h.b16 %v208
      %v361 = vunpack.c.l.b16 %v209
      %v362 = vunpack.c.h.b16 %v209
      %v363 = vunpack.c.l.b16 %v210
      %v364 = vunpack.c.h.b16 %v210
      %v365 = vunpack.c.l.b16 %v211
      %v366 = vunpack.c.h.b16 %v211
      %v367 = vunpack.c.l.b16 %v212
      %v368 = vunpack.c.h.b16 %v212
      %v369 = vunpack.c.l.b16 %v213
      %v370 = vunpack.c.h.b16 %v213
      %v371 = vunpack.c.l.b16 %v214
      %v372 = vunpack.c.h.b16 %v214
      %v373 = vunpack.c.l.b16 %v215
      %v374 = vunpack.c.h.b16 %v215
      %v375 = vunpack.c.l.b16 %v216
      %v376 = vunpack.c.h.b16 %v216
      %v377 = vunpack.c.l.b16 %v217
      %v378 = vunpack.c.h.b16 %v217
      %v379 = vunpack.c.l.b16 %v218
      %v380 = vunpack.c.h.b16 %v218
      %v381 = vunpack.c.l.b16 %v219
      %v382 = vunpack.c.h.b16 %v219
      %v383 = vunpack.c.l.b16 %v220
      %v384 = vunpack.c.h.b16 %v220
      %v385 = vunpack.c.l.b16 %v221
      %v386 = vunpack.c.h.b16 %v221
      %v387 = vunpack.c.l.b16 %v222
      %v388 = vunpack.c.h.b16 %v222
      %v389 = vunpack.c.l.b16 %v223
      %v390 = vunpack.c.h.b16 %v223
      %v391 = vpack.c.b16 %v331, %v327
      %v392 = vpack.c.b16 %v332, %v328
      %v393 = vpack.c.b16 %v333, %v329
      %v394 = vpack.c.b16 %v334, %v330
      %v395 = vpack.c.b16 %v339, %v335
      %v396 = vpack.c.b16 %v340, %v336
      %v397 = vpack.c.b16 %v341, %v337
      %v398 = vpack.c.b16 %v342, %v338
      %v399 = vpack.c.b16 %v347, %v343
      %v400 = vpack.c.b16 %v348, %v344
      %v401 = vpack.c.b16 %v349, %v345
      %v402 = vpack.c.b16 %v350, %v346
      %v403 = vpack.c.b16 %v355, %v351
      %v404 = vpack.c.b16 %v356, %v352
      %v405 = vpack.c.b16 %v357, %v353
      %v406 = vpack.c.b16 %v358, %v354
      %v407 = vpack.c.b16 %v363, %v359
      %v408 = vpack.c.b16 %v364, %v360
      %v409 = vpack.c.b16 %v365, %v361
      %v410 = vpack.c.b16 %v366, %v362
      %v411 = vpack.c.b16 %v371, %v367
      %v412 = vpack.c.b16 %v372, %v368
      %v413 = vpack.c.b16 %v373, %v369
      %v414 = vpack.c.b16 %v374, %v370
      %v415 = vpack.c.b16 %v379, %v375
      %v416 = vpack.c.b16 %v380, %v376
      %v417 = vpack.c.b16 %v381, %v377
      %v418 = vpack.c.b16 %v382, %v378
      %v419 = vpack.c.b16 %v387, %v383
      %v420 = vpack.c.b16 %v388, %v384
      %v421 = vpack.c.b16 %v389, %v385
      %v422 = vpack.c.b16 %v390, %v386
      %v519 = vunpack.c.l.b16 %v224
      %v520 = vunpack.c.l.b16 %v225
      %v521 = vunpack.c.l.b16 %v226
      %v522 = vunpack.c.l.b16 %v227
      %v523 = vunpack.c.l.b16 %v228
      %v524 = vunpack.c.l.b16 %v229
      %v525 = vunpack.c.l.b16 %v230
      %v526 = vunpack.c.l.b16 %v231
      %v527 = vunpack.c.l.b16 %v232
      %v528 = vunpack.c.l.b16 %v233
      %v529 = vunpack.c.l.b16 %v234
      %v530 = vunpack.c.l.b16 %v235
      %v531 = vunpack.c.l.b16 %v236
      %v532 = vunpack.c.l.b16 %v237
      %v533 = vunpack.c.l.b16 %v238
      %v534 = vunpack.c.l.b16 %v239
      %v535 = vunpack.c.l.b16 %v240
      %v536 = vunpack.c.l.b16 %v241
      %v537 = vunpack.c.l.b16 %v242
      %v538 = vunpack.c.l.b16 %v243
      %v539 = vunpack.c.l.b16 %v244
      %v540 = vunpack.c.l.b16 %v245
      %v541 = vunpack.c.l.b16 %v246
      %v542 = vunpack.c.l.b16 %v247
      %v543 = vunpack.c.l.b16 %v248
      %v544 = vunpack.c.l.b16 %v249
      %v545 = vunpack.c.l.b16 %v250
      %v546 = vunpack.c.l.b16 %v251
      %v547 = vunpack.c.l.b16 %v252
      %v548 = vunpack.c.l.b16 %v253
      %v549 = vunpack.c.l.b16 %v254
      %v550 = vunpack.c.l.b16 %v255
      %v551 = vunpack.c.l.b16 %v256
      %v552 = vunpack.c.l.b16 %v257
      %v553 = vunpack.c.l.b16 %v258
      %v554 = vunpack.c.l.b16 %v259
      %v555 = vunpack.c.l.b16 %v260
      %v556 = vunpack.c.l.b16 %v261
      %v557 = vunpack.c.l.b16 %v262
      %v558 = vunpack.c.l.b16 %v263
      %v559 = vunpack.c.l.b16 %v264
      %v560 = vunpack.c.l.b16 %v265
      %v561 = vunpack.c.l.b16 %v266
      %v562 = vunpack.c.l.b16 %v267
      %v563 = vunpack.c.l.b16 %v268
      %v564 = vunpack.c.l.b16 %v269
      %v565 = vunpack.c.l.b16 %v270
      %v566 = vunpack.c.l.b16 %v271
      %v567 = vunpack.c.l.b16 %v272
      %v568 = vunpack.c.l.b16 %v273
      %v569 = vunpack.c.l.b16 %v274
      %v570 = vunpack.c.l.b16 %v275
      %v571 = vunpack.c.l.b16 %v276
      %v572 = vunpack.c.l.b16 %v277
      %v573 = vunpack.c.l.b16 %v278
      %v574 = vunpack.c.l.b16 %v279
      %v575 = vunpack.c.l.b16 %v280
      %v576 = vunpack.c.l.b16 %v281
      %v577 = vunpack.c.l.b16 %v282
      %v578 = vunpack.c.l.b16 %v283
      %v579 = vunpack.c.l.b16 %v284
      %v580 = vunpack.c.l.b16 %v285
      %v581 = vunpack.c.l.b16 %v286
      %v582 = vunpack.c.l.b16 %v287
      %v583 = vpack.c.b16 %v520, %v519
      %v584 = vpack.c.b16 %v522, %v521
      %v585 = vpack.c.b16 %v524, %v523
      %v586 = vpack.c.b16 %v526, %v525
      %v587 = vpack.c.b16 %v528, %v527
      %v588 = vpack.c.b16 %v530, %v529
      %v589 = vpack.c.b16 %v532, %v531
      %v590 = vpack.c.b16 %v534, %v533
      %v591 = vpack.c.b16 %v536, %v535
      %v592 = vpack.c.b16 %v538, %v537
      %v593 = vpack.c.b16 %v540, %v539
      %v594 = vpack.c.b16 %v542, %v541
      %v595 = vpack.c.b16 %v544, %v543
      %v596 = vpack.c.b16 %v546, %v545
      %v597 = vpack.c.b16 %v548, %v547
      %v598 = vpack.c.b16 %v550, %v549
      %v599 = vpack.c.b16 %v552, %v551
      %v600 = vpack.c.b16 %v554, %v553
      %v601 = vpack.c.b16 %v556, %v555
      %v602 = vpack.c.b16 %v558, %v557
      %v603 = vpack.c.b16 %v560, %v559
      %v604 = vpack.c.b16 %v562, %v561
      %v605 = vpack.c.b16 %v564, %v563
      %v606 = vpack.c.b16 %v566, %v565
      %v607 = vpack.c.b16 %v568, %v567
      %v608 = vpack.c.b16 %v570, %v569
      %v609 = vpack.c.b16 %v572, %v571
      %v610 = vpack.c.b16 %v574, %v573
      %v611 = vpack.c.b16 %v576, %v575
      %v612 = vpack.c.b16 %v578, %v577
      %v613 = vpack.c.b16 %v580, %v579
      %v614 = vpack.c.b16 %v582, %v581
      %647 = vmatprep.subr.bf16.mxu0 0
      %648 = vmatpush1.bf16.msra.mxu0 %v583
      %649 = vmatprep.subr.bf16.mxu0 0
      %650 = vmatpush1.bf16.msra.mxu0 %v584
      %651 = vmatprep.subr.bf16.mxu0 0
      %652 = vmatpush1.bf16.msra.mxu0 %v585
      %653 = vmatprep.subr.bf16.mxu0 0
      %654 = vmatpush1.bf16.msra.mxu0 %v586
      %655 = vmatprep.subr.bf16.mxu0 0
      %656 = vmatpush1.bf16.msra.mxu0 %v587
      %657 = vmatprep.subr.bf16.mxu0 0
      %658 = vmatpush1.bf16.msra.mxu0 %v588
      %659 = vmatprep.subr.bf16.mxu0 0
      %660 = vmatpush1.bf16.msra.mxu0 %v589
      %661 = vmatprep.subr.bf16.mxu0 0
      %662 = vmatpush1.bf16.msra.mxu0 %v590
      %663 = vmatprep.subr.bf16.mxu0 0
      %664 = vmatpush1.bf16.msra.mxu0 %v591
      %665 = vmatprep.subr.bf16.mxu0 0
      %666 = vmatpush1.bf16.msra.mxu0 %v592
      %667 = vmatprep.subr.bf16.mxu0 0
      %668 = vmatpush1.bf16.msra.mxu0 %v593
      %669 = vmatprep.subr.bf16.mxu0 0
      %670 = vmatpush1.bf16.msra.mxu0 %v594
      %671 = vmatprep.subr.bf16.mxu0 0
      %672 = vmatpush1.bf16.msra.mxu0 %v595
      %673 = vmatprep.subr.bf16.mxu0 0
      %674 = vmatpush1.bf16.msra.mxu0 %v596
      %675 = vmatprep.subr.bf16.mxu0 0
      %676 = vmatpush1.bf16.msra.mxu0 %v597
      %677 = vmatprep.subr.bf16.mxu0 0
      %678 = vmatpush1.bf16.msra.mxu0 %v598
      %679 = vmatprep.mubr.bf16.mxu0 %v392
      %680 = vmatmul.mubr.bf16.gmra.mrb[0].mxu0 %v391
      %v681 = vpop.f32.mrb[0].mxu0
      %v682 = vadd.f32 %v293, %v681
      %v683 = vpop.f32.mrb[0].mxu0
      %v684 = vpop.f32.mrb[0].mxu0
      %v685 = vadd.f32 %v293, %v684
      %v686 = vpop.f32.mrb[0].mxu0
      %687 = vmatprep.mubr.bf16.mxu0 %v396
      %688 = vmatmul.mubr.bf16.gmra.mrb[0].mxu0 %v395
      %v689 = vpop.f32.mrb[0].mxu0
      %v690 = vadd.f32 %v293, %v689
      %v691 = vpop.f32.mrb[0].mxu0
      %v692 = vpop.f32.mrb[0].mxu0
      %v693 = vadd.f32 %v293, %v692
      %v694 = vpop.f32.mrb[0].mxu0
      %695 = vmatprep.mubr.bf16.mxu0 %v400
      %696 = vmatmul.mubr.bf16.gmra.mrb[0].mxu0 %v399
      %v697 = vpop.f32.mrb[0].mxu0
      %v698 = vadd.f32 %v293, %v697
      %v699 = vpop.f32.mrb[0].mxu0
      %v700 = vpop.f32.mrb[0].mxu0
      %v701 = vadd.f32 %v293, %v700
      %v702 = vpop.f32.mrb[0].mxu0
      %703 = vmatprep.mubr.bf16.mxu0 %v404
      %704 = vmatmul.mubr.bf16.gmra.mrb[0].mxu0 %v403
      %v705 = vpop.f32.mrb[0].mxu0
      %v706 = vadd.f32 %v293, %v705
      %v707 = vpop.f32.mrb[0].mxu0
      %v708 = vpop.f32.mrb[0].mxu0
      %v709 = vadd.f32 %v293, %v708
      %v710 = vpop.f32.mrb[0].mxu0
      %711 = vmatprep.mubr.bf16.mxu0 %v408
      %712 = vmatmul.mubr.bf16.gmra.mrb[0].mxu0 %v407
      %v713 = vpop.f32.mrb[0].mxu0
      %v714 = vadd.f32 %v293, %v713
      %v715 = vpop.f32.mrb[0].mxu0
      %v716 = vpop.f32.mrb[0].mxu0
      %v717 = vadd.f32 %v293, %v716
      %v718 = vpop.f32.mrb[0].mxu0
      %719 = vmatprep.mubr.bf16.mxu0 %v412
      %720 = vmatmul.mubr.bf16.gmra.mrb[0].mxu0 %v411
      %v721 = vpop.f32.mrb[0].mxu0
      %v722 = vadd.f32 %v293, %v721
      %v723 = vpop.f32.mrb[0].mxu0
      %v724 = vpop.f32.mrb[0].mxu0
      %v725 = vadd.f32 %v293, %v724
      %v726 = vpop.f32.mrb[0].mxu0
      %727 = vmatprep.mubr.bf16.mxu0 %v416
      %728 = vmatmul.mubr.bf16.gmra.mrb[0].mxu0 %v415
      %v729 = vpop.f32.mrb[0].mxu0
      %v730 = vadd.f32 %v293, %v729
      %v731 = vpop.f32.mrb[0].mxu0
      %v732 = vpop.f32.mrb[0].mxu0
      %v733 = vadd.f32 %v293, %v732
      %v734 = vpop.f32.mrb[0].mxu0
      %735 = vmatprep.mubr.bf16.mxu0 %v420
      %736 = vmatmul.mubr.bf16.gmra.mrb[0].mxu0 %v419
      %v737 = vpop.f32.mrb[0].mxu0
      %v738 = vadd.f32 %v293, %v737
      %v739 = vpop.f32.mrb[0].mxu0
      %v740 = vpop.f32.mrb[0].mxu0
      %v741 = vadd.f32 %v293, %v740
      %v742 = vpop.f32.mrb[0].mxu0
      %743 = vdwg.mxu0
      %744 = vmatprep.subr.bf16.mxu0 0
      %745 = vmatpush1.bf16.msra.mxu0 %v599
      %746 = vmatprep.subr.bf16.mxu0 0
      %747 = vmatpush1.bf16.msra.mxu0 %v600
      %748 = vmatprep.subr.bf16.mxu0 0
      %749 = vmatpush1.bf16.msra.mxu0 %v601
      %750 = vmatprep.subr.bf16.mxu0 0
      %751 = vmatpush1.bf16.msra.mxu0 %v602
      %752 = vmatprep.subr.bf16.mxu0 0
      %753 = vmatpush1.bf16.msra.mxu0 %v603
      %754 = vmatprep.subr.bf16.mxu0 0
      %755 = vmatpush1.bf16.msra.mxu0 %v604
      %756 = vmatprep.subr.bf16.mxu0 0
      %757 = vmatpush1.bf16.msra.mxu0 %v605
      %758 = vmatprep.subr.bf16.mxu0 0
      %759 = vmatpush1.bf16.msra.mxu0 %v606
      %760 = vmatprep.subr.bf16.mxu0 0
      %761 = vmatpush1.bf16.msra.mxu0 %v607
      %762 = vmatprep.subr.bf16.mxu0 0
      %763 = vmatpush1.bf16.msra.mxu0 %v608
      %764 = vmatprep.subr.bf16.mxu0 0
      %765 = vmatpush1.bf16.msra.mxu0 %v609
      %766 = vmatprep.subr.bf16.mxu0 0
      %767 = vmatpush1.bf16.msra.mxu0 %v610
      %768 = vmatprep.subr.bf16.mxu0 0
      %769 = vmatpush1.bf16.msra.mxu0 %v611
      %770 = vmatprep.subr.bf16.mxu0 0
      %771 = vmatpush1.bf16.msra.mxu0 %v612
      %772 = vmatprep.subr.bf16.mxu0 0
      %773 = vmatpush1.bf16.msra.mxu0 %v613
      %774 = vmatprep.subr.bf16.mxu0 0
      %775 = vmatpush1.bf16.msra.mxu0 %v614
      %776 = vmatprep.mubr.bf16.mxu0 %v394
      %777 = vmatmul.mubr.bf16.gmra.mrb[0].mxu0 %v393
      %v778 = vpop.f32.mrb[0].mxu0
      %v779 = vadd.f32 %v682, %v778
      %v780 = vpop.f32.mrb[0].mxu0
      %v781 = vpop.f32.mrb[0].mxu0
      %v782 = vadd.f32 %v685, %v781
      %v783 = vpop.f32.mrb[0].mxu0
      %784 = vmatprep.mubr.bf16.mxu0 %v398
      %785 = vmatmul.mubr.bf16.gmra.mrb[0].mxu0 %v397
      %v786 = vpop.f32.mrb[0].mxu0
      %v787 = vadd.f32 %v690, %v786
      %v788 = vpop.f32.mrb[0].mxu0
      %v789 = vpop.f32.mrb[0].mxu0
      %v790 = vadd.f32 %v693, %v789
      %v791 = vpop.f32.mrb[0].mxu0
      %792 = vmatprep.mubr.bf16.mxu0 %v402
      %793 = vmatmul.mubr.bf16.gmra.mrb[0].mxu0 %v401
      %v794 = vpop.f32.mrb[0].mxu0
      %v795 = vadd.f32 %v698, %v794
      %v796 = vpop.f32.mrb[0].mxu0
      %v797 = vpop.f32.mrb[0].mxu0
      %v798 = vadd.f32 %v701, %v797
      %v799 = vpop.f32.mrb[0].mxu0
      %800 = vmatprep.mubr.bf16.mxu0 %v406
      %801 = vmatmul.mubr.bf16.gmra.mrb[0].mxu0 %v405
      %v802 = vpop.f32.mrb[0].mxu0
      %v803 = vadd.f32 %v706, %v802
      %v804 = vpop.f32.mrb[0].mxu0
      %v805 = vpop.f32.mrb[0].mxu0
      %v806 = vadd.f32 %v709, %v805
      %v807 = vpop.f32.mrb[0].mxu0
      %808 = vmatprep.mubr.bf16.mxu0 %v410
      %809 = vmatmul.mubr.bf16.gmra.mrb[0].mxu0 %v409
      %v810 = vpop.f32.mrb[0].mxu0
      %v811 = vadd.f32 %v714, %v810
      %v812 = vpop.f32.mrb[0].mxu0
      %v813 = vpop.f32.mrb[0].mxu0
      %v814 = vadd.f32 %v717, %v813
      %v815 = vpop.f32.mrb[0].mxu0
      %816 = vmatprep.mubr.bf16.mxu0 %v414
      %817 = vmatmul.mubr.bf16.gmra.mrb[0].mxu0 %v413
      %v818 = vpop.f32.mrb[0].mxu0
      %v819 = vadd.f32 %v722, %v818
      %v820 = vpop.f32.mrb[0].mxu0
      %v821 = vpop.f32.mrb[0].mxu0
      %v822 = vadd.f32 %v725, %v821
      %v823 = vpop.f32.mrb[0].mxu0
      %824 = vmatprep.mubr.bf16.mxu0 %v418
      %825 = vmatmul.mubr.bf16.gmra.mrb[0].mxu0 %v417
      %v826 = vpop.f32.mrb[0].mxu0
      %v827 = vadd.f32 %v730, %v826
      %v828 = vpop.f32.mrb[0].mxu0
      %v829 = vpop.f32.mrb[0].mxu0
      %v830 = vadd.f32 %v733, %v829
      %v831 = vpop.f32.mrb[0].mxu0
      %832 = vmatprep.mubr.bf16.mxu0 %v422
      %833 = vmatmul.mubr.bf16.gmra.mrb[0].mxu0 %v421
      %v834 = vpop.f32.mrb[0].mxu0
      %v835 = vadd.f32 %v738, %v834
      %v836 = vpop.f32.mrb[0].mxu0
      %v837 = vpop.f32.mrb[0].mxu0
      %v838 = vadd.f32 %v741, %v837
      %v839 = vpop.f32.mrb[0].mxu0
      %840 = vdwg.mxu0
      %v841 = vmax.f32 %v779, 0.0
      %v842 = vmax.f32 %v782, 0.0
      %v843 = vmax.f32 %v787, 0.0
      %v844 = vmax.f32 %v790, 0.0
      %v845 = vmax.f32 %v795, 0.0
      %v846 = vmax.f32 %v798, 0.0
      %v847 = vmax.f32 %v803, 0.0
      %v848 = vmax.f32 %v806, 0.0
      %v849 = vmax.f32 %v811, 0.0
      %v850 = vmax.f32 %v814, 0.0
      %v851 = vmax.f32 %v819, 0.0
      %v852 = vmax.f32 %v822, 0.0
      %v853 = vmax.f32 %v827, 0.0
      %v854 = vmax.f32 %v830, 0.0
      %v855 = vmax.f32 %v835, 0.0
      %v856 = vmax.f32 %v838, 0.0
      %v857 = vpack.c.bf16 %v842, %v841
      %v858 = vpack.c.bf16 %v844, %v843
      %v859 = vpack.c.bf16 %v846, %v845
      %v860 = vpack.c.bf16 %v848, %v847
      %v861 = vpack.c.bf16 %v850, %v849
      %v862 = vpack.c.bf16 %v852, %v851
      %v863 = vpack.c.bf16 %v854, %v853
      %v864 = vpack.c.bf16 %v856, %v855
      %v873 = vunpack.c.l.b16 %v857
      %v874 = vunpack.c.h.b16 %v857
      %v875 = vunpack.c.l.b16 %v858
      %v876 = vunpack.c.h.b16 %v858
      %v877 = vunpack.c.l.b16 %v859
      %v878 = vunpack.c.h.b16 %v859
      %v879 = vunpack.c.l.b16 %v860
      %v880 = vunpack.c.h.b16 %v860
      %v881 = vunpack.c.l.b16 %v861
      %v882 = vunpack.c.h.b16 %v861
      %v883 = vunpack.c.l.b16 %v862
      %v884 = vunpack.c.h.b16 %v862
      %v885 = vunpack.c.l.b16 %v863
      %v886 = vunpack.c.h.b16 %v863
      %v887 = vunpack.c.l.b16 %v864
      %v888 = vunpack.c.h.b16 %v864
      %v889 = vpack.c.b16 %v873, %v873
      %v890 = vpack.c.b16 %v874, %v874
      %v891 = vpack.c.b16 %v875, %v875
      %v892 = vpack.c.b16 %v876, %v876
      %v893 = vpack.c.b16 %v877, %v877
      %v894 = vpack.c.b16 %v878, %v878
      %v895 = vpack.c.b16 %v879, %v879
      %v896 = vpack.c.b16 %v880, %v880
      %v897 = vpack.c.b16 %v881, %v881
      %v898 = vpack.c.b16 %v882, %v882
      %v899 = vpack.c.b16 %v883, %v883
      %v900 = vpack.c.b16 %v884, %v884
      %v901 = vpack.c.b16 %v885, %v885
      %v902 = vpack.c.b16 %v886, %v886
      %v903 = vpack.c.b16 %v887, %v887
      %v904 = vpack.c.b16 %v888, %v888
      %vm921 = vcmask 519168
      %922 = vst.msk [vmem:[%s190] sm:$0xf] %vm921, %v889
      %923 = vst.msk [vmem:[%s190 + $0x4] sm:$0xf] %vm921, %v890
      %924 = vst.msk [vmem:[%s190 + $0x8] sm:$0xf] %vm921, %v891
      %925 = vst.msk [vmem:[%s190 + $0xc] sm:$0xf] %vm921, %v892
      %926 = vst.msk [vmem:[%s190 + $0x10] sm:$0xf] %vm921, %v893
      %927 = vst.msk [vmem:[%s190 + $0x14] sm:$0xf] %vm921, %v894
      %928 = vst.msk [vmem:[%s190 + $0x18] sm:$0xf] %vm921, %v895
      %929 = vst.msk [vmem:[%s190 + $0x1c] sm:$0xf] %vm921, %v896
      %930 = vst.msk [vmem:[%s190 + $0x20] sm:$0xf] %vm921, %v897
      %931 = vst.msk [vmem:[%s190 + $0x24] sm:$0xf] %vm921, %v898
      %932 = vst.msk [vmem:[%s190 + $0x28] sm:$0xf] %vm921, %v899
      %933 = vst.msk [vmem:[%s190 + $0x2c] sm:$0xf] %vm921, %v900
      %934 = vst.msk [vmem:[%s190 + $0x30] sm:$0xf] %vm921, %v901
      %935 = vst.msk [vmem:[%s190 + $0x34] sm:$0xf] %vm921, %v902
      %936 = vst.msk [vmem:[%s190 + $0x38] sm:$0xf] %vm921, %v903
      %937 = vst.msk [vmem:[%s190 + $0x3c] sm:$0xf] %vm921, %v904
      %p938 = scmp.lt.s32.totalorder %s14, 3
      %s939 = scalar_select %p938, %s14, 3
      %s940 = smul.addr %s939, 16
      %s941 = smul.addr %s940, 4
      %s942 = scalar_lea.vmem %s3, %s941
      // Predicated region
      $region33: #{ae_cifar_forward.12} parent=31 // pred_check
        %p943 = pneg %p105
      $region34: #{ae_cifar_forward.12} parent=31 // pred_check_branch
        %945 = sbr.rel (%p943) target = $region36
      $region35: #{ae_cifar_forward.12} parent=31 // pred_region
        _
      $region36: #{ae_cifar_forward.12} parent=31 // pred_fallthru
        _
    $region32: #{ae_cifar_forward.12} parent=5 // pred_fallthru
      _
    %p946 = scmp.le.s32.totalorder 2, %s9
    // Predicated region
    $region37: #{ae_cifar_forward.12} parent=5 // pred_check
      %p947 = pneg %p946
    $region38: #{ae_cifar_forward.12} parent=5 // pred_check_branch
      %949 = sbr.rel (%p947) target = $region40
    $region39: #{ae_cifar_forward.12} parent=5 // pred_region
      %s950 = ssub.s32 %s9, 2
      // Predicated region
      $region41: #{ae_cifar_forward.12} parent=39 // pred_check
        %p951 = pneg %p111
      $region42: #{ae_cifar_forward.12} parent=39 // pred_check_branch
        %953 = sbr.rel (%p951) target = $region44
      $region43: #{ae_cifar_forward.12} parent=39 // pred_region
        %p954 = scmp.lt.s32.totalorder %s15, 3
        %s955 = scalar_select %p954, %s15, 3
        %s956 = smul.addr %s955, 16
        %s957 = smul.addr %s956, 4
        %s958 = scalar_lea.vmem %s3, %s957
      $region44: #{ae_cifar_forward.12} parent=39 // pred_fallthru
        _
    $region40: #{ae_cifar_forward.12} parent=5 // pred_fallthru
      _
  $region6: #{ae_cifar_forward.12} parent=0 // loop_footer
    %s13 = sadd.s32 1, %s9
  $region7: #{ae_cifar_forward.12} parent=0 // loop_footer_branch
    %8 = sbr.rel target = $region3
  $region8: #{ae_cifar_forward.12} parent=0 // loop_exit
    _

// kernel: ae_cifar_forward.13
$region0: #{ae_cifar_forward.13}
  #allocation0 [shape = 'u32[]', space=smem, size = 0x4, offset = 0x4, fixed_abs, tag = 'smem constant byte address 0x4 - core index']
  #allocation1 [shape = 'u32[144,128]{1,0:T(1,128)}', space=vmem, size = 0x12000, scoped, tag = 'internal scratch']
  %s0 = inlined_call_operand.vmem [shape: bf16[4,3,256], index: 0, kind: input, shape index: {}]
  %s1 = inlined_call_operand.vmem [shape: bf16[4,256,512], index: 1, kind: input, shape index: {}]
  %s2 = inlined_call_operand.vmem [shape: f32[3,1], index: 2, kind: input, shape index: {}]
  %s3 = inlined_call_operand.vmem [shape: f32[4,3,512], index: 3, kind: output, shape index: {}]
  %s4 = sld [smem:[#allocation0]]
  $region45: #{ae_cifar_forward.13} parent=0
    _
  %s6 = ssub.s32 1, %s4
  %s7 = scalar_select 0, %s6, %s4
  loop: start=0, step=1, limit=6
  $region2: #{ae_cifar_forward.13} parent=0 // loop_pre_header
    _
  $region3: #{ae_cifar_forward.13} parent=0 // loop_header
    %s9 = sphi 0, %s13
    %p10 = scmp.ge.s32.totalorder %s9, 6
    %s19 = sphi 0, %s21
    %s22 = sphi 0, %s19
    %s23 = sphi 0, %s22
    %s39 = sphi 0, %s23
    %s45 = sphi 0, %s47
    %s48 = sphi 0, %s45
    %s49 = sphi 0, %s48
    %s65 = sphi 0, %s49
    %s69 = sphi 0, %s69
    %s71 = sphi 0, %s69
    %s72 = sphi 0, %s71
    %s86 = sphi 0, %s72
    %s92 = sphi 0, %s94
    %s95 = sphi 0, %s92
    %s96 = sphi 0, %s95
    %s112 = sphi 0, %s96
  $region4: #{ae_cifar_forward.13} parent=0 // loop_header_branch
    %12 = sbr.rel (%p10) target = $region8
  $region5: #{ae_cifar_forward.13} parent=0 // loop_body
    %s14 = ssub.s32 %s9, 1
    %s15 = ssub.s32 %s9, 2
    %s16 = sadd.s32 %s9, 1
    %s17 = ssub.s32 %s9, %s16
    %p18 = scmp.eq.s32.totalorder %s17, 0
    %s20 = sadd.s32 %s19, 1
    %s21 = scalar_select %p18, %s19, %s20
    %p24 = pneg %p18
    %p25 = scmp.eq.s32.totalorder %s9, 3
    %p26 = por %p24, %p25
    %p27 = scmp.ne.s32.totalorder %s19, %s22
    %p28 = scmp.eq.s32.totalorder %s9, 0
    %p29 = por %p27, %p28
    %p30 = scmp.ne.s32.totalorder %s19, %s22
    %p31 = scmp.eq.s32.totalorder %s14, 3
    %p32 = por %p30, %p31
    %p33 = scmp.ne.s32.totalorder %s22, %s23
    %p34 = scmp.eq.s32.totalorder %s14, 0
    %p35 = por %p33, %p34
    %p36 = scmp.ne.s32.totalorder %s22, %s23
    %p37 = scmp.eq.s32.totalorder %s15, 3
    %p38 = por %p36, %p37
    %p40 = scmp.ne.s32.totalorder %s23, %s39
    %p41 = scmp.eq.s32.totalorder %s15, 0
    %p42 = por %p40, %p41
    %s43 = ssub.s32 %s9, %s16
    %p44 = scmp.eq.s32.totalorder %s43, 0
    %s46 = sadd.s32 %s45, 1
    %s47 = scalar_select %p44, %s45, %s46
    %p50 = pneg %p44
    %p51 = scmp.eq.s32.totalorder %s9, 3
    %p52 = por %p50, %p51
    %p53 = scmp.ne.s32.totalorder %s45, %s48
    %p54 = scmp.eq.s32.totalorder %s9, 0
    %p55 = por %p53, %p54
    %p56 = scmp.ne.s32.totalorder %s45, %s48
    %p57 = scmp.eq.s32.totalorder %s14, 3
    %p58 = por %p56, %p57
    %p59 = scmp.ne.s32.totalorder %s48, %s49
    %p60 = scmp.eq.s32.totalorder %s14, 0
    %p61 = por %p59, %p60
    %p62 = scmp.ne.s32.totalorder %s48, %s49
    %p63 = scmp.eq.s32.totalorder %s15, 3
    %p64 = por %p62, %p63
    %p66 = scmp.ne.s32.totalorder %s49, %s65
    %p67 = scmp.eq.s32.totalorder %s15, 0
    %p68 = por %p66, %p67
    %s70 = sadd.s32 %s69, 1
    %p73 = scmp.eq.s32.totalorder %s9, 3
    %p74 = scmp.ne.s32.totalorder %s69, %s71
    %p75 = scmp.eq.s32.totalorder %s9, 0
    %p76 = por %p74, %p75
    %p77 = scmp.ne.s32.totalorder %s69, %s71
    %p78 = scmp.eq.s32.totalorder %s14, 3
    %p79 = por %p77, %p78
    %p80 = scmp.ne.s32.totalorder %s71, %s72
    %p81 = scmp.eq.s32.totalorder %s14, 0
    %p82 = por %p80, %p81
    %p83 = scmp.ne.s32.totalorder %s71, %s72
    %p84 = scmp.eq.s32.totalorder %s15, 3
    %p85 = por %p83, %p84
    %p87 = scmp.ne.s32.totalorder %s72, %s86
    %p88 = scmp.eq.s32.totalorder %s15, 0
    %p89 = por %p87, %p88
    %s90 = ssub.s32 %s9, %s16
    %p91 = scmp.eq.s32.totalorder %s90, 0
    %s93 = sadd.s32 %s92, 1
    %s94 = scalar_select %p91, %s92, %s93
    %p97 = pneg %p91
    %p98 = scmp.eq.s32.totalorder %s9, 3
    %p99 = por %p97, %p98
    %p100 = scmp.ne.s32.totalorder %s92, %s95
    %p101 = scmp.eq.s32.totalorder %s9, 0
    %p102 = por %p100, %p101
    %p103 = scmp.ne.s32.totalorder %s92, %s95
    %p104 = scmp.eq.s32.totalorder %s14, 3
    %p105 = por %p103, %p104
    %p106 = scmp.ne.s32.totalorder %s95, %s96
    %p107 = scmp.eq.s32.totalorder %s14, 0
    %p108 = por %p106, %p107
    %p109 = scmp.ne.s32.totalorder %s95, %s96
    %p110 = scmp.eq.s32.totalorder %s15, 3
    %p111 = por %p109, %p110
    %p113 = scmp.ne.s32.totalorder %s96, %s112
    %p114 = scmp.eq.s32.totalorder %s15, 0
    %p115 = por %p113, %p114
    %p116 = scmp.le.s32.totalorder 1, %s9
    %p117 = scmp.lt.s32.totalorder %s9, 5
    %p118 = pnand %p116, %p117
    %p119 = pneg %p118
    // Predicated region
    $region9: #{ae_cifar_forward.13} parent=5 // pred_check
      _
    $region10: #{ae_cifar_forward.13} parent=5 // pred_check_branch
      %121 = sbr.rel (%p118) target = $region12
    $region11: #{ae_cifar_forward.13} parent=5 // pred_region
      %s122 = ssub.s32 %s9, 1
      // Predicated region
      $region13: #{ae_cifar_forward.13} parent=11 // pred_check
        %p123 = pneg %p82
      $region14: #{ae_cifar_forward.13} parent=11 // pred_check_branch
        %125 = sbr.rel (%p123) target = $region16
      $region15: #{ae_cifar_forward.13} parent=11 // pred_region
        _
      $region16: #{ae_cifar_forward.13} parent=11 // pred_fallthru
        _
    $region12: #{ae_cifar_forward.13} parent=5 // pred_fallthru
      _
    %p126 = scmp.lt.s32.totalorder %s9, 4
    // Predicated region
    $region17: #{ae_cifar_forward.13} parent=5 // pred_check
      %p127 = pneg %p126
    $region18: #{ae_cifar_forward.13} parent=5 // pred_check_branch
      %129 = sbr.rel (%p127) target = $region20
    $region19: #{ae_cifar_forward.13} parent=5 // pred_region
      // Predicated region
      $region21: #{ae_cifar_forward.13} parent=19 // pred_check
        %p130 = pneg %p29
      $region22: #{ae_cifar_forward.13} parent=19 // pred_check_branch
        %132 = sbr.rel (%p130) target = $region24
      $region23: #{ae_cifar_forward.13} parent=19 // pred_region
        %p133 = scmp.lt.s32.totalorder %s9, 3
        %s134 = scalar_select %p133, %s9, 3
        %s135 = smul.addr %s134, 2
        %s136 = smul.addr %s135, 2
        %s137 = scalar_lea.vmem %s0, %s136
      $region24: #{ae_cifar_forward.13} parent=19 // pred_fallthru
        _
      // Predicated region
      $region25: #{ae_cifar_forward.13} parent=19 // pred_check
        %p138 = pneg %p55
      $region26: #{ae_cifar_forward.13} parent=19 // pred_check_branch
        %140 = sbr.rel (%p138) target = $region28
      $region27: #{ae_cifar_forward.13} parent=19 // pred_region
        %p141 = scmp.lt.s32.totalorder %s9, 3
        %s142 = scalar_select %p141, %s9, 3
        %s143 = smul.addr %s142, 128
        %s144 = smul.addr %s143, 4
        %s145 = scalar_lea.vmem %s1, %s144
      $region28: #{ae_cifar_forward.13} parent=19 // pred_fallthru
        _
    $region20: #{ae_cifar_forward.13} parent=5 // pred_fallthru
      _
    %p146 = scmp.le.s32.totalorder 1, %s9
    %p147 = scmp.lt.s32.totalorder %s9, 5
    %p148 = pnand %p146, %p147
    %p149 = pneg %p148
    // Predicated region
    $region29: #{ae_cifar_forward.13} parent=5 // pred_check
      _
    $region30: #{ae_cifar_forward.13} parent=5 // pred_check_branch
      %151 = sbr.rel (%p148) target = $region32
    $region31: #{ae_cifar_forward.13} parent=5 // pred_region
      %s152 = ssub.s32 %s9, 1
      %p153 = scmp.lt.s32.totalorder %s14, 3
      %s154 = scalar_select %p153, %s14, 3
      %s155 = smul.addr %s154, 2
      %s156 = smul.addr %s155, 2
      %s157 = scalar_lea.vmem %s0, %s156
      %p158 = pneg %p35
      %p159 = pneg %p32
      %p160 = scmp.lt.s32.totalorder %s14, 3
      %s161 = scalar_select %p160, %s14, 3
      %s162 = smul.addr %s161, 128
      %s163 = smul.addr %s162, 4
      %s164 = scalar_lea.vmem %s1, %s163
      %p165 = pneg %p61
      %p166 = pneg %p58
      %p167 = pneg %p82
      %p168 = pneg %p79
      %p169 = pneg %p108
      %p170 = pneg %p105
      %p171 = scmp.lt.s32.totalorder %s14, 3
      %s172 = scalar_select %p171, %s14, 3
      %s173 = smul.addr %s172, 4
      %s174 = smul.addr %s173, 4
      %s175 = scalar_lea.vmem %s3, %s174
      %p176 = scmp.lt.s32.totalorder %s14, 3
      %s177 = scalar_select %p176, %s14, 3
      %s178 = smul.addr %s177, 2
      %s179 = smul.addr %s178, 2
      %s180 = scalar_lea.vmem %s0, %s179
      %p181 = scmp.lt.s32.totalorder %s14, 3
      %s182 = scalar_select %p181, %s14, 3
      %s183 = smul.addr %s182, 128
      %s184 = smul.addr %s183, 4
      %s185 = scalar_lea.vmem %s1, %s184
      %p186 = scmp.lt.s32.totalorder %s14, 3
      %s187 = scalar_select %p186, %s14, 3
      %s188 = smul.addr %s187, 4
      %s189 = smul.addr %s188, 4
      %s190 = scalar_lea.vmem %s3, %s189
      %v191 = vld [vmem:[%s180] sm:$0xf]
      %v192 = vld [vmem:[%s185] sm:$0xff]
      %v193 = vld [vmem:[%s185 + $0x8] sm:$0xff]
      %v194 = vld [vmem:[%s185 + $0x10] sm:$0xff]
      %v195 = vld [vmem:[%s185 + $0x18] sm:$0xff]
      %v196 = vld [vmem:[%s185 + $0x20] sm:$0xff]
      %v197 = vld [vmem:[%s185 + $0x28] sm:$0xff]
      %v198 = vld [vmem:[%s185 + $0x30] sm:$0xff]
      %v199 = vld [vmem:[%s185 + $0x38] sm:$0xff]
      %v200 = vld [vmem:[%s185 + $0x40] sm:$0xff]
      %v201 = vld [vmem:[%s185 + $0x48] sm:$0xff]
      %v202 = vld [vmem:[%s185 + $0x50] sm:$0xff]
      %v203 = vld [vmem:[%s185 + $0x58] sm:$0xff]
      %v204 = vld [vmem:[%s185 + $0x60] sm:$0xff]
      %v205 = vld [vmem:[%s185 + $0x68] sm:$0xff]
      %v206 = vld [vmem:[%s185 + $0x70] sm:$0xff]
      %v207 = vld [vmem:[%s185 + $0x78] sm:$0xff]
      %v208 = vld [vmem:[%s185 + $0x80] sm:$0xff]
      %v209 = vld [vmem:[%s185 + $0x88] sm:$0xff]
      %v210 = vld [vmem:[%s185 + $0x90] sm:$0xff]
      %v211 = vld [vmem:[%s185 + $0x98] sm:$0xff]
      %v212 = vld [vmem:[%s185 + $0xa0] sm:$0xff]
      %v213 = vld [vmem:[%s185 + $0xa8] sm:$0xff]
      %v214 = vld [vmem:[%s185 + $0xb0] sm:$0xff]
      %v215 = vld [vmem:[%s185 + $0xb8] sm:$0xff]
      %v216 = vld [vmem:[%s185 + $0xc0] sm:$0xff]
      %v217 = vld [vmem:[%s185 + $0xc8] sm:$0xff]
      %v218 = vld [vmem:[%s185 + $0xd0] sm:$0xff]
      %v219 = vld [vmem:[%s185 + $0xd8] sm:$0xff]
      %v220 = vld [vmem:[%s185 + $0xe0] sm:$0xff]
      %v221 = vld [vmem:[%s185 + $0xe8] sm:$0xff]
      %v222 = vld [vmem:[%s185 + $0xf0] sm:$0xff]
      %v223 = vld [vmem:[%s185 + $0xf8] sm:$0xff]
      %v224 = vld [vmem:[%s185 + $0x100] sm:$0xff]
      %v225 = vld [vmem:[%s185 + $0x108] sm:$0xff]
      %v226 = vld [vmem:[%s185 + $0x110] sm:$0xff]
      %v227 = vld [vmem:[%s185 + $0x118] sm:$0xff]
      %v228 = vld [vmem:[%s185 + $0x120] sm:$0xff]
      %v229 = vld [vmem:[%s185 + $0x128] sm:$0xff]
      %v230 = vld [vmem:[%s185 + $0x130] sm:$0xff]
      %v231 = vld [vmem:[%s185 + $0x138] sm:$0xff]
      %v232 = vld [vmem:[%s185 + $0x140] sm:$0xff]
      %v233 = vld [vmem:[%s185 + $0x148] sm:$0xff]
      %v234 = vld [vmem:[%s185 + $0x150] sm:$0xff]
      %v235 = vld [vmem:[%s185 + $0x158] sm:$0xff]
      %v236 = vld [vmem:[%s185 + $0x160] sm:$0xff]
      %v237 = vld [vmem:[%s185 + $0x168] sm:$0xff]
      %v238 = vld [vmem:[%s185 + $0x170] sm:$0xff]
      %v239 = vld [vmem:[%s185 + $0x178] sm:$0xff]
      %v240 = vld [vmem:[%s185 + $0x180] sm:$0xff]
      %v241 = vld [vmem:[%s185 + $0x188] sm:$0xff]
      %v242 = vld [vmem:[%s185 + $0x190] sm:$0xff]
      %v243 = vld [vmem:[%s185 + $0x198] sm:$0xff]
      %v244 = vld [vmem:[%s185 + $0x1a0] sm:$0xff]
      %v245 = vld [vmem:[%s185 + $0x1a8] sm:$0xff]
      %v246 = vld [vmem:[%s185 + $0x1b0] sm:$0xff]
      %v247 = vld [vmem:[%s185 + $0x1b8] sm:$0xff]
      %v248 = vld [vmem:[%s185 + $0x1c0] sm:$0xff]
      %v249 = vld [vmem:[%s185 + $0x1c8] sm:$0xff]
      %v250 = vld [vmem:[%s185 + $0x1d0] sm:$0xff]
      %v251 = vld [vmem:[%s185 + $0x1d8] sm:$0xff]
      %v252 = vld [vmem:[%s185 + $0x1e0] sm:$0xff]
      %v253 = vld [vmem:[%s185 + $0x1e8] sm:$0xff]
      %v254 = vld [vmem:[%s185 + $0x1f0] sm:$0xff]
      %v255 = vld [vmem:[%s185 + $0x1f8] sm:$0xff]
      %v256 = vld [vmem:[%s2] sm:$0x7]
      %258 = vset.pattern.permute.xlu0 0
      %259 = vperm.xlu0 %258, %v256
      %v260 = vpop.permute.xlu0 %259
      %v264 = vunpack.c.l.s4 1983009808
      %v265 = vunpack.c.0.s8 %v264
      %v266 = vlaneseq
      %v267 = vshrl.u32 %v266, 7
      %v268 = vsub.s32 %v265, %v267
      %v269 = vrot.slane %v191, %v268
      %v270 = vcombine.high %v269, %v269
      %v337 = vunpack.c.l.b16 %v192
      %v338 = vunpack.c.h.b16 %v192
      %v339 = vunpack.c.l.b16 %v193
      %v340 = vunpack.c.h.b16 %v193
      %v341 = vunpack.c.l.b16 %v194
      %v342 = vunpack.c.h.b16 %v194
      %v343 = vunpack.c.l.b16 %v195
      %v344 = vunpack.c.h.b16 %v195
      %v345 = vunpack.c.l.b16 %v196
      %v346 = vunpack.c.h.b16 %v196
      %v347 = vunpack.c.l.b16 %v197
      %v348 = vunpack.c.h.b16 %v197
      %v349 = vunpack.c.l.b16 %v198
      %v350 = vunpack.c.h.b16 %v198
      %v351 = vunpack.c.l.b16 %v199
      %v352 = vunpack.c.h.b16 %v199
      %v353 = vunpack.c.l.b16 %v200
      %v354 = vunpack.c.h.b16 %v200
      %v355 = vunpack.c.l.b16 %v201
      %v356 = vunpack.c.h.b16 %v201
      %v357 = vunpack.c.l.b16 %v202
      %v358 = vunpack.c.h.b16 %v202
      %v359 = vunpack.c.l.b16 %v203
      %v360 = vunpack.c.h.b16 %v203
      %v361 = vunpack.c.l.b16 %v204
      %v362 = vunpack.c.h.b16 %v204
      %v363 = vunpack.c.l.b16 %v205
      %v364 = vunpack.c.h.b16 %v205
      %v365 = vunpack.c.l.b16 %v206
      %v366 = vunpack.c.h.b16 %v206
      %v367 = vunpack.c.l.b16 %v207
      %v368 = vunpack.c.h.b16 %v207
      %v369 = vunpack.c.l.b16 %v208
      %v370 = vunpack.c.h.b16 %v208
      %v371 = vunpack.c.l.b16 %v209
      %v372 = vunpack.c.h.b16 %v209
      %v373 = vunpack.c.l.b16 %v210
      %v374 = vunpack.c.h.b16 %v210
      %v375 = vunpack.c.l.b16 %v211
      %v376 = vunpack.c.h.b16 %v211
      %v377 = vunpack.c.l.b16 %v212
      %v378 = vunpack.c.h.b16 %v212
      %v379 = vunpack.c.l.b16 %v213
      %v380 = vunpack.c.h.b16 %v213
      %v381 = vunpack.c.l.b16 %v214
      %v382 = vunpack.c.h.b16 %v214
      %v383 = vunpack.c.l.b16 %v215
      %v384 = vunpack.c.h.b16 %v215
      %v385 = vunpack.c.l.b16 %v216
      %v386 = vunpack.c.h.b16 %v216
      %v387 = vunpack.c.l.b16 %v217
      %v388 = vunpack.c.h.b16 %v217
      %v389 = vunpack.c.l.b16 %v218
      %v390 = vunpack.c.h.b16 %v218
      %v391 = vunpack.c.l.b16 %v219
      %v392 = vunpack.c.h.b16 %v219
      %v393 = vunpack.c.l.b16 %v220
      %v394 = vunpack.c.h.b16 %v220
      %v395 = vunpack.c.l.b16 %v221
      %v396 = vunpack.c.h.b16 %v221
      %v397 = vunpack.c.l.b16 %v222
      %v398 = vunpack.c.h.b16 %v222
      %v399 = vunpack.c.l.b16 %v223
      %v400 = vunpack.c.h.b16 %v223
      %v401 = vunpack.c.l.b16 %v224
      %v402 = vunpack.c.h.b16 %v224
      %v403 = vunpack.c.l.b16 %v225
      %v404 = vunpack.c.h.b16 %v225
      %v405 = vunpack.c.l.b16 %v226
      %v406 = vunpack.c.h.b16 %v226
      %v407 = vunpack.c.l.b16 %v227
      %v408 = vunpack.c.h.b16 %v227
      %v409 = vunpack.c.l.b16 %v228
      %v410 = vunpack.c.h.b16 %v228
      %v411 = vunpack.c.l.b16 %v229
      %v412 = vunpack.c.h.b16 %v229
      %v413 = vunpack.c.l.b16 %v230
      %v414 = vunpack.c.h.b16 %v230
      %v415 = vunpack.c.l.b16 %v231
      %v416 = vunpack.c.h.b16 %v231
      %v417 = vunpack.c.l.b16 %v232
      %v418 = vunpack.c.h.b16 %v232
      %v419 = vunpack.c.l.b16 %v233
      %v420 = vunpack.c.h.b16 %v233
      %v421 = vunpack.c.l.b16 %v234
      %v422 = vunpack.c.h.b16 %v234
      %v423 = vunpack.c.l.b16 %v235
      %v424 = vunpack.c.h.b16 %v235
      %v425 = vunpack.c.l.b16 %v236
      %v426 = vunpack.c.h.b16 %v236
      %v427 = vunpack.c.l.b16 %v237
      %v428 = vunpack.c.h.b16 %v237
      %v429 = vunpack.c.l.b16 %v238
      %v430 = vunpack.c.h.b16 %v238
      %v431 = vunpack.c.l.b16 %v239
      %v432 = vunpack.c.h.b16 %v239
      %v433 = vunpack.c.l.b16 %v240
      %v434 = vunpack.c.h.b16 %v240
      %v435 = vunpack.c.l.b16 %v241
      %v436 = vunpack.c.h.b16 %v241
      %v437 = vunpack.c.l.b16 %v242
      %v438 = vunpack.c.h.b16 %v242
      %v439 = vunpack.c.l.b16 %v243
      %v440 = vunpack.c.h.b16 %v243
      %v441 = vunpack.c.l.b16 %v244
      %v442 = vunpack.c.h.b16 %v244
      %v443 = vunpack.c.l.b16 %v245
      %v444 = vunpack.c.h.b16 %v245
      %v445 = vunpack.c.l.b16 %v246
      %v446 = vunpack.c.h.b16 %v246
      %v447 = vunpack.c.l.b16 %v247
      %v448 = vunpack.c.h.b16 %v247
      %v449 = vunpack.c.l.b16 %v248
      %v450 = vunpack.c.h.b16 %v248
      %v451 = vunpack.c.l.b16 %v249
      %v452 = vunpack.c.h.b16 %v249
      %v453 = vunpack.c.l.b16 %v250
      %v454 = vunpack.c.h.b16 %v250
      %v455 = vunpack.c.l.b16 %v251
      %v456 = vunpack.c.h.b16 %v251
      %v457 = vunpack.c.l.b16 %v252
      %v458 = vunpack.c.h.b16 %v252
      %v459 = vunpack.c.l.b16 %v253
      %v460 = vunpack.c.h.b16 %v253
      %v461 = vunpack.c.l.b16 %v254
      %v462 = vunpack.c.h.b16 %v254
      %v463 = vunpack.c.l.b16 %v255
      %v464 = vunpack.c.h.b16 %v255
      %v465 = vpack.c.b16 %v341, %v337
      %v466 = vpack.c.b16 %v342, %v338
      %v467 = vpack.c.b16 %v343, %v339
      %v468 = vpack.c.b16 %v344, %v340
      %v469 = vpack.c.b16 %v349, %v345
      %v470 = vpack.c.b16 %v350, %v346
      %v471 = vpack.c.b16 %v351, %v347
      %v472 = vpack.c.b16 %v352, %v348
      %v473 = vpack.c.b16 %v357, %v353
      %v474 = vpack.c.b16 %v358, %v354
      %v475 = vpack.c.b16 %v359, %v355
      %v476 = vpack.c.b16 %v360, %v356
      %v477 = vpack.c.b16 %v365, %v361
      %v478 = vpack.c.b16 %v366, %v362
      %v479 = vpack.c.b16 %v367, %v363
      %v480 = vpack.c.b16 %v368, %v364
      %v481 = vpack.c.b16 %v373, %v369
      %v482 = vpack.c.b16 %v374, %v370
      %v483 = vpack.c.b16 %v375, %v371
      %v484 = vpack.c.b16 %v376, %v372
      %v485 = vpack.c.b16 %v381, %v377
      %v486 = vpack.c.b16 %v382, %v378
      %v487 = vpack.c.b16 %v383, %v379
      %v488 = vpack.c.b16 %v384, %v380
      %v489 = vpack.c.b16 %v389, %v385
      %v490 = vpack.c.b16 %v390, %v386
      %v491 = vpack.c.b16 %v391, %v387
      %v492 = vpack.c.b16 %v392, %v388
      %v493 = vpack.c.b16 %v397, %v393
      %v494 = vpack.c.b16 %v398, %v394
      %v495 = vpack.c.b16 %v399, %v395
      %v496 = vpack.c.b16 %v400, %v396
      %v497 = vpack.c.b16 %v405, %v401
      %v498 = vpack.c.b16 %v406, %v402
      %v499 = vpack.c.b16 %v407, %v403
      %v500 = vpack.c.b16 %v408, %v404
      %v501 = vpack.c.b16 %v413, %v409
      %v502 = vpack.c.b16 %v414, %v410
      %v503 = vpack.c.b16 %v415, %v411
      %v504 = vpack.c.b16 %v416, %v412
      %v505 = vpack.c.b16 %v421, %v417
      %v506 = vpack.c.b16 %v422, %v418
      %v507 = vpack.c.b16 %v423, %v419
      %v508 = vpack.c.b16 %v424, %v420
      %v509 = vpack.c.b16 %v429, %v425
      %v510 = vpack.c.b16 %v430, %v426
      %v511 = vpack.c.b16 %v431, %v427
      %v512 = vpack.c.b16 %v432, %v428
      %v513 = vpack.c.b16 %v437, %v433
      %v514 = vpack.c.b16 %v438, %v434
      %v515 = vpack.c.b16 %v439, %v435
      %v516 = vpack.c.b16 %v440, %v436
      %v517 = vpack.c.b16 %v445, %v441
      %v518 = vpack.c.b16 %v446, %v442
      %v519 = vpack.c.b16 %v447, %v443
      %v520 = vpack.c.b16 %v448, %v444
      %v521 = vpack.c.b16 %v453, %v449
      %v522 = vpack.c.b16 %v454, %v450
      %v523 = vpack.c.b16 %v455, %v451
      %v524 = vpack.c.b16 %v456, %v452
      %v525 = vpack.c.b16 %v461, %v457
      %v526 = vpack.c.b16 %v462, %v458
      %v527 = vpack.c.b16 %v463, %v459
      %v528 = vpack.c.b16 %v464, %v460
      %593 = vmatprep.subr.bf16.mxu0 %v466
      %594 = vmatpush1.bf16.msra.mxu0 %v465
      %595 = vmatprep.subr.bf16.mxu0 %v470
      %596 = vmatpush1.bf16.msra.mxu0 %v469
      %597 = vmatprep.subr.bf16.mxu0 %v474
      %598 = vmatpush1.bf16.msra.mxu0 %v473
      %599 = vmatprep.subr.bf16.mxu0 %v478
      %600 = vmatpush1.bf16.msra.mxu0 %v477
      %601 = vmatprep.subr.bf16.mxu0 %v482
      %602 = vmatpush1.bf16.msra.mxu0 %v481
      %603 = vmatprep.subr.bf16.mxu0 %v486
      %604 = vmatpush1.bf16.msra.mxu0 %v485
      %605 = vmatprep.subr.bf16.mxu0 %v490
      %606 = vmatpush1.bf16.msra.mxu0 %v489
      %607 = vmatprep.subr.bf16.mxu0 %v494
      %608 = vmatpush1.bf16.msra.mxu0 %v493
      %609 = vmatprep.subr.bf16.mxu0 %v498
      %610 = vmatpush1.bf16.msra.mxu0 %v497
      %611 = vmatprep.subr.bf16.mxu0 %v502
      %612 = vmatpush1.bf16.msra.mxu0 %v501
      %613 = vmatprep.subr.bf16.mxu0 %v506
      %614 = vmatpush1.bf16.msra.mxu0 %v505
      %615 = vmatprep.subr.bf16.mxu0 %v510
      %616 = vmatpush1.bf16.msra.mxu0 %v509
      %617 = vmatprep.subr.bf16.mxu0 %v514
      %618 = vmatpush1.bf16.msra.mxu0 %v513
      %619 = vmatprep.subr.bf16.mxu0 %v518
      %620 = vmatpush1.bf16.msra.mxu0 %v517
      %621 = vmatprep.subr.bf16.mxu0 %v522
      %622 = vmatpush1.bf16.msra.mxu0 %v521
      %623 = vmatprep.subr.bf16.mxu0 %v526
      %624 = vmatpush1.bf16.msra.mxu0 %v525
      %625 = vmatprep.mubr.bf16.mxu0 %v270
      %626 = vmatmul.mubr.bf16.gmra.mrb[0].mxu0 %v269
      %v627 = vpop.f32.mrb[0].mxu0
      %v628 = vadd.f32 %v260, %v627
      %v629 = vpop.f32.mrb[0].mxu0
      %v630 = vadd.f32 %v260, %v629
      %v631 = vpop.f32.mrb[0].mxu0
      %v632 = vpop.f32.mrb[0].mxu0
      %633 = vdwg.mxu0
      %634 = vmatprep.subr.bf16.mxu0 %v468
      %635 = vmatpush1.bf16.msra.mxu0 %v467
      %636 = vmatprep.subr.bf16.mxu0 %v472
      %637 = vmatpush1.bf16.msra.mxu0 %v471
      %638 = vmatprep.subr.bf16.mxu0 %v476
      %639 = vmatpush1.bf16.msra.mxu0 %v475
      %640 = vmatprep.subr.bf16.mxu0 %v480
      %641 = vmatpush1.bf16.msra.mxu0 %v479
      %642 = vmatprep.subr.bf16.mxu0 %v484
      %643 = vmatpush1.bf16.msra.mxu0 %v483
      %644 = vmatprep.subr.bf16.mxu0 %v488
      %645 = vmatpush1.bf16.msra.mxu0 %v487
      %646 = vmatprep.subr.bf16.mxu0 %v492
      %647 = vmatpush1.bf16.msra.mxu0 %v491
      %648 = vmatprep.subr.bf16.mxu0 %v496
      %649 = vmatpush1.bf16.msra.mxu0 %v495
      %650 = vmatprep.subr.bf16.mxu0 %v500
      %651 = vmatpush1.bf16.msra.mxu0 %v499
      %652 = vmatprep.subr.bf16.mxu0 %v504
      %653 = vmatpush1.bf16.msra.mxu0 %v503
      %654 = vmatprep.subr.bf16.mxu0 %v508
      %655 = vmatpush1.bf16.msra.mxu0 %v507
      %656 = vmatprep.subr.bf16.mxu0 %v512
      %657 = vmatpush1.bf16.msra.mxu0 %v511
      %658 = vmatprep.subr.bf16.mxu0 %v516
      %659 = vmatpush1.bf16.msra.mxu0 %v515
      %660 = vmatprep.subr.bf16.mxu0 %v520
      %661 = vmatpush1.bf16.msra.mxu0 %v519
      %662 = vmatprep.subr.bf16.mxu0 %v524
      %663 = vmatpush1.bf16.msra.mxu0 %v523
      %664 = vmatprep.subr.bf16.mxu0 %v528
      %665 = vmatpush1.bf16.msra.mxu0 %v527
      %666 = vmatprep.mubr.bf16.mxu0 %v270
      %667 = vmatmul.mubr.bf16.gmra.mrb[0].mxu0 %v269
      %v668 = vpop.f32.mrb[0].mxu0
      %v669 = vadd.f32 %v260, %v668
      %v670 = vpop.f32.mrb[0].mxu0
      %v671 = vadd.f32 %v260, %v670
      %v672 = vpop.f32.mrb[0].mxu0
      %v673 = vpop.f32.mrb[0].mxu0
      %674 = vdwg.mxu0
      %v675 = vmul.f32 %v628, 0.5
      %v676 = vmul.f32 %v630, 0.5
      %v677 = vmul.f32 %v669, 0.5
      %v678 = vmul.f32 %v671, 0.5
      %v679 = vtanh.pop %v675
      %v680 = vtanh.pop %v676
      %v681 = vtanh.pop %v677
      %v682 = vtanh.pop %v678
      %v683 = vadd.f32 %v679, 1.0
      %v684 = vadd.f32 %v680, 1.0
      %v685 = vadd.f32 %v681, 1.0
      %v686 = vadd.f32 %v682, 1.0
      %v687 = vmul.f32 %v683, 0.5
      %v688 = vmul.f32 %v684, 0.5
      %v689 = vmul.f32 %v685, 0.5
      %v690 = vmul.f32 %v686, 0.5
      %v695 = vcombine.low %v687, %v688
      %v696 = vcombine.low %v689, %v690
      %699 = vst [vmem:[%s190] sm:$0x77] %v695
      %700 = vst [vmem:[%s190 + $0x8] sm:$0x77] %v696
      %p701 = scmp.lt.s32.totalorder %s14, 3
      %s702 = scalar_select %p701, %s14, 3
      %s703 = smul.addr %s702, 4
      %s704 = smul.addr %s703, 4
      %s705 = scalar_lea.vmem %s3, %s704
      // Predicated region
      $region33: #{ae_cifar_forward.13} parent=31 // pred_check
        %p706 = pneg %p105
      $region34: #{ae_cifar_forward.13} parent=31 // pred_check_branch
        %708 = sbr.rel (%p706) target = $region36
      $region35: #{ae_cifar_forward.13} parent=31 // pred_region
        _
      $region36: #{ae_cifar_forward.13} parent=31 // pred_fallthru
        _
    $region32: #{ae_cifar_forward.13} parent=5 // pred_fallthru
      _
    %p709 = scmp.le.s32.totalorder 2, %s9
    // Predicated region
    $region37: #{ae_cifar_forward.13} parent=5 // pred_check
      %p710 = pneg %p709
    $region38: #{ae_cifar_forward.13} parent=5 // pred_check_branch
      %712 = sbr.rel (%p710) target = $region40
    $region39: #{ae_cifar_forward.13} parent=5 // pred_region
      %s713 = ssub.s32 %s9, 2
      // Predicated region
      $region41: #{ae_cifar_forward.13} parent=39 // pred_check
        %p714 = pneg %p111
      $region42: #{ae_cifar_forward.13} parent=39 // pred_check_branch
        %716 = sbr.rel (%p714) target = $region44
      $region43: #{ae_cifar_forward.13} parent=39 // pred_region
        %p717 = scmp.lt.s32.totalorder %s15, 3
        %s718 = scalar_select %p717, %s15, 3
        %s719 = smul.addr %s718, 4
        %s720 = smul.addr %s719, 4
        %s721 = scalar_lea.vmem %s3, %s720
      $region44: #{ae_cifar_forward.13} parent=39 // pred_fallthru
        _
    $region40: #{ae_cifar_forward.13} parent=5 // pred_fallthru
      _
  $region6: #{ae_cifar_forward.13} parent=0 // loop_footer
    %s13 = sadd.s32 1, %s9
  $region7: #{ae_cifar_forward.13} parent=0 // loop_footer_branch
    %8 = sbr.rel target = $region3
  $region8: #{ae_cifar_forward.13} parent=0 // loop_exit
    _

</llo_original>
